<compile_context>
chip_gen: v6e
topology: v6e:2x2x1
jax: 0.10.0
libtpu: 0.0.40
codegen_flags: <defaults>
</compile_context>

<pallas_src>
import functools

import jax
import jax.numpy as jnp
import numpy as np
from jax.experimental import pallas as pl
from jax.experimental.pallas import tpu as pltpu


# ---------------------------------------------------------------------------
# Kernel 1: batched attention + gate + GRU-input projections (parallel grid).
# ---------------------------------------------------------------------------
def _attend_gate_kernel(pe_ref, q_ref, wp_pe_ref, vt_ref,
                        wq_ref, bq_ref, wgc_ref,
                        giq_ref, gic_ref, gib_ref,
                        out_ref, *, mm_dtype):
    bP, lP, twoH = pe_ref.shape
    H = twoH // 2
    tq = q_ref.shape[1]                     # query-time tile handled here
    N = bP * tq

    pe = pe_ref[...]                        # (bP, lP, 2H) keys, f32
    q = q_ref[...]                          # (bP, tq, 2H) query block (BlockSpec)
    q2 = q.reshape(N, twoH)

    # Fused query-side dot: [WPhat_sub_v | Wg_q] -> (N, 5H)  (bias fused too).
    qproj = (jnp.dot(q2.astype(mm_dtype), wq_ref[...],
                     preferred_element_type=jnp.float32)
             + bq_ref[...])
    wph_q = qproj[:, :H].reshape(bP, tq, H)          # WPhat(q)
    gq = qproj[:, H:]                                # q-part of gate logits (+Wg bias)

    # Attention scores: s[b,t,l] = sum_h tanh(WP(pe)[b,l,h] + WPhat(q)[b,t,h]) * vt[b,h]
    # Layout keeps lP as the LAST (lane) axis of s so the softmax reductions
    # and exp are lane-dense.
    temp = jnp.tanh(wp_pe_ref[...][:, None, :, :] + wph_q[:, :, None, :])  # (bP,tq,lP,H)
    s = jnp.sum(temp * vt_ref[...][:, None, None, :], axis=-1)             # (bP,tq,lP)

    s = s - jnp.max(s, axis=-1, keepdims=True)
    e = jnp.exp(s)
    a = e * pl.reciprocal(jnp.sum(e, axis=-1, keepdims=True), approx=True)  # (bP,tq,lP)

    # Context: batched MXU contraction over lP (per-b (tq,lP) @ (lP,2H)).
    c = jnp.einsum('btl,bld->btd', a.astype(mm_dtype), pe.astype(mm_dtype),
                   preferred_element_type=jnp.float32)                      # (bP,tq,2H)
    c2 = c.reshape(N, twoH)

    # Gate g = sigmoid(Wg [q; c]) without a lane concatenate (row-split Wg).
    glog = gq + jnp.dot(c2.astype(mm_dtype), wgc_ref[...],
                        preferred_element_type=jnp.float32)                 # (N, 4H)
    g = jax.nn.sigmoid(glog)
    xq = g[:, :twoH] * q2                     # gated encoder half (f32)
    xc = g[:, twoH:] * c2                     # gated context half (f32)

    # GRU *input* projections for BOTH directions, fused into a single
    # (N, 6H) slab: [fwd r|z|n | rev r|z|n].
    gi = (jnp.dot(xq.astype(mm_dtype), giq_ref[...],
                  preferred_element_type=jnp.float32)
          + jnp.dot(xc.astype(mm_dtype), gic_ref[...],
                    preferred_element_type=jnp.float32)
          + gib_ref[...])
    out_ref[...] = gi.reshape(bP, tq, 6 * H)  # lane-dense (6H) store


# ---------------------------------------------------------------------------
# Kernel 2: the only serial part — two GRU hidden-state recurrences,
# streamed over time chunks.
# ---------------------------------------------------------------------------
def _gru_scan_kernel(gf_ref, gr_ref,
                     wf_ref, bf_ref, wr_ref, br_ref,
                     h0f_ref, h0r_ref,
                     out_ref,
                     hf_sc, hr_sc):
    bP, tc, sixH = gf_ref.shape
    H = sixH // 6

    @pl.when(pl.program_id(0) == 0)
    def _():
        hf_sc[...] = h0f_ref[...]
        hr_sc[...] = h0r_ref[...]

    wf = wf_ref[...]; bf = bf_ref[...]
    wr = wr_ref[...]; br = br_ref[...]

    def cell(gi, h, w, b):
        # PyTorch GRUCell semantics; fused (H,3H) hidden matmul per step.
        gh = jnp.dot(h, w, preferred_element_type=jnp.float32) + b
        r = jax.nn.sigmoid(gi[:, 0:H] + gh[:, 0:H])
        z = jax.nn.sigmoid(gi[:, H:2 * H] + gh[:, H:2 * H])
        n = jnp.tanh(gi[:, 2 * H:3 * H] + r * gh[:, 2 * H:3 * H])
        return (1.0 - z) * n + z * h

    h_f = hf_sc[...]
    h_r = hr_sc[...]
    # tc is a small static chunk => full unroll of the chunk = bounded unroll
    # overall (the grid boundary bounds live ranges / code size).
    for j in range(tc):
        gf = gf_ref[:, j, :]                 # (bP, 6H), static slice
        gr = gr_ref[:, tc - 1 - j, :]        # reverse within the reversed chunk
        h_f = cell(gf[:, 0:3 * H], h_f, wf, bf)
        h_r = cell(gr[:, 3 * H:6 * H], h_r, wr, br)
        out_ref[j, :, 0:H] = h_f
        out_ref[j, :, H:2 * H] = h_r
    hf_sc[...] = h_f
    hr_sc[...] = h_r


# ---------------------------------------------------------------------------
# Wrapper.
# ---------------------------------------------------------------------------
def _full_spec(a):
    nd = a.ndim
    return pl.BlockSpec(a.shape, lambda i, _nd=nd: (0,) * _nd)


def self_matching_attention(passEnc, params, h0_fwd, h0_rev, *,
                            tq=None, tc=None, matmul_dtype=jnp.float32):
    lP, bP, twoH = passEnc.shape
    H = twoH // 2
    mmd = matmul_dtype

    # Query-tile size: prefer M = tq*bP >= 256 to fill MXU rows; must divide
    # lP and be a multiple of 8 (sublane tiling) unless it equals lP.
    if tq is None:
        tq = lP
        if lP % 8 == 0:
            cand = 8
            while cand * bP < 256 and lP % (cand * 2) == 0:
                cand *= 2
            tq = cand
    assert lP % tq == 0
    assert tq % 8 == 0 or tq == lP
    if tc is None:
        tc = 8 if lP % 8 == 0 else lP
    assert lP % tc == 0
    assert tc % 8 == 0 or tc == lP

    # ---- hoisted / fused parameter prep (pure XLA, tiny) -------------------
    pe_b = jnp.transpose(passEnc, (1, 0, 2))                       # (bP, lP, 2H)
    # Key-side projection WP_sub_v(passEnc), computed ONCE (not per tile).
    wp_pe = (jnp.dot(pe_b.reshape(-1, twoH).astype(mmd),
                     params["wp_w"].astype(mmd),
                     preferred_element_type=jnp.float32)
             + params["wp_b"]).reshape(bP, lP, H)

    wq_cat = jnp.concatenate([params["wph_w"], params["wg_w"][:twoH]],
                             axis=1).astype(mmd)                   # (2H, 5H)
    bq_cat = jnp.concatenate([params["wph_b"], params["wg_b"]], axis=1)  # (1, 5H)
    wgc = params["wg_w"][twoH:].astype(mmd)                        # (2H, 4H)
    giq_w = jnp.concatenate([params["gfi_w"][:twoH], params["gri_w"][:twoH]],
                            axis=1).astype(mmd)                    # (2H, 6H)
    gic_w = jnp.concatenate([params["gfi_w"][twoH:], params["gri_w"][twoH:]],
                            axis=1).astype(mmd)                    # (2H, 6H)
    gi_b = jnp.concatenate([params["gfi_b"], params["gri_b"]], axis=1)  # (1, 6H)

    nq = lP // tq
    k1_args = (pe_b, pe_b, wp_pe, params["vt"],
               wq_cat, bq_cat, wgc, giq_w, gic_w, gi_b)
    k1_in_specs = [
        _full_spec(pe_b),                                   # keys / context source
        pl.BlockSpec((bP, tq, twoH), lambda i: (0, i, 0)),  # query block
        _full_spec(wp_pe),
        _full_spec(params["vt"]),
        _full_spec(wq_cat), _full_spec(bq_cat), _full_spec(wgc),
        _full_spec(giq_w), _full_spec(gic_w), _full_spec(gi_b),
    ]
    # NOTE: grid-invariant inputs keep the default double-buffering; at
    # production v7x sizes consider single-buffering them to save VMEM.
    gates = pl.pallas_call(
        functools.partial(_attend_gate_kernel, mm_dtype=mmd),
        grid=(nq,),
        in_specs=k1_in_specs,
        out_specs=pl.BlockSpec((bP, tq, 6 * H), lambda i: (0, i, 0)),
        out_shape=jax.ShapeDtypeStruct((bP, lP, 6 * H), jnp.float32),
        compiler_params=pltpu.CompilerParams(
            dimension_semantics=("parallel",),
            vmem_limit_bytes=48 * 1024 * 1024),
    )(*k1_args)

    # ---- serial GRU recurrence, streamed over time chunks ------------------
    ntc = lP // tc
    gate_fwd_spec = pl.BlockSpec((bP, tc, 6 * H), lambda i: (0, i, 0))
    gate_rev_spec = pl.BlockSpec((bP, tc, 6 * H), lambda i: (0, ntc - 1 - i, 0))

    out = pl.pallas_call(
        _gru_scan_kernel,
        grid=(ntc,),
        in_specs=[gate_fwd_spec, gate_rev_spec,
                  _full_spec(params["gfh_w"]), _full_spec(params["gfh_b"]),
                  _full_spec(params["grh_w"]), _full_spec(params["grh_b"]),
                  _full_spec(h0_fwd), _full_spec(h0_rev)],
        out_specs=pl.BlockSpec((tc, bP, twoH), lambda i: (i, 0, 0)),
        out_shape=jax.ShapeDtypeStruct((lP, bP, twoH), jnp.float32),
        scratch_shapes=[pltpu.VMEM((bP, H), jnp.float32),
                        pltpu.VMEM((bP, H), jnp.float32)],
        compiler_params=pltpu.CompilerParams(
            dimension_semantics=("arbitrary",),
            vmem_limit_bytes=32 * 1024 * 1024),
    )(gates, gates,
      params["gfh_w"], params["gfh_b"], params["grh_w"], params["grh_b"],
      h0_fwd, h0_rev)

    # TODO(synk): nn.Dropout(p=0.2) on hP_all_timesteps is treated as identity
    # (eval semantics); training-mode torch dropout RNG has no reproducible
    # Pallas equivalent.
    return out


# ---------------------------------------------------------------------------
# Parameters & pure-JAX reference (mirrors the PyTorch forward, eval dropout).
# ---------------------------------------------------------------------------
def init_params(key, H, bP):
    ks = jax.random.split(key, 6)

    def linear(k, fan_in, fan_out):
        kw, kb = jax.random.split(k)
        bound = 1.0 / np.sqrt(fan_in)
        w = jax.random.uniform(kw, (fan_in, fan_out), jnp.float32, -bound, bound)
        b = jax.random.uniform(kb, (1, fan_out), jnp.float32, -bound, bound)
        return w, b

    def gru(k, in_dim):
        k1, k2, k3, k4 = jax.random.split(k, 4)
        bound = 1.0 / np.sqrt(H)
        wi = jax.random.uniform(k1, (in_dim, 3 * H), jnp.float32, -bound, bound)
        wh = jax.random.uniform(k2, (H, 3 * H), jnp.float32, -bound, bound)
        bi = jax.random.uniform(k3, (1, 3 * H), jnp.float32, -bound, bound)
        bh = jax.random.uniform(k4, (1, 3 * H), jnp.float32, -bound, bound)
        return wi, wh, bi, bh

    wp_w, wp_b = linear(ks[0], 2 * H, H)       # WP_sub_v
    wph_w, wph_b = linear(ks[1], 2 * H, H)     # WPhat_sub_v
    wg_w, wg_b = linear(ks[2], 4 * H, 4 * H)   # Wg
    vt = jax.random.normal(ks[3], (bP, H), jnp.float32)   # torch Vt (bP, H, 1)
    gfi_w, gfh_w, gfi_b, gfh_b = gru(ks[4], 4 * H)
    gri_w, grh_w, gri_b, grh_b = gru(ks[5], 4 * H)
    return dict(wp_w=wp_w, wp_b=wp_b, wph_w=wph_w, wph_b=wph_b,
                wg_w=wg_w, wg_b=wg_b, vt=vt,
                gfi_w=gfi_w, gfh_w=gfh_w, gfi_b=gfi_b, gfh_b=gfh_b,
                gri_w=gri_w, grh_w=grh_w, gri_b=gri_b, grh_b=grh_b)


def reference(passEnc, params, h0_fwd, h0_rev):
    """Pure-JAX mirror of the PyTorch forward (eval-mode dropout)."""
    lP, bP, twoH = passEnc.shape
    H = twoH // 2
    pe_rev = jnp.flip(passEnc, axis=0)
    pe_bf = jnp.transpose(passEnc, (1, 0, 2))
    pe_rev_bf = jnp.transpose(pe_rev, (1, 0, 2))
    vt = params["vt"]

    def WP(x): return x @ params["wp_w"] + params["wp_b"][0]
    def WPhat(x): return x @ params["wph_w"] + params["wph_b"][0]
    def Wg(x): return x @ params["wg_w"] + params["wg_b"][0]

    def gru(x, h, wi, wh, bi, bh):
        gi = x @ wi + bi[0]
        gh = h @ wh + bh[0]
        r = jax.nn.sigmoid(gi[:, :H] + gh[:, :H])
        z = jax.nn.sigmoid(gi[:, H:2 * H] + gh[:, H:2 * H])
        n = jnp.tanh(gi[:, 2 * H:] + r * gh[:, 2 * H:])
        return (1.0 - z) * n + z * h

    h_f, h_r = h0_fwd, h0_rev
    outs = []
    for t in range(lP):
        temp_f = jnp.tanh(WP(passEnc) + WPhat(passEnc[t]))
        temp_r = jnp.tanh(WP(pe_rev) + WPhat(pe_rev[t]))
        s_f = jnp.einsum('blh,bh->bl', jnp.transpose(temp_f, (1, 0, 2)), vt)
        s_r = jnp.einsum('blh,bh->bl', jnp.transpose(temp_r, (1, 0, 2)), vt)
        a_f = jax.nn.softmax(s_f, axis=1)
        a_r = jax.nn.softmax(s_r, axis=1)
        c_f = jnp.einsum('bl,bld->bd', a_f, pe_bf)
        c_r = jnp.einsum('bl,bld->bd', a_r, pe_rev_bf)
        cc_f = jnp.concatenate([passEnc[t], c_f], axis=1)
        cc_r = jnp.concatenate([pe_rev[t], c_r], axis=1)
        x_f = jax.nn.sigmoid(Wg(cc_f)) * cc_f
        x_r = jax.nn.sigmoid(Wg(cc_r)) * cc_r
        h_f = gru(x_f, h_f, params["gfi_w"], params["gfh_w"], params["gfi_b"], params["gfh_b"])
        h_r = gru(x_r, h_r, params["gri_w"], params["grh_w"], params["gri_b"], params["grh_b"])
        outs.append(jnp.concatenate([h_f, h_r], axis=1))
    return jnp.stack(outs, axis=0)


if __name__ == "__main__":
    H = 32    # hidden_size
    bP = 8    # batch
    lP = 16   # passage length
    key = jax.random.PRNGKey(0)
    k_pe, k_par, k_h1, k_h2 = jax.random.split(key, 4)

    passEnc = jax.random.normal(k_pe, (lP, bP, 2 * H), jnp.float32)
    params = init_params(k_par, H, bP)
    # torch.randn initial hidden states from forward(), made deterministic here.
    h0_fwd = jax.random.normal(k_h1, (bP, H), jnp.float32)
    h0_rev = jax.random.normal(k_h2, (bP, H), jnp.float32)

    # tq=8 -> 2 parallel attention tiles; tc=8 -> 2 streamed GRU chunks.
    out = self_matching_attention(passEnc, params, h0_fwd, h0_rev, tq=8, tc=8)
    out = jax.block_until_ready(out)
    assert out.shape == (lP, bP, 2 * H)

    ref = reference(passEnc, params, h0_fwd, h0_rev)
    np.testing.assert_allclose(np.asarray(out), np.asarray(ref), atol=2e-2, rtol=2e-2)

    print("KERNEL_OK")
</pallas_src>

<mosaic_0001>
module attributes {stable_mosaic.version = 11 : i64} {
  func.func @_attend_gate_kernel(%arg0: i32, %arg1: memref<8x16x64xf32, #tpu.memory_space<vmem>>, %arg2: memref<8x8x64xf32, #tpu.memory_space<vmem>>, %arg3: memref<8x16x32xf32, #tpu.memory_space<vmem>>, %arg4: memref<8x32xf32, #tpu.memory_space<vmem>>, %arg5: memref<64x160xf32, #tpu.memory_space<vmem>>, %arg6: memref<1x160xf32, #tpu.memory_space<vmem>>, %arg7: memref<64x128xf32, #tpu.memory_space<vmem>>, %arg8: memref<64x192xf32, #tpu.memory_space<vmem>>, %arg9: memref<64x192xf32, #tpu.memory_space<vmem>>, %arg10: memref<1x192xf32, #tpu.memory_space<vmem>>, %arg11: memref<8x8x192xf32, #tpu.memory_space<vmem>>) attributes {dimension_semantics = [#tpu.dimension_semantics<parallel>], iteration_bounds = array<i64: 2>, scalar_prefetch = 0 : i64, scratch_operands = 0 : i64, tpu.core_type = #tpu.core_type<tc>, window_params = [{pipeline_mode = #tpu.pipeline_mode<synchronous>, transform_indices = @transform_0, window_bounds = array<i64: 8, 16, 64>}, {transform_indices = @transform_1, window_bounds = array<i64: 8, 8, 64>}, {pipeline_mode = #tpu.pipeline_mode<synchronous>, transform_indices = @transform_2, window_bounds = array<i64: 8, 16, 32>}, {pipeline_mode = #tpu.pipeline_mode<synchronous>, transform_indices = @transform_3, window_bounds = array<i64: 8, 32>}, {pipeline_mode = #tpu.pipeline_mode<synchronous>, transform_indices = @transform_4, window_bounds = array<i64: 64, 160>}, {pipeline_mode = #tpu.pipeline_mode<synchronous>, transform_indices = @transform_5, window_bounds = array<i64: 1, 160>}, {pipeline_mode = #tpu.pipeline_mode<synchronous>, transform_indices = @transform_6, window_bounds = array<i64: 64, 128>}, {pipeline_mode = #tpu.pipeline_mode<synchronous>, transform_indices = @transform_7, window_bounds = array<i64: 64, 192>}, {pipeline_mode = #tpu.pipeline_mode<synchronous>, transform_indices = @transform_8, window_bounds = array<i64: 64, 192>}, {pipeline_mode = #tpu.pipeline_mode<synchronous>, transform_indices = @transform_9, window_bounds = array<i64: 1, 192>}, {transform_indices = @transform_10, window_bounds = array<i64: 8, 8, 192>}]} {
    %c0 = arith.constant 0 : index
    %c0_0 = arith.constant 0 : index
    %c0_1 = arith.constant 0 : index
    %0 = vector.load %arg1[%c0, %c0_0, %c0_1] : memref<8x16x64xf32, #tpu.memory_space<vmem>>, vector<8x16x64xf32>
    %c0_2 = arith.constant 0 : index
    %c0_3 = arith.constant 0 : index
    %c0_4 = arith.constant 0 : index
    %1 = vector.load %arg2[%c0_2, %c0_3, %c0_4] : memref<8x8x64xf32, #tpu.memory_space<vmem>>, vector<8x8x64xf32>
    %2 = vector.shape_cast %1 : vector<8x8x64xf32> to vector<64x64xf32>
    %c0_5 = arith.constant 0 : index
    %c0_6 = arith.constant 0 : index
    %3 = vector.load %arg5[%c0_5, %c0_6] : memref<64x160xf32, #tpu.memory_space<vmem>>, vector<64x160xf32>
    %cst = arith.constant dense<0.000000e+00> : vector<64x160xf32>
    %4 = tpu.matmul %2, %3, %cst {dimension_numbers = #tpu.dot_dimension_numbers<[1], [0], [0], [1], [0, 0, 1, 1], [], []>} : vector<64x64xf32>, vector<64x160xf32>, vector<64x160xf32> -> vector<64x160xf32>
    %c0_7 = arith.constant 0 : index
    %c0_8 = arith.constant 0 : index
    %5 = vector.load %arg6[%c0_7, %c0_8] : memref<1x160xf32, #tpu.memory_space<vmem>>, vector<1x160xf32>
    %6 = vector.broadcast %5 : vector<1x160xf32> to vector<64x160xf32>
    %7 = arith.addf %4, %6 : vector<64x160xf32>
    %8 = vector.extract_strided_slice %7 {offsets = [0, 0], sizes = [64, 32], strides = [1, 1]} : vector<64x160xf32> to vector<64x32xf32>
    %9 = vector.shape_cast %8 : vector<64x32xf32> to vector<8x8x32xf32>
    %10 = vector.extract_strided_slice %7 {offsets = [0, 32], sizes = [64, 128], strides = [1, 1]} : vector<64x160xf32> to vector<64x128xf32>
    %c0_9 = arith.constant 0 : index
    %c0_10 = arith.constant 0 : index
    %c0_11 = arith.constant 0 : index
    %11 = vector.load %arg3[%c0_9, %c0_10, %c0_11] : memref<8x16x32xf32, #tpu.memory_space<vmem>>, vector<8x16x32xf32>
    %12 = vector.shape_cast %11 : vector<8x16x32xf32> to vector<8x1x16x32xf32>
    %13 = vector.shape_cast %9 : vector<8x8x32xf32> to vector<8x8x1x32xf32>
    %14 = vector.broadcast %12 : vector<8x1x16x32xf32> to vector<8x8x16x32xf32>
    %15 = vector.broadcast %13 : vector<8x8x1x32xf32> to vector<8x8x16x32xf32>
    %16 = arith.addf %14, %15 : vector<8x8x16x32xf32>
    %17 = math.tanh %16 : vector<8x8x16x32xf32>
    %c0_12 = arith.constant 0 : index
    %c0_13 = arith.constant 0 : index
    %18 = vector.load %arg4[%c0_12, %c0_13] : memref<8x32xf32, #tpu.memory_space<vmem>>, vector<8x32xf32>
    %19 = vector.shape_cast %18 : vector<8x32xf32> to vector<8x1x1x32xf32>
    %20 = vector.broadcast %19 : vector<8x1x1x32xf32> to vector<8x8x16x32xf32>
    %21 = arith.mulf %17, %20 : vector<8x8x16x32xf32>
    %cst_14 = arith.constant dense<0.000000e+00> : vector<8x8x16xf32>
    %22 = vector.multi_reduction <add>, %21, %cst_14 [3] : vector<8x8x16x32xf32> to vector<8x8x16xf32>
    %cst_15 = arith.constant dense<0xFF800000> : vector<8x8xf32>
    %23 = vector.multi_reduction <maximumf>, %22, %cst_15 [2] : vector<8x8x16xf32> to vector<8x8xf32>
    %24 = vector.shape_cast %23 : vector<8x8xf32> to vector<8x8x1xf32>
    %25 = vector.broadcast %24 : vector<8x8x1xf32> to vector<8x8x16xf32>
    %26 = arith.subf %22, %25 : vector<8x8x16xf32>
    %27 = math.exp %26 : vector<8x8x16xf32>
    %cst_16 = arith.constant dense<0.000000e+00> : vector<8x8xf32>
    %28 = vector.multi_reduction <add>, %27, %cst_16 [2] : vector<8x8x16xf32> to vector<8x8xf32>
    %29 = vector.shape_cast %28 : vector<8x8xf32> to vector<8x8x1xf32>
    %30 = tpu.reciprocal %29 {approx = true} : vector<8x8x1xf32> -> vector<8x8x1xf32>
    %31 = vector.broadcast %30 : vector<8x8x1xf32> to vector<8x8x16xf32>
    %32 = arith.mulf %27, %31 : vector<8x8x16xf32>
    "tpu.trace_start"() <{level = 10 : i32, message = "btl,bld->btd"}> : () -> ()
    %cst_17 = arith.constant dense<0.000000e+00> : vector<8x8x64xf32>
    %33 = tpu.matmul %32, %0, %cst_17 {dimension_numbers = #tpu.dot_dimension_numbers<[2], [1], [1], [2], [0, 0, 0, 1, 1, 2], [0], [0]>} : vector<8x8x16xf32>, vector<8x16x64xf32>, vector<8x8x64xf32> -> vector<8x8x64xf32>
    "tpu.trace_stop"() : () -> ()
    %34 = vector.shape_cast %33 : vector<8x8x64xf32> to vector<64x64xf32>
    %c0_18 = arith.constant 0 : index
    %c0_19 = arith.constant 0 : index
    %35 = vector.load %arg7[%c0_18, %c0_19] : memref<64x128xf32, #tpu.memory_space<vmem>>, vector<64x128xf32>
    %cst_20 = arith.constant dense<0.000000e+00> : vector<64x128xf32>
    %36 = tpu.matmul %34, %35, %cst_20 {dimension_numbers = #tpu.dot_dimension_numbers<[1], [0], [0], [1], [0, 0, 1, 1], [], []>} : vector<64x64xf32>, vector<64x128xf32>, vector<64x128xf32> -> vector<64x128xf32>
    %37 = arith.addf %10, %36 : vector<64x128xf32>
    %38 = arith.negf %37 : vector<64x128xf32>
    %39 = math.exp %38 : vector<64x128xf32>
    %cst_21 = arith.constant 1.000000e+00 : f32
    %40 = vector.broadcast %cst_21 : f32 to vector<64x128xf32>
    %41 = arith.addf %40, %39 : vector<64x128xf32>
    %42 = arith.divf %40, %41 : vector<64x128xf32>
    %43 = vector.extract_strided_slice %42 {offsets = [0, 0], sizes = [64, 64], strides = [1, 1]} : vector<64x128xf32> to vector<64x64xf32>
    %44 = arith.mulf %43, %2 : vector<64x64xf32>
    %45 = vector.extract_strided_slice %42 {offsets = [0, 64], sizes = [64, 64], strides = [1, 1]} : vector<64x128xf32> to vector<64x64xf32>
    %46 = arith.mulf %45, %34 : vector<64x64xf32>
    %c0_22 = arith.constant 0 : index
    %c0_23 = arith.constant 0 : index
    %47 = vector.load %arg8[%c0_22, %c0_23] : memref<64x192xf32, #tpu.memory_space<vmem>>, vector<64x192xf32>
    %cst_24 = arith.constant dense<0.000000e+00> : vector<64x192xf32>
    %48 = tpu.matmul %44, %47, %cst_24 {dimension_numbers = #tpu.dot_dimension_numbers<[1], [0], [0], [1], [0, 0, 1, 1], [], []>} : vector<64x64xf32>, vector<64x192xf32>, vector<64x192xf32> -> vector<64x192xf32>
    %c0_25 = arith.constant 0 : index
    %c0_26 = arith.constant 0 : index
    %49 = vector.load %arg9[%c0_25, %c0_26] : memref<64x192xf32, #tpu.memory_space<vmem>>, vector<64x192xf32>
    %cst_27 = arith.constant dense<0.000000e+00> : vector<64x192xf32>
    %50 = tpu.matmul %46, %49, %cst_27 {dimension_numbers = #tpu.dot_dimension_numbers<[1], [0], [0], [1], [0, 0, 1, 1], [], []>} : vector<64x64xf32>, vector<64x192xf32>, vector<64x192xf32> -> vector<64x192xf32>
    %51 = arith.addf %48, %50 : vector<64x192xf32>
    %c0_28 = arith.constant 0 : index
    %c0_29 = arith.constant 0 : index
    %52 = vector.load %arg10[%c0_28, %c0_29] : memref<1x192xf32, #tpu.memory_space<vmem>>, vector<1x192xf32>
    %53 = vector.broadcast %52 : vector<1x192xf32> to vector<64x192xf32>
    %54 = arith.addf %51, %53 : vector<64x192xf32>
    %55 = vector.shape_cast %54 : vector<64x192xf32> to vector<8x8x192xf32>
    %c0_30 = arith.constant 0 : index
    %c0_31 = arith.constant 0 : index
    %c0_32 = arith.constant 0 : index
    %56 = vector.load %arg11[%c0_30, %c0_31, %c0_32] : memref<8x8x192xf32, #tpu.memory_space<vmem>>, vector<8x8x192xf32>
    tpu.vector_store %arg11[%c0_30, %c0_31, %c0_32], %55 {strides = array<i32>} : memref<8x8x192xf32, #tpu.memory_space<vmem>>, vector<8x8x192xf32>,
    return
  }
  func.func @transform_0(%arg0: i32) -> (i32, i32, i32) {
    %c0_i32 = arith.constant 0 : i32
    %c0_i32_0 = arith.constant 0 : i32
    %c0_i32_1 = arith.constant 0 : i32
    %c0_i32_2 = arith.constant 0 : i32
    return %c0_i32, %c0_i32_0, %c0_i32_1 : i32, i32, i32
  }
  func.func @transform_1(%arg0: i32) -> (i32, i32, i32) {
    %c0_i32 = arith.constant 0 : i32
    %c0_i32_0 = arith.constant 0 : i32
    %c0_i32_1 = arith.constant 0 : i32
    return %c0_i32, %arg0, %c0_i32_0 : i32, i32, i32
  }
  func.func @transform_2(%arg0: i32) -> (i32, i32, i32) {
    %c0_i32 = arith.constant 0 : i32
    %c0_i32_0 = arith.constant 0 : i32
    %c0_i32_1 = arith.constant 0 : i32
    %c0_i32_2 = arith.constant 0 : i32
    return %c0_i32, %c0_i32_0, %c0_i32_1 : i32, i32, i32
  }
  func.func @transform_3(%arg0: i32) -> (i32, i32) {
    %c0_i32 = arith.constant 0 : i32
    %c0_i32_0 = arith.constant 0 : i32
    %c0_i32_1 = arith.constant 0 : i32
    return %c0_i32, %c0_i32_0 : i32, i32
  }
  func.func @transform_4(%arg0: i32) -> (i32, i32) {
    %c0_i32 = arith.constant 0 : i32
    %c0_i32_0 = arith.constant 0 : i32
    %c0_i32_1 = arith.constant 0 : i32
    return %c0_i32, %c0_i32_0 : i32, i32
  }
  func.func @transform_5(%arg0: i32) -> (i32, i32) {
    %c0_i32 = arith.constant 0 : i32
    %c0_i32_0 = arith.constant 0 : i32
    %c0_i32_1 = arith.constant 0 : i32
    return %c0_i32, %c0_i32_0 : i32, i32
  }
  func.func @transform_6(%arg0: i32) -> (i32, i32) {
    %c0_i32 = arith.constant 0 : i32
    %c0_i32_0 = arith.constant 0 : i32
    %c0_i32_1 = arith.constant 0 : i32
    return %c0_i32, %c0_i32_0 : i32, i32
  }
  func.func @transform_7(%arg0: i32) -> (i32, i32) {
    %c0_i32 = arith.constant 0 : i32
    %c0_i32_0 = arith.constant 0 : i32
    %c0_i32_1 = arith.constant 0 : i32
    return %c0_i32, %c0_i32_0 : i32, i32
  }
  func.func @transform_8(%arg0: i32) -> (i32, i32) {
    %c0_i32 = arith.constant 0 : i32
    %c0_i32_0 = arith.constant 0 : i32
    %c0_i32_1 = arith.constant 0 : i32
    return %c0_i32, %c0_i32_0 : i32, i32
  }
  func.func @transform_9(%arg0: i32) -> (i32, i32) {
    %c0_i32 = arith.constant 0 : i32
    %c0_i32_0 = arith.constant 0 : i32
    %c0_i32_1 = arith.constant 0 : i32
    return %c0_i32, %c0_i32_0 : i32, i32
  }
  func.func @transform_10(%arg0: i32) -> (i32, i32, i32) {
    %c0_i32 = arith.constant 0 : i32
    %c0_i32_0 = arith.constant 0 : i32
    %c0_i32_1 = arith.constant 0 : i32
    return %c0_i32, %arg0, %c0_i32_0 : i32, i32, i32
  }
}

</mosaic_0001>

<llo_original>
// kernel: tpu_custom_call.1
$region0: #{tpu_custom_call.1}
  #allocation0 [shape = 'u32[]', space=smem, size = 0x4, offset = 0x4, fixed_abs, tag = 'smem constant byte address 0x4 - core index']
  #allocation1 [shape = 'u32[144,128]{1,0:T(1,128)}', space=vmem, size = 0x12000, scoped, tag = 'internal scratch']
  %s0 = inlined_call_operand.hbm [shape: f32[8,16,64], index: 0, kind: input, shape index: {}]
  %s1 = inlined_call_operand.hbm [shape: f32[8,16,64], index: 1, kind: input, shape index: {}]
  %s2 = inlined_call_operand.hbm [shape: f32[8,16,32], index: 2, kind: input, shape index: {}]
  %s3 = inlined_call_operand.hbm [shape: f32[8,32], index: 3, kind: input, shape index: {}]
  %s4 = inlined_call_operand.hbm [shape: f32[64,160], index: 4, kind: input, shape index: {}]
  %s5 = inlined_call_operand.vmem [shape: f32[1,160], index: 5, kind: input, shape index: {}]
  %s6 = inlined_call_operand.hbm [shape: f32[64,128], index: 6, kind: input, shape index: {}]
  %s7 = inlined_call_operand.hbm [shape: f32[64,192], index: 7, kind: input, shape index: {}]
  %s8 = inlined_call_operand.hbm [shape: f32[64,192], index: 8, kind: input, shape index: {}]
  %s9 = inlined_call_operand.vmem [shape: f32[1,192], index: 9, kind: input, shape index: {}]
  %s10 = inlined_call_operand.hbm [shape: f32[8,16,192], index: 10, kind: output, shape index: {}]
  %s11 = sld [smem:[#allocation0]]
  $region105: #{tpu_custom_call.1} parent=0
    _
  %s13 = ssub.s32 1, %s11
  %s14 = scalar_select 0, %s13, %s11
  $region1: #{tpu_custom_call.1} parent=0
    #allocation2 [shape = 'u8[65536]{0}', space=vmem, size = 0x10000, scoped, tag = 'input window, operand 0, single buffered']
    #allocation3 [shape = 's32[2]{0}', space=sflag, size = 0x8, scoped, tag = 'scoped memory for tpu_custom_call.1']
    #allocation4 [shape = 's32[2]{0}', space=sflag, size = 0x8, scoped, tag = 'scoped memory for tpu_custom_call.1']
    #allocation5 [shape = 'u8[65536]{0}', space=vmem, size = 0x10000, scoped, tag = 'input window, operand 1']
    #allocation6 [shape = 's32[2]{0}', space=sflag, size = 0x8, scoped, tag = 'scoped memory for tpu_custom_call.1']
    #allocation7 [shape = 'u8[65536]{0}', space=vmem, size = 0x10000, scoped, tag = 'input window, operand 2, single buffered']
    #allocation8 [shape = 'u8[4096]{0}', space=vmem, size = 0x1000, scoped, tag = 'input window, operand 3, single buffered']
    #allocation9 [shape = 's32[1]{0}', space=sflag, size = 0x4, scoped, tag = 'scoped memory for tpu_custom_call.1']
    #allocation10 [shape = 'u8[65536]{0}', space=vmem, size = 0x10000, scoped, tag = 'input window, operand 4, single buffered']
    #allocation11 [shape = 'u8[32768]{0}', space=vmem, size = 0x8000, scoped, tag = 'input window, operand 6, single buffered']
    #allocation12 [shape = 's32[1]{0}', space=sflag, size = 0x4, scoped, tag = 'scoped memory for tpu_custom_call.1']
    #allocation13 [shape = 'u8[65536]{0}', space=vmem, size = 0x10000, scoped, tag = 'input window, operand 7, single buffered']
    #allocation14 [shape = 'u8[65536]{0}', space=vmem, size = 0x10000, scoped, tag = 'input window, operand 8, single buffered']
    #allocation15 [shape = 's32[1]{0}', space=sflag, size = 0x4, scoped, tag = 'scoped memory for tpu_custom_call.1']
    #allocation16 [shape = 'u8[131072]{0}', space=vmem, size = 0x20000, scoped, tag = 'output window, operand 0']
    %15 = vsyncpa [#allocation3], 0
    %16 = vsyncpa [#allocation6], 0
    %s17 = scalar_lea.sflag [#allocation6], 1
    %18 = vsyncpa %s17, 0
    %19 = vsyncpa [#allocation9], 0
    %20 = vsyncpa [#allocation12], 0
    %21 = vsyncpa [#allocation15], 0
    %22 = vsyncpa [#allocation4], 0
    %s23 = scalar_lea.sflag [#allocation4], 1
    %24 = vsyncpa %s23, 0
    loop: start=0, step=1, limit=4
    $region2: #{tpu_custom_call.1} parent=1 // loop_pre_header
      _
    $region3: #{tpu_custom_call.1} parent=1 // loop_header
      %s26 = sphi 0, %s30
      %p27 = scmp.ge.s32.totalorder %s26, 4
      %s34 = sphi 0, %s34
      %s36 = sphi 0, %s34
      %s37 = sphi 0, %s36
      %s51 = sphi 0, %s37
      %s57 = sphi 0, %s59
      %s60 = sphi 0, %s57
      %s61 = sphi 0, %s60
      %s77 = sphi 0, %s61
      %s81 = sphi 0, %s81
      %s83 = sphi 0, %s81
      %s84 = sphi 0, %s83
      %s98 = sphi 0, %s84
      %s102 = sphi 0, %s102
      %s104 = sphi 0, %s102
      %s105 = sphi 0, %s104
      %s119 = sphi 0, %s105
      %s123 = sphi 0, %s123
      %s125 = sphi 0, %s123
      %s126 = sphi 0, %s125
      %s140 = sphi 0, %s126
      %s144 = sphi 0, %s144
      %s146 = sphi 0, %s144
      %s147 = sphi 0, %s146
      %s161 = sphi 0, %s147
      %s165 = sphi 0, %s165
      %s167 = sphi 0, %s165
      %s168 = sphi 0, %s167
      %s182 = sphi 0, %s168
      %s186 = sphi 0, %s186
      %s188 = sphi 0, %s186
      %s189 = sphi 0, %s188
      %s203 = sphi 0, %s189
      %s207 = sphi 0, %s207
      %s209 = sphi 0, %s207
      %s210 = sphi 0, %s209
      %s224 = sphi 0, %s210
      %s228 = sphi 0, %s228
      %s230 = sphi 0, %s228
      %s231 = sphi 0, %s230
      %s245 = sphi 0, %s231
      %s251 = sphi 0, %s253
      %s254 = sphi 0, %s251
      %s255 = sphi 0, %s254
      %s271 = sphi 0, %s255
    $region4: #{tpu_custom_call.1} parent=1 // loop_header_branch
      %29 = sbr.rel (%p27) target = $region8
    $region5: #{tpu_custom_call.1} parent=1 // loop_body
      %s31 = ssub.s32 %s26, 1
      %s32 = ssub.s32 %s26, 2
      %s33 = sadd.s32 %s26, 1
      %s35 = sadd.s32 %s34, 1
      %p38 = scmp.eq.s32.totalorder %s26, 1
      %p39 = scmp.ne.s32.totalorder %s34, %s36
      %p40 = scmp.eq.s32.totalorder %s26, 0
      %p41 = por %p39, %p40
      %p42 = scmp.ne.s32.totalorder %s34, %s36
      %p43 = scmp.eq.s32.totalorder %s31, 1
      %p44 = por %p42, %p43
      %p45 = scmp.ne.s32.totalorder %s36, %s37
      %p46 = scmp.eq.s32.totalorder %s31, 0
      %p47 = por %p45, %p46
      %p48 = scmp.ne.s32.totalorder %s36, %s37
      %p49 = scmp.eq.s32.totalorder %s32, 1
      %p50 = por %p48, %p49
      %p52 = scmp.ne.s32.totalorder %s37, %s51
      %p53 = scmp.eq.s32.totalorder %s32, 0
      %p54 = por %p52, %p53
      %s55 = ssub.s32 %s26, %s33
      %p56 = scmp.eq.s32.totalorder %s55, 0
      %s58 = sadd.s32 %s57, 1
      %s59 = scalar_select %p56, %s57, %s58
      %p62 = pneg %p56
      %p63 = scmp.eq.s32.totalorder %s26, 1
      %p64 = por %p62, %p63
      %p65 = scmp.ne.s32.totalorder %s57, %s60
      %p66 = scmp.eq.s32.totalorder %s26, 0
      %p67 = por %p65, %p66
      %p68 = scmp.ne.s32.totalorder %s57, %s60
      %p69 = scmp.eq.s32.totalorder %s31, 1
      %p70 = por %p68, %p69
      %p71 = scmp.ne.s32.totalorder %s60, %s61
      %p72 = scmp.eq.s32.totalorder %s31, 0
      %p73 = por %p71, %p72
      %p74 = scmp.ne.s32.totalorder %s60, %s61
      %p75 = scmp.eq.s32.totalorder %s32, 1
      %p76 = por %p74, %p75
      %p78 = scmp.ne.s32.totalorder %s61, %s77
      %p79 = scmp.eq.s32.totalorder %s32, 0
      %p80 = por %p78, %p79
      %s82 = sadd.s32 %s81, 1
      %p85 = scmp.eq.s32.totalorder %s26, 1
      %p86 = scmp.ne.s32.totalorder %s81, %s83
      %p87 = scmp.eq.s32.totalorder %s26, 0
      %p88 = por %p86, %p87
      %p89 = scmp.ne.s32.totalorder %s81, %s83
      %p90 = scmp.eq.s32.totalorder %s31, 1
      %p91 = por %p89, %p90
      %p92 = scmp.ne.s32.totalorder %s83, %s84
      %p93 = scmp.eq.s32.totalorder %s31, 0
      %p94 = por %p92, %p93
      %p95 = scmp.ne.s32.totalorder %s83, %s84
      %p96 = scmp.eq.s32.totalorder %s32, 1
      %p97 = por %p95, %p96
      %p99 = scmp.ne.s32.totalorder %s84, %s98
      %p100 = scmp.eq.s32.totalorder %s32, 0
      %p101 = por %p99, %p100
      %s103 = sadd.s32 %s102, 1
      %p106 = scmp.eq.s32.totalorder %s26, 1
      %p107 = scmp.ne.s32.totalorder %s102, %s104
      %p108 = scmp.eq.s32.totalorder %s26, 0
      %p109 = por %p107, %p108
      %p110 = scmp.ne.s32.totalorder %s102, %s104
      %p111 = scmp.eq.s32.totalorder %s31, 1
      %p112 = por %p110, %p111
      %p113 = scmp.ne.s32.totalorder %s104, %s105
      %p114 = scmp.eq.s32.totalorder %s31, 0
      %p115 = por %p113, %p114
      %p116 = scmp.ne.s32.totalorder %s104, %s105
      %p117 = scmp.eq.s32.totalorder %s32, 1
      %p118 = por %p116, %p117
      %p120 = scmp.ne.s32.totalorder %s105, %s119
      %p121 = scmp.eq.s32.totalorder %s32, 0
      %p122 = por %p120, %p121
      %s124 = sadd.s32 %s123, 1
      %p127 = scmp.eq.s32.totalorder %s26, 1
      %p128 = scmp.ne.s32.totalorder %s123, %s125
      %p129 = scmp.eq.s32.totalorder %s26, 0
      %p130 = por %p128, %p129
      %p131 = scmp.ne.s32.totalorder %s123, %s125
      %p132 = scmp.eq.s32.totalorder %s31, 1
      %p133 = por %p131, %p132
      %p134 = scmp.ne.s32.totalorder %s125, %s126
      %p135 = scmp.eq.s32.totalorder %s31, 0
      %p136 = por %p134, %p135
      %p137 = scmp.ne.s32.totalorder %s125, %s126
      %p138 = scmp.eq.s32.totalorder %s32, 1
      %p139 = por %p137, %p138
      %p141 = scmp.ne.s32.totalorder %s126, %s140
      %p142 = scmp.eq.s32.totalorder %s32, 0
      %p143 = por %p141, %p142
      %s145 = sadd.s32 %s144, 1
      %p148 = scmp.eq.s32.totalorder %s26, 1
      %p149 = scmp.ne.s32.totalorder %s144, %s146
      %p150 = scmp.eq.s32.totalorder %s26, 0
      %p151 = por %p149, %p150
      %p152 = scmp.ne.s32.totalorder %s144, %s146
      %p153 = scmp.eq.s32.totalorder %s31, 1
      %p154 = por %p152, %p153
      %p155 = scmp.ne.s32.totalorder %s146, %s147
      %p156 = scmp.eq.s32.totalorder %s31, 0
      %p157 = por %p155, %p156
      %p158 = scmp.ne.s32.totalorder %s146, %s147
      %p159 = scmp.eq.s32.totalorder %s32, 1
      %p160 = por %p158, %p159
      %p162 = scmp.ne.s32.totalorder %s147, %s161
      %p163 = scmp.eq.s32.totalorder %s32, 0
      %p164 = por %p162, %p163
      %s166 = sadd.s32 %s165, 1
      %p169 = scmp.eq.s32.totalorder %s26, 1
      %p170 = scmp.ne.s32.totalorder %s165, %s167
      %p171 = scmp.eq.s32.totalorder %s26, 0
      %p172 = por %p170, %p171
      %p173 = scmp.ne.s32.totalorder %s165, %s167
      %p174 = scmp.eq.s32.totalorder %s31, 1
      %p175 = por %p173, %p174
      %p176 = scmp.ne.s32.totalorder %s167, %s168
      %p177 = scmp.eq.s32.totalorder %s31, 0
      %p178 = por %p176, %p177
      %p179 = scmp.ne.s32.totalorder %s167, %s168
      %p180 = scmp.eq.s32.totalorder %s32, 1
      %p181 = por %p179, %p180
      %p183 = scmp.ne.s32.totalorder %s168, %s182
      %p184 = scmp.eq.s32.totalorder %s32, 0
      %p185 = por %p183, %p184
      %s187 = sadd.s32 %s186, 1
      %p190 = scmp.eq.s32.totalorder %s26, 1
      %p191 = scmp.ne.s32.totalorder %s186, %s188
      %p192 = scmp.eq.s32.totalorder %s26, 0
      %p193 = por %p191, %p192
      %p194 = scmp.ne.s32.totalorder %s186, %s188
      %p195 = scmp.eq.s32.totalorder %s31, 1
      %p196 = por %p194, %p195
      %p197 = scmp.ne.s32.totalorder %s188, %s189
      %p198 = scmp.eq.s32.totalorder %s31, 0
      %p199 = por %p197, %p198
      %p200 = scmp.ne.s32.totalorder %s188, %s189
      %p201 = scmp.eq.s32.totalorder %s32, 1
      %p202 = por %p200, %p201
      %p204 = scmp.ne.s32.totalorder %s189, %s203
      %p205 = scmp.eq.s32.totalorder %s32, 0
      %p206 = por %p204, %p205
      %s208 = sadd.s32 %s207, 1
      %p211 = scmp.eq.s32.totalorder %s26, 1
      %p212 = scmp.ne.s32.totalorder %s207, %s209
      %p213 = scmp.eq.s32.totalorder %s26, 0
      %p214 = por %p212, %p213
      %p215 = scmp.ne.s32.totalorder %s207, %s209
      %p216 = scmp.eq.s32.totalorder %s31, 1
      %p217 = por %p215, %p216
      %p218 = scmp.ne.s32.totalorder %s209, %s210
      %p219 = scmp.eq.s32.totalorder %s31, 0
      %p220 = por %p218, %p219
      %p221 = scmp.ne.s32.totalorder %s209, %s210
      %p222 = scmp.eq.s32.totalorder %s32, 1
      %p223 = por %p221, %p222
      %p225 = scmp.ne.s32.totalorder %s210, %s224
      %p226 = scmp.eq.s32.totalorder %s32, 0
      %p227 = por %p225, %p226
      %s229 = sadd.s32 %s228, 1
      %p232 = scmp.eq.s32.totalorder %s26, 1
      %p233 = scmp.ne.s32.totalorder %s228, %s230
      %p234 = scmp.eq.s32.totalorder %s26, 0
      %p235 = por %p233, %p234
      %p236 = scmp.ne.s32.totalorder %s228, %s230
      %p237 = scmp.eq.s32.totalorder %s31, 1
      %p238 = por %p236, %p237
      %p239 = scmp.ne.s32.totalorder %s230, %s231
      %p240 = scmp.eq.s32.totalorder %s31, 0
      %p241 = por %p239, %p240
      %p242 = scmp.ne.s32.totalorder %s230, %s231
      %p243 = scmp.eq.s32.totalorder %s32, 1
      %p244 = por %p242, %p243
      %p246 = scmp.ne.s32.totalorder %s231, %s245
      %p247 = scmp.eq.s32.totalorder %s32, 0
      %p248 = por %p246, %p247
      %s249 = ssub.s32 %s26, %s33
      %p250 = scmp.eq.s32.totalorder %s249, 0
      %s252 = sadd.s32 %s251, 1
      %s253 = scalar_select %p250, %s251, %s252
      %p256 = pneg %p250
      %p257 = scmp.eq.s32.totalorder %s26, 1
      %p258 = por %p256, %p257
      %p259 = scmp.ne.s32.totalorder %s251, %s254
      %p260 = scmp.eq.s32.totalorder %s26, 0
      %p261 = por %p259, %p260
      %p262 = scmp.ne.s32.totalorder %s251, %s254
      %p263 = scmp.eq.s32.totalorder %s31, 1
      %p264 = por %p262, %p263
      %p265 = scmp.ne.s32.totalorder %s254, %s255
      %p266 = scmp.eq.s32.totalorder %s31, 0
      %p267 = por %p265, %p266
      %p268 = scmp.ne.s32.totalorder %s254, %s255
      %p269 = scmp.eq.s32.totalorder %s32, 1
      %p270 = por %p268, %p269
      %p272 = scmp.ne.s32.totalorder %s255, %s271
      %p273 = scmp.eq.s32.totalorder %s32, 0
      %p274 = por %p272, %p273
      %p275 = scmp.le.s32.totalorder 1, %s26
      %p276 = scmp.lt.s32.totalorder %s26, 3
      %p277 = pnand %p275, %p276
      %p278 = pneg %p277
      // Predicated region
      $region9: #{tpu_custom_call.1} parent=5 // pred_check
        _
      $region10: #{tpu_custom_call.1} parent=5 // pred_check_branch
        %280 = sbr.rel (%p277) target = $region12
      $region11: #{tpu_custom_call.1} parent=5 // pred_region
        %s281 = ssub.s32 %s26, 1
        // Predicated region
        $region13: #{tpu_custom_call.1} parent=11 // pred_check
          %p282 = pneg %p47
        $region14: #{tpu_custom_call.1} parent=11 // pred_check_branch
          %284 = sbr.rel (%p282) target = $region16
        $region15: #{tpu_custom_call.1} parent=11 // pred_region
          %s286 = ssub.s32 2048, 2048
          %287 = vsyncadd [#allocation3], %s286
          %s288 = sshll.u32 [#allocation2], 4
          %s289 = int_to_ptr.vmem [resolvable:$true] %s288
          %294 = dma.hbm_to_vmem [thread:$0]  %s0, 2048, %s289, [#allocation3], 128, 128, 8
        $region16: #{tpu_custom_call.1} parent=11 // pred_fallthru
          _
        // Predicated region
        $region17: #{tpu_custom_call.1} parent=11 // pred_check
          %p295 = pneg %p94
        $region18: #{tpu_custom_call.1} parent=11 // pred_check_branch
          %297 = sbr.rel (%p295) target = $region20
        $region19: #{tpu_custom_call.1} parent=11 // pred_region
          %s299 = ssub.s32 2048, 2048
          %300 = vsyncadd [#allocation6], %s299
          %s301 = sshll.u32 [#allocation7], 4
          %s302 = int_to_ptr.vmem [resolvable:$true] %s301
          %307 = dma.hbm_to_vmem [thread:$0]  %s2, 2048, %s302, [#allocation6], 128, 128, 8
        $region20: #{tpu_custom_call.1} parent=11 // pred_fallthru
          _
        // Predicated region
        $region21: #{tpu_custom_call.1} parent=11 // pred_check
          %p308 = pneg %p115
        $region22: #{tpu_custom_call.1} parent=11 // pred_check_branch
          %310 = sbr.rel (%p308) target = $region24
        $region23: #{tpu_custom_call.1} parent=11 // pred_region
          %s312 = ssub.s32 128, 128
          %313 = vsyncadd [#allocation9], %s312
          %s315 = sshll.u32 [#allocation8], 4
          %s316 = int_to_ptr.vmem [resolvable:$true] %s315
          %318 = dma.hbm_to_vmem [thread:$0]  %s3, 128, %s316, [#allocation9]
        $region24: #{tpu_custom_call.1} parent=11 // pred_fallthru
          _
        // Predicated region
        $region25: #{tpu_custom_call.1} parent=11 // pred_check
          %p319 = pneg %p136
        $region26: #{tpu_custom_call.1} parent=11 // pred_check_branch
          %321 = sbr.rel (%p319) target = $region28
        $region27: #{tpu_custom_call.1} parent=11 // pred_region
          %s323 = ssub.s32 2048, 2048
          %324 = vsyncadd [#allocation9], %s323
          %s325 = sshll.u32 [#allocation10], 4
          %s326 = int_to_ptr.vmem [resolvable:$true] %s325
          %331 = dma.hbm_to_vmem [thread:$0]  %s4, 2048, %s326, [#allocation9], 256, 256, 16
        $region28: #{tpu_custom_call.1} parent=11 // pred_fallthru
          _
        // Predicated region
        $region29: #{tpu_custom_call.1} parent=11 // pred_check
          %p332 = pneg %p157
        $region30: #{tpu_custom_call.1} parent=11 // pred_check_branch
          %334 = sbr.rel (%p332) target = $region32
        $region31: #{tpu_custom_call.1} parent=11 // pred_region
          _
        $region32: #{tpu_custom_call.1} parent=11 // pred_fallthru
          _
        // Predicated region
        $region33: #{tpu_custom_call.1} parent=11 // pred_check
          %p335 = pneg %p178
        $region34: #{tpu_custom_call.1} parent=11 // pred_check_branch
          %337 = sbr.rel (%p335) target = $region36
        $region35: #{tpu_custom_call.1} parent=11 // pred_region
          %s339 = ssub.s32 1024, 1024
          %340 = vsyncadd [#allocation12], %s339
          %s341 = sshll.u32 [#allocation11], 4
          %s342 = int_to_ptr.vmem [resolvable:$true] %s341
          %347 = dma.hbm_to_vmem [thread:$0]  %s6, 1024, %s342, [#allocation12], 128, 128, 8
        $region36: #{tpu_custom_call.1} parent=11 // pred_fallthru
          _
        // Predicated region
        $region37: #{tpu_custom_call.1} parent=11 // pred_check
          %p348 = pneg %p199
        $region38: #{tpu_custom_call.1} parent=11 // pred_check_branch
          %350 = sbr.rel (%p348) target = $region40
        $region39: #{tpu_custom_call.1} parent=11 // pred_region
          %s352 = ssub.s32 2048, 2048
          %353 = vsyncadd [#allocation12], %s352
          %s354 = sshll.u32 [#allocation13], 4
          %s355 = int_to_ptr.vmem [resolvable:$true] %s354
          %360 = dma.hbm_to_vmem [thread:$0]  %s7, 2048, %s355, [#allocation12], 256, 256, 16
        $region40: #{tpu_custom_call.1} parent=11 // pred_fallthru
          _
        // Predicated region
        $region41: #{tpu_custom_call.1} parent=11 // pred_check
          %p361 = pneg %p220
        $region42: #{tpu_custom_call.1} parent=11 // pred_check_branch
          %363 = sbr.rel (%p361) target = $region44
        $region43: #{tpu_custom_call.1} parent=11 // pred_region
          %s365 = ssub.s32 2048, 2048
          %366 = vsyncadd [#allocation15], %s365
          %s367 = sshll.u32 [#allocation14], 4
          %s368 = int_to_ptr.vmem [resolvable:$true] %s367
          %373 = dma.hbm_to_vmem [thread:$0]  %s8, 2048, %s368, [#allocation15], 256, 256, 16
        $region44: #{tpu_custom_call.1} parent=11 // pred_fallthru
          _
        // Predicated region
        $region45: #{tpu_custom_call.1} parent=11 // pred_check
          %p374 = pneg %p241
        $region46: #{tpu_custom_call.1} parent=11 // pred_check_branch
          %376 = sbr.rel (%p374) target = $region48
        $region47: #{tpu_custom_call.1} parent=11 // pred_region
          _
        $region48: #{tpu_custom_call.1} parent=11 // pred_fallthru
          _
      $region12: #{tpu_custom_call.1} parent=5 // pred_fallthru
        _
      %p377 = scmp.lt.s32.totalorder %s26, 2
      // Predicated region
      $region49: #{tpu_custom_call.1} parent=5 // pred_check
        %p378 = pneg %p377
      $region50: #{tpu_custom_call.1} parent=5 // pred_check_branch
        %380 = sbr.rel (%p378) target = $region52
      $region51: #{tpu_custom_call.1} parent=5 // pred_region
        // Predicated region
        $region53: #{tpu_custom_call.1} parent=51 // pred_check
          %p381 = pneg %p67
        $region54: #{tpu_custom_call.1} parent=51 // pred_check_branch
          %383 = sbr.rel (%p381) target = $region56
        $region55: #{tpu_custom_call.1} parent=51 // pred_region
          %s384 = sand.u32 %s26, 1
          %s385 = scalar_lea.sflag [#allocation6], %s384
          %s386 = sand.u32 %s57, 1
          %s387 = smul.addr %s386, 64
          %s388 = scalar_lea.vmem [#allocation5], %s387
          %s390 = ssub.s32 1024, 1024
          %391 = vsyncadd %s385, %s390
          %s392 = smul.addr %s26, 128
          %s393 = scalar_lea.hbm %s1, %s392
          %s394 = sshll.u32 %s388, 4
          %s395 = int_to_ptr.vmem [resolvable:$true] %s394
          %400 = dma.hbm_to_vmem [thread:$0]  %s393, 1024, %s395, %s385, 256, 128, 8
        $region56: #{tpu_custom_call.1} parent=51 // pred_fallthru
          _
      $region52: #{tpu_custom_call.1} parent=5 // pred_fallthru
        _
      %p401 = scmp.le.s32.totalorder 1, %s26
      %p402 = scmp.lt.s32.totalorder %s26, 3
      %p403 = pnand %p401, %p402
      %p404 = pneg %p403
      // Predicated region
      $region57: #{tpu_custom_call.1} parent=5 // pred_check
        _
      $region58: #{tpu_custom_call.1} parent=5 // pred_check_branch
        %406 = sbr.rel (%p403) target = $region60
      $region59: #{tpu_custom_call.1} parent=5 // pred_region
        %s407 = ssub.s32 %s26, 1
        // Predicated region
        $region61: #{tpu_custom_call.1} parent=59 // pred_check
          %p408 = pneg %p47
        $region62: #{tpu_custom_call.1} parent=59 // pred_check_branch
          %410 = sbr.rel (%p408) target = $region64
        $region63: #{tpu_custom_call.1} parent=59 // pred_region
          %411 = dma.done [#allocation3], 2048
        $region64: #{tpu_custom_call.1} parent=59 // pred_fallthru
          _
        %s412 = sand.u32 %s31, 1
        %s413 = scalar_lea.sflag [#allocation6], %s412
        %s414 = sand.u32 %s60, 1
        %s415 = smul.addr %s414, 64
        %s416 = scalar_lea.vmem [#allocation5], %s415
        // Predicated region
        $region65: #{tpu_custom_call.1} parent=59 // pred_check
          %p417 = pneg %p73
        $region66: #{tpu_custom_call.1} parent=59 // pred_check_branch
          %419 = sbr.rel (%p417) target = $region68
        $region67: #{tpu_custom_call.1} parent=59 // pred_region
          %420 = dma.done %s413, 1024
        $region68: #{tpu_custom_call.1} parent=59 // pred_fallthru
          _
        // Predicated region
        $region69: #{tpu_custom_call.1} parent=59 // pred_check
          %p421 = pneg %p94
        $region70: #{tpu_custom_call.1} parent=59 // pred_check_branch
          %423 = sbr.rel (%p421) target = $region72
        $region71: #{tpu_custom_call.1} parent=59 // pred_region
          %424 = dma.done [#allocation6], 2048
        $region72: #{tpu_custom_call.1} parent=59 // pred_fallthru
          _
        // Predicated region
        $region73: #{tpu_custom_call.1} parent=59 // pred_check
          %p425 = pneg %p115
        $region74: #{tpu_custom_call.1} parent=59 // pred_check_branch
          %427 = sbr.rel (%p425) target = $region76
        $region75: #{tpu_custom_call.1} parent=59 // pred_region
          %428 = dma.done [#allocation9], 128
        $region76: #{tpu_custom_call.1} parent=59 // pred_fallthru
          _
        // Predicated region
        $region77: #{tpu_custom_call.1} parent=59 // pred_check
          %p429 = pneg %p136
        $region78: #{tpu_custom_call.1} parent=59 // pred_check_branch
          %431 = sbr.rel (%p429) target = $region80
        $region79: #{tpu_custom_call.1} parent=59 // pred_region
          %432 = dma.done [#allocation9], 2048
        $region80: #{tpu_custom_call.1} parent=59 // pred_fallthru
          _
        // Predicated region
        $region81: #{tpu_custom_call.1} parent=59 // pred_check
          %p433 = pneg %p178
        $region82: #{tpu_custom_call.1} parent=59 // pred_check_branch
          %435 = sbr.rel (%p433) target = $region84
        $region83: #{tpu_custom_call.1} parent=59 // pred_region
          %436 = dma.done [#allocation12], 1024
        $region84: #{tpu_custom_call.1} parent=59 // pred_fallthru
          _
        // Predicated region
        $region85: #{tpu_custom_call.1} parent=59 // pred_check
          %p437 = pneg %p199
        $region86: #{tpu_custom_call.1} parent=59 // pred_check_branch
          %439 = sbr.rel (%p437) target = $region88
        $region87: #{tpu_custom_call.1} parent=59 // pred_region
          %440 = dma.done [#allocation12], 2048
        $region88: #{tpu_custom_call.1} parent=59 // pred_fallthru
          _
        // Predicated region
        $region89: #{tpu_custom_call.1} parent=59 // pred_check
          %p441 = pneg %p220
        $region90: #{tpu_custom_call.1} parent=59 // pred_check_branch
          %443 = sbr.rel (%p441) target = $region92
        $region91: #{tpu_custom_call.1} parent=59 // pred_region
          %444 = dma.done [#allocation15], 2048
        $region92: #{tpu_custom_call.1} parent=59 // pred_fallthru
          _
        %p445 = pneg %p47
        %p446 = pneg %p44
        %s447 = sand.u32 %s31, 1
        %s448 = scalar_lea.sflag [#allocation6], %s447
        %s449 = sand.u32 %s60, 1
        %s450 = smul.addr %s449, 64
        %s451 = scalar_lea.vmem [#allocation5], %s450
        %p452 = pneg %p73
        %p453 = pneg %p70
        %p454 = pneg %p94
        %p455 = pneg %p91
        %p456 = pneg %p115
        %p457 = pneg %p112
        %p458 = pneg %p136
        %p459 = pneg %p133
        %p460 = pneg %p157
        %p461 = pneg %p154
        %p462 = pneg %p178
        %p463 = pneg %p175
        %p464 = pneg %p199
        %p465 = pneg %p196
        %p466 = pneg %p220
        %p467 = pneg %p217
        %p468 = pneg %p241
        %p469 = pneg %p238
        %p470 = pneg %p267
        %p471 = pneg %p264
        %s472 = sand.u32 %s254, 1
        %s473 = scalar_lea.sflag [#allocation4], %s472
        %s474 = sand.u32 %s254, 1
        %s475 = smul.addr %s474, 128
        %s476 = scalar_lea.vmem [#allocation16], %s475
        %v477 = vld [vmem:[#allocation2] sm:$0xff]
        %v478 = vld [vmem:[#allocation2 + $0x8] sm:$0xff]
        %v479 = vld [vmem:[#allocation2 + $0x10] sm:$0xff]
        %v480 = vld [vmem:[#allocation2 + $0x18] sm:$0xff]
        %v481 = vld [vmem:[#allocation2 + $0x20] sm:$0xff]
        %v482 = vld [vmem:[#allocation2 + $0x28] sm:$0xff]
        %v483 = vld [vmem:[#allocation2 + $0x30] sm:$0xff]
        %v484 = vld [vmem:[#allocation2 + $0x38] sm:$0xff]
        %v485 = vld [vmem:[#allocation2 + $0x40] sm:$0xff]
        %v486 = vld [vmem:[#allocation2 + $0x48] sm:$0xff]
        %v487 = vld [vmem:[#allocation2 + $0x50] sm:$0xff]
        %v488 = vld [vmem:[#allocation2 + $0x58] sm:$0xff]
        %v489 = vld [vmem:[#allocation2 + $0x60] sm:$0xff]
        %v490 = vld [vmem:[#allocation2 + $0x68] sm:$0xff]
        %v491 = vld [vmem:[#allocation2 + $0x70] sm:$0xff]
        %v492 = vld [vmem:[#allocation2 + $0x78] sm:$0xff]
        %v493 = vld [vmem:[%s416] sm:$0xff]
        %v494 = vld [vmem:[%s416 + $0x8] sm:$0xff]
        %v495 = vld [vmem:[%s416 + $0x10] sm:$0xff]
        %v496 = vld [vmem:[%s416 + $0x18] sm:$0xff]
        %v497 = vld [vmem:[%s416 + $0x20] sm:$0xff]
        %v498 = vld [vmem:[%s416 + $0x28] sm:$0xff]
        %v499 = vld [vmem:[%s416 + $0x30] sm:$0xff]
        %v500 = vld [vmem:[%s416 + $0x38] sm:$0xff]
        %v501 = vld [vmem:[#allocation10] sm:$0xff]
        %v502 = vld [vmem:[#allocation10 + $0x8] sm:$0xff]
        %v503 = vld [vmem:[#allocation10 + $0x10] sm:$0xff]
        %v504 = vld [vmem:[#allocation10 + $0x18] sm:$0xff]
        %v505 = vld [vmem:[#allocation10 + $0x20] sm:$0xff]
        %v506 = vld [vmem:[#allocation10 + $0x28] sm:$0xff]
        %v507 = vld [vmem:[#allocation10 + $0x30] sm:$0xff]
        %v508 = vld [vmem:[#allocation10 + $0x38] sm:$0xff]
        %v509 = vld [vmem:[#allocation10 + $0x40] sm:$0xff]
        %v510 = vld [vmem:[#allocation10 + $0x48] sm:$0xff]
        %v511 = vld [vmem:[#allocation10 + $0x50] sm:$0xff]
        %v512 = vld [vmem:[#allocation10 + $0x58] sm:$0xff]
        %v513 = vld [vmem:[#allocation10 + $0x60] sm:$0xff]
        %v514 = vld [vmem:[#allocation10 + $0x68] sm:$0xff]
        %v515 = vld [vmem:[#allocation10 + $0x70] sm:$0xff]
        %v516 = vld [vmem:[#allocation10 + $0x78] sm:$0xff]
        %v517 = vld [vmem:[%s5] sm:$0x3]
        %v519 = vlaneseq
        %v520 = vshrl.u32 %v519, 7
        %v521 = vsub.s32 0, %v520
        %v522 = vrot.slane %v517, %v521
        %v523 = vlaneseq
        %v524 = vshrl.u32 %v523, 7
        %v525 = vsub.s32 1, %v524
        %v526 = vrot.slane %v517, %v525
        %vm529 = vcmask 523264
        %v531 = vsel %vm529, %v493, 0
        %v534 = vsel %vm529, %v494, 0
        %v537 = vsel %vm529, %v495, 0
        %v540 = vsel %vm529, %v496, 0
        %v543 = vsel %vm529, %v497, 0
        %v546 = vsel %vm529, %v498, 0
        %v549 = vsel %vm529, %v499, 0
        %v552 = vsel %vm529, %v500, 0
        %554 = vmatprep.subr.mxu0 0.0
        %555 = vmatpush1.msra.mxu0 0.0
        %556 = vmatprep.subr.mxu0 0.0
        %557 = vmatpush1.msra.mxu0 0.0
        %558 = vmatprep.subr.mxu0 0.0
        %559 = vmatpush1.msra.mxu0 0.0
        %560 = vmatprep.subr.mxu0 0.0
        %561 = vmatpush1.msra.mxu0 0.0
        %562 = vmatprep.subr.mxu0 0.0
        %563 = vmatpush1.msra.mxu0 0.0
        %564 = vmatprep.subr.mxu0 0.0
        %565 = vmatpush1.msra.mxu0 0.0
        %566 = vmatprep.subr.mxu0 0.0
        %567 = vmatpush1.msra.mxu0 0.0
        %568 = vmatprep.subr.mxu0 0.0
        %569 = vmatpush1.msra.mxu0 0.0
        %570 = vmatprep.subr.mxu0 %v516
        %571 = vmatpush1.msra.mxu0 %v515
        %572 = vmatprep.subr.mxu0 %v514
        %573 = vmatpush1.msra.mxu0 %v513
        %574 = vmatprep.subr.mxu0 %v512
        %575 = vmatpush1.msra.mxu0 %v511
        %576 = vmatprep.subr.mxu0 %v510
        %577 = vmatpush1.msra.mxu0 %v509
        %578 = vmatprep.subr.mxu0 %v508
        %579 = vmatpush1.msra.mxu0 %v507
        %580 = vmatprep.subr.mxu0 %v506
        %581 = vmatpush1.msra.mxu0 %v505
        %582 = vmatprep.subr.mxu0 %v504
        %583 = vmatpush1.msra.mxu0 %v503
        %584 = vmatprep.subr.mxu0 %v502
        %585 = vmatpush1.msra.mxu0 %v501
        %586 = vmatprep.subr.mxu0 0.0
        %587 = vmatpush2.msra.mxu0 0.0
        %588 = vmatprep.subr.mxu0 0.0
        %589 = vmatpush2.msra.mxu0 0.0
        %590 = vmatprep.subr.mxu0 0.0
        %591 = vmatpush2.msra.mxu0 0.0
        %592 = vmatprep.subr.mxu0 0.0
        %593 = vmatpush2.msra.mxu0 0.0
        %594 = vmatprep.subr.mxu0 0.0
        %595 = vmatpush2.msra.mxu0 0.0
        %596 = vmatprep.subr.mxu0 0.0
        %597 = vmatpush2.msra.mxu0 0.0
        %598 = vmatprep.subr.mxu0 0.0
        %599 = vmatpush2.msra.mxu0 0.0
        %600 = vmatprep.subr.mxu0 0.0
        %601 = vmatpush2.msra.mxu0 0.0
        %602 = vmatprep.subr.mxu0 0.0
        %603 = vmatpush2.msra.mxu0 0.0
        %604 = vmatprep.subr.mxu0 0.0
        %605 = vmatpush2.msra.mxu0 0.0
        %606 = vmatprep.subr.mxu0 0.0
        %607 = vmatpush2.msra.mxu0 0.0
        %608 = vmatprep.subr.mxu0 0.0
        %609 = vmatpush2.msra.mxu0 0.0
        %610 = vmatprep.subr.mxu0 0.0
        %611 = vmatpush2.msra.mxu0 0.0
        %612 = vmatprep.subr.mxu0 0.0
        %613 = vmatpush2.msra.mxu0 0.0
        %614 = vmatprep.subr.mxu0 0.0
        %615 = vmatpush2.msra.mxu0 0.0
        %616 = vmatprep.subr.mxu0 0.0
        %617 = vmatpush2.msra.mxu0 0.0
        %618 = vmatprep.mubr.f32.mxu0 0.0
        %619 = vmatmul.mubr.f32.gmra.mxu0 %v531
        %v620 = vpop.f32.mrf.mxu0
        %v621 = vadd.f32 %v522, %v620
        %v622 = vpop.f32.mrf.mxu0
        %v623 = vadd.f32 %v526, %v622
        %624 = vmatprep.mubr.f32.mxu0 0.0
        %625 = vmatmul.mubr.f32.gmra.mxu0 %v534
        %v626 = vpop.f32.mrf.mxu0
        %v627 = vadd.f32 %v522, %v626
        %v628 = vpop.f32.mrf.mxu0
        %v629 = vadd.f32 %v526, %v628
        %630 = vmatprep.mubr.f32.mxu0 0.0
        %631 = vmatmul.mubr.f32.gmra.mxu0 %v537
        %v632 = vpop.f32.mrf.mxu0
        %v633 = vadd.f32 %v522, %v632
        %v634 = vpop.f32.mrf.mxu0
        %v635 = vadd.f32 %v526, %v634
        %636 = vmatprep.mubr.f32.mxu0 0.0
        %637 = vmatmul.mubr.f32.gmra.mxu0 %v540
        %v638 = vpop.f32.mrf.mxu0
        %v639 = vadd.f32 %v522, %v638
        %v640 = vpop.f32.mrf.mxu0
        %v641 = vadd.f32 %v526, %v640
        %642 = vmatprep.mubr.f32.mxu0 0.0
        %643 = vmatmul.mubr.f32.gmra.mxu0 %v543
        %v644 = vpop.f32.mrf.mxu0
        %v645 = vadd.f32 %v522, %v644
        %v646 = vpop.f32.mrf.mxu0
        %v647 = vadd.f32 %v526, %v646
        %648 = vmatprep.mubr.f32.mxu0 0.0
        %649 = vmatmul.mubr.f32.gmra.mxu0 %v546
        %v650 = vpop.f32.mrf.mxu0
        %v651 = vadd.f32 %v522, %v650
        %v652 = vpop.f32.mrf.mxu0
        %v653 = vadd.f32 %v526, %v652
        %654 = vmatprep.mubr.f32.mxu0 0.0
        %655 = vmatmul.mubr.f32.gmra.mxu0 %v549
        %v656 = vpop.f32.mrf.mxu0
        %v657 = vadd.f32 %v522, %v656
        %v658 = vpop.f32.mrf.mxu0
        %v659 = vadd.f32 %v526, %v658
        %660 = vmatprep.mubr.f32.mxu0 0.0
        %661 = vmatmul.mubr.f32.gmra.mxu0 %v552
        %v662 = vpop.f32.mrf.mxu0
        %v663 = vadd.f32 %v522, %v662
        %v664 = vpop.f32.mrf.mxu0
        %v665 = vadd.f32 %v526, %v664
        %666 = vdwg.mxu0
        %v667 = vld [vmem:[#allocation7] sm:$0xff]
        %v668 = vld [vmem:[#allocation7 + $0x8] sm:$0xff]
        %v669 = vld [vmem:[#allocation7 + $0x10] sm:$0xff]
        %v670 = vld [vmem:[#allocation7 + $0x18] sm:$0xff]
        %v671 = vld [vmem:[#allocation7 + $0x20] sm:$0xff]
        %v672 = vld [vmem:[#allocation7 + $0x28] sm:$0xff]
        %v673 = vld [vmem:[#allocation7 + $0x30] sm:$0xff]
        %v674 = vld [vmem:[#allocation7 + $0x38] sm:$0xff]
        %v675 = vld [vmem:[#allocation7 + $0x40] sm:$0xff]
        %v676 = vld [vmem:[#allocation7 + $0x48] sm:$0xff]
        %v677 = vld [vmem:[#allocation7 + $0x50] sm:$0xff]
        %v678 = vld [vmem:[#allocation7 + $0x58] sm:$0xff]
        %v679 = vld [vmem:[#allocation7 + $0x60] sm:$0xff]
        %v680 = vld [vmem:[#allocation7 + $0x68] sm:$0xff]
        %v681 = vld [vmem:[#allocation7 + $0x70] sm:$0xff]
        %v682 = vld [vmem:[#allocation7 + $0x78] sm:$0xff]
        %v691 = vcombine.high %v621, %v621
        %v693 = vunpack.c.l.s4 1966171168
        %v694 = vunpack.c.0.s8 %v693
        %v695 = vlaneseq
        %v696 = vshrl.u32 %v695, 7
        %v697 = vsub.s32 %v694, %v696
        %v698 = vrot.slane %v621, %v697
        %v700 = vunpack.c.l.s4 1966171168
        %v701 = vunpack.c.0.s8 %v700
        %v702 = vlaneseq
        %v703 = vshrl.u32 %v702, 7
        %v704 = vsub.s32 %v701, %v703
        %v705 = vrot.slane %v691, %v704
        %v706 = vcombine.high %v698, %v698
        %v707 = vcombine.high %v705, %v705
        %v709 = vunpack.c.l.s4 1966171168
        %v710 = vunpack.c.0.s8 %v709
        %v711 = vlaneseq
        %v712 = vshrl.u32 %v711, 7
        %v713 = vsub.s32 %v710, %v712
        %v714 = vrot.slane %v698, %v713
        %v716 = vunpack.c.l.s4 1966171168
        %v717 = vunpack.c.0.s8 %v716
        %v718 = vlaneseq
        %v719 = vshrl.u32 %v718, 7
        %v720 = vsub.s32 %v717, %v719
        %v721 = vrot.slane %v705, %v720
        %v723 = vunpack.c.l.s4 1966171168
        %v724 = vunpack.c.0.s8 %v723
        %v725 = vlaneseq
        %v726 = vshrl.u32 %v725, 7
        %v727 = vsub.s32 %v724, %v726
        %v728 = vrot.slane %v706, %v727
        %v730 = vunpack.c.l.s4 1966171168
        %v731 = vunpack.c.0.s8 %v730
        %v732 = vlaneseq
        %v733 = vshrl.u32 %v732, 7
        %v734 = vsub.s32 %v731, %v733
        %v735 = vrot.slane %v707, %v734
        %v736 = vcombine.high %v714, %v714
        %v737 = vcombine.high %v721, %v721
        %v738 = vcombine.high %v728, %v728
        %v739 = vcombine.high %v735, %v735
        %v740 = vcombine.high %v627, %v627
        %v742 = vunpack.c.l.s4 1966171168
        %v743 = vunpack.c.0.s8 %v742
        %v744 = vlaneseq
        %v745 = vshrl.u32 %v744, 7
        %v746 = vsub.s32 %v743, %v745
        %v747 = vrot.slane %v627, %v746
        %v749 = vunpack.c.l.s4 1966171168
        %v750 = vunpack.c.0.s8 %v749
        %v751 = vlaneseq
        %v752 = vshrl.u32 %v751, 7
        %v753 = vsub.s32 %v750, %v752
        %v754 = vrot.slane %v740, %v753
        %v755 = vcombine.high %v747, %v747
        %v756 = vcombine.high %v754, %v754
        %v758 = vunpack.c.l.s4 1966171168
        %v759 = vunpack.c.0.s8 %v758
        %v760 = vlaneseq
        %v761 = vshrl.u32 %v760, 7
        %v762 = vsub.s32 %v759, %v761
        %v763 = vrot.slane %v747, %v762
        %v765 = vunpack.c.l.s4 1966171168
        %v766 = vunpack.c.0.s8 %v765
        %v767 = vlaneseq
        %v768 = vshrl.u32 %v767, 7
        %v769 = vsub.s32 %v766, %v768
        %v770 = vrot.slane %v754, %v769
        %v772 = vunpack.c.l.s4 1966171168
        %v773 = vunpack.c.0.s8 %v772
        %v774 = vlaneseq
        %v775 = vshrl.u32 %v774, 7
        %v776 = vsub.s32 %v773, %v775
        %v777 = vrot.slane %v755, %v776
        %v779 = vunpack.c.l.s4 1966171168
        %v780 = vunpack.c.0.s8 %v779
        %v781 = vlaneseq
        %v782 = vshrl.u32 %v781, 7
        %v783 = vsub.s32 %v780, %v782
        %v784 = vrot.slane %v756, %v783
        %v785 = vcombine.high %v763, %v763
        %v786 = vcombine.high %v770, %v770
        %v787 = vcombine.high %v777, %v777
        %v788 = vcombine.high %v784, %v784
        %v789 = vcombine.high %v633, %v633
        %v791 = vunpack.c.l.s4 1966171168
        %v792 = vunpack.c.0.s8 %v791
        %v793 = vlaneseq
        %v794 = vshrl.u32 %v793, 7
        %v795 = vsub.s32 %v792, %v794
        %v796 = vrot.slane %v633, %v795
        %v798 = vunpack.c.l.s4 1966171168
        %v799 = vunpack.c.0.s8 %v798
        %v800 = vlaneseq
        %v801 = vshrl.u32 %v800, 7
        %v802 = vsub.s32 %v799, %v801
        %v803 = vrot.slane %v789, %v802
        %v804 = vcombine.high %v796, %v796
        %v805 = vcombine.high %v803, %v803
        %v807 = vunpack.c.l.s4 1966171168
        %v808 = vunpack.c.0.s8 %v807
        %v809 = vlaneseq
        %v810 = vshrl.u32 %v809, 7
        %v811 = vsub.s32 %v808, %v810
        %v812 = vrot.slane %v796, %v811
        %v814 = vunpack.c.l.s4 1966171168
        %v815 = vunpack.c.0.s8 %v814
        %v816 = vlaneseq
        %v817 = vshrl.u32 %v816, 7
        %v818 = vsub.s32 %v815, %v817
        %v819 = vrot.slane %v803, %v818
        %v821 = vunpack.c.l.s4 1966171168
        %v822 = vunpack.c.0.s8 %v821
        %v823 = vlaneseq
        %v824 = vshrl.u32 %v823, 7
        %v825 = vsub.s32 %v822, %v824
        %v826 = vrot.slane %v804, %v825
        %v828 = vunpack.c.l.s4 1966171168
        %v829 = vunpack.c.0.s8 %v828
        %v830 = vlaneseq
        %v831 = vshrl.u32 %v830, 7
        %v832 = vsub.s32 %v829, %v831
        %v833 = vrot.slane %v805, %v832
        %v834 = vcombine.high %v812, %v812
        %v835 = vcombine.high %v819, %v819
        %v836 = vcombine.high %v826, %v826
        %v837 = vcombine.high %v833, %v833
        %v838 = vcombine.high %v639, %v639
        %v840 = vunpack.c.l.s4 1966171168
        %v841 = vunpack.c.0.s8 %v840
        %v842 = vlaneseq
        %v843 = vshrl.u32 %v842, 7
        %v844 = vsub.s32 %v841, %v843
        %v845 = vrot.slane %v639, %v844
        %v847 = vunpack.c.l.s4 1966171168
        %v848 = vunpack.c.0.s8 %v847
        %v849 = vlaneseq
        %v850 = vshrl.u32 %v849, 7
        %v851 = vsub.s32 %v848, %v850
        %v852 = vrot.slane %v838, %v851
        %v853 = vcombine.high %v845, %v845
        %v854 = vcombine.high %v852, %v852
        %v856 = vunpack.c.l.s4 1966171168
        %v857 = vunpack.c.0.s8 %v856
        %v858 = vlaneseq
        %v859 = vshrl.u32 %v858, 7
        %v860 = vsub.s32 %v857, %v859
        %v861 = vrot.slane %v845, %v860
        %v863 = vunpack.c.l.s4 1966171168
        %v864 = vunpack.c.0.s8 %v863
        %v865 = vlaneseq
        %v866 = vshrl.u32 %v865, 7
        %v867 = vsub.s32 %v864, %v866
        %v868 = vrot.slane %v852, %v867
        %v870 = vunpack.c.l.s4 1966171168
        %v871 = vunpack.c.0.s8 %v870
        %v872 = vlaneseq
        %v873 = vshrl.u32 %v872, 7
        %v874 = vsub.s32 %v871, %v873
        %v875 = vrot.slane %v853, %v874
        %v877 = vunpack.c.l.s4 1966171168
        %v878 = vunpack.c.0.s8 %v877
        %v879 = vlaneseq
        %v880 = vshrl.u32 %v879, 7
        %v881 = vsub.s32 %v878, %v880
        %v882 = vrot.slane %v854, %v881
        %v883 = vcombine.high %v861, %v861
        %v884 = vcombine.high %v868, %v868
        %v885 = vcombine.high %v875, %v875
        %v886 = vcombine.high %v882, %v882
        %v887 = vcombine.high %v645, %v645
        %v889 = vunpack.c.l.s4 1966171168
        %v890 = vunpack.c.0.s8 %v889
        %v891 = vlaneseq
        %v892 = vshrl.u32 %v891, 7
        %v893 = vsub.s32 %v890, %v892
        %v894 = vrot.slane %v645, %v893
        %v896 = vunpack.c.l.s4 1966171168
        %v897 = vunpack.c.0.s8 %v896
        %v898 = vlaneseq
        %v899 = vshrl.u32 %v898, 7
        %v900 = vsub.s32 %v897, %v899
        %v901 = vrot.slane %v887, %v900
        %v902 = vcombine.high %v894, %v894
        %v903 = vcombine.high %v901, %v901
        %v905 = vunpack.c.l.s4 1966171168
        %v906 = vunpack.c.0.s8 %v905
        %v907 = vlaneseq
        %v908 = vshrl.u32 %v907, 7
        %v909 = vsub.s32 %v906, %v908
        %v910 = vrot.slane %v894, %v909
        %v912 = vunpack.c.l.s4 1966171168
        %v913 = vunpack.c.0.s8 %v912
        %v914 = vlaneseq
        %v915 = vshrl.u32 %v914, 7
        %v916 = vsub.s32 %v913, %v915
        %v917 = vrot.slane %v901, %v916
        %v919 = vunpack.c.l.s4 1966171168
        %v920 = vunpack.c.0.s8 %v919
        %v921 = vlaneseq
        %v922 = vshrl.u32 %v921, 7
        %v923 = vsub.s32 %v920, %v922
        %v924 = vrot.slane %v902, %v923
        %v926 = vunpack.c.l.s4 1966171168
        %v927 = vunpack.c.0.s8 %v926
        %v928 = vlaneseq
        %v929 = vshrl.u32 %v928, 7
        %v930 = vsub.s32 %v927, %v929
        %v931 = vrot.slane %v903, %v930
        %v932 = vcombine.high %v910, %v910
        %v933 = vcombine.high %v917, %v917
        %v934 = vcombine.high %v924, %v924
        %v935 = vcombine.high %v931, %v931
        %v936 = vcombine.high %v651, %v651
        %v938 = vunpack.c.l.s4 1966171168
        %v939 = vunpack.c.0.s8 %v938
        %v940 = vlaneseq
        %v941 = vshrl.u32 %v940, 7
        %v942 = vsub.s32 %v939, %v941
        %v943 = vrot.slane %v651, %v942
        %v945 = vunpack.c.l.s4 1966171168
        %v946 = vunpack.c.0.s8 %v945
        %v947 = vlaneseq
        %v948 = vshrl.u32 %v947, 7
        %v949 = vsub.s32 %v946, %v948
        %v950 = vrot.slane %v936, %v949
        %v951 = vcombine.high %v943, %v943
        %v952 = vcombine.high %v950, %v950
        %v954 = vunpack.c.l.s4 1966171168
        %v955 = vunpack.c.0.s8 %v954
        %v956 = vlaneseq
        %v957 = vshrl.u32 %v956, 7
        %v958 = vsub.s32 %v955, %v957
        %v959 = vrot.slane %v943, %v958
        %v961 = vunpack.c.l.s4 1966171168
        %v962 = vunpack.c.0.s8 %v961
        %v963 = vlaneseq
        %v964 = vshrl.u32 %v963, 7
        %v965 = vsub.s32 %v962, %v964
        %v966 = vrot.slane %v950, %v965
        %v968 = vunpack.c.l.s4 1966171168
        %v969 = vunpack.c.0.s8 %v968
        %v970 = vlaneseq
        %v971 = vshrl.u32 %v970, 7
        %v972 = vsub.s32 %v969, %v971
        %v973 = vrot.slane %v951, %v972
        %v975 = vunpack.c.l.s4 1966171168
        %v976 = vunpack.c.0.s8 %v975
        %v977 = vlaneseq
        %v978 = vshrl.u32 %v977, 7
        %v979 = vsub.s32 %v976, %v978
        %v980 = vrot.slane %v952, %v979
        %v981 = vcombine.high %v959, %v959
        %v982 = vcombine.high %v966, %v966
        %v983 = vcombine.high %v973, %v973
        %v984 = vcombine.high %v980, %v980
        %v985 = vcombine.high %v657, %v657
        %v987 = vunpack.c.l.s4 1966171168
        %v988 = vunpack.c.0.s8 %v987
        %v989 = vlaneseq
        %v990 = vshrl.u32 %v989, 7
        %v991 = vsub.s32 %v988, %v990
        %v992 = vrot.slane %v657, %v991
        %v994 = vunpack.c.l.s4 1966171168
        %v995 = vunpack.c.0.s8 %v994
        %v996 = vlaneseq
        %v997 = vshrl.u32 %v996, 7
        %v998 = vsub.s32 %v995, %v997
        %v999 = vrot.slane %v985, %v998
        %v1000 = vcombine.high %v992, %v992
        %v1001 = vcombine.high %v999, %v999
        %v1003 = vunpack.c.l.s4 1966171168
        %v1004 = vunpack.c.0.s8 %v1003
        %v1005 = vlaneseq
        %v1006 = vshrl.u32 %v1005, 7
        %v1007 = vsub.s32 %v1004, %v1006
        %v1008 = vrot.slane %v992, %v1007
        %v1010 = vunpack.c.l.s4 1966171168
        %v1011 = vunpack.c.0.s8 %v1010
        %v1012 = vlaneseq
        %v1013 = vshrl.u32 %v1012, 7
        %v1014 = vsub.s32 %v1011, %v1013
        %v1015 = vrot.slane %v999, %v1014
        %v1017 = vunpack.c.l.s4 1966171168
        %v1018 = vunpack.c.0.s8 %v1017
        %v1019 = vlaneseq
        %v1020 = vshrl.u32 %v1019, 7
        %v1021 = vsub.s32 %v1018, %v1020
        %v1022 = vrot.slane %v1000, %v1021
        %v1024 = vunpack.c.l.s4 1966171168
        %v1025 = vunpack.c.0.s8 %v1024
        %v1026 = vlaneseq
        %v1027 = vshrl.u32 %v1026, 7
        %v1028 = vsub.s32 %v1025, %v1027
        %v1029 = vrot.slane %v1001, %v1028
        %v1030 = vcombine.high %v1008, %v1008
        %v1031 = vcombine.high %v1015, %v1015
        %v1032 = vcombine.high %v1022, %v1022
        %v1033 = vcombine.high %v1029, %v1029
        %v1034 = vcombine.high %v663, %v663
        %v1036 = vunpack.c.l.s4 1966171168
        %v1037 = vunpack.c.0.s8 %v1036
        %v1038 = vlaneseq
        %v1039 = vshrl.u32 %v1038, 7
        %v1040 = vsub.s32 %v1037, %v1039
        %v1041 = vrot.slane %v663, %v1040
        %v1043 = vunpack.c.l.s4 1966171168
        %v1044 = vunpack.c.0.s8 %v1043
        %v1045 = vlaneseq
        %v1046 = vshrl.u32 %v1045, 7
        %v1047 = vsub.s32 %v1044, %v1046
        %v1048 = vrot.slane %v1034, %v1047
        %v1049 = vcombine.high %v1041, %v1041
        %v1050 = vcombine.high %v1048, %v1048
        %v1052 = vunpack.c.l.s4 1966171168
        %v1053 = vunpack.c.0.s8 %v1052
        %v1054 = vlaneseq
        %v1055 = vshrl.u32 %v1054, 7
        %v1056 = vsub.s32 %v1053, %v1055
        %v1057 = vrot.slane %v1041, %v1056
        %v1059 = vunpack.c.l.s4 1966171168
        %v1060 = vunpack.c.0.s8 %v1059
        %v1061 = vlaneseq
        %v1062 = vshrl.u32 %v1061, 7
        %v1063 = vsub.s32 %v1060, %v1062
        %v1064 = vrot.slane %v1048, %v1063
        %v1066 = vunpack.c.l.s4 1966171168
        %v1067 = vunpack.c.0.s8 %v1066
        %v1068 = vlaneseq
        %v1069 = vshrl.u32 %v1068, 7
        %v1070 = vsub.s32 %v1067, %v1069
        %v1071 = vrot.slane %v1049, %v1070
        %v1073 = vunpack.c.l.s4 1966171168
        %v1074 = vunpack.c.0.s8 %v1073
        %v1075 = vlaneseq
        %v1076 = vshrl.u32 %v1075, 7
        %v1077 = vsub.s32 %v1074, %v1076
        %v1078 = vrot.slane %v1050, %v1077
        %v1079 = vcombine.high %v1057, %v1057
        %v1080 = vcombine.high %v1064, %v1064
        %v1081 = vcombine.high %v1071, %v1071
        %v1082 = vcombine.high %v1078, %v1078
        %v1083 = vlaneseq
        %v1084 = vshrl.u32 %v1083, 7
        %v1085 = vsub.s32 0, %v1084
        %v1086 = vrot.slane %v714, %v1085
        %v1087 = vlaneseq
        %v1088 = vshrl.u32 %v1087, 7
        %v1089 = vsub.s32 0, %v1088
        %v1090 = vrot.slane %v728, %v1089
        %v1091 = vlaneseq
        %v1092 = vshrl.u32 %v1091, 7
        %v1093 = vsub.s32 0, %v1092
        %v1094 = vrot.slane %v736, %v1093
        %v1095 = vlaneseq
        %v1096 = vshrl.u32 %v1095, 7
        %v1097 = vsub.s32 0, %v1096
        %v1098 = vrot.slane %v738, %v1097
        %v1099 = vlaneseq
        %v1100 = vshrl.u32 %v1099, 7
        %v1101 = vsub.s32 0, %v1100
        %v1102 = vrot.slane %v721, %v1101
        %v1103 = vlaneseq
        %v1104 = vshrl.u32 %v1103, 7
        %v1105 = vsub.s32 0, %v1104
        %v1106 = vrot.slane %v735, %v1105
        %v1107 = vlaneseq
        %v1108 = vshrl.u32 %v1107, 7
        %v1109 = vsub.s32 0, %v1108
        %v1110 = vrot.slane %v737, %v1109
        %v1111 = vlaneseq
        %v1112 = vshrl.u32 %v1111, 7
        %v1113 = vsub.s32 0, %v1112
        %v1114 = vrot.slane %v739, %v1113
        %v1115 = vlaneseq
        %v1116 = vshrl.u32 %v1115, 7
        %v1117 = vsub.s32 0, %v1116
        %v1118 = vrot.slane %v763, %v1117
        %v1119 = vlaneseq
        %v1120 = vshrl.u32 %v1119, 7
        %v1121 = vsub.s32 0, %v1120
        %v1122 = vrot.slane %v777, %v1121
        %v1123 = vlaneseq
        %v1124 = vshrl.u32 %v1123, 7
        %v1125 = vsub.s32 0, %v1124
        %v1126 = vrot.slane %v785, %v1125
        %v1127 = vlaneseq
        %v1128 = vshrl.u32 %v1127, 7
        %v1129 = vsub.s32 0, %v1128
        %v1130 = vrot.slane %v787, %v1129
        %v1131 = vlaneseq
        %v1132 = vshrl.u32 %v1131, 7
        %v1133 = vsub.s32 0, %v1132
        %v1134 = vrot.slane %v770, %v1133
        %v1135 = vlaneseq
        %v1136 = vshrl.u32 %v1135, 7
        %v1137 = vsub.s32 0, %v1136
        %v1138 = vrot.slane %v784, %v1137
        %v1139 = vlaneseq
        %v1140 = vshrl.u32 %v1139, 7
        %v1141 = vsub.s32 0, %v1140
        %v1142 = vrot.slane %v786, %v1141
        %v1143 = vlaneseq
        %v1144 = vshrl.u32 %v1143, 7
        %v1145 = vsub.s32 0, %v1144
        %v1146 = vrot.slane %v788, %v1145
        %v1147 = vlaneseq
        %v1148 = vshrl.u32 %v1147, 7
        %v1149 = vsub.s32 0, %v1148
        %v1150 = vrot.slane %v812, %v1149
        %v1151 = vlaneseq
        %v1152 = vshrl.u32 %v1151, 7
        %v1153 = vsub.s32 0, %v1152
        %v1154 = vrot.slane %v826, %v1153
        %v1155 = vlaneseq
        %v1156 = vshrl.u32 %v1155, 7
        %v1157 = vsub.s32 0, %v1156
        %v1158 = vrot.slane %v834, %v1157
        %v1159 = vlaneseq
        %v1160 = vshrl.u32 %v1159, 7
        %v1161 = vsub.s32 0, %v1160
        %v1162 = vrot.slane %v836, %v1161
        %v1163 = vlaneseq
        %v1164 = vshrl.u32 %v1163, 7
        %v1165 = vsub.s32 0, %v1164
        %v1166 = vrot.slane %v819, %v1165
        %v1167 = vlaneseq
        %v1168 = vshrl.u32 %v1167, 7
        %v1169 = vsub.s32 0, %v1168
        %v1170 = vrot.slane %v833, %v1169
        %v1171 = vlaneseq
        %v1172 = vshrl.u32 %v1171, 7
        %v1173 = vsub.s32 0, %v1172
        %v1174 = vrot.slane %v835, %v1173
        %v1175 = vlaneseq
        %v1176 = vshrl.u32 %v1175, 7
        %v1177 = vsub.s32 0, %v1176
        %v1178 = vrot.slane %v837, %v1177
        %v1179 = vlaneseq
        %v1180 = vshrl.u32 %v1179, 7
        %v1181 = vsub.s32 0, %v1180
        %v1182 = vrot.slane %v861, %v1181
        %v1183 = vlaneseq
        %v1184 = vshrl.u32 %v1183, 7
        %v1185 = vsub.s32 0, %v1184
        %v1186 = vrot.slane %v875, %v1185
        %v1187 = vlaneseq
        %v1188 = vshrl.u32 %v1187, 7
        %v1189 = vsub.s32 0, %v1188
        %v1190 = vrot.slane %v883, %v1189
        %v1191 = vlaneseq
        %v1192 = vshrl.u32 %v1191, 7
        %v1193 = vsub.s32 0, %v1192
        %v1194 = vrot.slane %v885, %v1193
        %v1195 = vlaneseq
        %v1196 = vshrl.u32 %v1195, 7
        %v1197 = vsub.s32 0, %v1196
        %v1198 = vrot.slane %v868, %v1197
        %v1199 = vlaneseq
        %v1200 = vshrl.u32 %v1199, 7
        %v1201 = vsub.s32 0, %v1200
        %v1202 = vrot.slane %v882, %v1201
        %v1203 = vlaneseq
        %v1204 = vshrl.u32 %v1203, 7
        %v1205 = vsub.s32 0, %v1204
        %v1206 = vrot.slane %v884, %v1205
        %v1207 = vlaneseq
        %v1208 = vshrl.u32 %v1207, 7
        %v1209 = vsub.s32 0, %v1208
        %v1210 = vrot.slane %v886, %v1209
        %v1211 = vlaneseq
        %v1212 = vshrl.u32 %v1211, 7
        %v1213 = vsub.s32 0, %v1212
        %v1214 = vrot.slane %v910, %v1213
        %v1215 = vlaneseq
        %v1216 = vshrl.u32 %v1215, 7
        %v1217 = vsub.s32 0, %v1216
        %v1218 = vrot.slane %v924, %v1217
        %v1219 = vlaneseq
        %v1220 = vshrl.u32 %v1219, 7
        %v1221 = vsub.s32 0, %v1220
        %v1222 = vrot.slane %v932, %v1221
        %v1223 = vlaneseq
        %v1224 = vshrl.u32 %v1223, 7
        %v1225 = vsub.s32 0, %v1224
        %v1226 = vrot.slane %v934, %v1225
        %v1227 = vlaneseq
        %v1228 = vshrl.u32 %v1227, 7
        %v1229 = vsub.s32 0, %v1228
        %v1230 = vrot.slane %v917, %v1229
        %v1231 = vlaneseq
        %v1232 = vshrl.u32 %v1231, 7
        %v1233 = vsub.s32 0, %v1232
        %v1234 = vrot.slane %v931, %v1233
        %v1235 = vlaneseq
        %v1236 = vshrl.u32 %v1235, 7
        %v1237 = vsub.s32 0, %v1236
        %v1238 = vrot.slane %v933, %v1237
        %v1239 = vlaneseq
        %v1240 = vshrl.u32 %v1239, 7
        %v1241 = vsub.s32 0, %v1240
        %v1242 = vrot.slane %v935, %v1241
        %v1243 = vlaneseq
        %v1244 = vshrl.u32 %v1243, 7
        %v1245 = vsub.s32 0, %v1244
        %v1246 = vrot.slane %v959, %v1245
        %v1247 = vlaneseq
        %v1248 = vshrl.u32 %v1247, 7
        %v1249 = vsub.s32 0, %v1248
        %v1250 = vrot.slane %v973, %v1249
        %v1251 = vlaneseq
        %v1252 = vshrl.u32 %v1251, 7
        %v1253 = vsub.s32 0, %v1252
        %v1254 = vrot.slane %v981, %v1253
        %v1255 = vlaneseq
        %v1256 = vshrl.u32 %v1255, 7
        %v1257 = vsub.s32 0, %v1256
        %v1258 = vrot.slane %v983, %v1257
        %v1259 = vlaneseq
        %v1260 = vshrl.u32 %v1259, 7
        %v1261 = vsub.s32 0, %v1260
        %v1262 = vrot.slane %v966, %v1261
        %v1263 = vlaneseq
        %v1264 = vshrl.u32 %v1263, 7
        %v1265 = vsub.s32 0, %v1264
        %v1266 = vrot.slane %v980, %v1265
        %v1267 = vlaneseq
        %v1268 = vshrl.u32 %v1267, 7
        %v1269 = vsub.s32 0, %v1268
        %v1270 = vrot.slane %v982, %v1269
        %v1271 = vlaneseq
        %v1272 = vshrl.u32 %v1271, 7
        %v1273 = vsub.s32 0, %v1272
        %v1274 = vrot.slane %v984, %v1273
        %v1275 = vlaneseq
        %v1276 = vshrl.u32 %v1275, 7
        %v1277 = vsub.s32 0, %v1276
        %v1278 = vrot.slane %v1008, %v1277
        %v1279 = vlaneseq
        %v1280 = vshrl.u32 %v1279, 7
        %v1281 = vsub.s32 0, %v1280
        %v1282 = vrot.slane %v1022, %v1281
        %v1283 = vlaneseq
        %v1284 = vshrl.u32 %v1283, 7
        %v1285 = vsub.s32 0, %v1284
        %v1286 = vrot.slane %v1030, %v1285
        %v1287 = vlaneseq
        %v1288 = vshrl.u32 %v1287, 7
        %v1289 = vsub.s32 0, %v1288
        %v1290 = vrot.slane %v1032, %v1289
        %v1291 = vlaneseq
        %v1292 = vshrl.u32 %v1291, 7
        %v1293 = vsub.s32 0, %v1292
        %v1294 = vrot.slane %v1015, %v1293
        %v1295 = vlaneseq
        %v1296 = vshrl.u32 %v1295, 7
        %v1297 = vsub.s32 0, %v1296
        %v1298 = vrot.slane %v1029, %v1297
        %v1299 = vlaneseq
        %v1300 = vshrl.u32 %v1299, 7
        %v1301 = vsub.s32 0, %v1300
        %v1302 = vrot.slane %v1031, %v1301
        %v1303 = vlaneseq
        %v1304 = vshrl.u32 %v1303, 7
        %v1305 = vsub.s32 0, %v1304
        %v1306 = vrot.slane %v1033, %v1305
        %v1307 = vlaneseq
        %v1308 = vshrl.u32 %v1307, 7
        %v1309 = vsub.s32 0, %v1308
        %v1310 = vrot.slane %v1057, %v1309
        %v1311 = vlaneseq
        %v1312 = vshrl.u32 %v1311, 7
        %v1313 = vsub.s32 0, %v1312
        %v1314 = vrot.slane %v1071, %v1313
        %v1315 = vlaneseq
        %v1316 = vshrl.u32 %v1315, 7
        %v1317 = vsub.s32 0, %v1316
        %v1318 = vrot.slane %v1079, %v1317
        %v1319 = vlaneseq
        %v1320 = vshrl.u32 %v1319, 7
        %v1321 = vsub.s32 0, %v1320
        %v1322 = vrot.slane %v1081, %v1321
        %v1323 = vlaneseq
        %v1324 = vshrl.u32 %v1323, 7
        %v1325 = vsub.s32 0, %v1324
        %v1326 = vrot.slane %v1064, %v1325
        %v1327 = vlaneseq
        %v1328 = vshrl.u32 %v1327, 7
        %v1329 = vsub.s32 0, %v1328
        %v1330 = vrot.slane %v1078, %v1329
        %v1331 = vlaneseq
        %v1332 = vshrl.u32 %v1331, 7
        %v1333 = vsub.s32 0, %v1332
        %v1334 = vrot.slane %v1080, %v1333
        %v1335 = vlaneseq
        %v1336 = vshrl.u32 %v1335, 7
        %v1337 = vsub.s32 0, %v1336
        %v1338 = vrot.slane %v1082, %v1337
        %v1403 = vadd.f32 %v667, %v1086
        %v1404 = vadd.f32 %v668, %v1086
        %v1405 = vadd.f32 %v667, %v1090
        %v1406 = vadd.f32 %v668, %v1090
        %v1407 = vadd.f32 %v667, %v1094
        %v1408 = vadd.f32 %v668, %v1094
        %v1409 = vadd.f32 %v667, %v1098
        %v1410 = vadd.f32 %v668, %v1098
        %v1411 = vadd.f32 %v667, %v1102
        %v1412 = vadd.f32 %v668, %v1102
        %v1413 = vadd.f32 %v667, %v1106
        %v1414 = vadd.f32 %v668, %v1106
        %v1415 = vadd.f32 %v667, %v1110
        %v1416 = vadd.f32 %v668, %v1110
        %v1417 = vadd.f32 %v667, %v1114
        %v1418 = vadd.f32 %v668, %v1114
        %v1419 = vadd.f32 %v669, %v1118
        %v1420 = vadd.f32 %v670, %v1118
        %v1421 = vadd.f32 %v669, %v1122
        %v1422 = vadd.f32 %v670, %v1122
        %v1423 = vadd.f32 %v669, %v1126
        %v1424 = vadd.f32 %v670, %v1126
        %v1425 = vadd.f32 %v669, %v1130
        %v1426 = vadd.f32 %v670, %v1130
        %v1427 = vadd.f32 %v669, %v1134
        %v1428 = vadd.f32 %v670, %v1134
        %v1429 = vadd.f32 %v669, %v1138
        %v1430 = vadd.f32 %v670, %v1138
        %v1431 = vadd.f32 %v669, %v1142
        %v1432 = vadd.f32 %v670, %v1142
        %v1433 = vadd.f32 %v669, %v1146
        %v1434 = vadd.f32 %v670, %v1146
        %v1435 = vadd.f32 %v671, %v1150
        %v1436 = vadd.f32 %v672, %v1150
        %v1437 = vadd.f32 %v671, %v1154
        %v1438 = vadd.f32 %v672, %v1154
        %v1439 = vadd.f32 %v671, %v1158
        %v1440 = vadd.f32 %v672, %v1158
        %v1441 = vadd.f32 %v671, %v1162
        %v1442 = vadd.f32 %v672, %v1162
        %v1443 = vadd.f32 %v671, %v1166
        %v1444 = vadd.f32 %v672, %v1166
        %v1445 = vadd.f32 %v671, %v1170
        %v1446 = vadd.f32 %v672, %v1170
        %v1447 = vadd.f32 %v671, %v1174
        %v1448 = vadd.f32 %v672, %v1174
        %v1449 = vadd.f32 %v671, %v1178
        %v1450 = vadd.f32 %v672, %v1178
        %v1451 = vadd.f32 %v673, %v1182
        %v1452 = vadd.f32 %v674, %v1182
        %v1453 = vadd.f32 %v673, %v1186
        %v1454 = vadd.f32 %v674, %v1186
        %v1455 = vadd.f32 %v673, %v1190
        %v1456 = vadd.f32 %v674, %v1190
        %v1457 = vadd.f32 %v673, %v1194
        %v1458 = vadd.f32 %v674, %v1194
        %v1459 = vadd.f32 %v673, %v1198
        %v1460 = vadd.f32 %v674, %v1198
        %v1461 = vadd.f32 %v673, %v1202
        %v1462 = vadd.f32 %v674, %v1202
        %v1463 = vadd.f32 %v673, %v1206
        %v1464 = vadd.f32 %v674, %v1206
        %v1465 = vadd.f32 %v673, %v1210
        %v1466 = vadd.f32 %v674, %v1210
        %v1467 = vadd.f32 %v675, %v1214
        %v1468 = vadd.f32 %v676, %v1214
        %v1469 = vadd.f32 %v675, %v1218
        %v1470 = vadd.f32 %v676, %v1218
        %v1471 = vadd.f32 %v675, %v1222
        %v1472 = vadd.f32 %v676, %v1222
        %v1473 = vadd.f32 %v675, %v1226
        %v1474 = vadd.f32 %v676, %v1226
        %v1475 = vadd.f32 %v675, %v1230
        %v1476 = vadd.f32 %v676, %v1230
        %v1477 = vadd.f32 %v675, %v1234
        %v1478 = vadd.f32 %v676, %v1234
        %v1479 = vadd.f32 %v675, %v1238
        %v1480 = vadd.f32 %v676, %v1238
        %v1481 = vadd.f32 %v675, %v1242
        %v1482 = vadd.f32 %v676, %v1242
        %v1483 = vadd.f32 %v677, %v1246
        %v1484 = vadd.f32 %v678, %v1246
        %v1485 = vadd.f32 %v677, %v1250
        %v1486 = vadd.f32 %v678, %v1250
        %v1487 = vadd.f32 %v677, %v1254
        %v1488 = vadd.f32 %v678, %v1254
        %v1489 = vadd.f32 %v677, %v1258
        %v1490 = vadd.f32 %v678, %v1258
        %v1491 = vadd.f32 %v677, %v1262
        %v1492 = vadd.f32 %v678, %v1262
        %v1493 = vadd.f32 %v677, %v1266
        %v1494 = vadd.f32 %v678, %v1266
        %v1495 = vadd.f32 %v677, %v1270
        %v1496 = vadd.f32 %v678, %v1270
        %v1497 = vadd.f32 %v677, %v1274
        %v1498 = vadd.f32 %v678, %v1274
        %v1499 = vadd.f32 %v679, %v1278
        %v1500 = vadd.f32 %v680, %v1278
        %v1501 = vadd.f32 %v679, %v1282
        %v1502 = vadd.f32 %v680, %v1282
        %v1503 = vadd.f32 %v679, %v1286
        %v1504 = vadd.f32 %v680, %v1286
        %v1505 = vadd.f32 %v679, %v1290
        %v1506 = vadd.f32 %v680, %v1290
        %v1507 = vadd.f32 %v679, %v1294
        %v1508 = vadd.f32 %v680, %v1294
        %v1509 = vadd.f32 %v679, %v1298
        %v1510 = vadd.f32 %v680, %v1298
        %v1511 = vadd.f32 %v679, %v1302
        %v1512 = vadd.f32 %v680, %v1302
        %v1513 = vadd.f32 %v679, %v1306
        %v1514 = vadd.f32 %v680, %v1306
        %v1515 = vadd.f32 %v681, %v1310
        %v1516 = vadd.f32 %v682, %v1310
        %v1517 = vadd.f32 %v681, %v1314
        %v1518 = vadd.f32 %v682, %v1314
        %v1519 = vadd.f32 %v681, %v1318
        %v1520 = vadd.f32 %v682, %v1318
        %v1521 = vadd.f32 %v681, %v1322
        %v1522 = vadd.f32 %v682, %v1322
        %v1523 = vadd.f32 %v681, %v1326
        %v1524 = vadd.f32 %v682, %v1326
        %v1525 = vadd.f32 %v681, %v1330
        %v1526 = vadd.f32 %v682, %v1330
        %v1527 = vadd.f32 %v681, %v1334
        %v1528 = vadd.f32 %v682, %v1334
        %v1529 = vadd.f32 %v681, %v1338
        %v1530 = vadd.f32 %v682, %v1338
        %v1531 = vtanh.pop %v1403
        %v1532 = vtanh.pop %v1404
        %v1533 = vtanh.pop %v1405
        %v1534 = vtanh.pop %v1406
        %v1535 = vtanh.pop %v1407
        %v1536 = vtanh.pop %v1408
        %v1537 = vtanh.pop %v1409
        %v1538 = vtanh.pop %v1410
        %v1539 = vtanh.pop %v1411
        %v1540 = vtanh.pop %v1412
        %v1541 = vtanh.pop %v1413
        %v1542 = vtanh.pop %v1414
        %v1543 = vtanh.pop %v1415
        %v1544 = vtanh.pop %v1416
        %v1545 = vtanh.pop %v1417
        %v1546 = vtanh.pop %v1418
        %v1547 = vtanh.pop %v1419
        %v1548 = vtanh.pop %v1420
        %v1549 = vtanh.pop %v1421
        %v1550 = vtanh.pop %v1422
        %v1551 = vtanh.pop %v1423
        %v1552 = vtanh.pop %v1424
        %v1553 = vtanh.pop %v1425
        %v1554 = vtanh.pop %v1426
        %v1555 = vtanh.pop %v1427
        %v1556 = vtanh.pop %v1428
        %v1557 = vtanh.pop %v1429
        %v1558 = vtanh.pop %v1430
        %v1559 = vtanh.pop %v1431
        %v1560 = vtanh.pop %v1432
        %v1561 = vtanh.pop %v1433
        %v1562 = vtanh.pop %v1434
        %v1563 = vtanh.pop %v1435
        %v1564 = vtanh.pop %v1436
        %v1565 = vtanh.pop %v1437
        %v1566 = vtanh.pop %v1438
        %v1567 = vtanh.pop %v1439
        %v1568 = vtanh.pop %v1440
        %v1569 = vtanh.pop %v1441
        %v1570 = vtanh.pop %v1442
        %v1571 = vtanh.pop %v1443
        %v1572 = vtanh.pop %v1444
        %v1573 = vtanh.pop %v1445
        %v1574 = vtanh.pop %v1446
        %v1575 = vtanh.pop %v1447
        %v1576 = vtanh.pop %v1448
        %v1577 = vtanh.pop %v1449
        %v1578 = vtanh.pop %v1450
        %v1579 = vtanh.pop %v1451
        %v1580 = vtanh.pop %v1452
        %v1581 = vtanh.pop %v1453
        %v1582 = vtanh.pop %v1454
        %v1583 = vtanh.pop %v1455
        %v1584 = vtanh.pop %v1456
        %v1585 = vtanh.pop %v1457
        %v1586 = vtanh.pop %v1458
        %v1587 = vtanh.pop %v1459
        %v1588 = vtanh.pop %v1460
        %v1589 = vtanh.pop %v1461
        %v1590 = vtanh.pop %v1462
        %v1591 = vtanh.pop %v1463
        %v1592 = vtanh.pop %v1464
        %v1593 = vtanh.pop %v1465
        %v1594 = vtanh.pop %v1466
        %v1595 = vtanh.pop %v1467
        %v1596 = vtanh.pop %v1468
        %v1597 = vtanh.pop %v1469
        %v1598 = vtanh.pop %v1470
        %v1599 = vtanh.pop %v1471
        %v1600 = vtanh.pop %v1472
        %v1601 = vtanh.pop %v1473
        %v1602 = vtanh.pop %v1474
        %v1603 = vtanh.pop %v1475
        %v1604 = vtanh.pop %v1476
        %v1605 = vtanh.pop %v1477
        %v1606 = vtanh.pop %v1478
        %v1607 = vtanh.pop %v1479
        %v1608 = vtanh.pop %v1480
        %v1609 = vtanh.pop %v1481
        %v1610 = vtanh.pop %v1482
        %v1611 = vtanh.pop %v1483
        %v1612 = vtanh.pop %v1484
        %v1613 = vtanh.pop %v1485
        %v1614 = vtanh.pop %v1486
        %v1615 = vtanh.pop %v1487
        %v1616 = vtanh.pop %v1488
        %v1617 = vtanh.pop %v1489
        %v1618 = vtanh.pop %v1490
        %v1619 = vtanh.pop %v1491
        %v1620 = vtanh.pop %v1492
        %v1621 = vtanh.pop %v1493
        %v1622 = vtanh.pop %v1494
        %v1623 = vtanh.pop %v1495
        %v1624 = vtanh.pop %v1496
        %v1625 = vtanh.pop %v1497
        %v1626 = vtanh.pop %v1498
        %v1627 = vtanh.pop %v1499
        %v1628 = vtanh.pop %v1500
        %v1629 = vtanh.pop %v1501
        %v1630 = vtanh.pop %v1502
        %v1631 = vtanh.pop %v1503
        %v1632 = vtanh.pop %v1504
        %v1633 = vtanh.pop %v1505
        %v1634 = vtanh.pop %v1506
        %v1635 = vtanh.pop %v1507
        %v1636 = vtanh.pop %v1508
        %v1637 = vtanh.pop %v1509
        %v1638 = vtanh.pop %v1510
        %v1639 = vtanh.pop %v1511
        %v1640 = vtanh.pop %v1512
        %v1641 = vtanh.pop %v1513
        %v1642 = vtanh.pop %v1514
        %v1643 = vtanh.pop %v1515
        %v1644 = vtanh.pop %v1516
        %v1645 = vtanh.pop %v1517
        %v1646 = vtanh.pop %v1518
        %v1647 = vtanh.pop %v1519
        %v1648 = vtanh.pop %v1520
        %v1649 = vtanh.pop %v1521
        %v1650 = vtanh.pop %v1522
        %v1651 = vtanh.pop %v1523
        %v1652 = vtanh.pop %v1524
        %v1653 = vtanh.pop %v1525
        %v1654 = vtanh.pop %v1526
        %v1655 = vtanh.pop %v1527
        %v1656 = vtanh.pop %v1528
        %v1657 = vtanh.pop %v1529
        %v1658 = vtanh.pop %v1530
        %v1659 = vld [vmem:[#allocation8] sm:$0xff]
        %v1661 = vcombine.high %v1659, %v1659
        %v1663 = vunpack.c.l.s4 1966171168
        %v1664 = vunpack.c.0.s8 %v1663
        %v1665 = vlaneseq
        %v1666 = vshrl.u32 %v1665, 7
        %v1667 = vsub.s32 %v1664, %v1666
        %v1668 = vrot.slane %v1659, %v1667
        %v1670 = vunpack.c.l.s4 1966171168
        %v1671 = vunpack.c.0.s8 %v1670
        %v1672 = vlaneseq
        %v1673 = vshrl.u32 %v1672, 7
        %v1674 = vsub.s32 %v1671, %v1673
        %v1675 = vrot.slane %v1661, %v1674
        %v1676 = vcombine.high %v1668, %v1668
        %v1677 = vcombine.high %v1675, %v1675
        %v1679 = vunpack.c.l.s4 1966171168
        %v1680 = vunpack.c.0.s8 %v1679
        %v1681 = vlaneseq
        %v1682 = vshrl.u32 %v1681, 7
        %v1683 = vsub.s32 %v1680, %v1682
        %v1684 = vrot.slane %v1668, %v1683
        %v1686 = vunpack.c.l.s4 1966171168
        %v1687 = vunpack.c.0.s8 %v1686
        %v1688 = vlaneseq
        %v1689 = vshrl.u32 %v1688, 7
        %v1690 = vsub.s32 %v1687, %v1689
        %v1691 = vrot.slane %v1675, %v1690
        %v1693 = vunpack.c.l.s4 1966171168
        %v1694 = vunpack.c.0.s8 %v1693
        %v1695 = vlaneseq
        %v1696 = vshrl.u32 %v1695, 7
        %v1697 = vsub.s32 %v1694, %v1696
        %v1698 = vrot.slane %v1676, %v1697
        %v1700 = vunpack.c.l.s4 1966171168
        %v1701 = vunpack.c.0.s8 %v1700
        %v1702 = vlaneseq
        %v1703 = vshrl.u32 %v1702, 7
        %v1704 = vsub.s32 %v1701, %v1703
        %v1705 = vrot.slane %v1677, %v1704
        %v1706 = vcombine.high %v1684, %v1684
        %v1707 = vcombine.high %v1691, %v1691
        %v1708 = vcombine.high %v1698, %v1698
        %v1709 = vcombine.high %v1705, %v1705
        %v1710 = vlaneseq
        %v1711 = vshrl.u32 %v1710, 7
        %v1712 = vsub.s32 0, %v1711
        %v1713 = vrot.slane %v1684, %v1712
        %v1714 = vlaneseq
        %v1715 = vshrl.u32 %v1714, 7
        %v1716 = vsub.s32 0, %v1715
        %v1717 = vrot.slane %v1698, %v1716
        %v1718 = vlaneseq
        %v1719 = vshrl.u32 %v1718, 7
        %v1720 = vsub.s32 0, %v1719
        %v1721 = vrot.slane %v1706, %v1720
        %v1722 = vlaneseq
        %v1723 = vshrl.u32 %v1722, 7
        %v1724 = vsub.s32 0, %v1723
        %v1725 = vrot.slane %v1708, %v1724
        %v1726 = vlaneseq
        %v1727 = vshrl.u32 %v1726, 7
        %v1728 = vsub.s32 0, %v1727
        %v1729 = vrot.slane %v1691, %v1728
        %v1730 = vlaneseq
        %v1731 = vshrl.u32 %v1730, 7
        %v1732 = vsub.s32 0, %v1731
        %v1733 = vrot.slane %v1705, %v1732
        %v1734 = vlaneseq
        %v1735 = vshrl.u32 %v1734, 7
        %v1736 = vsub.s32 0, %v1735
        %v1737 = vrot.slane %v1707, %v1736
        %v1738 = vlaneseq
        %v1739 = vshrl.u32 %v1738, 7
        %v1740 = vsub.s32 0, %v1739
        %v1741 = vrot.slane %v1709, %v1740
        %v1750 = vmul.f32 %v1531, %v1713
        %v1751 = vmul.f32 %v1532, %v1713
        %v1752 = vmul.f32 %v1533, %v1713
        %v1753 = vmul.f32 %v1534, %v1713
        %v1754 = vmul.f32 %v1535, %v1713
        %v1755 = vmul.f32 %v1536, %v1713
        %v1756 = vmul.f32 %v1537, %v1713
        %v1757 = vmul.f32 %v1538, %v1713
        %v1758 = vmul.f32 %v1539, %v1713
        %v1759 = vmul.f32 %v1540, %v1713
        %v1760 = vmul.f32 %v1541, %v1713
        %v1761 = vmul.f32 %v1542, %v1713
        %v1762 = vmul.f32 %v1543, %v1713
        %v1763 = vmul.f32 %v1544, %v1713
        %v1764 = vmul.f32 %v1545, %v1713
        %v1765 = vmul.f32 %v1546, %v1713
        %v1766 = vmul.f32 %v1547, %v1717
        %v1767 = vmul.f32 %v1548, %v1717
        %v1768 = vmul.f32 %v1549, %v1717
        %v1769 = vmul.f32 %v1550, %v1717
        %v1770 = vmul.f32 %v1551, %v1717
        %v1771 = vmul.f32 %v1552, %v1717
        %v1772 = vmul.f32 %v1553, %v1717
        %v1773 = vmul.f32 %v1554, %v1717
        %v1774 = vmul.f32 %v1555, %v1717
        %v1775 = vmul.f32 %v1556, %v1717
        %v1776 = vmul.f32 %v1557, %v1717
        %v1777 = vmul.f32 %v1558, %v1717
        %v1778 = vmul.f32 %v1559, %v1717
        %v1779 = vmul.f32 %v1560, %v1717
        %v1780 = vmul.f32 %v1561, %v1717
        %v1781 = vmul.f32 %v1562, %v1717
        %v1782 = vmul.f32 %v1563, %v1721
        %v1783 = vmul.f32 %v1564, %v1721
        %v1784 = vmul.f32 %v1565, %v1721
        %v1785 = vmul.f32 %v1566, %v1721
        %v1786 = vmul.f32 %v1567, %v1721
        %v1787 = vmul.f32 %v1568, %v1721
        %v1788 = vmul.f32 %v1569, %v1721
        %v1789 = vmul.f32 %v1570, %v1721
        %v1790 = vmul.f32 %v1571, %v1721
        %v1791 = vmul.f32 %v1572, %v1721
        %v1792 = vmul.f32 %v1573, %v1721
        %v1793 = vmul.f32 %v1574, %v1721
        %v1794 = vmul.f32 %v1575, %v1721
        %v1795 = vmul.f32 %v1576, %v1721
        %v1796 = vmul.f32 %v1577, %v1721
        %v1797 = vmul.f32 %v1578, %v1721
        %v1798 = vmul.f32 %v1579, %v1725
        %v1799 = vmul.f32 %v1580, %v1725
        %v1800 = vmul.f32 %v1581, %v1725
        %v1801 = vmul.f32 %v1582, %v1725
        %v1802 = vmul.f32 %v1583, %v1725
        %v1803 = vmul.f32 %v1584, %v1725
        %v1804 = vmul.f32 %v1585, %v1725
        %v1805 = vmul.f32 %v1586, %v1725
        %v1806 = vmul.f32 %v1587, %v1725
        %v1807 = vmul.f32 %v1588, %v1725
        %v1808 = vmul.f32 %v1589, %v1725
        %v1809 = vmul.f32 %v1590, %v1725
        %v1810 = vmul.f32 %v1591, %v1725
        %v1811 = vmul.f32 %v1592, %v1725
        %v1812 = vmul.f32 %v1593, %v1725
        %v1813 = vmul.f32 %v1594, %v1725
        %v1814 = vmul.f32 %v1595, %v1729
        %v1815 = vmul.f32 %v1596, %v1729
        %v1816 = vmul.f32 %v1597, %v1729
        %v1817 = vmul.f32 %v1598, %v1729
        %v1818 = vmul.f32 %v1599, %v1729
        %v1819 = vmul.f32 %v1600, %v1729
        %v1820 = vmul.f32 %v1601, %v1729
        %v1821 = vmul.f32 %v1602, %v1729
        %v1822 = vmul.f32 %v1603, %v1729
        %v1823 = vmul.f32 %v1604, %v1729
        %v1824 = vmul.f32 %v1605, %v1729
        %v1825 = vmul.f32 %v1606, %v1729
        %v1826 = vmul.f32 %v1607, %v1729
        %v1827 = vmul.f32 %v1608, %v1729
        %v1828 = vmul.f32 %v1609, %v1729
        %v1829 = vmul.f32 %v1610, %v1729
        %v1830 = vmul.f32 %v1611, %v1733
        %v1831 = vmul.f32 %v1612, %v1733
        %v1832 = vmul.f32 %v1613, %v1733
        %v1833 = vmul.f32 %v1614, %v1733
        %v1834 = vmul.f32 %v1615, %v1733
        %v1835 = vmul.f32 %v1616, %v1733
        %v1836 = vmul.f32 %v1617, %v1733
        %v1837 = vmul.f32 %v1618, %v1733
        %v1838 = vmul.f32 %v1619, %v1733
        %v1839 = vmul.f32 %v1620, %v1733
        %v1840 = vmul.f32 %v1621, %v1733
        %v1841 = vmul.f32 %v1622, %v1733
        %v1842 = vmul.f32 %v1623, %v1733
        %v1843 = vmul.f32 %v1624, %v1733
        %v1844 = vmul.f32 %v1625, %v1733
        %v1845 = vmul.f32 %v1626, %v1733
        %v1846 = vmul.f32 %v1627, %v1737
        %v1847 = vmul.f32 %v1628, %v1737
        %v1848 = vmul.f32 %v1629, %v1737
        %v1849 = vmul.f32 %v1630, %v1737
        %v1850 = vmul.f32 %v1631, %v1737
        %v1851 = vmul.f32 %v1632, %v1737
        %v1852 = vmul.f32 %v1633, %v1737
        %v1853 = vmul.f32 %v1634, %v1737
        %v1854 = vmul.f32 %v1635, %v1737
        %v1855 = vmul.f32 %v1636, %v1737
        %v1856 = vmul.f32 %v1637, %v1737
        %v1857 = vmul.f32 %v1638, %v1737
        %v1858 = vmul.f32 %v1639, %v1737
        %v1859 = vmul.f32 %v1640, %v1737
        %v1860 = vmul.f32 %v1641, %v1737
        %v1861 = vmul.f32 %v1642, %v1737
        %v1862 = vmul.f32 %v1643, %v1741
        %v1863 = vmul.f32 %v1644, %v1741
        %v1864 = vmul.f32 %v1645, %v1741
        %v1865 = vmul.f32 %v1646, %v1741
        %v1866 = vmul.f32 %v1647, %v1741
        %v1867 = vmul.f32 %v1648, %v1741
        %v1868 = vmul.f32 %v1649, %v1741
        %v1869 = vmul.f32 %v1650, %v1741
        %v1870 = vmul.f32 %v1651, %v1741
        %v1871 = vmul.f32 %v1652, %v1741
        %v1872 = vmul.f32 %v1653, %v1741
        %v1873 = vmul.f32 %v1654, %v1741
        %v1874 = vmul.f32 %v1655, %v1741
        %v1875 = vmul.f32 %v1656, %v1741
        %v1876 = vmul.f32 %v1657, %v1741
        %v1877 = vmul.f32 %v1658, %v1741
        %vm1878 = vcmask 261120
        %v1879 = vsel %vm1878, %v1750, 0.0
        %1880 = vadd.xlane.f32.xlu0 %v1879
        %v1881 = vpop.xlane.xlu0 %1880
        %v1882 = vsel %vm1878, %v1751, 0.0
        %1883 = vadd.xlane.f32.xlu0 %v1882
        %v1884 = vpop.xlane.xlu0 %1883
        %v1885 = vsel %vm1878, %v1752, 0.0
        %1886 = vadd.xlane.f32.xlu0 %v1885
        %v1887 = vpop.xlane.xlu0 %1886
        %v1888 = vsel %vm1878, %v1753, 0.0
        %1889 = vadd.xlane.f32.xlu0 %v1888
        %v1890 = vpop.xlane.xlu0 %1889
        %v1891 = vsel %vm1878, %v1754, 0.0
        %1892 = vadd.xlane.f32.xlu0 %v1891
        %v1893 = vpop.xlane.xlu0 %1892
        %v1894 = vsel %vm1878, %v1755, 0.0
        %1895 = vadd.xlane.f32.xlu0 %v1894
        %v1896 = vpop.xlane.xlu0 %1895
        %v1897 = vsel %vm1878, %v1756, 0.0
        %1898 = vadd.xlane.f32.xlu0 %v1897
        %v1899 = vpop.xlane.xlu0 %1898
        %v1900 = vsel %vm1878, %v1757, 0.0
        %1901 = vadd.xlane.f32.xlu0 %v1900
        %v1902 = vpop.xlane.xlu0 %1901
        %v1903 = vsel %vm1878, %v1758, 0.0
        %1904 = vadd.xlane.f32.xlu0 %v1903
        %v1905 = vpop.xlane.xlu0 %1904
        %v1906 = vsel %vm1878, %v1759, 0.0
        %1907 = vadd.xlane.f32.xlu0 %v1906
        %v1908 = vpop.xlane.xlu0 %1907
        %v1909 = vsel %vm1878, %v1760, 0.0
        %1910 = vadd.xlane.f32.xlu0 %v1909
        %v1911 = vpop.xlane.xlu0 %1910
        %v1912 = vsel %vm1878, %v1761, 0.0
        %1913 = vadd.xlane.f32.xlu0 %v1912
        %v1914 = vpop.xlane.xlu0 %1913
        %v1915 = vsel %vm1878, %v1762, 0.0
        %1916 = vadd.xlane.f32.xlu0 %v1915
        %v1917 = vpop.xlane.xlu0 %1916
        %v1918 = vsel %vm1878, %v1763, 0.0
        %1919 = vadd.xlane.f32.xlu0 %v1918
        %v1920 = vpop.xlane.xlu0 %1919
        %v1921 = vsel %vm1878, %v1764, 0.0
        %1922 = vadd.xlane.f32.xlu0 %v1921
        %v1923 = vpop.xlane.xlu0 %1922
        %v1924 = vsel %vm1878, %v1765, 0.0
        %1925 = vadd.xlane.f32.xlu0 %v1924
        %v1926 = vpop.xlane.xlu0 %1925
        %v1927 = vsel %vm1878, %v1766, 0.0
        %1928 = vadd.xlane.f32.xlu0 %v1927
        %v1929 = vpop.xlane.xlu0 %1928
        %v1930 = vsel %vm1878, %v1767, 0.0
        %1931 = vadd.xlane.f32.xlu0 %v1930
        %v1932 = vpop.xlane.xlu0 %1931
        %v1933 = vsel %vm1878, %v1768, 0.0
        %1934 = vadd.xlane.f32.xlu0 %v1933
        %v1935 = vpop.xlane.xlu0 %1934
        %v1936 = vsel %vm1878, %v1769, 0.0
        %1937 = vadd.xlane.f32.xlu0 %v1936
        %v1938 = vpop.xlane.xlu0 %1937
        %v1939 = vsel %vm1878, %v1770, 0.0
        %1940 = vadd.xlane.f32.xlu0 %v1939
        %v1941 = vpop.xlane.xlu0 %1940
        %v1942 = vsel %vm1878, %v1771, 0.0
        %1943 = vadd.xlane.f32.xlu0 %v1942
        %v1944 = vpop.xlane.xlu0 %1943
        %v1945 = vsel %vm1878, %v1772, 0.0
        %1946 = vadd.xlane.f32.xlu0 %v1945
        %v1947 = vpop.xlane.xlu0 %1946
        %v1948 = vsel %vm1878, %v1773, 0.0
        %1949 = vadd.xlane.f32.xlu0 %v1948
        %v1950 = vpop.xlane.xlu0 %1949
        %v1951 = vsel %vm1878, %v1774, 0.0
        %1952 = vadd.xlane.f32.xlu0 %v1951
        %v1953 = vpop.xlane.xlu0 %1952
        %v1954 = vsel %vm1878, %v1775, 0.0
        %1955 = vadd.xlane.f32.xlu0 %v1954
        %v1956 = vpop.xlane.xlu0 %1955
        %v1957 = vsel %vm1878, %v1776, 0.0
        %1958 = vadd.xlane.f32.xlu0 %v1957
        %v1959 = vpop.xlane.xlu0 %1958
        %v1960 = vsel %vm1878, %v1777, 0.0
        %1961 = vadd.xlane.f32.xlu0 %v1960
        %v1962 = vpop.xlane.xlu0 %1961
        %v1963 = vsel %vm1878, %v1778, 0.0
        %1964 = vadd.xlane.f32.xlu0 %v1963
        %v1965 = vpop.xlane.xlu0 %1964
        %v1966 = vsel %vm1878, %v1779, 0.0
        %1967 = vadd.xlane.f32.xlu0 %v1966
        %v1968 = vpop.xlane.xlu0 %1967
        %v1969 = vsel %vm1878, %v1780, 0.0
        %1970 = vadd.xlane.f32.xlu0 %v1969
        %v1971 = vpop.xlane.xlu0 %1970
        %v1972 = vsel %vm1878, %v1781, 0.0
        %1973 = vadd.xlane.f32.xlu0 %v1972
        %v1974 = vpop.xlane.xlu0 %1973
        %v1975 = vsel %vm1878, %v1782, 0.0
        %1976 = vadd.xlane.f32.xlu0 %v1975
        %v1977 = vpop.xlane.xlu0 %1976
        %v1978 = vsel %vm1878, %v1783, 0.0
        %1979 = vadd.xlane.f32.xlu0 %v1978
        %v1980 = vpop.xlane.xlu0 %1979
        %v1981 = vsel %vm1878, %v1784, 0.0
        %1982 = vadd.xlane.f32.xlu0 %v1981
        %v1983 = vpop.xlane.xlu0 %1982
        %v1984 = vsel %vm1878, %v1785, 0.0
        %1985 = vadd.xlane.f32.xlu0 %v1984
        %v1986 = vpop.xlane.xlu0 %1985
        %v1987 = vsel %vm1878, %v1786, 0.0
        %1988 = vadd.xlane.f32.xlu0 %v1987
        %v1989 = vpop.xlane.xlu0 %1988
        %v1990 = vsel %vm1878, %v1787, 0.0
        %1991 = vadd.xlane.f32.xlu0 %v1990
        %v1992 = vpop.xlane.xlu0 %1991
        %v1993 = vsel %vm1878, %v1788, 0.0
        %1994 = vadd.xlane.f32.xlu0 %v1993
        %v1995 = vpop.xlane.xlu0 %1994
        %v1996 = vsel %vm1878, %v1789, 0.0
        %1997 = vadd.xlane.f32.xlu0 %v1996
        %v1998 = vpop.xlane.xlu0 %1997
        %v1999 = vsel %vm1878, %v1790, 0.0
        %2000 = vadd.xlane.f32.xlu0 %v1999
        %v2001 = vpop.xlane.xlu0 %2000
        %v2002 = vsel %vm1878, %v1791, 0.0
        %2003 = vadd.xlane.f32.xlu0 %v2002
        %v2004 = vpop.xlane.xlu0 %2003
        %v2005 = vsel %vm1878, %v1792, 0.0
        %2006 = vadd.xlane.f32.xlu0 %v2005
        %v2007 = vpop.xlane.xlu0 %2006
        %v2008 = vsel %vm1878, %v1793, 0.0
        %2009 = vadd.xlane.f32.xlu0 %v2008
        %v2010 = vpop.xlane.xlu0 %2009
        %v2011 = vsel %vm1878, %v1794, 0.0
        %2012 = vadd.xlane.f32.xlu0 %v2011
        %v2013 = vpop.xlane.xlu0 %2012
        %v2014 = vsel %vm1878, %v1795, 0.0
        %2015 = vadd.xlane.f32.xlu0 %v2014
        %v2016 = vpop.xlane.xlu0 %2015
        %v2017 = vsel %vm1878, %v1796, 0.0
        %2018 = vadd.xlane.f32.xlu0 %v2017
        %v2019 = vpop.xlane.xlu0 %2018
        %v2020 = vsel %vm1878, %v1797, 0.0
        %2021 = vadd.xlane.f32.xlu0 %v2020
        %v2022 = vpop.xlane.xlu0 %2021
        %v2023 = vsel %vm1878, %v1798, 0.0
        %2024 = vadd.xlane.f32.xlu0 %v2023
        %v2025 = vpop.xlane.xlu0 %2024
        %v2026 = vsel %vm1878, %v1799, 0.0
        %2027 = vadd.xlane.f32.xlu0 %v2026
        %v2028 = vpop.xlane.xlu0 %2027
        %v2029 = vsel %vm1878, %v1800, 0.0
        %2030 = vadd.xlane.f32.xlu0 %v2029
        %v2031 = vpop.xlane.xlu0 %2030
        %v2032 = vsel %vm1878, %v1801, 0.0
        %2033 = vadd.xlane.f32.xlu0 %v2032
        %v2034 = vpop.xlane.xlu0 %2033
        %v2035 = vsel %vm1878, %v1802, 0.0
        %2036 = vadd.xlane.f32.xlu0 %v2035
        %v2037 = vpop.xlane.xlu0 %2036
        %v2038 = vsel %vm1878, %v1803, 0.0
        %2039 = vadd.xlane.f32.xlu0 %v2038
        %v2040 = vpop.xlane.xlu0 %2039
        %v2041 = vsel %vm1878, %v1804, 0.0
        %2042 = vadd.xlane.f32.xlu0 %v2041
        %v2043 = vpop.xlane.xlu0 %2042
        %v2044 = vsel %vm1878, %v1805, 0.0
        %2045 = vadd.xlane.f32.xlu0 %v2044
        %v2046 = vpop.xlane.xlu0 %2045
        %v2047 = vsel %vm1878, %v1806, 0.0
        %2048 = vadd.xlane.f32.xlu0 %v2047
        %v2049 = vpop.xlane.xlu0 %2048
        %v2050 = vsel %vm1878, %v1807, 0.0
        %2051 = vadd.xlane.f32.xlu0 %v2050
        %v2052 = vpop.xlane.xlu0 %2051
        %v2053 = vsel %vm1878, %v1808, 0.0
        %2054 = vadd.xlane.f32.xlu0 %v2053
        %v2055 = vpop.xlane.xlu0 %2054
        %v2056 = vsel %vm1878, %v1809, 0.0
        %2057 = vadd.xlane.f32.xlu0 %v2056
        %v2058 = vpop.xlane.xlu0 %2057
        %v2059 = vsel %vm1878, %v1810, 0.0
        %2060 = vadd.xlane.f32.xlu0 %v2059
        %v2061 = vpop.xlane.xlu0 %2060
        %v2062 = vsel %vm1878, %v1811, 0.0
        %2063 = vadd.xlane.f32.xlu0 %v2062
        %v2064 = vpop.xlane.xlu0 %2063
        %v2065 = vsel %vm1878, %v1812, 0.0
        %2066 = vadd.xlane.f32.xlu0 %v2065
        %v2067 = vpop.xlane.xlu0 %2066
        %v2068 = vsel %vm1878, %v1813, 0.0
        %2069 = vadd.xlane.f32.xlu0 %v2068
        %v2070 = vpop.xlane.xlu0 %2069
        %v2071 = vsel %vm1878, %v1814, 0.0
        %2072 = vadd.xlane.f32.xlu0 %v2071
        %v2073 = vpop.xlane.xlu0 %2072
        %v2074 = vsel %vm1878, %v1815, 0.0
        %2075 = vadd.xlane.f32.xlu0 %v2074
        %v2076 = vpop.xlane.xlu0 %2075
        %v2077 = vsel %vm1878, %v1816, 0.0
        %2078 = vadd.xlane.f32.xlu0 %v2077
        %v2079 = vpop.xlane.xlu0 %2078
        %v2080 = vsel %vm1878, %v1817, 0.0
        %2081 = vadd.xlane.f32.xlu0 %v2080
        %v2082 = vpop.xlane.xlu0 %2081
        %v2083 = vsel %vm1878, %v1818, 0.0
        %2084 = vadd.xlane.f32.xlu0 %v2083
        %v2085 = vpop.xlane.xlu0 %2084
        %v2086 = vsel %vm1878, %v1819, 0.0
        %2087 = vadd.xlane.f32.xlu0 %v2086
        %v2088 = vpop.xlane.xlu0 %2087
        %v2089 = vsel %vm1878, %v1820, 0.0
        %2090 = vadd.xlane.f32.xlu0 %v2089
        %v2091 = vpop.xlane.xlu0 %2090
        %v2092 = vsel %vm1878, %v1821, 0.0
        %2093 = vadd.xlane.f32.xlu0 %v2092
        %v2094 = vpop.xlane.xlu0 %2093
        %v2095 = vsel %vm1878, %v1822, 0.0
        %2096 = vadd.xlane.f32.xlu0 %v2095
        %v2097 = vpop.xlane.xlu0 %2096
        %v2098 = vsel %vm1878, %v1823, 0.0
        %2099 = vadd.xlane.f32.xlu0 %v2098
        %v2100 = vpop.xlane.xlu0 %2099
        %v2101 = vsel %vm1878, %v1824, 0.0
        %2102 = vadd.xlane.f32.xlu0 %v2101
        %v2103 = vpop.xlane.xlu0 %2102
        %v2104 = vsel %vm1878, %v1825, 0.0
        %2105 = vadd.xlane.f32.xlu0 %v2104
        %v2106 = vpop.xlane.xlu0 %2105
        %v2107 = vsel %vm1878, %v1826, 0.0
        %2108 = vadd.xlane.f32.xlu0 %v2107
        %v2109 = vpop.xlane.xlu0 %2108
        %v2110 = vsel %vm1878, %v1827, 0.0
        %2111 = vadd.xlane.f32.xlu0 %v2110
        %v2112 = vpop.xlane.xlu0 %2111
        %v2113 = vsel %vm1878, %v1828, 0.0
        %2114 = vadd.xlane.f32.xlu0 %v2113
        %v2115 = vpop.xlane.xlu0 %2114
        %v2116 = vsel %vm1878, %v1829, 0.0
        %2117 = vadd.xlane.f32.xlu0 %v2116
        %v2118 = vpop.xlane.xlu0 %2117
        %v2119 = vsel %vm1878, %v1830, 0.0
        %2120 = vadd.xlane.f32.xlu0 %v2119
        %v2121 = vpop.xlane.xlu0 %2120
        %v2122 = vsel %vm1878, %v1831, 0.0
        %2123 = vadd.xlane.f32.xlu0 %v2122
        %v2124 = vpop.xlane.xlu0 %2123
        %v2125 = vsel %vm1878, %v1832, 0.0
        %2126 = vadd.xlane.f32.xlu0 %v2125
        %v2127 = vpop.xlane.xlu0 %2126
        %v2128 = vsel %vm1878, %v1833, 0.0
        %2129 = vadd.xlane.f32.xlu0 %v2128
        %v2130 = vpop.xlane.xlu0 %2129
        %v2131 = vsel %vm1878, %v1834, 0.0
        %2132 = vadd.xlane.f32.xlu0 %v2131
        %v2133 = vpop.xlane.xlu0 %2132
        %v2134 = vsel %vm1878, %v1835, 0.0
        %2135 = vadd.xlane.f32.xlu0 %v2134
        %v2136 = vpop.xlane.xlu0 %2135
        %v2137 = vsel %vm1878, %v1836, 0.0
        %2138 = vadd.xlane.f32.xlu0 %v2137
        %v2139 = vpop.xlane.xlu0 %2138
        %v2140 = vsel %vm1878, %v1837, 0.0
        %2141 = vadd.xlane.f32.xlu0 %v2140
        %v2142 = vpop.xlane.xlu0 %2141
        %v2143 = vsel %vm1878, %v1838, 0.0
        %2144 = vadd.xlane.f32.xlu0 %v2143
        %v2145 = vpop.xlane.xlu0 %2144
        %v2146 = vsel %vm1878, %v1839, 0.0
        %2147 = vadd.xlane.f32.xlu0 %v2146
        %v2148 = vpop.xlane.xlu0 %2147
        %v2149 = vsel %vm1878, %v1840, 0.0
        %2150 = vadd.xlane.f32.xlu0 %v2149
        %v2151 = vpop.xlane.xlu0 %2150
        %v2152 = vsel %vm1878, %v1841, 0.0
        %2153 = vadd.xlane.f32.xlu0 %v2152
        %v2154 = vpop.xlane.xlu0 %2153
        %v2155 = vsel %vm1878, %v1842, 0.0
        %2156 = vadd.xlane.f32.xlu0 %v2155
        %v2157 = vpop.xlane.xlu0 %2156
        %v2158 = vsel %vm1878, %v1843, 0.0
        %2159 = vadd.xlane.f32.xlu0 %v2158
        %v2160 = vpop.xlane.xlu0 %2159
        %v2161 = vsel %vm1878, %v1844, 0.0
        %2162 = vadd.xlane.f32.xlu0 %v2161
        %v2163 = vpop.xlane.xlu0 %2162
        %v2164 = vsel %vm1878, %v1845, 0.0
        %2165 = vadd.xlane.f32.xlu0 %v2164
        %v2166 = vpop.xlane.xlu0 %2165
        %v2167 = vsel %vm1878, %v1846, 0.0
        %2168 = vadd.xlane.f32.xlu0 %v2167
        %v2169 = vpop.xlane.xlu0 %2168
        %v2170 = vsel %vm1878, %v1847, 0.0
        %2171 = vadd.xlane.f32.xlu0 %v2170
        %v2172 = vpop.xlane.xlu0 %2171
        %v2173 = vsel %vm1878, %v1848, 0.0
        %2174 = vadd.xlane.f32.xlu0 %v2173
        %v2175 = vpop.xlane.xlu0 %2174
        %v2176 = vsel %vm1878, %v1849, 0.0
        %2177 = vadd.xlane.f32.xlu0 %v2176
        %v2178 = vpop.xlane.xlu0 %2177
        %v2179 = vsel %vm1878, %v1850, 0.0
        %2180 = vadd.xlane.f32.xlu0 %v2179
        %v2181 = vpop.xlane.xlu0 %2180
        %v2182 = vsel %vm1878, %v1851, 0.0
        %2183 = vadd.xlane.f32.xlu0 %v2182
        %v2184 = vpop.xlane.xlu0 %2183
        %v2185 = vsel %vm1878, %v1852, 0.0
        %2186 = vadd.xlane.f32.xlu0 %v2185
        %v2187 = vpop.xlane.xlu0 %2186
        %v2188 = vsel %vm1878, %v1853, 0.0
        %2189 = vadd.xlane.f32.xlu0 %v2188
        %v2190 = vpop.xlane.xlu0 %2189
        %v2191 = vsel %vm1878, %v1854, 0.0
        %2192 = vadd.xlane.f32.xlu0 %v2191
        %v2193 = vpop.xlane.xlu0 %2192
        %v2194 = vsel %vm1878, %v1855, 0.0
        %2195 = vadd.xlane.f32.xlu0 %v2194
        %v2196 = vpop.xlane.xlu0 %2195
        %v2197 = vsel %vm1878, %v1856, 0.0
        %2198 = vadd.xlane.f32.xlu0 %v2197
        %v2199 = vpop.xlane.xlu0 %2198
        %v2200 = vsel %vm1878, %v1857, 0.0
        %2201 = vadd.xlane.f32.xlu0 %v2200
        %v2202 = vpop.xlane.xlu0 %2201
        %v2203 = vsel %vm1878, %v1858, 0.0
        %2204 = vadd.xlane.f32.xlu0 %v2203
        %v2205 = vpop.xlane.xlu0 %2204
        %v2206 = vsel %vm1878, %v1859, 0.0
        %2207 = vadd.xlane.f32.xlu0 %v2206
        %v2208 = vpop.xlane.xlu0 %2207
        %v2209 = vsel %vm1878, %v1860, 0.0
        %2210 = vadd.xlane.f32.xlu0 %v2209
        %v2211 = vpop.xlane.xlu0 %2210
        %v2212 = vsel %vm1878, %v1861, 0.0
        %2213 = vadd.xlane.f32.xlu0 %v2212
        %v2214 = vpop.xlane.xlu0 %2213
        %v2215 = vsel %vm1878, %v1862, 0.0
        %2216 = vadd.xlane.f32.xlu0 %v2215
        %v2217 = vpop.xlane.xlu0 %2216
        %v2218 = vsel %vm1878, %v1863, 0.0
        %2219 = vadd.xlane.f32.xlu0 %v2218
        %v2220 = vpop.xlane.xlu0 %2219
        %v2221 = vsel %vm1878, %v1864, 0.0
        %2222 = vadd.xlane.f32.xlu0 %v2221
        %v2223 = vpop.xlane.xlu0 %2222
        %v2224 = vsel %vm1878, %v1865, 0.0
        %2225 = vadd.xlane.f32.xlu0 %v2224
        %v2226 = vpop.xlane.xlu0 %2225
        %v2227 = vsel %vm1878, %v1866, 0.0
        %2228 = vadd.xlane.f32.xlu0 %v2227
        %v2229 = vpop.xlane.xlu0 %2228
        %v2230 = vsel %vm1878, %v1867, 0.0
        %2231 = vadd.xlane.f32.xlu0 %v2230
        %v2232 = vpop.xlane.xlu0 %2231
        %v2233 = vsel %vm1878, %v1868, 0.0
        %2234 = vadd.xlane.f32.xlu0 %v2233
        %v2235 = vpop.xlane.xlu0 %2234
        %v2236 = vsel %vm1878, %v1869, 0.0
        %2237 = vadd.xlane.f32.xlu0 %v2236
        %v2238 = vpop.xlane.xlu0 %2237
        %v2239 = vsel %vm1878, %v1870, 0.0
        %2240 = vadd.xlane.f32.xlu0 %v2239
        %v2241 = vpop.xlane.xlu0 %2240
        %v2242 = vsel %vm1878, %v1871, 0.0
        %2243 = vadd.xlane.f32.xlu0 %v2242
        %v2244 = vpop.xlane.xlu0 %2243
        %v2245 = vsel %vm1878, %v1872, 0.0
        %2246 = vadd.xlane.f32.xlu0 %v2245
        %v2247 = vpop.xlane.xlu0 %2246
        %v2248 = vsel %vm1878, %v1873, 0.0
        %2249 = vadd.xlane.f32.xlu0 %v2248
        %v2250 = vpop.xlane.xlu0 %2249
        %v2251 = vsel %vm1878, %v1874, 0.0
        %2252 = vadd.xlane.f32.xlu0 %v2251
        %v2253 = vpop.xlane.xlu0 %2252
        %v2254 = vsel %vm1878, %v1875, 0.0
        %2255 = vadd.xlane.f32.xlu0 %v2254
        %v2256 = vpop.xlane.xlu0 %2255
        %v2257 = vsel %vm1878, %v1876, 0.0
        %2258 = vadd.xlane.f32.xlu0 %v2257
        %v2259 = vpop.xlane.xlu0 %2258
        %v2260 = vsel %vm1878, %v1877, 0.0
        %2261 = vadd.xlane.f32.xlu0 %v2260
        %v2262 = vpop.xlane.xlu0 %2261
        %v2391 = vlaneseq
        %v2392 = vand.u32 %v2391, 127
        %v2393 = vlaneseq
        %v2394 = vshrl.u32 %v2393, 7
        %v2395 = vsub.s32 %v2392, %v2394
        %v2396 = vrot.slane %v1881, %v2395
        %v2397 = vadd.s32 %v2392, 4294967288
        %v2398 = vlaneseq
        %v2399 = vshrl.u32 %v2398, 7
        %v2400 = vsub.s32 %v2397, %v2399
        %v2401 = vrot.slane %v1884, %v2400
        %vm2402 = vcmask 130112
        %v2403 = vsel %vm2402, %v2401, %v2396
        %v2404 = vlaneseq
        %v2405 = vshrl.u32 %v2404, 7
        %v2406 = vsub.s32 %v2392, %v2405
        %v2407 = vrot.slane %v1887, %v2406
        %v2408 = vlaneseq
        %v2409 = vshrl.u32 %v2408, 7
        %v2410 = vsub.s32 %v2397, %v2409
        %v2411 = vrot.slane %v1890, %v2410
        %v2412 = vsel %vm2402, %v2411, %v2407
        %v2413 = vlaneseq
        %v2414 = vshrl.u32 %v2413, 7
        %v2415 = vsub.s32 %v2392, %v2414
        %v2416 = vrot.slane %v1893, %v2415
        %v2417 = vlaneseq
        %v2418 = vshrl.u32 %v2417, 7
        %v2419 = vsub.s32 %v2397, %v2418
        %v2420 = vrot.slane %v1896, %v2419
        %v2421 = vsel %vm2402, %v2420, %v2416
        %v2422 = vlaneseq
        %v2423 = vshrl.u32 %v2422, 7
        %v2424 = vsub.s32 %v2392, %v2423
        %v2425 = vrot.slane %v1899, %v2424
        %v2426 = vlaneseq
        %v2427 = vshrl.u32 %v2426, 7
        %v2428 = vsub.s32 %v2397, %v2427
        %v2429 = vrot.slane %v1902, %v2428
        %v2430 = vsel %vm2402, %v2429, %v2425
        %v2431 = vlaneseq
        %v2432 = vshrl.u32 %v2431, 7
        %v2433 = vsub.s32 %v2392, %v2432
        %v2434 = vrot.slane %v1905, %v2433
        %v2435 = vlaneseq
        %v2436 = vshrl.u32 %v2435, 7
        %v2437 = vsub.s32 %v2397, %v2436
        %v2438 = vrot.slane %v1908, %v2437
        %v2439 = vsel %vm2402, %v2438, %v2434
        %v2440 = vlaneseq
        %v2441 = vshrl.u32 %v2440, 7
        %v2442 = vsub.s32 %v2392, %v2441
        %v2443 = vrot.slane %v1911, %v2442
        %v2444 = vlaneseq
        %v2445 = vshrl.u32 %v2444, 7
        %v2446 = vsub.s32 %v2397, %v2445
        %v2447 = vrot.slane %v1914, %v2446
        %v2448 = vsel %vm2402, %v2447, %v2443
        %v2449 = vlaneseq
        %v2450 = vshrl.u32 %v2449, 7
        %v2451 = vsub.s32 %v2392, %v2450
        %v2452 = vrot.slane %v1917, %v2451
        %v2453 = vlaneseq
        %v2454 = vshrl.u32 %v2453, 7
        %v2455 = vsub.s32 %v2397, %v2454
        %v2456 = vrot.slane %v1920, %v2455
        %v2457 = vsel %vm2402, %v2456, %v2452
        %v2458 = vlaneseq
        %v2459 = vshrl.u32 %v2458, 7
        %v2460 = vsub.s32 %v2392, %v2459
        %v2461 = vrot.slane %v1923, %v2460
        %v2462 = vlaneseq
        %v2463 = vshrl.u32 %v2462, 7
        %v2464 = vsub.s32 %v2397, %v2463
        %v2465 = vrot.slane %v1926, %v2464
        %v2466 = vsel %vm2402, %v2465, %v2461
        %v2467 = vlaneseq
        %v2468 = vshrl.u32 %v2467, 7
        %v2469 = vsub.s32 %v2392, %v2468
        %v2470 = vrot.slane %v1929, %v2469
        %v2471 = vlaneseq
        %v2472 = vshrl.u32 %v2471, 7
        %v2473 = vsub.s32 %v2397, %v2472
        %v2474 = vrot.slane %v1932, %v2473
        %v2475 = vsel %vm2402, %v2474, %v2470
        %v2476 = vlaneseq
        %v2477 = vshrl.u32 %v2476, 7
        %v2478 = vsub.s32 %v2392, %v2477
        %v2479 = vrot.slane %v1935, %v2478
        %v2480 = vlaneseq
        %v2481 = vshrl.u32 %v2480, 7
        %v2482 = vsub.s32 %v2397, %v2481
        %v2483 = vrot.slane %v1938, %v2482
        %v2484 = vsel %vm2402, %v2483, %v2479
        %v2485 = vlaneseq
        %v2486 = vshrl.u32 %v2485, 7
        %v2487 = vsub.s32 %v2392, %v2486
        %v2488 = vrot.slane %v1941, %v2487
        %v2489 = vlaneseq
        %v2490 = vshrl.u32 %v2489, 7
        %v2491 = vsub.s32 %v2397, %v2490
        %v2492 = vrot.slane %v1944, %v2491
        %v2493 = vsel %vm2402, %v2492, %v2488
        %v2494 = vlaneseq
        %v2495 = vshrl.u32 %v2494, 7
        %v2496 = vsub.s32 %v2392, %v2495
        %v2497 = vrot.slane %v1947, %v2496
        %v2498 = vlaneseq
        %v2499 = vshrl.u32 %v2498, 7
        %v2500 = vsub.s32 %v2397, %v2499
        %v2501 = vrot.slane %v1950, %v2500
        %v2502 = vsel %vm2402, %v2501, %v2497
        %v2503 = vlaneseq
        %v2504 = vshrl.u32 %v2503, 7
        %v2505 = vsub.s32 %v2392, %v2504
        %v2506 = vrot.slane %v1953, %v2505
        %v2507 = vlaneseq
        %v2508 = vshrl.u32 %v2507, 7
        %v2509 = vsub.s32 %v2397, %v2508
        %v2510 = vrot.slane %v1956, %v2509
        %v2511 = vsel %vm2402, %v2510, %v2506
        %v2512 = vlaneseq
        %v2513 = vshrl.u32 %v2512, 7
        %v2514 = vsub.s32 %v2392, %v2513
        %v2515 = vrot.slane %v1959, %v2514
        %v2516 = vlaneseq
        %v2517 = vshrl.u32 %v2516, 7
        %v2518 = vsub.s32 %v2397, %v2517
        %v2519 = vrot.slane %v1962, %v2518
        %v2520 = vsel %vm2402, %v2519, %v2515
        %v2521 = vlaneseq
        %v2522 = vshrl.u32 %v2521, 7
        %v2523 = vsub.s32 %v2392, %v2522
        %v2524 = vrot.slane %v1965, %v2523
        %v2525 = vlaneseq
        %v2526 = vshrl.u32 %v2525, 7
        %v2527 = vsub.s32 %v2397, %v2526
        %v2528 = vrot.slane %v1968, %v2527
        %v2529 = vsel %vm2402, %v2528, %v2524
        %v2530 = vlaneseq
        %v2531 = vshrl.u32 %v2530, 7
        %v2532 = vsub.s32 %v2392, %v2531
        %v2533 = vrot.slane %v1971, %v2532
        %v2534 = vlaneseq
        %v2535 = vshrl.u32 %v2534, 7
        %v2536 = vsub.s32 %v2397, %v2535
        %v2537 = vrot.slane %v1974, %v2536
        %v2538 = vsel %vm2402, %v2537, %v2533
        %v2539 = vlaneseq
        %v2540 = vshrl.u32 %v2539, 7
        %v2541 = vsub.s32 %v2392, %v2540
        %v2542 = vrot.slane %v1977, %v2541
        %v2543 = vlaneseq
        %v2544 = vshrl.u32 %v2543, 7
        %v2545 = vsub.s32 %v2397, %v2544
        %v2546 = vrot.slane %v1980, %v2545
        %v2547 = vsel %vm2402, %v2546, %v2542
        %v2548 = vlaneseq
        %v2549 = vshrl.u32 %v2548, 7
        %v2550 = vsub.s32 %v2392, %v2549
        %v2551 = vrot.slane %v1983, %v2550
        %v2552 = vlaneseq
        %v2553 = vshrl.u32 %v2552, 7
        %v2554 = vsub.s32 %v2397, %v2553
        %v2555 = vrot.slane %v1986, %v2554
        %v2556 = vsel %vm2402, %v2555, %v2551
        %v2557 = vlaneseq
        %v2558 = vshrl.u32 %v2557, 7
        %v2559 = vsub.s32 %v2392, %v2558
        %v2560 = vrot.slane %v1989, %v2559
        %v2561 = vlaneseq
        %v2562 = vshrl.u32 %v2561, 7
        %v2563 = vsub.s32 %v2397, %v2562
        %v2564 = vrot.slane %v1992, %v2563
        %v2565 = vsel %vm2402, %v2564, %v2560
        %v2566 = vlaneseq
        %v2567 = vshrl.u32 %v2566, 7
        %v2568 = vsub.s32 %v2392, %v2567
        %v2569 = vrot.slane %v1995, %v2568
        %v2570 = vlaneseq
        %v2571 = vshrl.u32 %v2570, 7
        %v2572 = vsub.s32 %v2397, %v2571
        %v2573 = vrot.slane %v1998, %v2572
        %v2574 = vsel %vm2402, %v2573, %v2569
        %v2575 = vlaneseq
        %v2576 = vshrl.u32 %v2575, 7
        %v2577 = vsub.s32 %v2392, %v2576
        %v2578 = vrot.slane %v2001, %v2577
        %v2579 = vlaneseq
        %v2580 = vshrl.u32 %v2579, 7
        %v2581 = vsub.s32 %v2397, %v2580
        %v2582 = vrot.slane %v2004, %v2581
        %v2583 = vsel %vm2402, %v2582, %v2578
        %v2584 = vlaneseq
        %v2585 = vshrl.u32 %v2584, 7
        %v2586 = vsub.s32 %v2392, %v2585
        %v2587 = vrot.slane %v2007, %v2586
        %v2588 = vlaneseq
        %v2589 = vshrl.u32 %v2588, 7
        %v2590 = vsub.s32 %v2397, %v2589
        %v2591 = vrot.slane %v2010, %v2590
        %v2592 = vsel %vm2402, %v2591, %v2587
        %v2593 = vlaneseq
        %v2594 = vshrl.u32 %v2593, 7
        %v2595 = vsub.s32 %v2392, %v2594
        %v2596 = vrot.slane %v2013, %v2595
        %v2597 = vlaneseq
        %v2598 = vshrl.u32 %v2597, 7
        %v2599 = vsub.s32 %v2397, %v2598
        %v2600 = vrot.slane %v2016, %v2599
        %v2601 = vsel %vm2402, %v2600, %v2596
        %v2602 = vlaneseq
        %v2603 = vshrl.u32 %v2602, 7
        %v2604 = vsub.s32 %v2392, %v2603
        %v2605 = vrot.slane %v2019, %v2604
        %v2606 = vlaneseq
        %v2607 = vshrl.u32 %v2606, 7
        %v2608 = vsub.s32 %v2397, %v2607
        %v2609 = vrot.slane %v2022, %v2608
        %v2610 = vsel %vm2402, %v2609, %v2605
        %v2611 = vlaneseq
        %v2612 = vshrl.u32 %v2611, 7
        %v2613 = vsub.s32 %v2392, %v2612
        %v2614 = vrot.slane %v2025, %v2613
        %v2615 = vlaneseq
        %v2616 = vshrl.u32 %v2615, 7
        %v2617 = vsub.s32 %v2397, %v2616
        %v2618 = vrot.slane %v2028, %v2617
        %v2619 = vsel %vm2402, %v2618, %v2614
        %v2620 = vlaneseq
        %v2621 = vshrl.u32 %v2620, 7
        %v2622 = vsub.s32 %v2392, %v2621
        %v2623 = vrot.slane %v2031, %v2622
        %v2624 = vlaneseq
        %v2625 = vshrl.u32 %v2624, 7
        %v2626 = vsub.s32 %v2397, %v2625
        %v2627 = vrot.slane %v2034, %v2626
        %v2628 = vsel %vm2402, %v2627, %v2623
        %v2629 = vlaneseq
        %v2630 = vshrl.u32 %v2629, 7
        %v2631 = vsub.s32 %v2392, %v2630
        %v2632 = vrot.slane %v2037, %v2631
        %v2633 = vlaneseq
        %v2634 = vshrl.u32 %v2633, 7
        %v2635 = vsub.s32 %v2397, %v2634
        %v2636 = vrot.slane %v2040, %v2635
        %v2637 = vsel %vm2402, %v2636, %v2632
        %v2638 = vlaneseq
        %v2639 = vshrl.u32 %v2638, 7
        %v2640 = vsub.s32 %v2392, %v2639
        %v2641 = vrot.slane %v2043, %v2640
        %v2642 = vlaneseq
        %v2643 = vshrl.u32 %v2642, 7
        %v2644 = vsub.s32 %v2397, %v2643
        %v2645 = vrot.slane %v2046, %v2644
        %v2646 = vsel %vm2402, %v2645, %v2641
        %v2647 = vlaneseq
        %v2648 = vshrl.u32 %v2647, 7
        %v2649 = vsub.s32 %v2392, %v2648
        %v2650 = vrot.slane %v2049, %v2649
        %v2651 = vlaneseq
        %v2652 = vshrl.u32 %v2651, 7
        %v2653 = vsub.s32 %v2397, %v2652
        %v2654 = vrot.slane %v2052, %v2653
        %v2655 = vsel %vm2402, %v2654, %v2650
        %v2656 = vlaneseq
        %v2657 = vshrl.u32 %v2656, 7
        %v2658 = vsub.s32 %v2392, %v2657
        %v2659 = vrot.slane %v2055, %v2658
        %v2660 = vlaneseq
        %v2661 = vshrl.u32 %v2660, 7
        %v2662 = vsub.s32 %v2397, %v2661
        %v2663 = vrot.slane %v2058, %v2662
        %v2664 = vsel %vm2402, %v2663, %v2659
        %v2665 = vlaneseq
        %v2666 = vshrl.u32 %v2665, 7
        %v2667 = vsub.s32 %v2392, %v2666
        %v2668 = vrot.slane %v2061, %v2667
        %v2669 = vlaneseq
        %v2670 = vshrl.u32 %v2669, 7
        %v2671 = vsub.s32 %v2397, %v2670
        %v2672 = vrot.slane %v2064, %v2671
        %v2673 = vsel %vm2402, %v2672, %v2668
        %v2674 = vlaneseq
        %v2675 = vshrl.u32 %v2674, 7
        %v2676 = vsub.s32 %v2392, %v2675
        %v2677 = vrot.slane %v2067, %v2676
        %v2678 = vlaneseq
        %v2679 = vshrl.u32 %v2678, 7
        %v2680 = vsub.s32 %v2397, %v2679
        %v2681 = vrot.slane %v2070, %v2680
        %v2682 = vsel %vm2402, %v2681, %v2677
        %v2683 = vlaneseq
        %v2684 = vshrl.u32 %v2683, 7
        %v2685 = vsub.s32 %v2392, %v2684
        %v2686 = vrot.slane %v2073, %v2685
        %v2687 = vlaneseq
        %v2688 = vshrl.u32 %v2687, 7
        %v2689 = vsub.s32 %v2397, %v2688
        %v2690 = vrot.slane %v2076, %v2689
        %v2691 = vsel %vm2402, %v2690, %v2686
        %v2692 = vlaneseq
        %v2693 = vshrl.u32 %v2692, 7
        %v2694 = vsub.s32 %v2392, %v2693
        %v2695 = vrot.slane %v2079, %v2694
        %v2696 = vlaneseq
        %v2697 = vshrl.u32 %v2696, 7
        %v2698 = vsub.s32 %v2397, %v2697
        %v2699 = vrot.slane %v2082, %v2698
        %v2700 = vsel %vm2402, %v2699, %v2695
        %v2701 = vlaneseq
        %v2702 = vshrl.u32 %v2701, 7
        %v2703 = vsub.s32 %v2392, %v2702
        %v2704 = vrot.slane %v2085, %v2703
        %v2705 = vlaneseq
        %v2706 = vshrl.u32 %v2705, 7
        %v2707 = vsub.s32 %v2397, %v2706
        %v2708 = vrot.slane %v2088, %v2707
        %v2709 = vsel %vm2402, %v2708, %v2704
        %v2710 = vlaneseq
        %v2711 = vshrl.u32 %v2710, 7
        %v2712 = vsub.s32 %v2392, %v2711
        %v2713 = vrot.slane %v2091, %v2712
        %v2714 = vlaneseq
        %v2715 = vshrl.u32 %v2714, 7
        %v2716 = vsub.s32 %v2397, %v2715
        %v2717 = vrot.slane %v2094, %v2716
        %v2718 = vsel %vm2402, %v2717, %v2713
        %v2719 = vlaneseq
        %v2720 = vshrl.u32 %v2719, 7
        %v2721 = vsub.s32 %v2392, %v2720
        %v2722 = vrot.slane %v2097, %v2721
        %v2723 = vlaneseq
        %v2724 = vshrl.u32 %v2723, 7
        %v2725 = vsub.s32 %v2397, %v2724
        %v2726 = vrot.slane %v2100, %v2725
        %v2727 = vsel %vm2402, %v2726, %v2722
        %v2728 = vlaneseq
        %v2729 = vshrl.u32 %v2728, 7
        %v2730 = vsub.s32 %v2392, %v2729
        %v2731 = vrot.slane %v2103, %v2730
        %v2732 = vlaneseq
        %v2733 = vshrl.u32 %v2732, 7
        %v2734 = vsub.s32 %v2397, %v2733
        %v2735 = vrot.slane %v2106, %v2734
        %v2736 = vsel %vm2402, %v2735, %v2731
        %v2737 = vlaneseq
        %v2738 = vshrl.u32 %v2737, 7
        %v2739 = vsub.s32 %v2392, %v2738
        %v2740 = vrot.slane %v2109, %v2739
        %v2741 = vlaneseq
        %v2742 = vshrl.u32 %v2741, 7
        %v2743 = vsub.s32 %v2397, %v2742
        %v2744 = vrot.slane %v2112, %v2743
        %v2745 = vsel %vm2402, %v2744, %v2740
        %v2746 = vlaneseq
        %v2747 = vshrl.u32 %v2746, 7
        %v2748 = vsub.s32 %v2392, %v2747
        %v2749 = vrot.slane %v2115, %v2748
        %v2750 = vlaneseq
        %v2751 = vshrl.u32 %v2750, 7
        %v2752 = vsub.s32 %v2397, %v2751
        %v2753 = vrot.slane %v2118, %v2752
        %v2754 = vsel %vm2402, %v2753, %v2749
        %v2755 = vlaneseq
        %v2756 = vshrl.u32 %v2755, 7
        %v2757 = vsub.s32 %v2392, %v2756
        %v2758 = vrot.slane %v2121, %v2757
        %v2759 = vlaneseq
        %v2760 = vshrl.u32 %v2759, 7
        %v2761 = vsub.s32 %v2397, %v2760
        %v2762 = vrot.slane %v2124, %v2761
        %v2763 = vsel %vm2402, %v2762, %v2758
        %v2764 = vlaneseq
        %v2765 = vshrl.u32 %v2764, 7
        %v2766 = vsub.s32 %v2392, %v2765
        %v2767 = vrot.slane %v2127, %v2766
        %v2768 = vlaneseq
        %v2769 = vshrl.u32 %v2768, 7
        %v2770 = vsub.s32 %v2397, %v2769
        %v2771 = vrot.slane %v2130, %v2770
        %v2772 = vsel %vm2402, %v2771, %v2767
        %v2773 = vlaneseq
        %v2774 = vshrl.u32 %v2773, 7
        %v2775 = vsub.s32 %v2392, %v2774
        %v2776 = vrot.slane %v2133, %v2775
        %v2777 = vlaneseq
        %v2778 = vshrl.u32 %v2777, 7
        %v2779 = vsub.s32 %v2397, %v2778
        %v2780 = vrot.slane %v2136, %v2779
        %v2781 = vsel %vm2402, %v2780, %v2776
        %v2782 = vlaneseq
        %v2783 = vshrl.u32 %v2782, 7
        %v2784 = vsub.s32 %v2392, %v2783
        %v2785 = vrot.slane %v2139, %v2784
        %v2786 = vlaneseq
        %v2787 = vshrl.u32 %v2786, 7
        %v2788 = vsub.s32 %v2397, %v2787
        %v2789 = vrot.slane %v2142, %v2788
        %v2790 = vsel %vm2402, %v2789, %v2785
        %v2791 = vlaneseq
        %v2792 = vshrl.u32 %v2791, 7
        %v2793 = vsub.s32 %v2392, %v2792
        %v2794 = vrot.slane %v2145, %v2793
        %v2795 = vlaneseq
        %v2796 = vshrl.u32 %v2795, 7
        %v2797 = vsub.s32 %v2397, %v2796
        %v2798 = vrot.slane %v2148, %v2797
        %v2799 = vsel %vm2402, %v2798, %v2794
        %v2800 = vlaneseq
        %v2801 = vshrl.u32 %v2800, 7
        %v2802 = vsub.s32 %v2392, %v2801
        %v2803 = vrot.slane %v2151, %v2802
        %v2804 = vlaneseq
        %v2805 = vshrl.u32 %v2804, 7
        %v2806 = vsub.s32 %v2397, %v2805
        %v2807 = vrot.slane %v2154, %v2806
        %v2808 = vsel %vm2402, %v2807, %v2803
        %v2809 = vlaneseq
        %v2810 = vshrl.u32 %v2809, 7
        %v2811 = vsub.s32 %v2392, %v2810
        %v2812 = vrot.slane %v2157, %v2811
        %v2813 = vlaneseq
        %v2814 = vshrl.u32 %v2813, 7
        %v2815 = vsub.s32 %v2397, %v2814
        %v2816 = vrot.slane %v2160, %v2815
        %v2817 = vsel %vm2402, %v2816, %v2812
        %v2818 = vlaneseq
        %v2819 = vshrl.u32 %v2818, 7
        %v2820 = vsub.s32 %v2392, %v2819
        %v2821 = vrot.slane %v2163, %v2820
        %v2822 = vlaneseq
        %v2823 = vshrl.u32 %v2822, 7
        %v2824 = vsub.s32 %v2397, %v2823
        %v2825 = vrot.slane %v2166, %v2824
        %v2826 = vsel %vm2402, %v2825, %v2821
        %v2827 = vlaneseq
        %v2828 = vshrl.u32 %v2827, 7
        %v2829 = vsub.s32 %v2392, %v2828
        %v2830 = vrot.slane %v2169, %v2829
        %v2831 = vlaneseq
        %v2832 = vshrl.u32 %v2831, 7
        %v2833 = vsub.s32 %v2397, %v2832
        %v2834 = vrot.slane %v2172, %v2833
        %v2835 = vsel %vm2402, %v2834, %v2830
        %v2836 = vlaneseq
        %v2837 = vshrl.u32 %v2836, 7
        %v2838 = vsub.s32 %v2392, %v2837
        %v2839 = vrot.slane %v2175, %v2838
        %v2840 = vlaneseq
        %v2841 = vshrl.u32 %v2840, 7
        %v2842 = vsub.s32 %v2397, %v2841
        %v2843 = vrot.slane %v2178, %v2842
        %v2844 = vsel %vm2402, %v2843, %v2839
        %v2845 = vlaneseq
        %v2846 = vshrl.u32 %v2845, 7
        %v2847 = vsub.s32 %v2392, %v2846
        %v2848 = vrot.slane %v2181, %v2847
        %v2849 = vlaneseq
        %v2850 = vshrl.u32 %v2849, 7
        %v2851 = vsub.s32 %v2397, %v2850
        %v2852 = vrot.slane %v2184, %v2851
        %v2853 = vsel %vm2402, %v2852, %v2848
        %v2854 = vlaneseq
        %v2855 = vshrl.u32 %v2854, 7
        %v2856 = vsub.s32 %v2392, %v2855
        %v2857 = vrot.slane %v2187, %v2856
        %v2858 = vlaneseq
        %v2859 = vshrl.u32 %v2858, 7
        %v2860 = vsub.s32 %v2397, %v2859
        %v2861 = vrot.slane %v2190, %v2860
        %v2862 = vsel %vm2402, %v2861, %v2857
        %v2863 = vlaneseq
        %v2864 = vshrl.u32 %v2863, 7
        %v2865 = vsub.s32 %v2392, %v2864
        %v2866 = vrot.slane %v2193, %v2865
        %v2867 = vlaneseq
        %v2868 = vshrl.u32 %v2867, 7
        %v2869 = vsub.s32 %v2397, %v2868
        %v2870 = vrot.slane %v2196, %v2869
        %v2871 = vsel %vm2402, %v2870, %v2866
        %v2872 = vlaneseq
        %v2873 = vshrl.u32 %v2872, 7
        %v2874 = vsub.s32 %v2392, %v2873
        %v2875 = vrot.slane %v2199, %v2874
        %v2876 = vlaneseq
        %v2877 = vshrl.u32 %v2876, 7
        %v2878 = vsub.s32 %v2397, %v2877
        %v2879 = vrot.slane %v2202, %v2878
        %v2880 = vsel %vm2402, %v2879, %v2875
        %v2881 = vlaneseq
        %v2882 = vshrl.u32 %v2881, 7
        %v2883 = vsub.s32 %v2392, %v2882
        %v2884 = vrot.slane %v2205, %v2883
        %v2885 = vlaneseq
        %v2886 = vshrl.u32 %v2885, 7
        %v2887 = vsub.s32 %v2397, %v2886
        %v2888 = vrot.slane %v2208, %v2887
        %v2889 = vsel %vm2402, %v2888, %v2884
        %v2890 = vlaneseq
        %v2891 = vshrl.u32 %v2890, 7
        %v2892 = vsub.s32 %v2392, %v2891
        %v2893 = vrot.slane %v2211, %v2892
        %v2894 = vlaneseq
        %v2895 = vshrl.u32 %v2894, 7
        %v2896 = vsub.s32 %v2397, %v2895
        %v2897 = vrot.slane %v2214, %v2896
        %v2898 = vsel %vm2402, %v2897, %v2893
        %v2899 = vlaneseq
        %v2900 = vshrl.u32 %v2899, 7
        %v2901 = vsub.s32 %v2392, %v2900
        %v2902 = vrot.slane %v2217, %v2901
        %v2903 = vlaneseq
        %v2904 = vshrl.u32 %v2903, 7
        %v2905 = vsub.s32 %v2397, %v2904
        %v2906 = vrot.slane %v2220, %v2905
        %v2907 = vsel %vm2402, %v2906, %v2902
        %v2908 = vlaneseq
        %v2909 = vshrl.u32 %v2908, 7
        %v2910 = vsub.s32 %v2392, %v2909
        %v2911 = vrot.slane %v2223, %v2910
        %v2912 = vlaneseq
        %v2913 = vshrl.u32 %v2912, 7
        %v2914 = vsub.s32 %v2397, %v2913
        %v2915 = vrot.slane %v2226, %v2914
        %v2916 = vsel %vm2402, %v2915, %v2911
        %v2917 = vlaneseq
        %v2918 = vshrl.u32 %v2917, 7
        %v2919 = vsub.s32 %v2392, %v2918
        %v2920 = vrot.slane %v2229, %v2919
        %v2921 = vlaneseq
        %v2922 = vshrl.u32 %v2921, 7
        %v2923 = vsub.s32 %v2397, %v2922
        %v2924 = vrot.slane %v2232, %v2923
        %v2925 = vsel %vm2402, %v2924, %v2920
        %v2926 = vlaneseq
        %v2927 = vshrl.u32 %v2926, 7
        %v2928 = vsub.s32 %v2392, %v2927
        %v2929 = vrot.slane %v2235, %v2928
        %v2930 = vlaneseq
        %v2931 = vshrl.u32 %v2930, 7
        %v2932 = vsub.s32 %v2397, %v2931
        %v2933 = vrot.slane %v2238, %v2932
        %v2934 = vsel %vm2402, %v2933, %v2929
        %v2935 = vlaneseq
        %v2936 = vshrl.u32 %v2935, 7
        %v2937 = vsub.s32 %v2392, %v2936
        %v2938 = vrot.slane %v2241, %v2937
        %v2939 = vlaneseq
        %v2940 = vshrl.u32 %v2939, 7
        %v2941 = vsub.s32 %v2397, %v2940
        %v2942 = vrot.slane %v2244, %v2941
        %v2943 = vsel %vm2402, %v2942, %v2938
        %v2944 = vlaneseq
        %v2945 = vshrl.u32 %v2944, 7
        %v2946 = vsub.s32 %v2392, %v2945
        %v2947 = vrot.slane %v2247, %v2946
        %v2948 = vlaneseq
        %v2949 = vshrl.u32 %v2948, 7
        %v2950 = vsub.s32 %v2397, %v2949
        %v2951 = vrot.slane %v2250, %v2950
        %v2952 = vsel %vm2402, %v2951, %v2947
        %v2953 = vlaneseq
        %v2954 = vshrl.u32 %v2953, 7
        %v2955 = vsub.s32 %v2392, %v2954
        %v2956 = vrot.slane %v2253, %v2955
        %v2957 = vlaneseq
        %v2958 = vshrl.u32 %v2957, 7
        %v2959 = vsub.s32 %v2397, %v2958
        %v2960 = vrot.slane %v2256, %v2959
        %v2961 = vsel %vm2402, %v2960, %v2956
        %v2962 = vlaneseq
        %v2963 = vshrl.u32 %v2962, 7
        %v2964 = vsub.s32 %v2392, %v2963
        %v2965 = vrot.slane %v2259, %v2964
        %v2966 = vlaneseq
        %v2967 = vshrl.u32 %v2966, 7
        %v2968 = vsub.s32 %v2397, %v2967
        %v2969 = vrot.slane %v2262, %v2968
        %v2970 = vsel %vm2402, %v2969, %v2965
        %vm2971 = vcmask 1041409
        %v2972 = vsel %vm2971, %v2412, %v2403
        %vm2973 = vcmask 1042434
        %v2974 = vsel %vm2973, %v2421, %v2972
        %vm2975 = vcmask 1043459
        %v2976 = vsel %vm2975, %v2430, %v2974
        %vm2977 = vcmask 1044484
        %v2978 = vsel %vm2977, %v2439, %v2976
        %vm2979 = vcmask 1045509
        %v2980 = vsel %vm2979, %v2448, %v2978
        %vm2981 = vcmask 1046534
        %v2982 = vsel %vm2981, %v2457, %v2980
        %vm2983 = vcmask 1047559
        %v2984 = vsel %vm2983, %v2466, %v2982
        %v2985 = vsel %vm2971, %v2484, %v2475
        %v2986 = vsel %vm2973, %v2493, %v2985
        %v2987 = vsel %vm2975, %v2502, %v2986
        %v2988 = vsel %vm2977, %v2511, %v2987
        %v2989 = vsel %vm2979, %v2520, %v2988
        %v2990 = vsel %vm2981, %v2529, %v2989
        %v2991 = vsel %vm2983, %v2538, %v2990
        %v2992 = vsel %vm2971, %v2556, %v2547
        %v2993 = vsel %vm2973, %v2565, %v2992
        %v2994 = vsel %vm2975, %v2574, %v2993
        %v2995 = vsel %vm2977, %v2583, %v2994
        %v2996 = vsel %vm2979, %v2592, %v2995
        %v2997 = vsel %vm2981, %v2601, %v2996
        %v2998 = vsel %vm2983, %v2610, %v2997
        %v2999 = vsel %vm2971, %v2628, %v2619
        %v3000 = vsel %vm2973, %v2637, %v2999
        %v3001 = vsel %vm2975, %v2646, %v3000
        %v3002 = vsel %vm2977, %v2655, %v3001
        %v3003 = vsel %vm2979, %v2664, %v3002
        %v3004 = vsel %vm2981, %v2673, %v3003
        %v3005 = vsel %vm2983, %v2682, %v3004
        %v3006 = vsel %vm2971, %v2700, %v2691
        %v3007 = vsel %vm2973, %v2709, %v3006
        %v3008 = vsel %vm2975, %v2718, %v3007
        %v3009 = vsel %vm2977, %v2727, %v3008
        %v3010 = vsel %vm2979, %v2736, %v3009
        %v3011 = vsel %vm2981, %v2745, %v3010
        %v3012 = vsel %vm2983, %v2754, %v3011
        %v3013 = vsel %vm2971, %v2772, %v2763
        %v3014 = vsel %vm2973, %v2781, %v3013
        %v3015 = vsel %vm2975, %v2790, %v3014
        %v3016 = vsel %vm2977, %v2799, %v3015
        %v3017 = vsel %vm2979, %v2808, %v3016
        %v3018 = vsel %vm2981, %v2817, %v3017
        %v3019 = vsel %vm2983, %v2826, %v3018
        %v3020 = vsel %vm2971, %v2844, %v2835
        %v3021 = vsel %vm2973, %v2853, %v3020
        %v3022 = vsel %vm2975, %v2862, %v3021
        %v3023 = vsel %vm2977, %v2871, %v3022
        %v3024 = vsel %vm2979, %v2880, %v3023
        %v3025 = vsel %vm2981, %v2889, %v3024
        %v3026 = vsel %vm2983, %v2898, %v3025
        %v3027 = vsel %vm2971, %v2916, %v2907
        %v3028 = vsel %vm2973, %v2925, %v3027
        %v3029 = vsel %vm2975, %v2934, %v3028
        %v3030 = vsel %vm2977, %v2943, %v3029
        %v3031 = vsel %vm2979, %v2952, %v3030
        %v3032 = vsel %vm2981, %v2961, %v3031
        %v3033 = vsel %vm2983, %v2970, %v3032
        %vm3042 = vcmask 130048
        %v3043 = vsel %vm3042, %v2984, -inf
        %3044 = vmax.xlane.f32.xlu0 %v3043
        %v3045 = vpop.xlane.xlu0 %3044
        %v3046 = vsel %vm3042, %v2991, -inf
        %3047 = vmax.xlane.f32.xlu0 %v3046
        %v3048 = vpop.xlane.xlu0 %3047
        %v3049 = vsel %vm3042, %v2998, -inf
        %3050 = vmax.xlane.f32.xlu0 %v3049
        %v3051 = vpop.xlane.xlu0 %3050
        %v3052 = vsel %vm3042, %v3005, -inf
        %3053 = vmax.xlane.f32.xlu0 %v3052
        %v3054 = vpop.xlane.xlu0 %3053
        %v3055 = vsel %vm3042, %v3012, -inf
        %3056 = vmax.xlane.f32.xlu0 %v3055
        %v3057 = vpop.xlane.xlu0 %3056
        %v3058 = vsel %vm3042, %v3019, -inf
        %3059 = vmax.xlane.f32.xlu0 %v3058
        %v3060 = vpop.xlane.xlu0 %3059
        %v3061 = vsel %vm3042, %v3026, -inf
        %3062 = vmax.xlane.f32.xlu0 %v3061
        %v3063 = vpop.xlane.xlu0 %3062
        %v3064 = vsel %vm3042, %v3033, -inf
        %3065 = vmax.xlane.f32.xlu0 %v3064
        %v3066 = vpop.xlane.xlu0 %3065
        %v3075 = vlaneseq
        %v3076 = vshrl.u32 %v3075, 7
        %v3077 = vsub.s32 0, %v3076
        %v3078 = vrot.slane %v3045, %v3077
        %v3079 = vlaneseq
        %v3080 = vshrl.u32 %v3079, 7
        %v3081 = vsub.s32 1, %v3080
        %v3082 = vrot.slane %v3045, %v3081
        %v3083 = vlaneseq
        %v3084 = vshrl.u32 %v3083, 7
        %v3085 = vsub.s32 2, %v3084
        %v3086 = vrot.slane %v3045, %v3085
        %v3087 = vlaneseq
        %v3088 = vshrl.u32 %v3087, 7
        %v3089 = vsub.s32 3, %v3088
        %v3090 = vrot.slane %v3045, %v3089
        %v3091 = vlaneseq
        %v3092 = vshrl.u32 %v3091, 7
        %v3093 = vsub.s32 4, %v3092
        %v3094 = vrot.slane %v3045, %v3093
        %v3095 = vlaneseq
        %v3096 = vshrl.u32 %v3095, 7
        %v3097 = vsub.s32 5, %v3096
        %v3098 = vrot.slane %v3045, %v3097
        %v3099 = vlaneseq
        %v3100 = vshrl.u32 %v3099, 7
        %v3101 = vsub.s32 6, %v3100
        %v3102 = vrot.slane %v3045, %v3101
        %v3103 = vlaneseq
        %v3104 = vshrl.u32 %v3103, 7
        %v3105 = vsub.s32 7, %v3104
        %v3106 = vrot.slane %v3045, %v3105
        %v3107 = vlaneseq
        %v3108 = vshrl.u32 %v3107, 7
        %v3109 = vsub.s32 0, %v3108
        %v3110 = vrot.slane %v3048, %v3109
        %v3111 = vlaneseq
        %v3112 = vshrl.u32 %v3111, 7
        %v3113 = vsub.s32 1, %v3112
        %v3114 = vrot.slane %v3048, %v3113
        %v3115 = vlaneseq
        %v3116 = vshrl.u32 %v3115, 7
        %v3117 = vsub.s32 2, %v3116
        %v3118 = vrot.slane %v3048, %v3117
        %v3119 = vlaneseq
        %v3120 = vshrl.u32 %v3119, 7
        %v3121 = vsub.s32 3, %v3120
        %v3122 = vrot.slane %v3048, %v3121
        %v3123 = vlaneseq
        %v3124 = vshrl.u32 %v3123, 7
        %v3125 = vsub.s32 4, %v3124
        %v3126 = vrot.slane %v3048, %v3125
        %v3127 = vlaneseq
        %v3128 = vshrl.u32 %v3127, 7
        %v3129 = vsub.s32 5, %v3128
        %v3130 = vrot.slane %v3048, %v3129
        %v3131 = vlaneseq
        %v3132 = vshrl.u32 %v3131, 7
        %v3133 = vsub.s32 6, %v3132
        %v3134 = vrot.slane %v3048, %v3133
        %v3135 = vlaneseq
        %v3136 = vshrl.u32 %v3135, 7
        %v3137 = vsub.s32 7, %v3136
        %v3138 = vrot.slane %v3048, %v3137
        %v3139 = vlaneseq
        %v3140 = vshrl.u32 %v3139, 7
        %v3141 = vsub.s32 0, %v3140
        %v3142 = vrot.slane %v3051, %v3141
        %v3143 = vlaneseq
        %v3144 = vshrl.u32 %v3143, 7
        %v3145 = vsub.s32 1, %v3144
        %v3146 = vrot.slane %v3051, %v3145
        %v3147 = vlaneseq
        %v3148 = vshrl.u32 %v3147, 7
        %v3149 = vsub.s32 2, %v3148
        %v3150 = vrot.slane %v3051, %v3149
        %v3151 = vlaneseq
        %v3152 = vshrl.u32 %v3151, 7
        %v3153 = vsub.s32 3, %v3152
        %v3154 = vrot.slane %v3051, %v3153
        %v3155 = vlaneseq
        %v3156 = vshrl.u32 %v3155, 7
        %v3157 = vsub.s32 4, %v3156
        %v3158 = vrot.slane %v3051, %v3157
        %v3159 = vlaneseq
        %v3160 = vshrl.u32 %v3159, 7
        %v3161 = vsub.s32 5, %v3160
        %v3162 = vrot.slane %v3051, %v3161
        %v3163 = vlaneseq
        %v3164 = vshrl.u32 %v3163, 7
        %v3165 = vsub.s32 6, %v3164
        %v3166 = vrot.slane %v3051, %v3165
        %v3167 = vlaneseq
        %v3168 = vshrl.u32 %v3167, 7
        %v3169 = vsub.s32 7, %v3168
        %v3170 = vrot.slane %v3051, %v3169
        %v3171 = vlaneseq
        %v3172 = vshrl.u32 %v3171, 7
        %v3173 = vsub.s32 0, %v3172
        %v3174 = vrot.slane %v3054, %v3173
        %v3175 = vlaneseq
        %v3176 = vshrl.u32 %v3175, 7
        %v3177 = vsub.s32 1, %v3176
        %v3178 = vrot.slane %v3054, %v3177
        %v3179 = vlaneseq
        %v3180 = vshrl.u32 %v3179, 7
        %v3181 = vsub.s32 2, %v3180
        %v3182 = vrot.slane %v3054, %v3181
        %v3183 = vlaneseq
        %v3184 = vshrl.u32 %v3183, 7
        %v3185 = vsub.s32 3, %v3184
        %v3186 = vrot.slane %v3054, %v3185
        %v3187 = vlaneseq
        %v3188 = vshrl.u32 %v3187, 7
        %v3189 = vsub.s32 4, %v3188
        %v3190 = vrot.slane %v3054, %v3189
        %v3191 = vlaneseq
        %v3192 = vshrl.u32 %v3191, 7
        %v3193 = vsub.s32 5, %v3192
        %v3194 = vrot.slane %v3054, %v3193
        %v3195 = vlaneseq
        %v3196 = vshrl.u32 %v3195, 7
        %v3197 = vsub.s32 6, %v3196
        %v3198 = vrot.slane %v3054, %v3197
        %v3199 = vlaneseq
        %v3200 = vshrl.u32 %v3199, 7
        %v3201 = vsub.s32 7, %v3200
        %v3202 = vrot.slane %v3054, %v3201
        %v3203 = vlaneseq
        %v3204 = vshrl.u32 %v3203, 7
        %v3205 = vsub.s32 0, %v3204
        %v3206 = vrot.slane %v3057, %v3205
        %v3207 = vlaneseq
        %v3208 = vshrl.u32 %v3207, 7
        %v3209 = vsub.s32 1, %v3208
        %v3210 = vrot.slane %v3057, %v3209
        %v3211 = vlaneseq
        %v3212 = vshrl.u32 %v3211, 7
        %v3213 = vsub.s32 2, %v3212
        %v3214 = vrot.slane %v3057, %v3213
        %v3215 = vlaneseq
        %v3216 = vshrl.u32 %v3215, 7
        %v3217 = vsub.s32 3, %v3216
        %v3218 = vrot.slane %v3057, %v3217
        %v3219 = vlaneseq
        %v3220 = vshrl.u32 %v3219, 7
        %v3221 = vsub.s32 4, %v3220
        %v3222 = vrot.slane %v3057, %v3221
        %v3223 = vlaneseq
        %v3224 = vshrl.u32 %v3223, 7
        %v3225 = vsub.s32 5, %v3224
        %v3226 = vrot.slane %v3057, %v3225
        %v3227 = vlaneseq
        %v3228 = vshrl.u32 %v3227, 7
        %v3229 = vsub.s32 6, %v3228
        %v3230 = vrot.slane %v3057, %v3229
        %v3231 = vlaneseq
        %v3232 = vshrl.u32 %v3231, 7
        %v3233 = vsub.s32 7, %v3232
        %v3234 = vrot.slane %v3057, %v3233
        %v3235 = vlaneseq
        %v3236 = vshrl.u32 %v3235, 7
        %v3237 = vsub.s32 0, %v3236
        %v3238 = vrot.slane %v3060, %v3237
        %v3239 = vlaneseq
        %v3240 = vshrl.u32 %v3239, 7
        %v3241 = vsub.s32 1, %v3240
        %v3242 = vrot.slane %v3060, %v3241
        %v3243 = vlaneseq
        %v3244 = vshrl.u32 %v3243, 7
        %v3245 = vsub.s32 2, %v3244
        %v3246 = vrot.slane %v3060, %v3245
        %v3247 = vlaneseq
        %v3248 = vshrl.u32 %v3247, 7
        %v3249 = vsub.s32 3, %v3248
        %v3250 = vrot.slane %v3060, %v3249
        %v3251 = vlaneseq
        %v3252 = vshrl.u32 %v3251, 7
        %v3253 = vsub.s32 4, %v3252
        %v3254 = vrot.slane %v3060, %v3253
        %v3255 = vlaneseq
        %v3256 = vshrl.u32 %v3255, 7
        %v3257 = vsub.s32 5, %v3256
        %v3258 = vrot.slane %v3060, %v3257
        %v3259 = vlaneseq
        %v3260 = vshrl.u32 %v3259, 7
        %v3261 = vsub.s32 6, %v3260
        %v3262 = vrot.slane %v3060, %v3261
        %v3263 = vlaneseq
        %v3264 = vshrl.u32 %v3263, 7
        %v3265 = vsub.s32 7, %v3264
        %v3266 = vrot.slane %v3060, %v3265
        %v3267 = vlaneseq
        %v3268 = vshrl.u32 %v3267, 7
        %v3269 = vsub.s32 0, %v3268
        %v3270 = vrot.slane %v3063, %v3269
        %v3271 = vlaneseq
        %v3272 = vshrl.u32 %v3271, 7
        %v3273 = vsub.s32 1, %v3272
        %v3274 = vrot.slane %v3063, %v3273
        %v3275 = vlaneseq
        %v3276 = vshrl.u32 %v3275, 7
        %v3277 = vsub.s32 2, %v3276
        %v3278 = vrot.slane %v3063, %v3277
        %v3279 = vlaneseq
        %v3280 = vshrl.u32 %v3279, 7
        %v3281 = vsub.s32 3, %v3280
        %v3282 = vrot.slane %v3063, %v3281
        %v3283 = vlaneseq
        %v3284 = vshrl.u32 %v3283, 7
        %v3285 = vsub.s32 4, %v3284
        %v3286 = vrot.slane %v3063, %v3285
        %v3287 = vlaneseq
        %v3288 = vshrl.u32 %v3287, 7
        %v3289 = vsub.s32 5, %v3288
        %v3290 = vrot.slane %v3063, %v3289
        %v3291 = vlaneseq
        %v3292 = vshrl.u32 %v3291, 7
        %v3293 = vsub.s32 6, %v3292
        %v3294 = vrot.slane %v3063, %v3293
        %v3295 = vlaneseq
        %v3296 = vshrl.u32 %v3295, 7
        %v3297 = vsub.s32 7, %v3296
        %v3298 = vrot.slane %v3063, %v3297
        %v3299 = vlaneseq
        %v3300 = vshrl.u32 %v3299, 7
        %v3301 = vsub.s32 0, %v3300
        %v3302 = vrot.slane %v3066, %v3301
        %v3303 = vlaneseq
        %v3304 = vshrl.u32 %v3303, 7
        %v3305 = vsub.s32 1, %v3304
        %v3306 = vrot.slane %v3066, %v3305
        %v3307 = vlaneseq
        %v3308 = vshrl.u32 %v3307, 7
        %v3309 = vsub.s32 2, %v3308
        %v3310 = vrot.slane %v3066, %v3309
        %v3311 = vlaneseq
        %v3312 = vshrl.u32 %v3311, 7
        %v3313 = vsub.s32 3, %v3312
        %v3314 = vrot.slane %v3066, %v3313
        %v3315 = vlaneseq
        %v3316 = vshrl.u32 %v3315, 7
        %v3317 = vsub.s32 4, %v3316
        %v3318 = vrot.slane %v3066, %v3317
        %v3319 = vlaneseq
        %v3320 = vshrl.u32 %v3319, 7
        %v3321 = vsub.s32 5, %v3320
        %v3322 = vrot.slane %v3066, %v3321
        %v3323 = vlaneseq
        %v3324 = vshrl.u32 %v3323, 7
        %v3325 = vsub.s32 6, %v3324
        %v3326 = vrot.slane %v3066, %v3325
        %v3327 = vlaneseq
        %v3328 = vshrl.u32 %v3327, 7
        %v3329 = vsub.s32 7, %v3328
        %v3330 = vrot.slane %v3066, %v3329
        %v3395 = vsub.f32 %v1881, %v3078
        %v3396 = vsub.f32 %v1884, %v3078
        %v3397 = vsub.f32 %v1887, %v3082
        %v3398 = vsub.f32 %v1890, %v3082
        %v3399 = vsub.f32 %v1893, %v3086
        %v3400 = vsub.f32 %v1896, %v3086
        %v3401 = vsub.f32 %v1899, %v3090
        %v3402 = vsub.f32 %v1902, %v3090
        %v3403 = vsub.f32 %v1905, %v3094
        %v3404 = vsub.f32 %v1908, %v3094
        %v3405 = vsub.f32 %v1911, %v3098
        %v3406 = vsub.f32 %v1914, %v3098
        %v3407 = vsub.f32 %v1917, %v3102
        %v3408 = vsub.f32 %v1920, %v3102
        %v3409 = vsub.f32 %v1923, %v3106
        %v3410 = vsub.f32 %v1926, %v3106
        %v3411 = vsub.f32 %v1929, %v3110
        %v3412 = vsub.f32 %v1932, %v3110
        %v3413 = vsub.f32 %v1935, %v3114
        %v3414 = vsub.f32 %v1938, %v3114
        %v3415 = vsub.f32 %v1941, %v3118
        %v3416 = vsub.f32 %v1944, %v3118
        %v3417 = vsub.f32 %v1947, %v3122
        %v3418 = vsub.f32 %v1950, %v3122
        %v3419 = vsub.f32 %v1953, %v3126
        %v3420 = vsub.f32 %v1956, %v3126
        %v3421 = vsub.f32 %v1959, %v3130
        %v3422 = vsub.f32 %v1962, %v3130
        %v3423 = vsub.f32 %v1965, %v3134
        %v3424 = vsub.f32 %v1968, %v3134
        %v3425 = vsub.f32 %v1971, %v3138
        %v3426 = vsub.f32 %v1974, %v3138
        %v3427 = vsub.f32 %v1977, %v3142
        %v3428 = vsub.f32 %v1980, %v3142
        %v3429 = vsub.f32 %v1983, %v3146
        %v3430 = vsub.f32 %v1986, %v3146
        %v3431 = vsub.f32 %v1989, %v3150
        %v3432 = vsub.f32 %v1992, %v3150
        %v3433 = vsub.f32 %v1995, %v3154
        %v3434 = vsub.f32 %v1998, %v3154
        %v3435 = vsub.f32 %v2001, %v3158
        %v3436 = vsub.f32 %v2004, %v3158
        %v3437 = vsub.f32 %v2007, %v3162
        %v3438 = vsub.f32 %v2010, %v3162
        %v3439 = vsub.f32 %v2013, %v3166
        %v3440 = vsub.f32 %v2016, %v3166
        %v3441 = vsub.f32 %v2019, %v3170
        %v3442 = vsub.f32 %v2022, %v3170
        %v3443 = vsub.f32 %v2025, %v3174
        %v3444 = vsub.f32 %v2028, %v3174
        %v3445 = vsub.f32 %v2031, %v3178
        %v3446 = vsub.f32 %v2034, %v3178
        %v3447 = vsub.f32 %v2037, %v3182
        %v3448 = vsub.f32 %v2040, %v3182
        %v3449 = vsub.f32 %v2043, %v3186
        %v3450 = vsub.f32 %v2046, %v3186
        %v3451 = vsub.f32 %v2049, %v3190
        %v3452 = vsub.f32 %v2052, %v3190
        %v3453 = vsub.f32 %v2055, %v3194
        %v3454 = vsub.f32 %v2058, %v3194
        %v3455 = vsub.f32 %v2061, %v3198
        %v3456 = vsub.f32 %v2064, %v3198
        %v3457 = vsub.f32 %v2067, %v3202
        %v3458 = vsub.f32 %v2070, %v3202
        %v3459 = vsub.f32 %v2073, %v3206
        %v3460 = vsub.f32 %v2076, %v3206
        %v3461 = vsub.f32 %v2079, %v3210
        %v3462 = vsub.f32 %v2082, %v3210
        %v3463 = vsub.f32 %v2085, %v3214
        %v3464 = vsub.f32 %v2088, %v3214
        %v3465 = vsub.f32 %v2091, %v3218
        %v3466 = vsub.f32 %v2094, %v3218
        %v3467 = vsub.f32 %v2097, %v3222
        %v3468 = vsub.f32 %v2100, %v3222
        %v3469 = vsub.f32 %v2103, %v3226
        %v3470 = vsub.f32 %v2106, %v3226
        %v3471 = vsub.f32 %v2109, %v3230
        %v3472 = vsub.f32 %v2112, %v3230
        %v3473 = vsub.f32 %v2115, %v3234
        %v3474 = vsub.f32 %v2118, %v3234
        %v3475 = vsub.f32 %v2121, %v3238
        %v3476 = vsub.f32 %v2124, %v3238
        %v3477 = vsub.f32 %v2127, %v3242
        %v3478 = vsub.f32 %v2130, %v3242
        %v3479 = vsub.f32 %v2133, %v3246
        %v3480 = vsub.f32 %v2136, %v3246
        %v3481 = vsub.f32 %v2139, %v3250
        %v3482 = vsub.f32 %v2142, %v3250
        %v3483 = vsub.f32 %v2145, %v3254
        %v3484 = vsub.f32 %v2148, %v3254
        %v3485 = vsub.f32 %v2151, %v3258
        %v3486 = vsub.f32 %v2154, %v3258
        %v3487 = vsub.f32 %v2157, %v3262
        %v3488 = vsub.f32 %v2160, %v3262
        %v3489 = vsub.f32 %v2163, %v3266
        %v3490 = vsub.f32 %v2166, %v3266
        %v3491 = vsub.f32 %v2169, %v3270
        %v3492 = vsub.f32 %v2172, %v3270
        %v3493 = vsub.f32 %v2175, %v3274
        %v3494 = vsub.f32 %v2178, %v3274
        %v3495 = vsub.f32 %v2181, %v3278
        %v3496 = vsub.f32 %v2184, %v3278
        %v3497 = vsub.f32 %v2187, %v3282
        %v3498 = vsub.f32 %v2190, %v3282
        %v3499 = vsub.f32 %v2193, %v3286
        %v3500 = vsub.f32 %v2196, %v3286
        %v3501 = vsub.f32 %v2199, %v3290
        %v3502 = vsub.f32 %v2202, %v3290
        %v3503 = vsub.f32 %v2205, %v3294
        %v3504 = vsub.f32 %v2208, %v3294
        %v3505 = vsub.f32 %v2211, %v3298
        %v3506 = vsub.f32 %v2214, %v3298
        %v3507 = vsub.f32 %v2217, %v3302
        %v3508 = vsub.f32 %v2220, %v3302
        %v3509 = vsub.f32 %v2223, %v3306
        %v3510 = vsub.f32 %v2226, %v3306
        %v3511 = vsub.f32 %v2229, %v3310
        %v3512 = vsub.f32 %v2232, %v3310
        %v3513 = vsub.f32 %v2235, %v3314
        %v3514 = vsub.f32 %v2238, %v3314
        %v3515 = vsub.f32 %v2241, %v3318
        %v3516 = vsub.f32 %v2244, %v3318
        %v3517 = vsub.f32 %v2247, %v3322
        %v3518 = vsub.f32 %v2250, %v3322
        %v3519 = vsub.f32 %v2253, %v3326
        %v3520 = vsub.f32 %v2256, %v3326
        %v3521 = vsub.f32 %v2259, %v3330
        %v3522 = vsub.f32 %v2262, %v3330
        %v3523 = vmul.f32 %v3395, 1.442695
        %v3524 = vpow.pop %v3523
        %v3525 = vmul.f32 %v3396, 1.442695
        %v3526 = vpow.pop %v3525
        %v3527 = vmul.f32 %v3397, 1.442695
        %v3528 = vpow.pop %v3527
        %v3529 = vmul.f32 %v3398, 1.442695
        %v3530 = vpow.pop %v3529
        %v3531 = vmul.f32 %v3399, 1.442695
        %v3532 = vpow.pop %v3531
        %v3533 = vmul.f32 %v3400, 1.442695
        %v3534 = vpow.pop %v3533
        %v3535 = vmul.f32 %v3401, 1.442695
        %v3536 = vpow.pop %v3535
        %v3537 = vmul.f32 %v3402, 1.442695
        %v3538 = vpow.pop %v3537
        %v3539 = vmul.f32 %v3403, 1.442695
        %v3540 = vpow.pop %v3539
        %v3541 = vmul.f32 %v3404, 1.442695
        %v3542 = vpow.pop %v3541
        %v3543 = vmul.f32 %v3405, 1.442695
        %v3544 = vpow.pop %v3543
        %v3545 = vmul.f32 %v3406, 1.442695
        %v3546 = vpow.pop %v3545
        %v3547 = vmul.f32 %v3407, 1.442695
        %v3548 = vpow.pop %v3547
        %v3549 = vmul.f32 %v3408, 1.442695
        %v3550 = vpow.pop %v3549
        %v3551 = vmul.f32 %v3409, 1.442695
        %v3552 = vpow.pop %v3551
        %v3553 = vmul.f32 %v3410, 1.442695
        %v3554 = vpow.pop %v3553
        %v3555 = vmul.f32 %v3411, 1.442695
        %v3556 = vpow.pop %v3555
        %v3557 = vmul.f32 %v3412, 1.442695
        %v3558 = vpow.pop %v3557
        %v3559 = vmul.f32 %v3413, 1.442695
        %v3560 = vpow.pop %v3559
        %v3561 = vmul.f32 %v3414, 1.442695
        %v3562 = vpow.pop %v3561
        %v3563 = vmul.f32 %v3415, 1.442695
        %v3564 = vpow.pop %v3563
        %v3565 = vmul.f32 %v3416, 1.442695
        %v3566 = vpow.pop %v3565
        %v3567 = vmul.f32 %v3417, 1.442695
        %v3568 = vpow.pop %v3567
        %v3569 = vmul.f32 %v3418, 1.442695
        %v3570 = vpow.pop %v3569
        %v3571 = vmul.f32 %v3419, 1.442695
        %v3572 = vpow.pop %v3571
        %v3573 = vmul.f32 %v3420, 1.442695
        %v3574 = vpow.pop %v3573
        %v3575 = vmul.f32 %v3421, 1.442695
        %v3576 = vpow.pop %v3575
        %v3577 = vmul.f32 %v3422, 1.442695
        %v3578 = vpow.pop %v3577
        %v3579 = vmul.f32 %v3423, 1.442695
        %v3580 = vpow.pop %v3579
        %v3581 = vmul.f32 %v3424, 1.442695
        %v3582 = vpow.pop %v3581
        %v3583 = vmul.f32 %v3425, 1.442695
        %v3584 = vpow.pop %v3583
        %v3585 = vmul.f32 %v3426, 1.442695
        %v3586 = vpow.pop %v3585
        %v3587 = vmul.f32 %v3427, 1.442695
        %v3588 = vpow.pop %v3587
        %v3589 = vmul.f32 %v3428, 1.442695
        %v3590 = vpow.pop %v3589
        %v3591 = vmul.f32 %v3429, 1.442695
        %v3592 = vpow.pop %v3591
        %v3593 = vmul.f32 %v3430, 1.442695
        %v3594 = vpow.pop %v3593
        %v3595 = vmul.f32 %v3431, 1.442695
        %v3596 = vpow.pop %v3595
        %v3597 = vmul.f32 %v3432, 1.442695
        %v3598 = vpow.pop %v3597
        %v3599 = vmul.f32 %v3433, 1.442695
        %v3600 = vpow.pop %v3599
        %v3601 = vmul.f32 %v3434, 1.442695
        %v3602 = vpow.pop %v3601
        %v3603 = vmul.f32 %v3435, 1.442695
        %v3604 = vpow.pop %v3603
        %v3605 = vmul.f32 %v3436, 1.442695
        %v3606 = vpow.pop %v3605
        %v3607 = vmul.f32 %v3437, 1.442695
        %v3608 = vpow.pop %v3607
        %v3609 = vmul.f32 %v3438, 1.442695
        %v3610 = vpow.pop %v3609
        %v3611 = vmul.f32 %v3439, 1.442695
        %v3612 = vpow.pop %v3611
        %v3613 = vmul.f32 %v3440, 1.442695
        %v3614 = vpow.pop %v3613
        %v3615 = vmul.f32 %v3441, 1.442695
        %v3616 = vpow.pop %v3615
        %v3617 = vmul.f32 %v3442, 1.442695
        %v3618 = vpow.pop %v3617
        %v3619 = vmul.f32 %v3443, 1.442695
        %v3620 = vpow.pop %v3619
        %v3621 = vmul.f32 %v3444, 1.442695
        %v3622 = vpow.pop %v3621
        %v3623 = vmul.f32 %v3445, 1.442695
        %v3624 = vpow.pop %v3623
        %v3625 = vmul.f32 %v3446, 1.442695
        %v3626 = vpow.pop %v3625
        %v3627 = vmul.f32 %v3447, 1.442695
        %v3628 = vpow.pop %v3627
        %v3629 = vmul.f32 %v3448, 1.442695
        %v3630 = vpow.pop %v3629
        %v3631 = vmul.f32 %v3449, 1.442695
        %v3632 = vpow.pop %v3631
        %v3633 = vmul.f32 %v3450, 1.442695
        %v3634 = vpow.pop %v3633
        %v3635 = vmul.f32 %v3451, 1.442695
        %v3636 = vpow.pop %v3635
        %v3637 = vmul.f32 %v3452, 1.442695
        %v3638 = vpow.pop %v3637
        %v3639 = vmul.f32 %v3453, 1.442695
        %v3640 = vpow.pop %v3639
        %v3641 = vmul.f32 %v3454, 1.442695
        %v3642 = vpow.pop %v3641
        %v3643 = vmul.f32 %v3455, 1.442695
        %v3644 = vpow.pop %v3643
        %v3645 = vmul.f32 %v3456, 1.442695
        %v3646 = vpow.pop %v3645
        %v3647 = vmul.f32 %v3457, 1.442695
        %v3648 = vpow.pop %v3647
        %v3649 = vmul.f32 %v3458, 1.442695
        %v3650 = vpow.pop %v3649
        %v3651 = vmul.f32 %v3459, 1.442695
        %v3652 = vpow.pop %v3651
        %v3653 = vmul.f32 %v3460, 1.442695
        %v3654 = vpow.pop %v3653
        %v3655 = vmul.f32 %v3461, 1.442695
        %v3656 = vpow.pop %v3655
        %v3657 = vmul.f32 %v3462, 1.442695
        %v3658 = vpow.pop %v3657
        %v3659 = vmul.f32 %v3463, 1.442695
        %v3660 = vpow.pop %v3659
        %v3661 = vmul.f32 %v3464, 1.442695
        %v3662 = vpow.pop %v3661
        %v3663 = vmul.f32 %v3465, 1.442695
        %v3664 = vpow.pop %v3663
        %v3665 = vmul.f32 %v3466, 1.442695
        %v3666 = vpow.pop %v3665
        %v3667 = vmul.f32 %v3467, 1.442695
        %v3668 = vpow.pop %v3667
        %v3669 = vmul.f32 %v3468, 1.442695
        %v3670 = vpow.pop %v3669
        %v3671 = vmul.f32 %v3469, 1.442695
        %v3672 = vpow.pop %v3671
        %v3673 = vmul.f32 %v3470, 1.442695
        %v3674 = vpow.pop %v3673
        %v3675 = vmul.f32 %v3471, 1.442695
        %v3676 = vpow.pop %v3675
        %v3677 = vmul.f32 %v3472, 1.442695
        %v3678 = vpow.pop %v3677
        %v3679 = vmul.f32 %v3473, 1.442695
        %v3680 = vpow.pop %v3679
        %v3681 = vmul.f32 %v3474, 1.442695
        %v3682 = vpow.pop %v3681
        %v3683 = vmul.f32 %v3475, 1.442695
        %v3684 = vpow.pop %v3683
        %v3685 = vmul.f32 %v3476, 1.442695
        %v3686 = vpow.pop %v3685
        %v3687 = vmul.f32 %v3477, 1.442695
        %v3688 = vpow.pop %v3687
        %v3689 = vmul.f32 %v3478, 1.442695
        %v3690 = vpow.pop %v3689
        %v3691 = vmul.f32 %v3479, 1.442695
        %v3692 = vpow.pop %v3691
        %v3693 = vmul.f32 %v3480, 1.442695
        %v3694 = vpow.pop %v3693
        %v3695 = vmul.f32 %v3481, 1.442695
        %v3696 = vpow.pop %v3695
        %v3697 = vmul.f32 %v3482, 1.442695
        %v3698 = vpow.pop %v3697
        %v3699 = vmul.f32 %v3483, 1.442695
        %v3700 = vpow.pop %v3699
        %v3701 = vmul.f32 %v3484, 1.442695
        %v3702 = vpow.pop %v3701
        %v3703 = vmul.f32 %v3485, 1.442695
        %v3704 = vpow.pop %v3703
        %v3705 = vmul.f32 %v3486, 1.442695
        %v3706 = vpow.pop %v3705
        %v3707 = vmul.f32 %v3487, 1.442695
        %v3708 = vpow.pop %v3707
        %v3709 = vmul.f32 %v3488, 1.442695
        %v3710 = vpow.pop %v3709
        %v3711 = vmul.f32 %v3489, 1.442695
        %v3712 = vpow.pop %v3711
        %v3713 = vmul.f32 %v3490, 1.442695
        %v3714 = vpow.pop %v3713
        %v3715 = vmul.f32 %v3491, 1.442695
        %v3716 = vpow.pop %v3715
        %v3717 = vmul.f32 %v3492, 1.442695
        %v3718 = vpow.pop %v3717
        %v3719 = vmul.f32 %v3493, 1.442695
        %v3720 = vpow.pop %v3719
        %v3721 = vmul.f32 %v3494, 1.442695
        %v3722 = vpow.pop %v3721
        %v3723 = vmul.f32 %v3495, 1.442695
        %v3724 = vpow.pop %v3723
        %v3725 = vmul.f32 %v3496, 1.442695
        %v3726 = vpow.pop %v3725
        %v3727 = vmul.f32 %v3497, 1.442695
        %v3728 = vpow.pop %v3727
        %v3729 = vmul.f32 %v3498, 1.442695
        %v3730 = vpow.pop %v3729
        %v3731 = vmul.f32 %v3499, 1.442695
        %v3732 = vpow.pop %v3731
        %v3733 = vmul.f32 %v3500, 1.442695
        %v3734 = vpow.pop %v3733
        %v3735 = vmul.f32 %v3501, 1.442695
        %v3736 = vpow.pop %v3735
        %v3737 = vmul.f32 %v3502, 1.442695
        %v3738 = vpow.pop %v3737
        %v3739 = vmul.f32 %v3503, 1.442695
        %v3740 = vpow.pop %v3739
        %v3741 = vmul.f32 %v3504, 1.442695
        %v3742 = vpow.pop %v3741
        %v3743 = vmul.f32 %v3505, 1.442695
        %v3744 = vpow.pop %v3743
        %v3745 = vmul.f32 %v3506, 1.442695
        %v3746 = vpow.pop %v3745
        %v3747 = vmul.f32 %v3507, 1.442695
        %v3748 = vpow.pop %v3747
        %v3749 = vmul.f32 %v3508, 1.442695
        %v3750 = vpow.pop %v3749
        %v3751 = vmul.f32 %v3509, 1.442695
        %v3752 = vpow.pop %v3751
        %v3753 = vmul.f32 %v3510, 1.442695
        %v3754 = vpow.pop %v3753
        %v3755 = vmul.f32 %v3511, 1.442695
        %v3756 = vpow.pop %v3755
        %v3757 = vmul.f32 %v3512, 1.442695
        %v3758 = vpow.pop %v3757
        %v3759 = vmul.f32 %v3513, 1.442695
        %v3760 = vpow.pop %v3759
        %v3761 = vmul.f32 %v3514, 1.442695
        %v3762 = vpow.pop %v3761
        %v3763 = vmul.f32 %v3515, 1.442695
        %v3764 = vpow.pop %v3763
        %v3765 = vmul.f32 %v3516, 1.442695
        %v3766 = vpow.pop %v3765
        %v3767 = vmul.f32 %v3517, 1.442695
        %v3768 = vpow.pop %v3767
        %v3769 = vmul.f32 %v3518, 1.442695
        %v3770 = vpow.pop %v3769
        %v3771 = vmul.f32 %v3519, 1.442695
        %v3772 = vpow.pop %v3771
        %v3773 = vmul.f32 %v3520, 1.442695
        %v3774 = vpow.pop %v3773
        %v3775 = vmul.f32 %v3521, 1.442695
        %v3776 = vpow.pop %v3775
        %v3777 = vmul.f32 %v3522, 1.442695
        %v3778 = vpow.pop %v3777
        %3907 = vset.pattern.permute.xlu0 0
        %3908 = vperm.xlu0 %3907, %v3524
        %v3909 = vpop.permute.xlu0 %3908
        %3910 = vset.pattern.permute.xlu0 0
        %3911 = vperm.xlu0 %3910, %v3526
        %v3912 = vpop.permute.xlu0 %3911
        %3913 = vset.pattern.permute.xlu0 0
        %3914 = vperm.xlu0 %3913, %v3528
        %v3915 = vpop.permute.xlu0 %3914
        %3916 = vset.pattern.permute.xlu0 0
        %3917 = vperm.xlu0 %3916, %v3530
        %v3918 = vpop.permute.xlu0 %3917
        %3919 = vset.pattern.permute.xlu0 0
        %3920 = vperm.xlu0 %3919, %v3532
        %v3921 = vpop.permute.xlu0 %3920
        %3922 = vset.pattern.permute.xlu0 0
        %3923 = vperm.xlu0 %3922, %v3534
        %v3924 = vpop.permute.xlu0 %3923
        %3925 = vset.pattern.permute.xlu0 0
        %3926 = vperm.xlu0 %3925, %v3536
        %v3927 = vpop.permute.xlu0 %3926
        %3928 = vset.pattern.permute.xlu0 0
        %3929 = vperm.xlu0 %3928, %v3538
        %v3930 = vpop.permute.xlu0 %3929
        %3931 = vset.pattern.permute.xlu0 0
        %3932 = vperm.xlu0 %3931, %v3540
        %v3933 = vpop.permute.xlu0 %3932
        %3934 = vset.pattern.permute.xlu0 0
        %3935 = vperm.xlu0 %3934, %v3542
        %v3936 = vpop.permute.xlu0 %3935
        %3937 = vset.pattern.permute.xlu0 0
        %3938 = vperm.xlu0 %3937, %v3544
        %v3939 = vpop.permute.xlu0 %3938
        %3940 = vset.pattern.permute.xlu0 0
        %3941 = vperm.xlu0 %3940, %v3546
        %v3942 = vpop.permute.xlu0 %3941
        %3943 = vset.pattern.permute.xlu0 0
        %3944 = vperm.xlu0 %3943, %v3548
        %v3945 = vpop.permute.xlu0 %3944
        %3946 = vset.pattern.permute.xlu0 0
        %3947 = vperm.xlu0 %3946, %v3550
        %v3948 = vpop.permute.xlu0 %3947
        %3949 = vset.pattern.permute.xlu0 0
        %3950 = vperm.xlu0 %3949, %v3552
        %v3951 = vpop.permute.xlu0 %3950
        %3952 = vset.pattern.permute.xlu0 0
        %3953 = vperm.xlu0 %3952, %v3554
        %v3954 = vpop.permute.xlu0 %3953
        %3955 = vset.pattern.permute.xlu0 0
        %3956 = vperm.xlu0 %3955, %v3556
        %v3957 = vpop.permute.xlu0 %3956
        %3958 = vset.pattern.permute.xlu0 0
        %3959 = vperm.xlu0 %3958, %v3558
        %v3960 = vpop.permute.xlu0 %3959
        %3961 = vset.pattern.permute.xlu0 0
        %3962 = vperm.xlu0 %3961, %v3560
        %v3963 = vpop.permute.xlu0 %3962
        %3964 = vset.pattern.permute.xlu0 0
        %3965 = vperm.xlu0 %3964, %v3562
        %v3966 = vpop.permute.xlu0 %3965
        %3967 = vset.pattern.permute.xlu0 0
        %3968 = vperm.xlu0 %3967, %v3564
        %v3969 = vpop.permute.xlu0 %3968
        %3970 = vset.pattern.permute.xlu0 0
        %3971 = vperm.xlu0 %3970, %v3566
        %v3972 = vpop.permute.xlu0 %3971
        %3973 = vset.pattern.permute.xlu0 0
        %3974 = vperm.xlu0 %3973, %v3568
        %v3975 = vpop.permute.xlu0 %3974
        %3976 = vset.pattern.permute.xlu0 0
        %3977 = vperm.xlu0 %3976, %v3570
        %v3978 = vpop.permute.xlu0 %3977
        %3979 = vset.pattern.permute.xlu0 0
        %3980 = vperm.xlu0 %3979, %v3572
        %v3981 = vpop.permute.xlu0 %3980
        %3982 = vset.pattern.permute.xlu0 0
        %3983 = vperm.xlu0 %3982, %v3574
        %v3984 = vpop.permute.xlu0 %3983
        %3985 = vset.pattern.permute.xlu0 0
        %3986 = vperm.xlu0 %3985, %v3576
        %v3987 = vpop.permute.xlu0 %3986
        %3988 = vset.pattern.permute.xlu0 0
        %3989 = vperm.xlu0 %3988, %v3578
        %v3990 = vpop.permute.xlu0 %3989
        %3991 = vset.pattern.permute.xlu0 0
        %3992 = vperm.xlu0 %3991, %v3580
        %v3993 = vpop.permute.xlu0 %3992
        %3994 = vset.pattern.permute.xlu0 0
        %3995 = vperm.xlu0 %3994, %v3582
        %v3996 = vpop.permute.xlu0 %3995
        %3997 = vset.pattern.permute.xlu0 0
        %3998 = vperm.xlu0 %3997, %v3584
        %v3999 = vpop.permute.xlu0 %3998
        %4000 = vset.pattern.permute.xlu0 0
        %4001 = vperm.xlu0 %4000, %v3586
        %v4002 = vpop.permute.xlu0 %4001
        %4003 = vset.pattern.permute.xlu0 0
        %4004 = vperm.xlu0 %4003, %v3588
        %v4005 = vpop.permute.xlu0 %4004
        %4006 = vset.pattern.permute.xlu0 0
        %4007 = vperm.xlu0 %4006, %v3590
        %v4008 = vpop.permute.xlu0 %4007
        %4009 = vset.pattern.permute.xlu0 0
        %4010 = vperm.xlu0 %4009, %v3592
        %v4011 = vpop.permute.xlu0 %4010
        %4012 = vset.pattern.permute.xlu0 0
        %4013 = vperm.xlu0 %4012, %v3594
        %v4014 = vpop.permute.xlu0 %4013
        %4015 = vset.pattern.permute.xlu0 0
        %4016 = vperm.xlu0 %4015, %v3596
        %v4017 = vpop.permute.xlu0 %4016
        %4018 = vset.pattern.permute.xlu0 0
        %4019 = vperm.xlu0 %4018, %v3598
        %v4020 = vpop.permute.xlu0 %4019
        %4021 = vset.pattern.permute.xlu0 0
        %4022 = vperm.xlu0 %4021, %v3600
        %v4023 = vpop.permute.xlu0 %4022
        %4024 = vset.pattern.permute.xlu0 0
        %4025 = vperm.xlu0 %4024, %v3602
        %v4026 = vpop.permute.xlu0 %4025
        %4027 = vset.pattern.permute.xlu0 0
        %4028 = vperm.xlu0 %4027, %v3604
        %v4029 = vpop.permute.xlu0 %4028
        %4030 = vset.pattern.permute.xlu0 0
        %4031 = vperm.xlu0 %4030, %v3606
        %v4032 = vpop.permute.xlu0 %4031
        %4033 = vset.pattern.permute.xlu0 0
        %4034 = vperm.xlu0 %4033, %v3608
        %v4035 = vpop.permute.xlu0 %4034
        %4036 = vset.pattern.permute.xlu0 0
        %4037 = vperm.xlu0 %4036, %v3610
        %v4038 = vpop.permute.xlu0 %4037
        %4039 = vset.pattern.permute.xlu0 0
        %4040 = vperm.xlu0 %4039, %v3612
        %v4041 = vpop.permute.xlu0 %4040
        %4042 = vset.pattern.permute.xlu0 0
        %4043 = vperm.xlu0 %4042, %v3614
        %v4044 = vpop.permute.xlu0 %4043
        %4045 = vset.pattern.permute.xlu0 0
        %4046 = vperm.xlu0 %4045, %v3616
        %v4047 = vpop.permute.xlu0 %4046
        %4048 = vset.pattern.permute.xlu0 0
        %4049 = vperm.xlu0 %4048, %v3618
        %v4050 = vpop.permute.xlu0 %4049
        %4051 = vset.pattern.permute.xlu0 0
        %4052 = vperm.xlu0 %4051, %v3620
        %v4053 = vpop.permute.xlu0 %4052
        %4054 = vset.pattern.permute.xlu0 0
        %4055 = vperm.xlu0 %4054, %v3622
        %v4056 = vpop.permute.xlu0 %4055
        %4057 = vset.pattern.permute.xlu0 0
        %4058 = vperm.xlu0 %4057, %v3624
        %v4059 = vpop.permute.xlu0 %4058
        %4060 = vset.pattern.permute.xlu0 0
        %4061 = vperm.xlu0 %4060, %v3626
        %v4062 = vpop.permute.xlu0 %4061
        %4063 = vset.pattern.permute.xlu0 0
        %4064 = vperm.xlu0 %4063, %v3628
        %v4065 = vpop.permute.xlu0 %4064
        %4066 = vset.pattern.permute.xlu0 0
        %4067 = vperm.xlu0 %4066, %v3630
        %v4068 = vpop.permute.xlu0 %4067
        %4069 = vset.pattern.permute.xlu0 0
        %4070 = vperm.xlu0 %4069, %v3632
        %v4071 = vpop.permute.xlu0 %4070
        %4072 = vset.pattern.permute.xlu0 0
        %4073 = vperm.xlu0 %4072, %v3634
        %v4074 = vpop.permute.xlu0 %4073
        %4075 = vset.pattern.permute.xlu0 0
        %4076 = vperm.xlu0 %4075, %v3636
        %v4077 = vpop.permute.xlu0 %4076
        %4078 = vset.pattern.permute.xlu0 0
        %4079 = vperm.xlu0 %4078, %v3638
        %v4080 = vpop.permute.xlu0 %4079
        %4081 = vset.pattern.permute.xlu0 0
        %4082 = vperm.xlu0 %4081, %v3640
        %v4083 = vpop.permute.xlu0 %4082
        %4084 = vset.pattern.permute.xlu0 0
        %4085 = vperm.xlu0 %4084, %v3642
        %v4086 = vpop.permute.xlu0 %4085
        %4087 = vset.pattern.permute.xlu0 0
        %4088 = vperm.xlu0 %4087, %v3644
        %v4089 = vpop.permute.xlu0 %4088
        %4090 = vset.pattern.permute.xlu0 0
        %4091 = vperm.xlu0 %4090, %v3646
        %v4092 = vpop.permute.xlu0 %4091
        %4093 = vset.pattern.permute.xlu0 0
        %4094 = vperm.xlu0 %4093, %v3648
        %v4095 = vpop.permute.xlu0 %4094
        %4096 = vset.pattern.permute.xlu0 0
        %4097 = vperm.xlu0 %4096, %v3650
        %v4098 = vpop.permute.xlu0 %4097
        %4099 = vset.pattern.permute.xlu0 0
        %4100 = vperm.xlu0 %4099, %v3652
        %v4101 = vpop.permute.xlu0 %4100
        %4102 = vset.pattern.permute.xlu0 0
        %4103 = vperm.xlu0 %4102, %v3654
        %v4104 = vpop.permute.xlu0 %4103
        %4105 = vset.pattern.permute.xlu0 0
        %4106 = vperm.xlu0 %4105, %v3656
        %v4107 = vpop.permute.xlu0 %4106
        %4108 = vset.pattern.permute.xlu0 0
        %4109 = vperm.xlu0 %4108, %v3658
        %v4110 = vpop.permute.xlu0 %4109
        %4111 = vset.pattern.permute.xlu0 0
        %4112 = vperm.xlu0 %4111, %v3660
        %v4113 = vpop.permute.xlu0 %4112
        %4114 = vset.pattern.permute.xlu0 0
        %4115 = vperm.xlu0 %4114, %v3662
        %v4116 = vpop.permute.xlu0 %4115
        %4117 = vset.pattern.permute.xlu0 0
        %4118 = vperm.xlu0 %4117, %v3664
        %v4119 = vpop.permute.xlu0 %4118
        %4120 = vset.pattern.permute.xlu0 0
        %4121 = vperm.xlu0 %4120, %v3666
        %v4122 = vpop.permute.xlu0 %4121
        %4123 = vset.pattern.permute.xlu0 0
        %4124 = vperm.xlu0 %4123, %v3668
        %v4125 = vpop.permute.xlu0 %4124
        %4126 = vset.pattern.permute.xlu0 0
        %4127 = vperm.xlu0 %4126, %v3670
        %v4128 = vpop.permute.xlu0 %4127
        %4129 = vset.pattern.permute.xlu0 0
        %4130 = vperm.xlu0 %4129, %v3672
        %v4131 = vpop.permute.xlu0 %4130
        %4132 = vset.pattern.permute.xlu0 0
        %4133 = vperm.xlu0 %4132, %v3674
        %v4134 = vpop.permute.xlu0 %4133
        %4135 = vset.pattern.permute.xlu0 0
        %4136 = vperm.xlu0 %4135, %v3676
        %v4137 = vpop.permute.xlu0 %4136
        %4138 = vset.pattern.permute.xlu0 0
        %4139 = vperm.xlu0 %4138, %v3678
        %v4140 = vpop.permute.xlu0 %4139
        %4141 = vset.pattern.permute.xlu0 0
        %4142 = vperm.xlu0 %4141, %v3680
        %v4143 = vpop.permute.xlu0 %4142
        %4144 = vset.pattern.permute.xlu0 0
        %4145 = vperm.xlu0 %4144, %v3682
        %v4146 = vpop.permute.xlu0 %4145
        %4147 = vset.pattern.permute.xlu0 0
        %4148 = vperm.xlu0 %4147, %v3684
        %v4149 = vpop.permute.xlu0 %4148
        %4150 = vset.pattern.permute.xlu0 0
        %4151 = vperm.xlu0 %4150, %v3686
        %v4152 = vpop.permute.xlu0 %4151
        %4153 = vset.pattern.permute.xlu0 0
        %4154 = vperm.xlu0 %4153, %v3688
        %v4155 = vpop.permute.xlu0 %4154
        %4156 = vset.pattern.permute.xlu0 0
        %4157 = vperm.xlu0 %4156, %v3690
        %v4158 = vpop.permute.xlu0 %4157
        %4159 = vset.pattern.permute.xlu0 0
        %4160 = vperm.xlu0 %4159, %v3692
        %v4161 = vpop.permute.xlu0 %4160
        %4162 = vset.pattern.permute.xlu0 0
        %4163 = vperm.xlu0 %4162, %v3694
        %v4164 = vpop.permute.xlu0 %4163
        %4165 = vset.pattern.permute.xlu0 0
        %4166 = vperm.xlu0 %4165, %v3696
        %v4167 = vpop.permute.xlu0 %4166
        %4168 = vset.pattern.permute.xlu0 0
        %4169 = vperm.xlu0 %4168, %v3698
        %v4170 = vpop.permute.xlu0 %4169
        %4171 = vset.pattern.permute.xlu0 0
        %4172 = vperm.xlu0 %4171, %v3700
        %v4173 = vpop.permute.xlu0 %4172
        %4174 = vset.pattern.permute.xlu0 0
        %4175 = vperm.xlu0 %4174, %v3702
        %v4176 = vpop.permute.xlu0 %4175
        %4177 = vset.pattern.permute.xlu0 0
        %4178 = vperm.xlu0 %4177, %v3704
        %v4179 = vpop.permute.xlu0 %4178
        %4180 = vset.pattern.permute.xlu0 0
        %4181 = vperm.xlu0 %4180, %v3706
        %v4182 = vpop.permute.xlu0 %4181
        %4183 = vset.pattern.permute.xlu0 0
        %4184 = vperm.xlu0 %4183, %v3708
        %v4185 = vpop.permute.xlu0 %4184
        %4186 = vset.pattern.permute.xlu0 0
        %4187 = vperm.xlu0 %4186, %v3710
        %v4188 = vpop.permute.xlu0 %4187
        %4189 = vset.pattern.permute.xlu0 0
        %4190 = vperm.xlu0 %4189, %v3712
        %v4191 = vpop.permute.xlu0 %4190
        %4192 = vset.pattern.permute.xlu0 0
        %4193 = vperm.xlu0 %4192, %v3714
        %v4194 = vpop.permute.xlu0 %4193
        %4195 = vset.pattern.permute.xlu0 0
        %4196 = vperm.xlu0 %4195, %v3716
        %v4197 = vpop.permute.xlu0 %4196
        %4198 = vset.pattern.permute.xlu0 0
        %4199 = vperm.xlu0 %4198, %v3718
        %v4200 = vpop.permute.xlu0 %4199
        %4201 = vset.pattern.permute.xlu0 0
        %4202 = vperm.xlu0 %4201, %v3720
        %v4203 = vpop.permute.xlu0 %4202
        %4204 = vset.pattern.permute.xlu0 0
        %4205 = vperm.xlu0 %4204, %v3722
        %v4206 = vpop.permute.xlu0 %4205
        %4207 = vset.pattern.permute.xlu0 0
        %4208 = vperm.xlu0 %4207, %v3724
        %v4209 = vpop.permute.xlu0 %4208
        %4210 = vset.pattern.permute.xlu0 0
        %4211 = vperm.xlu0 %4210, %v3726
        %v4212 = vpop.permute.xlu0 %4211
        %4213 = vset.pattern.permute.xlu0 0
        %4214 = vperm.xlu0 %4213, %v3728
        %v4215 = vpop.permute.xlu0 %4214
        %4216 = vset.pattern.permute.xlu0 0
        %4217 = vperm.xlu0 %4216, %v3730
        %v4218 = vpop.permute.xlu0 %4217
        %4219 = vset.pattern.permute.xlu0 0
        %4220 = vperm.xlu0 %4219, %v3732
        %v4221 = vpop.permute.xlu0 %4220
        %4222 = vset.pattern.permute.xlu0 0
        %4223 = vperm.xlu0 %4222, %v3734
        %v4224 = vpop.permute.xlu0 %4223
        %4225 = vset.pattern.permute.xlu0 0
        %4226 = vperm.xlu0 %4225, %v3736
        %v4227 = vpop.permute.xlu0 %4226
        %4228 = vset.pattern.permute.xlu0 0
        %4229 = vperm.xlu0 %4228, %v3738
        %v4230 = vpop.permute.xlu0 %4229
        %4231 = vset.pattern.permute.xlu0 0
        %4232 = vperm.xlu0 %4231, %v3740
        %v4233 = vpop.permute.xlu0 %4232
        %4234 = vset.pattern.permute.xlu0 0
        %4235 = vperm.xlu0 %4234, %v3742
        %v4236 = vpop.permute.xlu0 %4235
        %4237 = vset.pattern.permute.xlu0 0
        %4238 = vperm.xlu0 %4237, %v3744
        %v4239 = vpop.permute.xlu0 %4238
        %4240 = vset.pattern.permute.xlu0 0
        %4241 = vperm.xlu0 %4240, %v3746
        %v4242 = vpop.permute.xlu0 %4241
        %4243 = vset.pattern.permute.xlu0 0
        %4244 = vperm.xlu0 %4243, %v3748
        %v4245 = vpop.permute.xlu0 %4244
        %4246 = vset.pattern.permute.xlu0 0
        %4247 = vperm.xlu0 %4246, %v3750
        %v4248 = vpop.permute.xlu0 %4247
        %4249 = vset.pattern.permute.xlu0 0
        %4250 = vperm.xlu0 %4249, %v3752
        %v4251 = vpop.permute.xlu0 %4250
        %4252 = vset.pattern.permute.xlu0 0
        %4253 = vperm.xlu0 %4252, %v3754
        %v4254 = vpop.permute.xlu0 %4253
        %4255 = vset.pattern.permute.xlu0 0
        %4256 = vperm.xlu0 %4255, %v3756
        %v4257 = vpop.permute.xlu0 %4256
        %4258 = vset.pattern.permute.xlu0 0
        %4259 = vperm.xlu0 %4258, %v3758
        %v4260 = vpop.permute.xlu0 %4259
        %4261 = vset.pattern.permute.xlu0 0
        %4262 = vperm.xlu0 %4261, %v3760
        %v4263 = vpop.permute.xlu0 %4262
        %4264 = vset.pattern.permute.xlu0 0
        %4265 = vperm.xlu0 %4264, %v3762
        %v4266 = vpop.permute.xlu0 %4265
        %4267 = vset.pattern.permute.xlu0 0
        %4268 = vperm.xlu0 %4267, %v3764
        %v4269 = vpop.permute.xlu0 %4268
        %4270 = vset.pattern.permute.xlu0 0
        %4271 = vperm.xlu0 %4270, %v3766
        %v4272 = vpop.permute.xlu0 %4271
        %4273 = vset.pattern.permute.xlu0 0
        %4274 = vperm.xlu0 %4273, %v3768
        %v4275 = vpop.permute.xlu0 %4274
        %4276 = vset.pattern.permute.xlu0 0
        %4277 = vperm.xlu0 %4276, %v3770
        %v4278 = vpop.permute.xlu0 %4277
        %4279 = vset.pattern.permute.xlu0 0
        %4280 = vperm.xlu0 %4279, %v3772
        %v4281 = vpop.permute.xlu0 %4280
        %4282 = vset.pattern.permute.xlu0 0
        %4283 = vperm.xlu0 %4282, %v3774
        %v4284 = vpop.permute.xlu0 %4283
        %4285 = vset.pattern.permute.xlu0 0
        %4286 = vperm.xlu0 %4285, %v3776
        %v4287 = vpop.permute.xlu0 %4286
        %4288 = vset.pattern.permute.xlu0 0
        %4289 = vperm.xlu0 %4288, %v3778
        %v4290 = vpop.permute.xlu0 %4289
        %v4291 = vlaneseq
        %v4292 = vshrl.u32 %v4291, 7
        %v4293 = vsub.s32 %v2392, %v4292
        %v4294 = vrot.slane %v3909, %v4293
        %v4295 = vlaneseq
        %v4296 = vshrl.u32 %v4295, 7
        %v4297 = vsub.s32 %v2397, %v4296
        %v4298 = vrot.slane %v3912, %v4297
        %v4299 = vsel %vm2402, %v4298, %v4294
        %v4300 = vlaneseq
        %v4301 = vshrl.u32 %v4300, 7
        %v4302 = vsub.s32 %v2392, %v4301
        %v4303 = vrot.slane %v3915, %v4302
        %v4304 = vlaneseq
        %v4305 = vshrl.u32 %v4304, 7
        %v4306 = vsub.s32 %v2397, %v4305
        %v4307 = vrot.slane %v3918, %v4306
        %v4308 = vsel %vm2402, %v4307, %v4303
        %v4309 = vlaneseq
        %v4310 = vshrl.u32 %v4309, 7
        %v4311 = vsub.s32 %v2392, %v4310
        %v4312 = vrot.slane %v3921, %v4311
        %v4313 = vlaneseq
        %v4314 = vshrl.u32 %v4313, 7
        %v4315 = vsub.s32 %v2397, %v4314
        %v4316 = vrot.slane %v3924, %v4315
        %v4317 = vsel %vm2402, %v4316, %v4312
        %v4318 = vlaneseq
        %v4319 = vshrl.u32 %v4318, 7
        %v4320 = vsub.s32 %v2392, %v4319
        %v4321 = vrot.slane %v3927, %v4320
        %v4322 = vlaneseq
        %v4323 = vshrl.u32 %v4322, 7
        %v4324 = vsub.s32 %v2397, %v4323
        %v4325 = vrot.slane %v3930, %v4324
        %v4326 = vsel %vm2402, %v4325, %v4321
        %v4327 = vlaneseq
        %v4328 = vshrl.u32 %v4327, 7
        %v4329 = vsub.s32 %v2392, %v4328
        %v4330 = vrot.slane %v3933, %v4329
        %v4331 = vlaneseq
        %v4332 = vshrl.u32 %v4331, 7
        %v4333 = vsub.s32 %v2397, %v4332
        %v4334 = vrot.slane %v3936, %v4333
        %v4335 = vsel %vm2402, %v4334, %v4330
        %v4336 = vlaneseq
        %v4337 = vshrl.u32 %v4336, 7
        %v4338 = vsub.s32 %v2392, %v4337
        %v4339 = vrot.slane %v3939, %v4338
        %v4340 = vlaneseq
        %v4341 = vshrl.u32 %v4340, 7
        %v4342 = vsub.s32 %v2397, %v4341
        %v4343 = vrot.slane %v3942, %v4342
        %v4344 = vsel %vm2402, %v4343, %v4339
        %v4345 = vlaneseq
        %v4346 = vshrl.u32 %v4345, 7
        %v4347 = vsub.s32 %v2392, %v4346
        %v4348 = vrot.slane %v3945, %v4347
        %v4349 = vlaneseq
        %v4350 = vshrl.u32 %v4349, 7
        %v4351 = vsub.s32 %v2397, %v4350
        %v4352 = vrot.slane %v3948, %v4351
        %v4353 = vsel %vm2402, %v4352, %v4348
        %v4354 = vlaneseq
        %v4355 = vshrl.u32 %v4354, 7
        %v4356 = vsub.s32 %v2392, %v4355
        %v4357 = vrot.slane %v3951, %v4356
        %v4358 = vlaneseq
        %v4359 = vshrl.u32 %v4358, 7
        %v4360 = vsub.s32 %v2397, %v4359
        %v4361 = vrot.slane %v3954, %v4360
        %v4362 = vsel %vm2402, %v4361, %v4357
        %v4363 = vlaneseq
        %v4364 = vshrl.u32 %v4363, 7
        %v4365 = vsub.s32 %v2392, %v4364
        %v4366 = vrot.slane %v3957, %v4365
        %v4367 = vlaneseq
        %v4368 = vshrl.u32 %v4367, 7
        %v4369 = vsub.s32 %v2397, %v4368
        %v4370 = vrot.slane %v3960, %v4369
        %v4371 = vsel %vm2402, %v4370, %v4366
        %v4372 = vlaneseq
        %v4373 = vshrl.u32 %v4372, 7
        %v4374 = vsub.s32 %v2392, %v4373
        %v4375 = vrot.slane %v3963, %v4374
        %v4376 = vlaneseq
        %v4377 = vshrl.u32 %v4376, 7
        %v4378 = vsub.s32 %v2397, %v4377
        %v4379 = vrot.slane %v3966, %v4378
        %v4380 = vsel %vm2402, %v4379, %v4375
        %v4381 = vlaneseq
        %v4382 = vshrl.u32 %v4381, 7
        %v4383 = vsub.s32 %v2392, %v4382
        %v4384 = vrot.slane %v3969, %v4383
        %v4385 = vlaneseq
        %v4386 = vshrl.u32 %v4385, 7
        %v4387 = vsub.s32 %v2397, %v4386
        %v4388 = vrot.slane %v3972, %v4387
        %v4389 = vsel %vm2402, %v4388, %v4384
        %v4390 = vlaneseq
        %v4391 = vshrl.u32 %v4390, 7
        %v4392 = vsub.s32 %v2392, %v4391
        %v4393 = vrot.slane %v3975, %v4392
        %v4394 = vlaneseq
        %v4395 = vshrl.u32 %v4394, 7
        %v4396 = vsub.s32 %v2397, %v4395
        %v4397 = vrot.slane %v3978, %v4396
        %v4398 = vsel %vm2402, %v4397, %v4393
        %v4399 = vlaneseq
        %v4400 = vshrl.u32 %v4399, 7
        %v4401 = vsub.s32 %v2392, %v4400
        %v4402 = vrot.slane %v3981, %v4401
        %v4403 = vlaneseq
        %v4404 = vshrl.u32 %v4403, 7
        %v4405 = vsub.s32 %v2397, %v4404
        %v4406 = vrot.slane %v3984, %v4405
        %v4407 = vsel %vm2402, %v4406, %v4402
        %v4408 = vlaneseq
        %v4409 = vshrl.u32 %v4408, 7
        %v4410 = vsub.s32 %v2392, %v4409
        %v4411 = vrot.slane %v3987, %v4410
        %v4412 = vlaneseq
        %v4413 = vshrl.u32 %v4412, 7
        %v4414 = vsub.s32 %v2397, %v4413
        %v4415 = vrot.slane %v3990, %v4414
        %v4416 = vsel %vm2402, %v4415, %v4411
        %v4417 = vlaneseq
        %v4418 = vshrl.u32 %v4417, 7
        %v4419 = vsub.s32 %v2392, %v4418
        %v4420 = vrot.slane %v3993, %v4419
        %v4421 = vlaneseq
        %v4422 = vshrl.u32 %v4421, 7
        %v4423 = vsub.s32 %v2397, %v4422
        %v4424 = vrot.slane %v3996, %v4423
        %v4425 = vsel %vm2402, %v4424, %v4420
        %v4426 = vlaneseq
        %v4427 = vshrl.u32 %v4426, 7
        %v4428 = vsub.s32 %v2392, %v4427
        %v4429 = vrot.slane %v3999, %v4428
        %v4430 = vlaneseq
        %v4431 = vshrl.u32 %v4430, 7
        %v4432 = vsub.s32 %v2397, %v4431
        %v4433 = vrot.slane %v4002, %v4432
        %v4434 = vsel %vm2402, %v4433, %v4429
        %v4435 = vlaneseq
        %v4436 = vshrl.u32 %v4435, 7
        %v4437 = vsub.s32 %v2392, %v4436
        %v4438 = vrot.slane %v4005, %v4437
        %v4439 = vlaneseq
        %v4440 = vshrl.u32 %v4439, 7
        %v4441 = vsub.s32 %v2397, %v4440
        %v4442 = vrot.slane %v4008, %v4441
        %v4443 = vsel %vm2402, %v4442, %v4438
        %v4444 = vlaneseq
        %v4445 = vshrl.u32 %v4444, 7
        %v4446 = vsub.s32 %v2392, %v4445
        %v4447 = vrot.slane %v4011, %v4446
        %v4448 = vlaneseq
        %v4449 = vshrl.u32 %v4448, 7
        %v4450 = vsub.s32 %v2397, %v4449
        %v4451 = vrot.slane %v4014, %v4450
        %v4452 = vsel %vm2402, %v4451, %v4447
        %v4453 = vlaneseq
        %v4454 = vshrl.u32 %v4453, 7
        %v4455 = vsub.s32 %v2392, %v4454
        %v4456 = vrot.slane %v4017, %v4455
        %v4457 = vlaneseq
        %v4458 = vshrl.u32 %v4457, 7
        %v4459 = vsub.s32 %v2397, %v4458
        %v4460 = vrot.slane %v4020, %v4459
        %v4461 = vsel %vm2402, %v4460, %v4456
        %v4462 = vlaneseq
        %v4463 = vshrl.u32 %v4462, 7
        %v4464 = vsub.s32 %v2392, %v4463
        %v4465 = vrot.slane %v4023, %v4464
        %v4466 = vlaneseq
        %v4467 = vshrl.u32 %v4466, 7
        %v4468 = vsub.s32 %v2397, %v4467
        %v4469 = vrot.slane %v4026, %v4468
        %v4470 = vsel %vm2402, %v4469, %v4465
        %v4471 = vlaneseq
        %v4472 = vshrl.u32 %v4471, 7
        %v4473 = vsub.s32 %v2392, %v4472
        %v4474 = vrot.slane %v4029, %v4473
        %v4475 = vlaneseq
        %v4476 = vshrl.u32 %v4475, 7
        %v4477 = vsub.s32 %v2397, %v4476
        %v4478 = vrot.slane %v4032, %v4477
        %v4479 = vsel %vm2402, %v4478, %v4474
        %v4480 = vlaneseq
        %v4481 = vshrl.u32 %v4480, 7
        %v4482 = vsub.s32 %v2392, %v4481
        %v4483 = vrot.slane %v4035, %v4482
        %v4484 = vlaneseq
        %v4485 = vshrl.u32 %v4484, 7
        %v4486 = vsub.s32 %v2397, %v4485
        %v4487 = vrot.slane %v4038, %v4486
        %v4488 = vsel %vm2402, %v4487, %v4483
        %v4489 = vlaneseq
        %v4490 = vshrl.u32 %v4489, 7
        %v4491 = vsub.s32 %v2392, %v4490
        %v4492 = vrot.slane %v4041, %v4491
        %v4493 = vlaneseq
        %v4494 = vshrl.u32 %v4493, 7
        %v4495 = vsub.s32 %v2397, %v4494
        %v4496 = vrot.slane %v4044, %v4495
        %v4497 = vsel %vm2402, %v4496, %v4492
        %v4498 = vlaneseq
        %v4499 = vshrl.u32 %v4498, 7
        %v4500 = vsub.s32 %v2392, %v4499
        %v4501 = vrot.slane %v4047, %v4500
        %v4502 = vlaneseq
        %v4503 = vshrl.u32 %v4502, 7
        %v4504 = vsub.s32 %v2397, %v4503
        %v4505 = vrot.slane %v4050, %v4504
        %v4506 = vsel %vm2402, %v4505, %v4501
        %v4507 = vlaneseq
        %v4508 = vshrl.u32 %v4507, 7
        %v4509 = vsub.s32 %v2392, %v4508
        %v4510 = vrot.slane %v4053, %v4509
        %v4511 = vlaneseq
        %v4512 = vshrl.u32 %v4511, 7
        %v4513 = vsub.s32 %v2397, %v4512
        %v4514 = vrot.slane %v4056, %v4513
        %v4515 = vsel %vm2402, %v4514, %v4510
        %v4516 = vlaneseq
        %v4517 = vshrl.u32 %v4516, 7
        %v4518 = vsub.s32 %v2392, %v4517
        %v4519 = vrot.slane %v4059, %v4518
        %v4520 = vlaneseq
        %v4521 = vshrl.u32 %v4520, 7
        %v4522 = vsub.s32 %v2397, %v4521
        %v4523 = vrot.slane %v4062, %v4522
        %v4524 = vsel %vm2402, %v4523, %v4519
        %v4525 = vlaneseq
        %v4526 = vshrl.u32 %v4525, 7
        %v4527 = vsub.s32 %v2392, %v4526
        %v4528 = vrot.slane %v4065, %v4527
        %v4529 = vlaneseq
        %v4530 = vshrl.u32 %v4529, 7
        %v4531 = vsub.s32 %v2397, %v4530
        %v4532 = vrot.slane %v4068, %v4531
        %v4533 = vsel %vm2402, %v4532, %v4528
        %v4534 = vlaneseq
        %v4535 = vshrl.u32 %v4534, 7
        %v4536 = vsub.s32 %v2392, %v4535
        %v4537 = vrot.slane %v4071, %v4536
        %v4538 = vlaneseq
        %v4539 = vshrl.u32 %v4538, 7
        %v4540 = vsub.s32 %v2397, %v4539
        %v4541 = vrot.slane %v4074, %v4540
        %v4542 = vsel %vm2402, %v4541, %v4537
        %v4543 = vlaneseq
        %v4544 = vshrl.u32 %v4543, 7
        %v4545 = vsub.s32 %v2392, %v4544
        %v4546 = vrot.slane %v4077, %v4545
        %v4547 = vlaneseq
        %v4548 = vshrl.u32 %v4547, 7
        %v4549 = vsub.s32 %v2397, %v4548
        %v4550 = vrot.slane %v4080, %v4549
        %v4551 = vsel %vm2402, %v4550, %v4546
        %v4552 = vlaneseq
        %v4553 = vshrl.u32 %v4552, 7
        %v4554 = vsub.s32 %v2392, %v4553
        %v4555 = vrot.slane %v4083, %v4554
        %v4556 = vlaneseq
        %v4557 = vshrl.u32 %v4556, 7
        %v4558 = vsub.s32 %v2397, %v4557
        %v4559 = vrot.slane %v4086, %v4558
        %v4560 = vsel %vm2402, %v4559, %v4555
        %v4561 = vlaneseq
        %v4562 = vshrl.u32 %v4561, 7
        %v4563 = vsub.s32 %v2392, %v4562
        %v4564 = vrot.slane %v4089, %v4563
        %v4565 = vlaneseq
        %v4566 = vshrl.u32 %v4565, 7
        %v4567 = vsub.s32 %v2397, %v4566
        %v4568 = vrot.slane %v4092, %v4567
        %v4569 = vsel %vm2402, %v4568, %v4564
        %v4570 = vlaneseq
        %v4571 = vshrl.u32 %v4570, 7
        %v4572 = vsub.s32 %v2392, %v4571
        %v4573 = vrot.slane %v4095, %v4572
        %v4574 = vlaneseq
        %v4575 = vshrl.u32 %v4574, 7
        %v4576 = vsub.s32 %v2397, %v4575
        %v4577 = vrot.slane %v4098, %v4576
        %v4578 = vsel %vm2402, %v4577, %v4573
        %v4579 = vlaneseq
        %v4580 = vshrl.u32 %v4579, 7
        %v4581 = vsub.s32 %v2392, %v4580
        %v4582 = vrot.slane %v4101, %v4581
        %v4583 = vlaneseq
        %v4584 = vshrl.u32 %v4583, 7
        %v4585 = vsub.s32 %v2397, %v4584
        %v4586 = vrot.slane %v4104, %v4585
        %v4587 = vsel %vm2402, %v4586, %v4582
        %v4588 = vlaneseq
        %v4589 = vshrl.u32 %v4588, 7
        %v4590 = vsub.s32 %v2392, %v4589
        %v4591 = vrot.slane %v4107, %v4590
        %v4592 = vlaneseq
        %v4593 = vshrl.u32 %v4592, 7
        %v4594 = vsub.s32 %v2397, %v4593
        %v4595 = vrot.slane %v4110, %v4594
        %v4596 = vsel %vm2402, %v4595, %v4591
        %v4597 = vlaneseq
        %v4598 = vshrl.u32 %v4597, 7
        %v4599 = vsub.s32 %v2392, %v4598
        %v4600 = vrot.slane %v4113, %v4599
        %v4601 = vlaneseq
        %v4602 = vshrl.u32 %v4601, 7
        %v4603 = vsub.s32 %v2397, %v4602
        %v4604 = vrot.slane %v4116, %v4603
        %v4605 = vsel %vm2402, %v4604, %v4600
        %v4606 = vlaneseq
        %v4607 = vshrl.u32 %v4606, 7
        %v4608 = vsub.s32 %v2392, %v4607
        %v4609 = vrot.slane %v4119, %v4608
        %v4610 = vlaneseq
        %v4611 = vshrl.u32 %v4610, 7
        %v4612 = vsub.s32 %v2397, %v4611
        %v4613 = vrot.slane %v4122, %v4612
        %v4614 = vsel %vm2402, %v4613, %v4609
        %v4615 = vlaneseq
        %v4616 = vshrl.u32 %v4615, 7
        %v4617 = vsub.s32 %v2392, %v4616
        %v4618 = vrot.slane %v4125, %v4617
        %v4619 = vlaneseq
        %v4620 = vshrl.u32 %v4619, 7
        %v4621 = vsub.s32 %v2397, %v4620
        %v4622 = vrot.slane %v4128, %v4621
        %v4623 = vsel %vm2402, %v4622, %v4618
        %v4624 = vlaneseq
        %v4625 = vshrl.u32 %v4624, 7
        %v4626 = vsub.s32 %v2392, %v4625
        %v4627 = vrot.slane %v4131, %v4626
        %v4628 = vlaneseq
        %v4629 = vshrl.u32 %v4628, 7
        %v4630 = vsub.s32 %v2397, %v4629
        %v4631 = vrot.slane %v4134, %v4630
        %v4632 = vsel %vm2402, %v4631, %v4627
        %v4633 = vlaneseq
        %v4634 = vshrl.u32 %v4633, 7
        %v4635 = vsub.s32 %v2392, %v4634
        %v4636 = vrot.slane %v4137, %v4635
        %v4637 = vlaneseq
        %v4638 = vshrl.u32 %v4637, 7
        %v4639 = vsub.s32 %v2397, %v4638
        %v4640 = vrot.slane %v4140, %v4639
        %v4641 = vsel %vm2402, %v4640, %v4636
        %v4642 = vlaneseq
        %v4643 = vshrl.u32 %v4642, 7
        %v4644 = vsub.s32 %v2392, %v4643
        %v4645 = vrot.slane %v4143, %v4644
        %v4646 = vlaneseq
        %v4647 = vshrl.u32 %v4646, 7
        %v4648 = vsub.s32 %v2397, %v4647
        %v4649 = vrot.slane %v4146, %v4648
        %v4650 = vsel %vm2402, %v4649, %v4645
        %v4651 = vlaneseq
        %v4652 = vshrl.u32 %v4651, 7
        %v4653 = vsub.s32 %v2392, %v4652
        %v4654 = vrot.slane %v4149, %v4653
        %v4655 = vlaneseq
        %v4656 = vshrl.u32 %v4655, 7
        %v4657 = vsub.s32 %v2397, %v4656
        %v4658 = vrot.slane %v4152, %v4657
        %v4659 = vsel %vm2402, %v4658, %v4654
        %v4660 = vlaneseq
        %v4661 = vshrl.u32 %v4660, 7
        %v4662 = vsub.s32 %v2392, %v4661
        %v4663 = vrot.slane %v4155, %v4662
        %v4664 = vlaneseq
        %v4665 = vshrl.u32 %v4664, 7
        %v4666 = vsub.s32 %v2397, %v4665
        %v4667 = vrot.slane %v4158, %v4666
        %v4668 = vsel %vm2402, %v4667, %v4663
        %v4669 = vlaneseq
        %v4670 = vshrl.u32 %v4669, 7
        %v4671 = vsub.s32 %v2392, %v4670
        %v4672 = vrot.slane %v4161, %v4671
        %v4673 = vlaneseq
        %v4674 = vshrl.u32 %v4673, 7
        %v4675 = vsub.s32 %v2397, %v4674
        %v4676 = vrot.slane %v4164, %v4675
        %v4677 = vsel %vm2402, %v4676, %v4672
        %v4678 = vlaneseq
        %v4679 = vshrl.u32 %v4678, 7
        %v4680 = vsub.s32 %v2392, %v4679
        %v4681 = vrot.slane %v4167, %v4680
        %v4682 = vlaneseq
        %v4683 = vshrl.u32 %v4682, 7
        %v4684 = vsub.s32 %v2397, %v4683
        %v4685 = vrot.slane %v4170, %v4684
        %v4686 = vsel %vm2402, %v4685, %v4681
        %v4687 = vlaneseq
        %v4688 = vshrl.u32 %v4687, 7
        %v4689 = vsub.s32 %v2392, %v4688
        %v4690 = vrot.slane %v4173, %v4689
        %v4691 = vlaneseq
        %v4692 = vshrl.u32 %v4691, 7
        %v4693 = vsub.s32 %v2397, %v4692
        %v4694 = vrot.slane %v4176, %v4693
        %v4695 = vsel %vm2402, %v4694, %v4690
        %v4696 = vlaneseq
        %v4697 = vshrl.u32 %v4696, 7
        %v4698 = vsub.s32 %v2392, %v4697
        %v4699 = vrot.slane %v4179, %v4698
        %v4700 = vlaneseq
        %v4701 = vshrl.u32 %v4700, 7
        %v4702 = vsub.s32 %v2397, %v4701
        %v4703 = vrot.slane %v4182, %v4702
        %v4704 = vsel %vm2402, %v4703, %v4699
        %v4705 = vlaneseq
        %v4706 = vshrl.u32 %v4705, 7
        %v4707 = vsub.s32 %v2392, %v4706
        %v4708 = vrot.slane %v4185, %v4707
        %v4709 = vlaneseq
        %v4710 = vshrl.u32 %v4709, 7
        %v4711 = vsub.s32 %v2397, %v4710
        %v4712 = vrot.slane %v4188, %v4711
        %v4713 = vsel %vm2402, %v4712, %v4708
        %v4714 = vlaneseq
        %v4715 = vshrl.u32 %v4714, 7
        %v4716 = vsub.s32 %v2392, %v4715
        %v4717 = vrot.slane %v4191, %v4716
        %v4718 = vlaneseq
        %v4719 = vshrl.u32 %v4718, 7
        %v4720 = vsub.s32 %v2397, %v4719
        %v4721 = vrot.slane %v4194, %v4720
        %v4722 = vsel %vm2402, %v4721, %v4717
        %v4723 = vlaneseq
        %v4724 = vshrl.u32 %v4723, 7
        %v4725 = vsub.s32 %v2392, %v4724
        %v4726 = vrot.slane %v4197, %v4725
        %v4727 = vlaneseq
        %v4728 = vshrl.u32 %v4727, 7
        %v4729 = vsub.s32 %v2397, %v4728
        %v4730 = vrot.slane %v4200, %v4729
        %v4731 = vsel %vm2402, %v4730, %v4726
        %v4732 = vlaneseq
        %v4733 = vshrl.u32 %v4732, 7
        %v4734 = vsub.s32 %v2392, %v4733
        %v4735 = vrot.slane %v4203, %v4734
        %v4736 = vlaneseq
        %v4737 = vshrl.u32 %v4736, 7
        %v4738 = vsub.s32 %v2397, %v4737
        %v4739 = vrot.slane %v4206, %v4738
        %v4740 = vsel %vm2402, %v4739, %v4735
        %v4741 = vlaneseq
        %v4742 = vshrl.u32 %v4741, 7
        %v4743 = vsub.s32 %v2392, %v4742
        %v4744 = vrot.slane %v4209, %v4743
        %v4745 = vlaneseq
        %v4746 = vshrl.u32 %v4745, 7
        %v4747 = vsub.s32 %v2397, %v4746
        %v4748 = vrot.slane %v4212, %v4747
        %v4749 = vsel %vm2402, %v4748, %v4744
        %v4750 = vlaneseq
        %v4751 = vshrl.u32 %v4750, 7
        %v4752 = vsub.s32 %v2392, %v4751
        %v4753 = vrot.slane %v4215, %v4752
        %v4754 = vlaneseq
        %v4755 = vshrl.u32 %v4754, 7
        %v4756 = vsub.s32 %v2397, %v4755
        %v4757 = vrot.slane %v4218, %v4756
        %v4758 = vsel %vm2402, %v4757, %v4753
        %v4759 = vlaneseq
        %v4760 = vshrl.u32 %v4759, 7
        %v4761 = vsub.s32 %v2392, %v4760
        %v4762 = vrot.slane %v4221, %v4761
        %v4763 = vlaneseq
        %v4764 = vshrl.u32 %v4763, 7
        %v4765 = vsub.s32 %v2397, %v4764
        %v4766 = vrot.slane %v4224, %v4765
        %v4767 = vsel %vm2402, %v4766, %v4762
        %v4768 = vlaneseq
        %v4769 = vshrl.u32 %v4768, 7
        %v4770 = vsub.s32 %v2392, %v4769
        %v4771 = vrot.slane %v4227, %v4770
        %v4772 = vlaneseq
        %v4773 = vshrl.u32 %v4772, 7
        %v4774 = vsub.s32 %v2397, %v4773
        %v4775 = vrot.slane %v4230, %v4774
        %v4776 = vsel %vm2402, %v4775, %v4771
        %v4777 = vlaneseq
        %v4778 = vshrl.u32 %v4777, 7
        %v4779 = vsub.s32 %v2392, %v4778
        %v4780 = vrot.slane %v4233, %v4779
        %v4781 = vlaneseq
        %v4782 = vshrl.u32 %v4781, 7
        %v4783 = vsub.s32 %v2397, %v4782
        %v4784 = vrot.slane %v4236, %v4783
        %v4785 = vsel %vm2402, %v4784, %v4780
        %v4786 = vlaneseq
        %v4787 = vshrl.u32 %v4786, 7
        %v4788 = vsub.s32 %v2392, %v4787
        %v4789 = vrot.slane %v4239, %v4788
        %v4790 = vlaneseq
        %v4791 = vshrl.u32 %v4790, 7
        %v4792 = vsub.s32 %v2397, %v4791
        %v4793 = vrot.slane %v4242, %v4792
        %v4794 = vsel %vm2402, %v4793, %v4789
        %v4795 = vlaneseq
        %v4796 = vshrl.u32 %v4795, 7
        %v4797 = vsub.s32 %v2392, %v4796
        %v4798 = vrot.slane %v4245, %v4797
        %v4799 = vlaneseq
        %v4800 = vshrl.u32 %v4799, 7
        %v4801 = vsub.s32 %v2397, %v4800
        %v4802 = vrot.slane %v4248, %v4801
        %v4803 = vsel %vm2402, %v4802, %v4798
        %v4804 = vlaneseq
        %v4805 = vshrl.u32 %v4804, 7
        %v4806 = vsub.s32 %v2392, %v4805
        %v4807 = vrot.slane %v4251, %v4806
        %v4808 = vlaneseq
        %v4809 = vshrl.u32 %v4808, 7
        %v4810 = vsub.s32 %v2397, %v4809
        %v4811 = vrot.slane %v4254, %v4810
        %v4812 = vsel %vm2402, %v4811, %v4807
        %v4813 = vlaneseq
        %v4814 = vshrl.u32 %v4813, 7
        %v4815 = vsub.s32 %v2392, %v4814
        %v4816 = vrot.slane %v4257, %v4815
        %v4817 = vlaneseq
        %v4818 = vshrl.u32 %v4817, 7
        %v4819 = vsub.s32 %v2397, %v4818
        %v4820 = vrot.slane %v4260, %v4819
        %v4821 = vsel %vm2402, %v4820, %v4816
        %v4822 = vlaneseq
        %v4823 = vshrl.u32 %v4822, 7
        %v4824 = vsub.s32 %v2392, %v4823
        %v4825 = vrot.slane %v4263, %v4824
        %v4826 = vlaneseq
        %v4827 = vshrl.u32 %v4826, 7
        %v4828 = vsub.s32 %v2397, %v4827
        %v4829 = vrot.slane %v4266, %v4828
        %v4830 = vsel %vm2402, %v4829, %v4825
        %v4831 = vlaneseq
        %v4832 = vshrl.u32 %v4831, 7
        %v4833 = vsub.s32 %v2392, %v4832
        %v4834 = vrot.slane %v4269, %v4833
        %v4835 = vlaneseq
        %v4836 = vshrl.u32 %v4835, 7
        %v4837 = vsub.s32 %v2397, %v4836
        %v4838 = vrot.slane %v4272, %v4837
        %v4839 = vsel %vm2402, %v4838, %v4834
        %v4840 = vlaneseq
        %v4841 = vshrl.u32 %v4840, 7
        %v4842 = vsub.s32 %v2392, %v4841
        %v4843 = vrot.slane %v4275, %v4842
        %v4844 = vlaneseq
        %v4845 = vshrl.u32 %v4844, 7
        %v4846 = vsub.s32 %v2397, %v4845
        %v4847 = vrot.slane %v4278, %v4846
        %v4848 = vsel %vm2402, %v4847, %v4843
        %v4849 = vlaneseq
        %v4850 = vshrl.u32 %v4849, 7
        %v4851 = vsub.s32 %v2392, %v4850
        %v4852 = vrot.slane %v4281, %v4851
        %v4853 = vlaneseq
        %v4854 = vshrl.u32 %v4853, 7
        %v4855 = vsub.s32 %v2397, %v4854
        %v4856 = vrot.slane %v4284, %v4855
        %v4857 = vsel %vm2402, %v4856, %v4852
        %v4858 = vlaneseq
        %v4859 = vshrl.u32 %v4858, 7
        %v4860 = vsub.s32 %v2392, %v4859
        %v4861 = vrot.slane %v4287, %v4860
        %v4862 = vlaneseq
        %v4863 = vshrl.u32 %v4862, 7
        %v4864 = vsub.s32 %v2397, %v4863
        %v4865 = vrot.slane %v4290, %v4864
        %v4866 = vsel %vm2402, %v4865, %v4861
        %v4867 = vsel %vm2971, %v4308, %v4299
        %v4868 = vsel %vm2973, %v4317, %v4867
        %v4869 = vsel %vm2975, %v4326, %v4868
        %v4870 = vsel %vm2977, %v4335, %v4869
        %v4871 = vsel %vm2979, %v4344, %v4870
        %v4872 = vsel %vm2981, %v4353, %v4871
        %v4873 = vsel %vm2983, %v4362, %v4872
        %v4874 = vsel %vm2971, %v4380, %v4371
        %v4875 = vsel %vm2973, %v4389, %v4874
        %v4876 = vsel %vm2975, %v4398, %v4875
        %v4877 = vsel %vm2977, %v4407, %v4876
        %v4878 = vsel %vm2979, %v4416, %v4877
        %v4879 = vsel %vm2981, %v4425, %v4878
        %v4880 = vsel %vm2983, %v4434, %v4879
        %v4881 = vsel %vm2971, %v4452, %v4443
        %v4882 = vsel %vm2973, %v4461, %v4881
        %v4883 = vsel %vm2975, %v4470, %v4882
        %v4884 = vsel %vm2977, %v4479, %v4883
        %v4885 = vsel %vm2979, %v4488, %v4884
        %v4886 = vsel %vm2981, %v4497, %v4885
        %v4887 = vsel %vm2983, %v4506, %v4886
        %v4888 = vsel %vm2971, %v4524, %v4515
        %v4889 = vsel %vm2973, %v4533, %v4888
        %v4890 = vsel %vm2975, %v4542, %v4889
        %v4891 = vsel %vm2977, %v4551, %v4890
        %v4892 = vsel %vm2979, %v4560, %v4891
        %v4893 = vsel %vm2981, %v4569, %v4892
        %v4894 = vsel %vm2983, %v4578, %v4893
        %v4895 = vsel %vm2971, %v4596, %v4587
        %v4896 = vsel %vm2973, %v4605, %v4895
        %v4897 = vsel %vm2975, %v4614, %v4896
        %v4898 = vsel %vm2977, %v4623, %v4897
        %v4899 = vsel %vm2979, %v4632, %v4898
        %v4900 = vsel %vm2981, %v4641, %v4899
        %v4901 = vsel %vm2983, %v4650, %v4900
        %v4902 = vsel %vm2971, %v4668, %v4659
        %v4903 = vsel %vm2973, %v4677, %v4902
        %v4904 = vsel %vm2975, %v4686, %v4903
        %v4905 = vsel %vm2977, %v4695, %v4904
        %v4906 = vsel %vm2979, %v4704, %v4905
        %v4907 = vsel %vm2981, %v4713, %v4906
        %v4908 = vsel %vm2983, %v4722, %v4907
        %v4909 = vsel %vm2971, %v4740, %v4731
        %v4910 = vsel %vm2973, %v4749, %v4909
        %v4911 = vsel %vm2975, %v4758, %v4910
        %v4912 = vsel %vm2977, %v4767, %v4911
        %v4913 = vsel %vm2979, %v4776, %v4912
        %v4914 = vsel %vm2981, %v4785, %v4913
        %v4915 = vsel %vm2983, %v4794, %v4914
        %v4916 = vsel %vm2971, %v4812, %v4803
        %v4917 = vsel %vm2973, %v4821, %v4916
        %v4918 = vsel %vm2975, %v4830, %v4917
        %v4919 = vsel %vm2977, %v4839, %v4918
        %v4920 = vsel %vm2979, %v4848, %v4919
        %v4921 = vsel %vm2981, %v4857, %v4920
        %v4922 = vsel %vm2983, %v4866, %v4921
        %v4931 = vsel %vm3042, %v4873, 0.0
        %4932 = vadd.xlane.f32.xlu0 %v4931
        %v4933 = vpop.xlane.xlu0 %4932
        %v4934 = vsel %vm3042, %v4880, 0.0
        %4935 = vadd.xlane.f32.xlu0 %v4934
        %v4936 = vpop.xlane.xlu0 %4935
        %v4937 = vsel %vm3042, %v4887, 0.0
        %4938 = vadd.xlane.f32.xlu0 %v4937
        %v4939 = vpop.xlane.xlu0 %4938
        %v4940 = vsel %vm3042, %v4894, 0.0
        %4941 = vadd.xlane.f32.xlu0 %v4940
        %v4942 = vpop.xlane.xlu0 %4941
        %v4943 = vsel %vm3042, %v4901, 0.0
        %4944 = vadd.xlane.f32.xlu0 %v4943
        %v4945 = vpop.xlane.xlu0 %4944
        %v4946 = vsel %vm3042, %v4908, 0.0
        %4947 = vadd.xlane.f32.xlu0 %v4946
        %v4948 = vpop.xlane.xlu0 %4947
        %v4949 = vsel %vm3042, %v4915, 0.0
        %4950 = vadd.xlane.f32.xlu0 %v4949
        %v4951 = vpop.xlane.xlu0 %4950
        %v4952 = vsel %vm3042, %v4922, 0.0
        %4953 = vadd.xlane.f32.xlu0 %v4952
        %v4954 = vpop.xlane.xlu0 %4953
        %v4955 = vrcp.pop %v4933
        %v4956 = vrcp.pop %v4936
        %v4957 = vrcp.pop %v4939
        %v4958 = vrcp.pop %v4942
        %v4959 = vrcp.pop %v4945
        %v4960 = vrcp.pop %v4948
        %v4961 = vrcp.pop %v4951
        %v4962 = vrcp.pop %v4954
        %v4971 = vlaneseq
        %v4972 = vshrl.u32 %v4971, 7
        %v4973 = vsub.s32 0, %v4972
        %v4974 = vrot.slane %v4955, %v4973
        %v4975 = vlaneseq
        %v4976 = vshrl.u32 %v4975, 7
        %v4977 = vsub.s32 1, %v4976
        %v4978 = vrot.slane %v4955, %v4977
        %v4979 = vlaneseq
        %v4980 = vshrl.u32 %v4979, 7
        %v4981 = vsub.s32 2, %v4980
        %v4982 = vrot.slane %v4955, %v4981
        %v4983 = vlaneseq
        %v4984 = vshrl.u32 %v4983, 7
        %v4985 = vsub.s32 3, %v4984
        %v4986 = vrot.slane %v4955, %v4985
        %v4987 = vlaneseq
        %v4988 = vshrl.u32 %v4987, 7
        %v4989 = vsub.s32 4, %v4988
        %v4990 = vrot.slane %v4955, %v4989
        %v4991 = vlaneseq
        %v4992 = vshrl.u32 %v4991, 7
        %v4993 = vsub.s32 5, %v4992
        %v4994 = vrot.slane %v4955, %v4993
        %v4995 = vlaneseq
        %v4996 = vshrl.u32 %v4995, 7
        %v4997 = vsub.s32 6, %v4996
        %v4998 = vrot.slane %v4955, %v4997
        %v4999 = vlaneseq
        %v5000 = vshrl.u32 %v4999, 7
        %v5001 = vsub.s32 7, %v5000
        %v5002 = vrot.slane %v4955, %v5001
        %v5003 = vlaneseq
        %v5004 = vshrl.u32 %v5003, 7
        %v5005 = vsub.s32 0, %v5004
        %v5006 = vrot.slane %v4956, %v5005
        %v5007 = vlaneseq
        %v5008 = vshrl.u32 %v5007, 7
        %v5009 = vsub.s32 1, %v5008
        %v5010 = vrot.slane %v4956, %v5009
        %v5011 = vlaneseq
        %v5012 = vshrl.u32 %v5011, 7
        %v5013 = vsub.s32 2, %v5012
        %v5014 = vrot.slane %v4956, %v5013
        %v5015 = vlaneseq
        %v5016 = vshrl.u32 %v5015, 7
        %v5017 = vsub.s32 3, %v5016
        %v5018 = vrot.slane %v4956, %v5017
        %v5019 = vlaneseq
        %v5020 = vshrl.u32 %v5019, 7
        %v5021 = vsub.s32 4, %v5020
        %v5022 = vrot.slane %v4956, %v5021
        %v5023 = vlaneseq
        %v5024 = vshrl.u32 %v5023, 7
        %v5025 = vsub.s32 5, %v5024
        %v5026 = vrot.slane %v4956, %v5025
        %v5027 = vlaneseq
        %v5028 = vshrl.u32 %v5027, 7
        %v5029 = vsub.s32 6, %v5028
        %v5030 = vrot.slane %v4956, %v5029
        %v5031 = vlaneseq
        %v5032 = vshrl.u32 %v5031, 7
        %v5033 = vsub.s32 7, %v5032
        %v5034 = vrot.slane %v4956, %v5033
        %v5035 = vlaneseq
        %v5036 = vshrl.u32 %v5035, 7
        %v5037 = vsub.s32 0, %v5036
        %v5038 = vrot.slane %v4957, %v5037
        %v5039 = vlaneseq
        %v5040 = vshrl.u32 %v5039, 7
        %v5041 = vsub.s32 1, %v5040
        %v5042 = vrot.slane %v4957, %v5041
        %v5043 = vlaneseq
        %v5044 = vshrl.u32 %v5043, 7
        %v5045 = vsub.s32 2, %v5044
        %v5046 = vrot.slane %v4957, %v5045
        %v5047 = vlaneseq
        %v5048 = vshrl.u32 %v5047, 7
        %v5049 = vsub.s32 3, %v5048
        %v5050 = vrot.slane %v4957, %v5049
        %v5051 = vlaneseq
        %v5052 = vshrl.u32 %v5051, 7
        %v5053 = vsub.s32 4, %v5052
        %v5054 = vrot.slane %v4957, %v5053
        %v5055 = vlaneseq
        %v5056 = vshrl.u32 %v5055, 7
        %v5057 = vsub.s32 5, %v5056
        %v5058 = vrot.slane %v4957, %v5057
        %v5059 = vlaneseq
        %v5060 = vshrl.u32 %v5059, 7
        %v5061 = vsub.s32 6, %v5060
        %v5062 = vrot.slane %v4957, %v5061
        %v5063 = vlaneseq
        %v5064 = vshrl.u32 %v5063, 7
        %v5065 = vsub.s32 7, %v5064
        %v5066 = vrot.slane %v4957, %v5065
        %v5067 = vlaneseq
        %v5068 = vshrl.u32 %v5067, 7
        %v5069 = vsub.s32 0, %v5068
        %v5070 = vrot.slane %v4958, %v5069
        %v5071 = vlaneseq
        %v5072 = vshrl.u32 %v5071, 7
        %v5073 = vsub.s32 1, %v5072
        %v5074 = vrot.slane %v4958, %v5073
        %v5075 = vlaneseq
        %v5076 = vshrl.u32 %v5075, 7
        %v5077 = vsub.s32 2, %v5076
        %v5078 = vrot.slane %v4958, %v5077
        %v5079 = vlaneseq
        %v5080 = vshrl.u32 %v5079, 7
        %v5081 = vsub.s32 3, %v5080
        %v5082 = vrot.slane %v4958, %v5081
        %v5083 = vlaneseq
        %v5084 = vshrl.u32 %v5083, 7
        %v5085 = vsub.s32 4, %v5084
        %v5086 = vrot.slane %v4958, %v5085
        %v5087 = vlaneseq
        %v5088 = vshrl.u32 %v5087, 7
        %v5089 = vsub.s32 5, %v5088
        %v5090 = vrot.slane %v4958, %v5089
        %v5091 = vlaneseq
        %v5092 = vshrl.u32 %v5091, 7
        %v5093 = vsub.s32 6, %v5092
        %v5094 = vrot.slane %v4958, %v5093
        %v5095 = vlaneseq
        %v5096 = vshrl.u32 %v5095, 7
        %v5097 = vsub.s32 7, %v5096
        %v5098 = vrot.slane %v4958, %v5097
        %v5099 = vlaneseq
        %v5100 = vshrl.u32 %v5099, 7
        %v5101 = vsub.s32 0, %v5100
        %v5102 = vrot.slane %v4959, %v5101
        %v5103 = vlaneseq
        %v5104 = vshrl.u32 %v5103, 7
        %v5105 = vsub.s32 1, %v5104
        %v5106 = vrot.slane %v4959, %v5105
        %v5107 = vlaneseq
        %v5108 = vshrl.u32 %v5107, 7
        %v5109 = vsub.s32 2, %v5108
        %v5110 = vrot.slane %v4959, %v5109
        %v5111 = vlaneseq
        %v5112 = vshrl.u32 %v5111, 7
        %v5113 = vsub.s32 3, %v5112
        %v5114 = vrot.slane %v4959, %v5113
        %v5115 = vlaneseq
        %v5116 = vshrl.u32 %v5115, 7
        %v5117 = vsub.s32 4, %v5116
        %v5118 = vrot.slane %v4959, %v5117
        %v5119 = vlaneseq
        %v5120 = vshrl.u32 %v5119, 7
        %v5121 = vsub.s32 5, %v5120
        %v5122 = vrot.slane %v4959, %v5121
        %v5123 = vlaneseq
        %v5124 = vshrl.u32 %v5123, 7
        %v5125 = vsub.s32 6, %v5124
        %v5126 = vrot.slane %v4959, %v5125
        %v5127 = vlaneseq
        %v5128 = vshrl.u32 %v5127, 7
        %v5129 = vsub.s32 7, %v5128
        %v5130 = vrot.slane %v4959, %v5129
        %v5131 = vlaneseq
        %v5132 = vshrl.u32 %v5131, 7
        %v5133 = vsub.s32 0, %v5132
        %v5134 = vrot.slane %v4960, %v5133
        %v5135 = vlaneseq
        %v5136 = vshrl.u32 %v5135, 7
        %v5137 = vsub.s32 1, %v5136
        %v5138 = vrot.slane %v4960, %v5137
        %v5139 = vlaneseq
        %v5140 = vshrl.u32 %v5139, 7
        %v5141 = vsub.s32 2, %v5140
        %v5142 = vrot.slane %v4960, %v5141
        %v5143 = vlaneseq
        %v5144 = vshrl.u32 %v5143, 7
        %v5145 = vsub.s32 3, %v5144
        %v5146 = vrot.slane %v4960, %v5145
        %v5147 = vlaneseq
        %v5148 = vshrl.u32 %v5147, 7
        %v5149 = vsub.s32 4, %v5148
        %v5150 = vrot.slane %v4960, %v5149
        %v5151 = vlaneseq
        %v5152 = vshrl.u32 %v5151, 7
        %v5153 = vsub.s32 5, %v5152
        %v5154 = vrot.slane %v4960, %v5153
        %v5155 = vlaneseq
        %v5156 = vshrl.u32 %v5155, 7
        %v5157 = vsub.s32 6, %v5156
        %v5158 = vrot.slane %v4960, %v5157
        %v5159 = vlaneseq
        %v5160 = vshrl.u32 %v5159, 7
        %v5161 = vsub.s32 7, %v5160
        %v5162 = vrot.slane %v4960, %v5161
        %v5163 = vlaneseq
        %v5164 = vshrl.u32 %v5163, 7
        %v5165 = vsub.s32 0, %v5164
        %v5166 = vrot.slane %v4961, %v5165
        %v5167 = vlaneseq
        %v5168 = vshrl.u32 %v5167, 7
        %v5169 = vsub.s32 1, %v5168
        %v5170 = vrot.slane %v4961, %v5169
        %v5171 = vlaneseq
        %v5172 = vshrl.u32 %v5171, 7
        %v5173 = vsub.s32 2, %v5172
        %v5174 = vrot.slane %v4961, %v5173
        %v5175 = vlaneseq
        %v5176 = vshrl.u32 %v5175, 7
        %v5177 = vsub.s32 3, %v5176
        %v5178 = vrot.slane %v4961, %v5177
        %v5179 = vlaneseq
        %v5180 = vshrl.u32 %v5179, 7
        %v5181 = vsub.s32 4, %v5180
        %v5182 = vrot.slane %v4961, %v5181
        %v5183 = vlaneseq
        %v5184 = vshrl.u32 %v5183, 7
        %v5185 = vsub.s32 5, %v5184
        %v5186 = vrot.slane %v4961, %v5185
        %v5187 = vlaneseq
        %v5188 = vshrl.u32 %v5187, 7
        %v5189 = vsub.s32 6, %v5188
        %v5190 = vrot.slane %v4961, %v5189
        %v5191 = vlaneseq
        %v5192 = vshrl.u32 %v5191, 7
        %v5193 = vsub.s32 7, %v5192
        %v5194 = vrot.slane %v4961, %v5193
        %v5195 = vlaneseq
        %v5196 = vshrl.u32 %v5195, 7
        %v5197 = vsub.s32 0, %v5196
        %v5198 = vrot.slane %v4962, %v5197
        %v5199 = vlaneseq
        %v5200 = vshrl.u32 %v5199, 7
        %v5201 = vsub.s32 1, %v5200
        %v5202 = vrot.slane %v4962, %v5201
        %v5203 = vlaneseq
        %v5204 = vshrl.u32 %v5203, 7
        %v5205 = vsub.s32 2, %v5204
        %v5206 = vrot.slane %v4962, %v5205
        %v5207 = vlaneseq
        %v5208 = vshrl.u32 %v5207, 7
        %v5209 = vsub.s32 3, %v5208
        %v5210 = vrot.slane %v4962, %v5209
        %v5211 = vlaneseq
        %v5212 = vshrl.u32 %v5211, 7
        %v5213 = vsub.s32 4, %v5212
        %v5214 = vrot.slane %v4962, %v5213
        %v5215 = vlaneseq
        %v5216 = vshrl.u32 %v5215, 7
        %v5217 = vsub.s32 5, %v5216
        %v5218 = vrot.slane %v4962, %v5217
        %v5219 = vlaneseq
        %v5220 = vshrl.u32 %v5219, 7
        %v5221 = vsub.s32 6, %v5220
        %v5222 = vrot.slane %v4962, %v5221
        %v5223 = vlaneseq
        %v5224 = vshrl.u32 %v5223, 7
        %v5225 = vsub.s32 7, %v5224
        %v5226 = vrot.slane %v4962, %v5225
        %v5291 = vmul.f32 %v3524, %v4974
        %v5292 = vmul.f32 %v3526, %v4974
        %v5293 = vmul.f32 %v3528, %v4978
        %v5294 = vmul.f32 %v3530, %v4978
        %v5295 = vmul.f32 %v3532, %v4982
        %v5296 = vmul.f32 %v3534, %v4982
        %v5297 = vmul.f32 %v3536, %v4986
        %v5298 = vmul.f32 %v3538, %v4986
        %v5299 = vmul.f32 %v3540, %v4990
        %v5300 = vmul.f32 %v3542, %v4990
        %v5301 = vmul.f32 %v3544, %v4994
        %v5302 = vmul.f32 %v3546, %v4994
        %v5303 = vmul.f32 %v3548, %v4998
        %v5304 = vmul.f32 %v3550, %v4998
        %v5305 = vmul.f32 %v3552, %v5002
        %v5306 = vmul.f32 %v3554, %v5002
        %v5307 = vmul.f32 %v3556, %v5006
        %v5308 = vmul.f32 %v3558, %v5006
        %v5309 = vmul.f32 %v3560, %v5010
        %v5310 = vmul.f32 %v3562, %v5010
        %v5311 = vmul.f32 %v3564, %v5014
        %v5312 = vmul.f32 %v3566, %v5014
        %v5313 = vmul.f32 %v3568, %v5018
        %v5314 = vmul.f32 %v3570, %v5018
        %v5315 = vmul.f32 %v3572, %v5022
        %v5316 = vmul.f32 %v3574, %v5022
        %v5317 = vmul.f32 %v3576, %v5026
        %v5318 = vmul.f32 %v3578, %v5026
        %v5319 = vmul.f32 %v3580, %v5030
        %v5320 = vmul.f32 %v3582, %v5030
        %v5321 = vmul.f32 %v3584, %v5034
        %v5322 = vmul.f32 %v3586, %v5034
        %v5323 = vmul.f32 %v3588, %v5038
        %v5324 = vmul.f32 %v3590, %v5038
        %v5325 = vmul.f32 %v3592, %v5042
        %v5326 = vmul.f32 %v3594, %v5042
        %v5327 = vmul.f32 %v3596, %v5046
        %v5328 = vmul.f32 %v3598, %v5046
        %v5329 = vmul.f32 %v3600, %v5050
        %v5330 = vmul.f32 %v3602, %v5050
        %v5331 = vmul.f32 %v3604, %v5054
        %v5332 = vmul.f32 %v3606, %v5054
        %v5333 = vmul.f32 %v3608, %v5058
        %v5334 = vmul.f32 %v3610, %v5058
        %v5335 = vmul.f32 %v3612, %v5062
        %v5336 = vmul.f32 %v3614, %v5062
        %v5337 = vmul.f32 %v3616, %v5066
        %v5338 = vmul.f32 %v3618, %v5066
        %v5339 = vmul.f32 %v3620, %v5070
        %v5340 = vmul.f32 %v3622, %v5070
        %v5341 = vmul.f32 %v3624, %v5074
        %v5342 = vmul.f32 %v3626, %v5074
        %v5343 = vmul.f32 %v3628, %v5078
        %v5344 = vmul.f32 %v3630, %v5078
        %v5345 = vmul.f32 %v3632, %v5082
        %v5346 = vmul.f32 %v3634, %v5082
        %v5347 = vmul.f32 %v3636, %v5086
        %v5348 = vmul.f32 %v3638, %v5086
        %v5349 = vmul.f32 %v3640, %v5090
        %v5350 = vmul.f32 %v3642, %v5090
        %v5351 = vmul.f32 %v3644, %v5094
        %v5352 = vmul.f32 %v3646, %v5094
        %v5353 = vmul.f32 %v3648, %v5098
        %v5354 = vmul.f32 %v3650, %v5098
        %v5355 = vmul.f32 %v3652, %v5102
        %v5356 = vmul.f32 %v3654, %v5102
        %v5357 = vmul.f32 %v3656, %v5106
        %v5358 = vmul.f32 %v3658, %v5106
        %v5359 = vmul.f32 %v3660, %v5110
        %v5360 = vmul.f32 %v3662, %v5110
        %v5361 = vmul.f32 %v3664, %v5114
        %v5362 = vmul.f32 %v3666, %v5114
        %v5363 = vmul.f32 %v3668, %v5118
        %v5364 = vmul.f32 %v3670, %v5118
        %v5365 = vmul.f32 %v3672, %v5122
        %v5366 = vmul.f32 %v3674, %v5122
        %v5367 = vmul.f32 %v3676, %v5126
        %v5368 = vmul.f32 %v3678, %v5126
        %v5369 = vmul.f32 %v3680, %v5130
        %v5370 = vmul.f32 %v3682, %v5130
        %v5371 = vmul.f32 %v3684, %v5134
        %v5372 = vmul.f32 %v3686, %v5134
        %v5373 = vmul.f32 %v3688, %v5138
        %v5374 = vmul.f32 %v3690, %v5138
        %v5375 = vmul.f32 %v3692, %v5142
        %v5376 = vmul.f32 %v3694, %v5142
        %v5377 = vmul.f32 %v3696, %v5146
        %v5378 = vmul.f32 %v3698, %v5146
        %v5379 = vmul.f32 %v3700, %v5150
        %v5380 = vmul.f32 %v3702, %v5150
        %v5381 = vmul.f32 %v3704, %v5154
        %v5382 = vmul.f32 %v3706, %v5154
        %v5383 = vmul.f32 %v3708, %v5158
        %v5384 = vmul.f32 %v3710, %v5158
        %v5385 = vmul.f32 %v3712, %v5162
        %v5386 = vmul.f32 %v3714, %v5162
        %v5387 = vmul.f32 %v3716, %v5166
        %v5388 = vmul.f32 %v3718, %v5166
        %v5389 = vmul.f32 %v3720, %v5170
        %v5390 = vmul.f32 %v3722, %v5170
        %v5391 = vmul.f32 %v3724, %v5174
        %v5392 = vmul.f32 %v3726, %v5174
        %v5393 = vmul.f32 %v3728, %v5178
        %v5394 = vmul.f32 %v3730, %v5178
        %v5395 = vmul.f32 %v3732, %v5182
        %v5396 = vmul.f32 %v3734, %v5182
        %v5397 = vmul.f32 %v3736, %v5186
        %v5398 = vmul.f32 %v3738, %v5186
        %v5399 = vmul.f32 %v3740, %v5190
        %v5400 = vmul.f32 %v3742, %v5190
        %v5401 = vmul.f32 %v3744, %v5194
        %v5402 = vmul.f32 %v3746, %v5194
        %v5403 = vmul.f32 %v3748, %v5198
        %v5404 = vmul.f32 %v3750, %v5198
        %v5405 = vmul.f32 %v3752, %v5202
        %v5406 = vmul.f32 %v3754, %v5202
        %v5407 = vmul.f32 %v3756, %v5206
        %v5408 = vmul.f32 %v3758, %v5206
        %v5409 = vmul.f32 %v3760, %v5210
        %v5410 = vmul.f32 %v3762, %v5210
        %v5411 = vmul.f32 %v3764, %v5214
        %v5412 = vmul.f32 %v3766, %v5214
        %v5413 = vmul.f32 %v3768, %v5218
        %v5414 = vmul.f32 %v3770, %v5218
        %v5415 = vmul.f32 %v3772, %v5222
        %v5416 = vmul.f32 %v3774, %v5222
        %v5417 = vmul.f32 %v3776, %v5226
        %v5418 = vmul.f32 %v3778, %v5226
        %5435 = vset.pattern.permute.xlu0 0
        %5436 = vperm.xlu0 %5435, %v5291
        %v5437 = vpop.permute.xlu0 %5436
        %5438 = vset.pattern.permute.xlu0 0
        %5439 = vperm.xlu0 %5438, %v5292
        %v5440 = vpop.permute.xlu0 %5439
        %5441 = vset.pattern.permute.xlu0 0
        %5442 = vperm.xlu0 %5441, %v5293
        %v5443 = vpop.permute.xlu0 %5442
        %5444 = vset.pattern.permute.xlu0 0
        %5445 = vperm.xlu0 %5444, %v5294
        %v5446 = vpop.permute.xlu0 %5445
        %5447 = vset.pattern.permute.xlu0 0
        %5448 = vperm.xlu0 %5447, %v5295
        %v5449 = vpop.permute.xlu0 %5448
        %5450 = vset.pattern.permute.xlu0 0
        %5451 = vperm.xlu0 %5450, %v5296
        %v5452 = vpop.permute.xlu0 %5451
        %5453 = vset.pattern.permute.xlu0 0
        %5454 = vperm.xlu0 %5453, %v5297
        %v5455 = vpop.permute.xlu0 %5454
        %5456 = vset.pattern.permute.xlu0 0
        %5457 = vperm.xlu0 %5456, %v5298
        %v5458 = vpop.permute.xlu0 %5457
        %5459 = vset.pattern.permute.xlu0 0
        %5460 = vperm.xlu0 %5459, %v5299
        %v5461 = vpop.permute.xlu0 %5460
        %5462 = vset.pattern.permute.xlu0 0
        %5463 = vperm.xlu0 %5462, %v5300
        %v5464 = vpop.permute.xlu0 %5463
        %5465 = vset.pattern.permute.xlu0 0
        %5466 = vperm.xlu0 %5465, %v5301
        %v5467 = vpop.permute.xlu0 %5466
        %5468 = vset.pattern.permute.xlu0 0
        %5469 = vperm.xlu0 %5468, %v5302
        %v5470 = vpop.permute.xlu0 %5469
        %5471 = vset.pattern.permute.xlu0 0
        %5472 = vperm.xlu0 %5471, %v5303
        %v5473 = vpop.permute.xlu0 %5472
        %5474 = vset.pattern.permute.xlu0 0
        %5475 = vperm.xlu0 %5474, %v5304
        %v5476 = vpop.permute.xlu0 %5475
        %5477 = vset.pattern.permute.xlu0 0
        %5478 = vperm.xlu0 %5477, %v5305
        %v5479 = vpop.permute.xlu0 %5478
        %5480 = vset.pattern.permute.xlu0 0
        %5481 = vperm.xlu0 %5480, %v5306
        %v5482 = vpop.permute.xlu0 %5481
        %v5483 = vlaneseq
        %v5484 = vshrl.u32 %v5483, 7
        %v5485 = vsub.s32 %v2392, %v5484
        %v5486 = vrot.slane %v5437, %v5485
        %v5487 = vlaneseq
        %v5488 = vshrl.u32 %v5487, 7
        %v5489 = vsub.s32 %v2397, %v5488
        %v5490 = vrot.slane %v5440, %v5489
        %v5491 = vsel %vm2402, %v5490, %v5486
        %v5492 = vlaneseq
        %v5493 = vshrl.u32 %v5492, 7
        %v5494 = vsub.s32 %v2392, %v5493
        %v5495 = vrot.slane %v5443, %v5494
        %v5496 = vlaneseq
        %v5497 = vshrl.u32 %v5496, 7
        %v5498 = vsub.s32 %v2397, %v5497
        %v5499 = vrot.slane %v5446, %v5498
        %v5500 = vsel %vm2402, %v5499, %v5495
        %v5501 = vlaneseq
        %v5502 = vshrl.u32 %v5501, 7
        %v5503 = vsub.s32 %v2392, %v5502
        %v5504 = vrot.slane %v5449, %v5503
        %v5505 = vlaneseq
        %v5506 = vshrl.u32 %v5505, 7
        %v5507 = vsub.s32 %v2397, %v5506
        %v5508 = vrot.slane %v5452, %v5507
        %v5509 = vsel %vm2402, %v5508, %v5504
        %v5510 = vlaneseq
        %v5511 = vshrl.u32 %v5510, 7
        %v5512 = vsub.s32 %v2392, %v5511
        %v5513 = vrot.slane %v5455, %v5512
        %v5514 = vlaneseq
        %v5515 = vshrl.u32 %v5514, 7
        %v5516 = vsub.s32 %v2397, %v5515
        %v5517 = vrot.slane %v5458, %v5516
        %v5518 = vsel %vm2402, %v5517, %v5513
        %v5519 = vlaneseq
        %v5520 = vshrl.u32 %v5519, 7
        %v5521 = vsub.s32 %v2392, %v5520
        %v5522 = vrot.slane %v5461, %v5521
        %v5523 = vlaneseq
        %v5524 = vshrl.u32 %v5523, 7
        %v5525 = vsub.s32 %v2397, %v5524
        %v5526 = vrot.slane %v5464, %v5525
        %v5527 = vsel %vm2402, %v5526, %v5522
        %v5528 = vlaneseq
        %v5529 = vshrl.u32 %v5528, 7
        %v5530 = vsub.s32 %v2392, %v5529
        %v5531 = vrot.slane %v5467, %v5530
        %v5532 = vlaneseq
        %v5533 = vshrl.u32 %v5532, 7
        %v5534 = vsub.s32 %v2397, %v5533
        %v5535 = vrot.slane %v5470, %v5534
        %v5536 = vsel %vm2402, %v5535, %v5531
        %v5537 = vlaneseq
        %v5538 = vshrl.u32 %v5537, 7
        %v5539 = vsub.s32 %v2392, %v5538
        %v5540 = vrot.slane %v5473, %v5539
        %v5541 = vlaneseq
        %v5542 = vshrl.u32 %v5541, 7
        %v5543 = vsub.s32 %v2397, %v5542
        %v5544 = vrot.slane %v5476, %v5543
        %v5545 = vsel %vm2402, %v5544, %v5540
        %v5546 = vlaneseq
        %v5547 = vshrl.u32 %v5546, 7
        %v5548 = vsub.s32 %v2392, %v5547
        %v5549 = vrot.slane %v5479, %v5548
        %v5550 = vlaneseq
        %v5551 = vshrl.u32 %v5550, 7
        %v5552 = vsub.s32 %v2397, %v5551
        %v5553 = vrot.slane %v5482, %v5552
        %v5554 = vsel %vm2402, %v5553, %v5549
        %v5555 = vsel %vm2971, %v5500, %v5491
        %v5556 = vsel %vm2973, %v5509, %v5555
        %v5557 = vsel %vm2975, %v5518, %v5556
        %v5558 = vsel %vm2977, %v5527, %v5557
        %v5559 = vsel %vm2979, %v5536, %v5558
        %v5560 = vsel %vm2981, %v5545, %v5559
        %v5561 = vsel %vm2983, %v5554, %v5560
        %v5562 = vsel %vm3042, %v5561, 0
        %5564 = vmatprep.subr.mxu0 0.0
        %5565 = vmatpush1.msra.mxu0 0.0
        %5566 = vmatprep.subr.mxu0 0.0
        %5567 = vmatpush1.msra.mxu0 0.0
        %5568 = vmatprep.subr.mxu0 0.0
        %5569 = vmatpush1.msra.mxu0 0.0
        %5570 = vmatprep.subr.mxu0 0.0
        %5571 = vmatpush1.msra.mxu0 0.0
        %5572 = vmatprep.subr.mxu0 0.0
        %5573 = vmatpush1.msra.mxu0 0.0
        %5574 = vmatprep.subr.mxu0 0.0
        %5575 = vmatpush1.msra.mxu0 0.0
        %5576 = vmatprep.subr.mxu0 0.0
        %5577 = vmatpush1.msra.mxu0 0.0
        %5578 = vmatprep.subr.mxu0 0.0
        %5579 = vmatpush1.msra.mxu0 0.0
        %5580 = vmatprep.subr.mxu0 0.0
        %5581 = vmatpush1.msra.mxu0 0.0
        %5582 = vmatprep.subr.mxu0 0.0
        %5583 = vmatpush1.msra.mxu0 0.0
        %5584 = vmatprep.subr.mxu0 0.0
        %5585 = vmatpush1.msra.mxu0 0.0
        %5586 = vmatprep.subr.mxu0 0.0
        %5587 = vmatpush1.msra.mxu0 0.0
        %5588 = vmatprep.subr.mxu0 0.0
        %5589 = vmatpush1.msra.mxu0 0.0
        %5590 = vmatprep.subr.mxu0 0.0
        %5591 = vmatpush1.msra.mxu0 0.0
        %5592 = vmatprep.subr.mxu0 0.0
        %5593 = vmatpush1.msra.mxu0 %v478
        %5594 = vmatprep.subr.mxu0 0.0
        %5595 = vmatpush1.msra.mxu0 %v477
        %5596 = vmatprep.subr.mxu0 0.0
        %5597 = vmatpush2.msra.mxu0 0.0
        %5598 = vmatprep.subr.mxu0 0.0
        %5599 = vmatpush2.msra.mxu0 0.0
        %5600 = vmatprep.subr.mxu0 0.0
        %5601 = vmatpush2.msra.mxu0 0.0
        %5602 = vmatprep.subr.mxu0 0.0
        %5603 = vmatpush2.msra.mxu0 0.0
        %5604 = vmatprep.subr.mxu0 0.0
        %5605 = vmatpush2.msra.mxu0 0.0
        %5606 = vmatprep.subr.mxu0 0.0
        %5607 = vmatpush2.msra.mxu0 0.0
        %5608 = vmatprep.subr.mxu0 0.0
        %5609 = vmatpush2.msra.mxu0 0.0
        %5610 = vmatprep.subr.mxu0 0.0
        %5611 = vmatpush2.msra.mxu0 0.0
        %5612 = vmatprep.subr.mxu0 0.0
        %5613 = vmatpush2.msra.mxu0 0.0
        %5614 = vmatprep.subr.mxu0 0.0
        %5615 = vmatpush2.msra.mxu0 0.0
        %5616 = vmatprep.subr.mxu0 0.0
        %5617 = vmatpush2.msra.mxu0 0.0
        %5618 = vmatprep.subr.mxu0 0.0
        %5619 = vmatpush2.msra.mxu0 0.0
        %5620 = vmatprep.subr.mxu0 0.0
        %5621 = vmatpush2.msra.mxu0 0.0
        %5622 = vmatprep.subr.mxu0 0.0
        %5623 = vmatpush2.msra.mxu0 0.0
        %5624 = vmatprep.subr.mxu0 0.0
        %5625 = vmatpush2.msra.mxu0 0.0
        %5626 = vmatprep.subr.mxu0 0.0
        %5627 = vmatpush2.msra.mxu0 0.0
        %5628 = vmatprep.mubr.f32.mxu0 0.0
        %5629 = vmatmul.mubr.f32.gmra.mxu0 %v5562
        %v5630 = vpop.f32.mrf.mxu0
        %v5631 = vadd.f32 0.0, %v5630
        %v5632 = vpop.f32.mrf.mxu0
        %5633 = vdwg.mxu0
        %5650 = vset.pattern.permute.xlu0 0
        %5651 = vperm.xlu0 %5650, %v5307
        %v5652 = vpop.permute.xlu0 %5651
        %5653 = vset.pattern.permute.xlu0 0
        %5654 = vperm.xlu0 %5653, %v5308
        %v5655 = vpop.permute.xlu0 %5654
        %5656 = vset.pattern.permute.xlu0 0
        %5657 = vperm.xlu0 %5656, %v5309
        %v5658 = vpop.permute.xlu0 %5657
        %5659 = vset.pattern.permute.xlu0 0
        %5660 = vperm.xlu0 %5659, %v5310
        %v5661 = vpop.permute.xlu0 %5660
        %5662 = vset.pattern.permute.xlu0 0
        %5663 = vperm.xlu0 %5662, %v5311
        %v5664 = vpop.permute.xlu0 %5663
        %5665 = vset.pattern.permute.xlu0 0
        %5666 = vperm.xlu0 %5665, %v5312
        %v5667 = vpop.permute.xlu0 %5666
        %5668 = vset.pattern.permute.xlu0 0
        %5669 = vperm.xlu0 %5668, %v5313
        %v5670 = vpop.permute.xlu0 %5669
        %5671 = vset.pattern.permute.xlu0 0
        %5672 = vperm.xlu0 %5671, %v5314
        %v5673 = vpop.permute.xlu0 %5672
        %5674 = vset.pattern.permute.xlu0 0
        %5675 = vperm.xlu0 %5674, %v5315
        %v5676 = vpop.permute.xlu0 %5675
        %5677 = vset.pattern.permute.xlu0 0
        %5678 = vperm.xlu0 %5677, %v5316
        %v5679 = vpop.permute.xlu0 %5678
        %5680 = vset.pattern.permute.xlu0 0
        %5681 = vperm.xlu0 %5680, %v5317
        %v5682 = vpop.permute.xlu0 %5681
        %5683 = vset.pattern.permute.xlu0 0
        %5684 = vperm.xlu0 %5683, %v5318
        %v5685 = vpop.permute.xlu0 %5684
        %5686 = vset.pattern.permute.xlu0 0
        %5687 = vperm.xlu0 %5686, %v5319
        %v5688 = vpop.permute.xlu0 %5687
        %5689 = vset.pattern.permute.xlu0 0
        %5690 = vperm.xlu0 %5689, %v5320
        %v5691 = vpop.permute.xlu0 %5690
        %5692 = vset.pattern.permute.xlu0 0
        %5693 = vperm.xlu0 %5692, %v5321
        %v5694 = vpop.permute.xlu0 %5693
        %5695 = vset.pattern.permute.xlu0 0
        %5696 = vperm.xlu0 %5695, %v5322
        %v5697 = vpop.permute.xlu0 %5696
        %v5698 = vlaneseq
        %v5699 = vshrl.u32 %v5698, 7
        %v5700 = vsub.s32 %v2392, %v5699
        %v5701 = vrot.slane %v5652, %v5700
        %v5702 = vlaneseq
        %v5703 = vshrl.u32 %v5702, 7
        %v5704 = vsub.s32 %v2397, %v5703
        %v5705 = vrot.slane %v5655, %v5704
        %v5706 = vsel %vm2402, %v5705, %v5701
        %v5707 = vlaneseq
        %v5708 = vshrl.u32 %v5707, 7
        %v5709 = vsub.s32 %v2392, %v5708
        %v5710 = vrot.slane %v5658, %v5709
        %v5711 = vlaneseq
        %v5712 = vshrl.u32 %v5711, 7
        %v5713 = vsub.s32 %v2397, %v5712
        %v5714 = vrot.slane %v5661, %v5713
        %v5715 = vsel %vm2402, %v5714, %v5710
        %v5716 = vlaneseq
        %v5717 = vshrl.u32 %v5716, 7
        %v5718 = vsub.s32 %v2392, %v5717
        %v5719 = vrot.slane %v5664, %v5718
        %v5720 = vlaneseq
        %v5721 = vshrl.u32 %v5720, 7
        %v5722 = vsub.s32 %v2397, %v5721
        %v5723 = vrot.slane %v5667, %v5722
        %v5724 = vsel %vm2402, %v5723, %v5719
        %v5725 = vlaneseq
        %v5726 = vshrl.u32 %v5725, 7
        %v5727 = vsub.s32 %v2392, %v5726
        %v5728 = vrot.slane %v5670, %v5727
        %v5729 = vlaneseq
        %v5730 = vshrl.u32 %v5729, 7
        %v5731 = vsub.s32 %v2397, %v5730
        %v5732 = vrot.slane %v5673, %v5731
        %v5733 = vsel %vm2402, %v5732, %v5728
        %v5734 = vlaneseq
        %v5735 = vshrl.u32 %v5734, 7
        %v5736 = vsub.s32 %v2392, %v5735
        %v5737 = vrot.slane %v5676, %v5736
        %v5738 = vlaneseq
        %v5739 = vshrl.u32 %v5738, 7
        %v5740 = vsub.s32 %v2397, %v5739
        %v5741 = vrot.slane %v5679, %v5740
        %v5742 = vsel %vm2402, %v5741, %v5737
        %v5743 = vlaneseq
        %v5744 = vshrl.u32 %v5743, 7
        %v5745 = vsub.s32 %v2392, %v5744
        %v5746 = vrot.slane %v5682, %v5745
        %v5747 = vlaneseq
        %v5748 = vshrl.u32 %v5747, 7
        %v5749 = vsub.s32 %v2397, %v5748
        %v5750 = vrot.slane %v5685, %v5749
        %v5751 = vsel %vm2402, %v5750, %v5746
        %v5752 = vlaneseq
        %v5753 = vshrl.u32 %v5752, 7
        %v5754 = vsub.s32 %v2392, %v5753
        %v5755 = vrot.slane %v5688, %v5754
        %v5756 = vlaneseq
        %v5757 = vshrl.u32 %v5756, 7
        %v5758 = vsub.s32 %v2397, %v5757
        %v5759 = vrot.slane %v5691, %v5758
        %v5760 = vsel %vm2402, %v5759, %v5755
        %v5761 = vlaneseq
        %v5762 = vshrl.u32 %v5761, 7
        %v5763 = vsub.s32 %v2392, %v5762
        %v5764 = vrot.slane %v5694, %v5763
        %v5765 = vlaneseq
        %v5766 = vshrl.u32 %v5765, 7
        %v5767 = vsub.s32 %v2397, %v5766
        %v5768 = vrot.slane %v5697, %v5767
        %v5769 = vsel %vm2402, %v5768, %v5764
        %v5770 = vsel %vm2971, %v5715, %v5706
        %v5771 = vsel %vm2973, %v5724, %v5770
        %v5772 = vsel %vm2975, %v5733, %v5771
        %v5773 = vsel %vm2977, %v5742, %v5772
        %v5774 = vsel %vm2979, %v5751, %v5773
        %v5775 = vsel %vm2981, %v5760, %v5774
        %v5776 = vsel %vm2983, %v5769, %v5775
        %v5777 = vsel %vm3042, %v5776, 0
        %5779 = vmatprep.subr.mxu0 0.0
        %5780 = vmatpush1.msra.mxu0 0.0
        %5781 = vmatprep.subr.mxu0 0.0
        %5782 = vmatpush1.msra.mxu0 0.0
        %5783 = vmatprep.subr.mxu0 0.0
        %5784 = vmatpush1.msra.mxu0 0.0
        %5785 = vmatprep.subr.mxu0 0.0
        %5786 = vmatpush1.msra.mxu0 0.0
        %5787 = vmatprep.subr.mxu0 0.0
        %5788 = vmatpush1.msra.mxu0 0.0
        %5789 = vmatprep.subr.mxu0 0.0
        %5790 = vmatpush1.msra.mxu0 0.0
        %5791 = vmatprep.subr.mxu0 0.0
        %5792 = vmatpush1.msra.mxu0 0.0
        %5793 = vmatprep.subr.mxu0 0.0
        %5794 = vmatpush1.msra.mxu0 0.0
        %5795 = vmatprep.subr.mxu0 0.0
        %5796 = vmatpush1.msra.mxu0 0.0
        %5797 = vmatprep.subr.mxu0 0.0
        %5798 = vmatpush1.msra.mxu0 0.0
        %5799 = vmatprep.subr.mxu0 0.0
        %5800 = vmatpush1.msra.mxu0 0.0
        %5801 = vmatprep.subr.mxu0 0.0
        %5802 = vmatpush1.msra.mxu0 0.0
        %5803 = vmatprep.subr.mxu0 0.0
        %5804 = vmatpush1.msra.mxu0 0.0
        %5805 = vmatprep.subr.mxu0 0.0
        %5806 = vmatpush1.msra.mxu0 0.0
        %5807 = vmatprep.subr.mxu0 0.0
        %5808 = vmatpush1.msra.mxu0 %v480
        %5809 = vmatprep.subr.mxu0 0.0
        %5810 = vmatpush1.msra.mxu0 %v479
        %5811 = vmatprep.subr.mxu0 0.0
        %5812 = vmatpush2.msra.mxu0 0.0
        %5813 = vmatprep.subr.mxu0 0.0
        %5814 = vmatpush2.msra.mxu0 0.0
        %5815 = vmatprep.subr.mxu0 0.0
        %5816 = vmatpush2.msra.mxu0 0.0
        %5817 = vmatprep.subr.mxu0 0.0
        %5818 = vmatpush2.msra.mxu0 0.0
        %5819 = vmatprep.subr.mxu0 0.0
        %5820 = vmatpush2.msra.mxu0 0.0
        %5821 = vmatprep.subr.mxu0 0.0
        %5822 = vmatpush2.msra.mxu0 0.0
        %5823 = vmatprep.subr.mxu0 0.0
        %5824 = vmatpush2.msra.mxu0 0.0
        %5825 = vmatprep.subr.mxu0 0.0
        %5826 = vmatpush2.msra.mxu0 0.0
        %5827 = vmatprep.subr.mxu0 0.0
        %5828 = vmatpush2.msra.mxu0 0.0
        %5829 = vmatprep.subr.mxu0 0.0
        %5830 = vmatpush2.msra.mxu0 0.0
        %5831 = vmatprep.subr.mxu0 0.0
        %5832 = vmatpush2.msra.mxu0 0.0
        %5833 = vmatprep.subr.mxu0 0.0
        %5834 = vmatpush2.msra.mxu0 0.0
        %5835 = vmatprep.subr.mxu0 0.0
        %5836 = vmatpush2.msra.mxu0 0.0
        %5837 = vmatprep.subr.mxu0 0.0
        %5838 = vmatpush2.msra.mxu0 0.0
        %5839 = vmatprep.subr.mxu0 0.0
        %5840 = vmatpush2.msra.mxu0 0.0
        %5841 = vmatprep.subr.mxu0 0.0
        %5842 = vmatpush2.msra.mxu0 0.0
        %5843 = vmatprep.mubr.f32.mxu0 0.0
        %5844 = vmatmul.mubr.f32.gmra.mxu0 %v5777
        %v5845 = vpop.f32.mrf.mxu0
        %v5846 = vadd.f32 0.0, %v5845
        %v5847 = vpop.f32.mrf.mxu0
        %5848 = vdwg.mxu0
        %5865 = vset.pattern.permute.xlu0 0
        %5866 = vperm.xlu0 %5865, %v5323
        %v5867 = vpop.permute.xlu0 %5866
        %5868 = vset.pattern.permute.xlu0 0
        %5869 = vperm.xlu0 %5868, %v5324
        %v5870 = vpop.permute.xlu0 %5869
        %5871 = vset.pattern.permute.xlu0 0
        %5872 = vperm.xlu0 %5871, %v5325
        %v5873 = vpop.permute.xlu0 %5872
        %5874 = vset.pattern.permute.xlu0 0
        %5875 = vperm.xlu0 %5874, %v5326
        %v5876 = vpop.permute.xlu0 %5875
        %5877 = vset.pattern.permute.xlu0 0
        %5878 = vperm.xlu0 %5877, %v5327
        %v5879 = vpop.permute.xlu0 %5878
        %5880 = vset.pattern.permute.xlu0 0
        %5881 = vperm.xlu0 %5880, %v5328
        %v5882 = vpop.permute.xlu0 %5881
        %5883 = vset.pattern.permute.xlu0 0
        %5884 = vperm.xlu0 %5883, %v5329
        %v5885 = vpop.permute.xlu0 %5884
        %5886 = vset.pattern.permute.xlu0 0
        %5887 = vperm.xlu0 %5886, %v5330
        %v5888 = vpop.permute.xlu0 %5887
        %5889 = vset.pattern.permute.xlu0 0
        %5890 = vperm.xlu0 %5889, %v5331
        %v5891 = vpop.permute.xlu0 %5890
        %5892 = vset.pattern.permute.xlu0 0
        %5893 = vperm.xlu0 %5892, %v5332
        %v5894 = vpop.permute.xlu0 %5893
        %5895 = vset.pattern.permute.xlu0 0
        %5896 = vperm.xlu0 %5895, %v5333
        %v5897 = vpop.permute.xlu0 %5896
        %5898 = vset.pattern.permute.xlu0 0
        %5899 = vperm.xlu0 %5898, %v5334
        %v5900 = vpop.permute.xlu0 %5899
        %5901 = vset.pattern.permute.xlu0 0
        %5902 = vperm.xlu0 %5901, %v5335
        %v5903 = vpop.permute.xlu0 %5902
        %5904 = vset.pattern.permute.xlu0 0
        %5905 = vperm.xlu0 %5904, %v5336
        %v5906 = vpop.permute.xlu0 %5905
        %5907 = vset.pattern.permute.xlu0 0
        %5908 = vperm.xlu0 %5907, %v5337
        %v5909 = vpop.permute.xlu0 %5908
        %5910 = vset.pattern.permute.xlu0 0
        %5911 = vperm.xlu0 %5910, %v5338
        %v5912 = vpop.permute.xlu0 %5911
        %v5913 = vlaneseq
        %v5914 = vshrl.u32 %v5913, 7
        %v5915 = vsub.s32 %v2392, %v5914
        %v5916 = vrot.slane %v5867, %v5915
        %v5917 = vlaneseq
        %v5918 = vshrl.u32 %v5917, 7
        %v5919 = vsub.s32 %v2397, %v5918
        %v5920 = vrot.slane %v5870, %v5919
        %v5921 = vsel %vm2402, %v5920, %v5916
        %v5922 = vlaneseq
        %v5923 = vshrl.u32 %v5922, 7
        %v5924 = vsub.s32 %v2392, %v5923
        %v5925 = vrot.slane %v5873, %v5924
        %v5926 = vlaneseq
        %v5927 = vshrl.u32 %v5926, 7
        %v5928 = vsub.s32 %v2397, %v5927
        %v5929 = vrot.slane %v5876, %v5928
        %v5930 = vsel %vm2402, %v5929, %v5925
        %v5931 = vlaneseq
        %v5932 = vshrl.u32 %v5931, 7
        %v5933 = vsub.s32 %v2392, %v5932
        %v5934 = vrot.slane %v5879, %v5933
        %v5935 = vlaneseq
        %v5936 = vshrl.u32 %v5935, 7
        %v5937 = vsub.s32 %v2397, %v5936
        %v5938 = vrot.slane %v5882, %v5937
        %v5939 = vsel %vm2402, %v5938, %v5934
        %v5940 = vlaneseq
        %v5941 = vshrl.u32 %v5940, 7
        %v5942 = vsub.s32 %v2392, %v5941
        %v5943 = vrot.slane %v5885, %v5942
        %v5944 = vlaneseq
        %v5945 = vshrl.u32 %v5944, 7
        %v5946 = vsub.s32 %v2397, %v5945
        %v5947 = vrot.slane %v5888, %v5946
        %v5948 = vsel %vm2402, %v5947, %v5943
        %v5949 = vlaneseq
        %v5950 = vshrl.u32 %v5949, 7
        %v5951 = vsub.s32 %v2392, %v5950
        %v5952 = vrot.slane %v5891, %v5951
        %v5953 = vlaneseq
        %v5954 = vshrl.u32 %v5953, 7
        %v5955 = vsub.s32 %v2397, %v5954
        %v5956 = vrot.slane %v5894, %v5955
        %v5957 = vsel %vm2402, %v5956, %v5952
        %v5958 = vlaneseq
        %v5959 = vshrl.u32 %v5958, 7
        %v5960 = vsub.s32 %v2392, %v5959
        %v5961 = vrot.slane %v5897, %v5960
        %v5962 = vlaneseq
        %v5963 = vshrl.u32 %v5962, 7
        %v5964 = vsub.s32 %v2397, %v5963
        %v5965 = vrot.slane %v5900, %v5964
        %v5966 = vsel %vm2402, %v5965, %v5961
        %v5967 = vlaneseq
        %v5968 = vshrl.u32 %v5967, 7
        %v5969 = vsub.s32 %v2392, %v5968
        %v5970 = vrot.slane %v5903, %v5969
        %v5971 = vlaneseq
        %v5972 = vshrl.u32 %v5971, 7
        %v5973 = vsub.s32 %v2397, %v5972
        %v5974 = vrot.slane %v5906, %v5973
        %v5975 = vsel %vm2402, %v5974, %v5970
        %v5976 = vlaneseq
        %v5977 = vshrl.u32 %v5976, 7
        %v5978 = vsub.s32 %v2392, %v5977
        %v5979 = vrot.slane %v5909, %v5978
        %v5980 = vlaneseq
        %v5981 = vshrl.u32 %v5980, 7
        %v5982 = vsub.s32 %v2397, %v5981
        %v5983 = vrot.slane %v5912, %v5982
        %v5984 = vsel %vm2402, %v5983, %v5979
        %v5985 = vsel %vm2971, %v5930, %v5921
        %v5986 = vsel %vm2973, %v5939, %v5985
        %v5987 = vsel %vm2975, %v5948, %v5986
        %v5988 = vsel %vm2977, %v5957, %v5987
        %v5989 = vsel %vm2979, %v5966, %v5988
        %v5990 = vsel %vm2981, %v5975, %v5989
        %v5991 = vsel %vm2983, %v5984, %v5990
        %v5992 = vsel %vm3042, %v5991, 0
        %5994 = vmatprep.subr.mxu0 0.0
        %5995 = vmatpush1.msra.mxu0 0.0
        %5996 = vmatprep.subr.mxu0 0.0
        %5997 = vmatpush1.msra.mxu0 0.0
        %5998 = vmatprep.subr.mxu0 0.0
        %5999 = vmatpush1.msra.mxu0 0.0
        %6000 = vmatprep.subr.mxu0 0.0
        %6001 = vmatpush1.msra.mxu0 0.0
        %6002 = vmatprep.subr.mxu0 0.0
        %6003 = vmatpush1.msra.mxu0 0.0
        %6004 = vmatprep.subr.mxu0 0.0
        %6005 = vmatpush1.msra.mxu0 0.0
        %6006 = vmatprep.subr.mxu0 0.0
        %6007 = vmatpush1.msra.mxu0 0.0
        %6008 = vmatprep.subr.mxu0 0.0
        %6009 = vmatpush1.msra.mxu0 0.0
        %6010 = vmatprep.subr.mxu0 0.0
        %6011 = vmatpush1.msra.mxu0 0.0
        %6012 = vmatprep.subr.mxu0 0.0
        %6013 = vmatpush1.msra.mxu0 0.0
        %6014 = vmatprep.subr.mxu0 0.0
        %6015 = vmatpush1.msra.mxu0 0.0
        %6016 = vmatprep.subr.mxu0 0.0
        %6017 = vmatpush1.msra.mxu0 0.0
        %6018 = vmatprep.subr.mxu0 0.0
        %6019 = vmatpush1.msra.mxu0 0.0
        %6020 = vmatprep.subr.mxu0 0.0
        %6021 = vmatpush1.msra.mxu0 0.0
        %6022 = vmatprep.subr.mxu0 0.0
        %6023 = vmatpush1.msra.mxu0 %v482
        %6024 = vmatprep.subr.mxu0 0.0
        %6025 = vmatpush1.msra.mxu0 %v481
        %6026 = vmatprep.subr.mxu0 0.0
        %6027 = vmatpush2.msra.mxu0 0.0
        %6028 = vmatprep.subr.mxu0 0.0
        %6029 = vmatpush2.msra.mxu0 0.0
        %6030 = vmatprep.subr.mxu0 0.0
        %6031 = vmatpush2.msra.mxu0 0.0
        %6032 = vmatprep.subr.mxu0 0.0
        %6033 = vmatpush2.msra.mxu0 0.0
        %6034 = vmatprep.subr.mxu0 0.0
        %6035 = vmatpush2.msra.mxu0 0.0
        %6036 = vmatprep.subr.mxu0 0.0
        %6037 = vmatpush2.msra.mxu0 0.0
        %6038 = vmatprep.subr.mxu0 0.0
        %6039 = vmatpush2.msra.mxu0 0.0
        %6040 = vmatprep.subr.mxu0 0.0
        %6041 = vmatpush2.msra.mxu0 0.0
        %6042 = vmatprep.subr.mxu0 0.0
        %6043 = vmatpush2.msra.mxu0 0.0
        %6044 = vmatprep.subr.mxu0 0.0
        %6045 = vmatpush2.msra.mxu0 0.0
        %6046 = vmatprep.subr.mxu0 0.0
        %6047 = vmatpush2.msra.mxu0 0.0
        %6048 = vmatprep.subr.mxu0 0.0
        %6049 = vmatpush2.msra.mxu0 0.0
        %6050 = vmatprep.subr.mxu0 0.0
        %6051 = vmatpush2.msra.mxu0 0.0
        %6052 = vmatprep.subr.mxu0 0.0
        %6053 = vmatpush2.msra.mxu0 0.0
        %6054 = vmatprep.subr.mxu0 0.0
        %6055 = vmatpush2.msra.mxu0 0.0
        %6056 = vmatprep.subr.mxu0 0.0
        %6057 = vmatpush2.msra.mxu0 0.0
        %6058 = vmatprep.mubr.f32.mxu0 0.0
        %6059 = vmatmul.mubr.f32.gmra.mxu0 %v5992
        %v6060 = vpop.f32.mrf.mxu0
        %v6061 = vadd.f32 0.0, %v6060
        %v6062 = vpop.f32.mrf.mxu0
        %6063 = vdwg.mxu0
        %6080 = vset.pattern.permute.xlu0 0
        %6081 = vperm.xlu0 %6080, %v5339
        %v6082 = vpop.permute.xlu0 %6081
        %6083 = vset.pattern.permute.xlu0 0
        %6084 = vperm.xlu0 %6083, %v5340
        %v6085 = vpop.permute.xlu0 %6084
        %6086 = vset.pattern.permute.xlu0 0
        %6087 = vperm.xlu0 %6086, %v5341
        %v6088 = vpop.permute.xlu0 %6087
        %6089 = vset.pattern.permute.xlu0 0
        %6090 = vperm.xlu0 %6089, %v5342
        %v6091 = vpop.permute.xlu0 %6090
        %6092 = vset.pattern.permute.xlu0 0
        %6093 = vperm.xlu0 %6092, %v5343
        %v6094 = vpop.permute.xlu0 %6093
        %6095 = vset.pattern.permute.xlu0 0
        %6096 = vperm.xlu0 %6095, %v5344
        %v6097 = vpop.permute.xlu0 %6096
        %6098 = vset.pattern.permute.xlu0 0
        %6099 = vperm.xlu0 %6098, %v5345
        %v6100 = vpop.permute.xlu0 %6099
        %6101 = vset.pattern.permute.xlu0 0
        %6102 = vperm.xlu0 %6101, %v5346
        %v6103 = vpop.permute.xlu0 %6102
        %6104 = vset.pattern.permute.xlu0 0
        %6105 = vperm.xlu0 %6104, %v5347
        %v6106 = vpop.permute.xlu0 %6105
        %6107 = vset.pattern.permute.xlu0 0
        %6108 = vperm.xlu0 %6107, %v5348
        %v6109 = vpop.permute.xlu0 %6108
        %6110 = vset.pattern.permute.xlu0 0
        %6111 = vperm.xlu0 %6110, %v5349
        %v6112 = vpop.permute.xlu0 %6111
        %6113 = vset.pattern.permute.xlu0 0
        %6114 = vperm.xlu0 %6113, %v5350
        %v6115 = vpop.permute.xlu0 %6114
        %6116 = vset.pattern.permute.xlu0 0
        %6117 = vperm.xlu0 %6116, %v5351
        %v6118 = vpop.permute.xlu0 %6117
        %6119 = vset.pattern.permute.xlu0 0
        %6120 = vperm.xlu0 %6119, %v5352
        %v6121 = vpop.permute.xlu0 %6120
        %6122 = vset.pattern.permute.xlu0 0
        %6123 = vperm.xlu0 %6122, %v5353
        %v6124 = vpop.permute.xlu0 %6123
        %6125 = vset.pattern.permute.xlu0 0
        %6126 = vperm.xlu0 %6125, %v5354
        %v6127 = vpop.permute.xlu0 %6126
        %v6128 = vlaneseq
        %v6129 = vshrl.u32 %v6128, 7
        %v6130 = vsub.s32 %v2392, %v6129
        %v6131 = vrot.slane %v6082, %v6130
        %v6132 = vlaneseq
        %v6133 = vshrl.u32 %v6132, 7
        %v6134 = vsub.s32 %v2397, %v6133
        %v6135 = vrot.slane %v6085, %v6134
        %v6136 = vsel %vm2402, %v6135, %v6131
        %v6137 = vlaneseq
        %v6138 = vshrl.u32 %v6137, 7
        %v6139 = vsub.s32 %v2392, %v6138
        %v6140 = vrot.slane %v6088, %v6139
        %v6141 = vlaneseq
        %v6142 = vshrl.u32 %v6141, 7
        %v6143 = vsub.s32 %v2397, %v6142
        %v6144 = vrot.slane %v6091, %v6143
        %v6145 = vsel %vm2402, %v6144, %v6140
        %v6146 = vlaneseq
        %v6147 = vshrl.u32 %v6146, 7
        %v6148 = vsub.s32 %v2392, %v6147
        %v6149 = vrot.slane %v6094, %v6148
        %v6150 = vlaneseq
        %v6151 = vshrl.u32 %v6150, 7
        %v6152 = vsub.s32 %v2397, %v6151
        %v6153 = vrot.slane %v6097, %v6152
        %v6154 = vsel %vm2402, %v6153, %v6149
        %v6155 = vlaneseq
        %v6156 = vshrl.u32 %v6155, 7
        %v6157 = vsub.s32 %v2392, %v6156
        %v6158 = vrot.slane %v6100, %v6157
        %v6159 = vlaneseq
        %v6160 = vshrl.u32 %v6159, 7
        %v6161 = vsub.s32 %v2397, %v6160
        %v6162 = vrot.slane %v6103, %v6161
        %v6163 = vsel %vm2402, %v6162, %v6158
        %v6164 = vlaneseq
        %v6165 = vshrl.u32 %v6164, 7
        %v6166 = vsub.s32 %v2392, %v6165
        %v6167 = vrot.slane %v6106, %v6166
        %v6168 = vlaneseq
        %v6169 = vshrl.u32 %v6168, 7
        %v6170 = vsub.s32 %v2397, %v6169
        %v6171 = vrot.slane %v6109, %v6170
        %v6172 = vsel %vm2402, %v6171, %v6167
        %v6173 = vlaneseq
        %v6174 = vshrl.u32 %v6173, 7
        %v6175 = vsub.s32 %v2392, %v6174
        %v6176 = vrot.slane %v6112, %v6175
        %v6177 = vlaneseq
        %v6178 = vshrl.u32 %v6177, 7
        %v6179 = vsub.s32 %v2397, %v6178
        %v6180 = vrot.slane %v6115, %v6179
        %v6181 = vsel %vm2402, %v6180, %v6176
        %v6182 = vlaneseq
        %v6183 = vshrl.u32 %v6182, 7
        %v6184 = vsub.s32 %v2392, %v6183
        %v6185 = vrot.slane %v6118, %v6184
        %v6186 = vlaneseq
        %v6187 = vshrl.u32 %v6186, 7
        %v6188 = vsub.s32 %v2397, %v6187
        %v6189 = vrot.slane %v6121, %v6188
        %v6190 = vsel %vm2402, %v6189, %v6185
        %v6191 = vlaneseq
        %v6192 = vshrl.u32 %v6191, 7
        %v6193 = vsub.s32 %v2392, %v6192
        %v6194 = vrot.slane %v6124, %v6193
        %v6195 = vlaneseq
        %v6196 = vshrl.u32 %v6195, 7
        %v6197 = vsub.s32 %v2397, %v6196
        %v6198 = vrot.slane %v6127, %v6197
        %v6199 = vsel %vm2402, %v6198, %v6194
        %v6200 = vsel %vm2971, %v6145, %v6136
        %v6201 = vsel %vm2973, %v6154, %v6200
        %v6202 = vsel %vm2975, %v6163, %v6201
        %v6203 = vsel %vm2977, %v6172, %v6202
        %v6204 = vsel %vm2979, %v6181, %v6203
        %v6205 = vsel %vm2981, %v6190, %v6204
        %v6206 = vsel %vm2983, %v6199, %v6205
        %v6207 = vsel %vm3042, %v6206, 0
        %6209 = vmatprep.subr.mxu0 0.0
        %6210 = vmatpush1.msra.mxu0 0.0
        %6211 = vmatprep.subr.mxu0 0.0
        %6212 = vmatpush1.msra.mxu0 0.0
        %6213 = vmatprep.subr.mxu0 0.0
        %6214 = vmatpush1.msra.mxu0 0.0
        %6215 = vmatprep.subr.mxu0 0.0
        %6216 = vmatpush1.msra.mxu0 0.0
        %6217 = vmatprep.subr.mxu0 0.0
        %6218 = vmatpush1.msra.mxu0 0.0
        %6219 = vmatprep.subr.mxu0 0.0
        %6220 = vmatpush1.msra.mxu0 0.0
        %6221 = vmatprep.subr.mxu0 0.0
        %6222 = vmatpush1.msra.mxu0 0.0
        %6223 = vmatprep.subr.mxu0 0.0
        %6224 = vmatpush1.msra.mxu0 0.0
        %6225 = vmatprep.subr.mxu0 0.0
        %6226 = vmatpush1.msra.mxu0 0.0
        %6227 = vmatprep.subr.mxu0 0.0
        %6228 = vmatpush1.msra.mxu0 0.0
        %6229 = vmatprep.subr.mxu0 0.0
        %6230 = vmatpush1.msra.mxu0 0.0
        %6231 = vmatprep.subr.mxu0 0.0
        %6232 = vmatpush1.msra.mxu0 0.0
        %6233 = vmatprep.subr.mxu0 0.0
        %6234 = vmatpush1.msra.mxu0 0.0
        %6235 = vmatprep.subr.mxu0 0.0
        %6236 = vmatpush1.msra.mxu0 0.0
        %6237 = vmatprep.subr.mxu0 0.0
        %6238 = vmatpush1.msra.mxu0 %v484
        %6239 = vmatprep.subr.mxu0 0.0
        %6240 = vmatpush1.msra.mxu0 %v483
        %6241 = vmatprep.subr.mxu0 0.0
        %6242 = vmatpush2.msra.mxu0 0.0
        %6243 = vmatprep.subr.mxu0 0.0
        %6244 = vmatpush2.msra.mxu0 0.0
        %6245 = vmatprep.subr.mxu0 0.0
        %6246 = vmatpush2.msra.mxu0 0.0
        %6247 = vmatprep.subr.mxu0 0.0
        %6248 = vmatpush2.msra.mxu0 0.0
        %6249 = vmatprep.subr.mxu0 0.0
        %6250 = vmatpush2.msra.mxu0 0.0
        %6251 = vmatprep.subr.mxu0 0.0
        %6252 = vmatpush2.msra.mxu0 0.0
        %6253 = vmatprep.subr.mxu0 0.0
        %6254 = vmatpush2.msra.mxu0 0.0
        %6255 = vmatprep.subr.mxu0 0.0
        %6256 = vmatpush2.msra.mxu0 0.0
        %6257 = vmatprep.subr.mxu0 0.0
        %6258 = vmatpush2.msra.mxu0 0.0
        %6259 = vmatprep.subr.mxu0 0.0
        %6260 = vmatpush2.msra.mxu0 0.0
        %6261 = vmatprep.subr.mxu0 0.0
        %6262 = vmatpush2.msra.mxu0 0.0
        %6263 = vmatprep.subr.mxu0 0.0
        %6264 = vmatpush2.msra.mxu0 0.0
        %6265 = vmatprep.subr.mxu0 0.0
        %6266 = vmatpush2.msra.mxu0 0.0
        %6267 = vmatprep.subr.mxu0 0.0
        %6268 = vmatpush2.msra.mxu0 0.0
        %6269 = vmatprep.subr.mxu0 0.0
        %6270 = vmatpush2.msra.mxu0 0.0
        %6271 = vmatprep.subr.mxu0 0.0
        %6272 = vmatpush2.msra.mxu0 0.0
        %6273 = vmatprep.mubr.f32.mxu0 0.0
        %6274 = vmatmul.mubr.f32.gmra.mxu0 %v6207
        %v6275 = vpop.f32.mrf.mxu0
        %v6276 = vadd.f32 0.0, %v6275
        %v6277 = vpop.f32.mrf.mxu0
        %6278 = vdwg.mxu0
        %6295 = vset.pattern.permute.xlu0 0
        %6296 = vperm.xlu0 %6295, %v5355
        %v6297 = vpop.permute.xlu0 %6296
        %6298 = vset.pattern.permute.xlu0 0
        %6299 = vperm.xlu0 %6298, %v5356
        %v6300 = vpop.permute.xlu0 %6299
        %6301 = vset.pattern.permute.xlu0 0
        %6302 = vperm.xlu0 %6301, %v5357
        %v6303 = vpop.permute.xlu0 %6302
        %6304 = vset.pattern.permute.xlu0 0
        %6305 = vperm.xlu0 %6304, %v5358
        %v6306 = vpop.permute.xlu0 %6305
        %6307 = vset.pattern.permute.xlu0 0
        %6308 = vperm.xlu0 %6307, %v5359
        %v6309 = vpop.permute.xlu0 %6308
        %6310 = vset.pattern.permute.xlu0 0
        %6311 = vperm.xlu0 %6310, %v5360
        %v6312 = vpop.permute.xlu0 %6311
        %6313 = vset.pattern.permute.xlu0 0
        %6314 = vperm.xlu0 %6313, %v5361
        %v6315 = vpop.permute.xlu0 %6314
        %6316 = vset.pattern.permute.xlu0 0
        %6317 = vperm.xlu0 %6316, %v5362
        %v6318 = vpop.permute.xlu0 %6317
        %6319 = vset.pattern.permute.xlu0 0
        %6320 = vperm.xlu0 %6319, %v5363
        %v6321 = vpop.permute.xlu0 %6320
        %6322 = vset.pattern.permute.xlu0 0
        %6323 = vperm.xlu0 %6322, %v5364
        %v6324 = vpop.permute.xlu0 %6323
        %6325 = vset.pattern.permute.xlu0 0
        %6326 = vperm.xlu0 %6325, %v5365
        %v6327 = vpop.permute.xlu0 %6326
        %6328 = vset.pattern.permute.xlu0 0
        %6329 = vperm.xlu0 %6328, %v5366
        %v6330 = vpop.permute.xlu0 %6329
        %6331 = vset.pattern.permute.xlu0 0
        %6332 = vperm.xlu0 %6331, %v5367
        %v6333 = vpop.permute.xlu0 %6332
        %6334 = vset.pattern.permute.xlu0 0
        %6335 = vperm.xlu0 %6334, %v5368
        %v6336 = vpop.permute.xlu0 %6335
        %6337 = vset.pattern.permute.xlu0 0
        %6338 = vperm.xlu0 %6337, %v5369
        %v6339 = vpop.permute.xlu0 %6338
        %6340 = vset.pattern.permute.xlu0 0
        %6341 = vperm.xlu0 %6340, %v5370
        %v6342 = vpop.permute.xlu0 %6341
        %v6343 = vlaneseq
        %v6344 = vshrl.u32 %v6343, 7
        %v6345 = vsub.s32 %v2392, %v6344
        %v6346 = vrot.slane %v6297, %v6345
        %v6347 = vlaneseq
        %v6348 = vshrl.u32 %v6347, 7
        %v6349 = vsub.s32 %v2397, %v6348
        %v6350 = vrot.slane %v6300, %v6349
        %v6351 = vsel %vm2402, %v6350, %v6346
        %v6352 = vlaneseq
        %v6353 = vshrl.u32 %v6352, 7
        %v6354 = vsub.s32 %v2392, %v6353
        %v6355 = vrot.slane %v6303, %v6354
        %v6356 = vlaneseq
        %v6357 = vshrl.u32 %v6356, 7
        %v6358 = vsub.s32 %v2397, %v6357
        %v6359 = vrot.slane %v6306, %v6358
        %v6360 = vsel %vm2402, %v6359, %v6355
        %v6361 = vlaneseq
        %v6362 = vshrl.u32 %v6361, 7
        %v6363 = vsub.s32 %v2392, %v6362
        %v6364 = vrot.slane %v6309, %v6363
        %v6365 = vlaneseq
        %v6366 = vshrl.u32 %v6365, 7
        %v6367 = vsub.s32 %v2397, %v6366
        %v6368 = vrot.slane %v6312, %v6367
        %v6369 = vsel %vm2402, %v6368, %v6364
        %v6370 = vlaneseq
        %v6371 = vshrl.u32 %v6370, 7
        %v6372 = vsub.s32 %v2392, %v6371
        %v6373 = vrot.slane %v6315, %v6372
        %v6374 = vlaneseq
        %v6375 = vshrl.u32 %v6374, 7
        %v6376 = vsub.s32 %v2397, %v6375
        %v6377 = vrot.slane %v6318, %v6376
        %v6378 = vsel %vm2402, %v6377, %v6373
        %v6379 = vlaneseq
        %v6380 = vshrl.u32 %v6379, 7
        %v6381 = vsub.s32 %v2392, %v6380
        %v6382 = vrot.slane %v6321, %v6381
        %v6383 = vlaneseq
        %v6384 = vshrl.u32 %v6383, 7
        %v6385 = vsub.s32 %v2397, %v6384
        %v6386 = vrot.slane %v6324, %v6385
        %v6387 = vsel %vm2402, %v6386, %v6382
        %v6388 = vlaneseq
        %v6389 = vshrl.u32 %v6388, 7
        %v6390 = vsub.s32 %v2392, %v6389
        %v6391 = vrot.slane %v6327, %v6390
        %v6392 = vlaneseq
        %v6393 = vshrl.u32 %v6392, 7
        %v6394 = vsub.s32 %v2397, %v6393
        %v6395 = vrot.slane %v6330, %v6394
        %v6396 = vsel %vm2402, %v6395, %v6391
        %v6397 = vlaneseq
        %v6398 = vshrl.u32 %v6397, 7
        %v6399 = vsub.s32 %v2392, %v6398
        %v6400 = vrot.slane %v6333, %v6399
        %v6401 = vlaneseq
        %v6402 = vshrl.u32 %v6401, 7
        %v6403 = vsub.s32 %v2397, %v6402
        %v6404 = vrot.slane %v6336, %v6403
        %v6405 = vsel %vm2402, %v6404, %v6400
        %v6406 = vlaneseq
        %v6407 = vshrl.u32 %v6406, 7
        %v6408 = vsub.s32 %v2392, %v6407
        %v6409 = vrot.slane %v6339, %v6408
        %v6410 = vlaneseq
        %v6411 = vshrl.u32 %v6410, 7
        %v6412 = vsub.s32 %v2397, %v6411
        %v6413 = vrot.slane %v6342, %v6412
        %v6414 = vsel %vm2402, %v6413, %v6409
        %v6415 = vsel %vm2971, %v6360, %v6351
        %v6416 = vsel %vm2973, %v6369, %v6415
        %v6417 = vsel %vm2975, %v6378, %v6416
        %v6418 = vsel %vm2977, %v6387, %v6417
        %v6419 = vsel %vm2979, %v6396, %v6418
        %v6420 = vsel %vm2981, %v6405, %v6419
        %v6421 = vsel %vm2983, %v6414, %v6420
        %v6422 = vsel %vm3042, %v6421, 0
        %6424 = vmatprep.subr.mxu0 0.0
        %6425 = vmatpush1.msra.mxu0 0.0
        %6426 = vmatprep.subr.mxu0 0.0
        %6427 = vmatpush1.msra.mxu0 0.0
        %6428 = vmatprep.subr.mxu0 0.0
        %6429 = vmatpush1.msra.mxu0 0.0
        %6430 = vmatprep.subr.mxu0 0.0
        %6431 = vmatpush1.msra.mxu0 0.0
        %6432 = vmatprep.subr.mxu0 0.0
        %6433 = vmatpush1.msra.mxu0 0.0
        %6434 = vmatprep.subr.mxu0 0.0
        %6435 = vmatpush1.msra.mxu0 0.0
        %6436 = vmatprep.subr.mxu0 0.0
        %6437 = vmatpush1.msra.mxu0 0.0
        %6438 = vmatprep.subr.mxu0 0.0
        %6439 = vmatpush1.msra.mxu0 0.0
        %6440 = vmatprep.subr.mxu0 0.0
        %6441 = vmatpush1.msra.mxu0 0.0
        %6442 = vmatprep.subr.mxu0 0.0
        %6443 = vmatpush1.msra.mxu0 0.0
        %6444 = vmatprep.subr.mxu0 0.0
        %6445 = vmatpush1.msra.mxu0 0.0
        %6446 = vmatprep.subr.mxu0 0.0
        %6447 = vmatpush1.msra.mxu0 0.0
        %6448 = vmatprep.subr.mxu0 0.0
        %6449 = vmatpush1.msra.mxu0 0.0
        %6450 = vmatprep.subr.mxu0 0.0
        %6451 = vmatpush1.msra.mxu0 0.0
        %6452 = vmatprep.subr.mxu0 0.0
        %6453 = vmatpush1.msra.mxu0 %v486
        %6454 = vmatprep.subr.mxu0 0.0
        %6455 = vmatpush1.msra.mxu0 %v485
        %6456 = vmatprep.subr.mxu0 0.0
        %6457 = vmatpush2.msra.mxu0 0.0
        %6458 = vmatprep.subr.mxu0 0.0
        %6459 = vmatpush2.msra.mxu0 0.0
        %6460 = vmatprep.subr.mxu0 0.0
        %6461 = vmatpush2.msra.mxu0 0.0
        %6462 = vmatprep.subr.mxu0 0.0
        %6463 = vmatpush2.msra.mxu0 0.0
        %6464 = vmatprep.subr.mxu0 0.0
        %6465 = vmatpush2.msra.mxu0 0.0
        %6466 = vmatprep.subr.mxu0 0.0
        %6467 = vmatpush2.msra.mxu0 0.0
        %6468 = vmatprep.subr.mxu0 0.0
        %6469 = vmatpush2.msra.mxu0 0.0
        %6470 = vmatprep.subr.mxu0 0.0
        %6471 = vmatpush2.msra.mxu0 0.0
        %6472 = vmatprep.subr.mxu0 0.0
        %6473 = vmatpush2.msra.mxu0 0.0
        %6474 = vmatprep.subr.mxu0 0.0
        %6475 = vmatpush2.msra.mxu0 0.0
        %6476 = vmatprep.subr.mxu0 0.0
        %6477 = vmatpush2.msra.mxu0 0.0
        %6478 = vmatprep.subr.mxu0 0.0
        %6479 = vmatpush2.msra.mxu0 0.0
        %6480 = vmatprep.subr.mxu0 0.0
        %6481 = vmatpush2.msra.mxu0 0.0
        %6482 = vmatprep.subr.mxu0 0.0
        %6483 = vmatpush2.msra.mxu0 0.0
        %6484 = vmatprep.subr.mxu0 0.0
        %6485 = vmatpush2.msra.mxu0 0.0
        %6486 = vmatprep.subr.mxu0 0.0
        %6487 = vmatpush2.msra.mxu0 0.0
        %6488 = vmatprep.mubr.f32.mxu0 0.0
        %6489 = vmatmul.mubr.f32.gmra.mxu0 %v6422
        %v6490 = vpop.f32.mrf.mxu0
        %v6491 = vadd.f32 0.0, %v6490
        %v6492 = vpop.f32.mrf.mxu0
        %6493 = vdwg.mxu0
        %6510 = vset.pattern.permute.xlu0 0
        %6511 = vperm.xlu0 %6510, %v5371
        %v6512 = vpop.permute.xlu0 %6511
        %6513 = vset.pattern.permute.xlu0 0
        %6514 = vperm.xlu0 %6513, %v5372
        %v6515 = vpop.permute.xlu0 %6514
        %6516 = vset.pattern.permute.xlu0 0
        %6517 = vperm.xlu0 %6516, %v5373
        %v6518 = vpop.permute.xlu0 %6517
        %6519 = vset.pattern.permute.xlu0 0
        %6520 = vperm.xlu0 %6519, %v5374
        %v6521 = vpop.permute.xlu0 %6520
        %6522 = vset.pattern.permute.xlu0 0
        %6523 = vperm.xlu0 %6522, %v5375
        %v6524 = vpop.permute.xlu0 %6523
        %6525 = vset.pattern.permute.xlu0 0
        %6526 = vperm.xlu0 %6525, %v5376
        %v6527 = vpop.permute.xlu0 %6526
        %6528 = vset.pattern.permute.xlu0 0
        %6529 = vperm.xlu0 %6528, %v5377
        %v6530 = vpop.permute.xlu0 %6529
        %6531 = vset.pattern.permute.xlu0 0
        %6532 = vperm.xlu0 %6531, %v5378
        %v6533 = vpop.permute.xlu0 %6532
        %6534 = vset.pattern.permute.xlu0 0
        %6535 = vperm.xlu0 %6534, %v5379
        %v6536 = vpop.permute.xlu0 %6535
        %6537 = vset.pattern.permute.xlu0 0
        %6538 = vperm.xlu0 %6537, %v5380
        %v6539 = vpop.permute.xlu0 %6538
        %6540 = vset.pattern.permute.xlu0 0
        %6541 = vperm.xlu0 %6540, %v5381
        %v6542 = vpop.permute.xlu0 %6541
        %6543 = vset.pattern.permute.xlu0 0
        %6544 = vperm.xlu0 %6543, %v5382
        %v6545 = vpop.permute.xlu0 %6544
        %6546 = vset.pattern.permute.xlu0 0
        %6547 = vperm.xlu0 %6546, %v5383
        %v6548 = vpop.permute.xlu0 %6547
        %6549 = vset.pattern.permute.xlu0 0
        %6550 = vperm.xlu0 %6549, %v5384
        %v6551 = vpop.permute.xlu0 %6550
        %6552 = vset.pattern.permute.xlu0 0
        %6553 = vperm.xlu0 %6552, %v5385
        %v6554 = vpop.permute.xlu0 %6553
        %6555 = vset.pattern.permute.xlu0 0
        %6556 = vperm.xlu0 %6555, %v5386
        %v6557 = vpop.permute.xlu0 %6556
        %v6558 = vlaneseq
        %v6559 = vshrl.u32 %v6558, 7
        %v6560 = vsub.s32 %v2392, %v6559
        %v6561 = vrot.slane %v6512, %v6560
        %v6562 = vlaneseq
        %v6563 = vshrl.u32 %v6562, 7
        %v6564 = vsub.s32 %v2397, %v6563
        %v6565 = vrot.slane %v6515, %v6564
        %v6566 = vsel %vm2402, %v6565, %v6561
        %v6567 = vlaneseq
        %v6568 = vshrl.u32 %v6567, 7
        %v6569 = vsub.s32 %v2392, %v6568
        %v6570 = vrot.slane %v6518, %v6569
        %v6571 = vlaneseq
        %v6572 = vshrl.u32 %v6571, 7
        %v6573 = vsub.s32 %v2397, %v6572
        %v6574 = vrot.slane %v6521, %v6573
        %v6575 = vsel %vm2402, %v6574, %v6570
        %v6576 = vlaneseq
        %v6577 = vshrl.u32 %v6576, 7
        %v6578 = vsub.s32 %v2392, %v6577
        %v6579 = vrot.slane %v6524, %v6578
        %v6580 = vlaneseq
        %v6581 = vshrl.u32 %v6580, 7
        %v6582 = vsub.s32 %v2397, %v6581
        %v6583 = vrot.slane %v6527, %v6582
        %v6584 = vsel %vm2402, %v6583, %v6579
        %v6585 = vlaneseq
        %v6586 = vshrl.u32 %v6585, 7
        %v6587 = vsub.s32 %v2392, %v6586
        %v6588 = vrot.slane %v6530, %v6587
        %v6589 = vlaneseq
        %v6590 = vshrl.u32 %v6589, 7
        %v6591 = vsub.s32 %v2397, %v6590
        %v6592 = vrot.slane %v6533, %v6591
        %v6593 = vsel %vm2402, %v6592, %v6588
        %v6594 = vlaneseq
        %v6595 = vshrl.u32 %v6594, 7
        %v6596 = vsub.s32 %v2392, %v6595
        %v6597 = vrot.slane %v6536, %v6596
        %v6598 = vlaneseq
        %v6599 = vshrl.u32 %v6598, 7
        %v6600 = vsub.s32 %v2397, %v6599
        %v6601 = vrot.slane %v6539, %v6600
        %v6602 = vsel %vm2402, %v6601, %v6597
        %v6603 = vlaneseq
        %v6604 = vshrl.u32 %v6603, 7
        %v6605 = vsub.s32 %v2392, %v6604
        %v6606 = vrot.slane %v6542, %v6605
        %v6607 = vlaneseq
        %v6608 = vshrl.u32 %v6607, 7
        %v6609 = vsub.s32 %v2397, %v6608
        %v6610 = vrot.slane %v6545, %v6609
        %v6611 = vsel %vm2402, %v6610, %v6606
        %v6612 = vlaneseq
        %v6613 = vshrl.u32 %v6612, 7
        %v6614 = vsub.s32 %v2392, %v6613
        %v6615 = vrot.slane %v6548, %v6614
        %v6616 = vlaneseq
        %v6617 = vshrl.u32 %v6616, 7
        %v6618 = vsub.s32 %v2397, %v6617
        %v6619 = vrot.slane %v6551, %v6618
        %v6620 = vsel %vm2402, %v6619, %v6615
        %v6621 = vlaneseq
        %v6622 = vshrl.u32 %v6621, 7
        %v6623 = vsub.s32 %v2392, %v6622
        %v6624 = vrot.slane %v6554, %v6623
        %v6625 = vlaneseq
        %v6626 = vshrl.u32 %v6625, 7
        %v6627 = vsub.s32 %v2397, %v6626
        %v6628 = vrot.slane %v6557, %v6627
        %v6629 = vsel %vm2402, %v6628, %v6624
        %v6630 = vsel %vm2971, %v6575, %v6566
        %v6631 = vsel %vm2973, %v6584, %v6630
        %v6632 = vsel %vm2975, %v6593, %v6631
        %v6633 = vsel %vm2977, %v6602, %v6632
        %v6634 = vsel %vm2979, %v6611, %v6633
        %v6635 = vsel %vm2981, %v6620, %v6634
        %v6636 = vsel %vm2983, %v6629, %v6635
        %v6637 = vsel %vm3042, %v6636, 0
        %6639 = vmatprep.subr.mxu0 0.0
        %6640 = vmatpush1.msra.mxu0 0.0
        %6641 = vmatprep.subr.mxu0 0.0
        %6642 = vmatpush1.msra.mxu0 0.0
        %6643 = vmatprep.subr.mxu0 0.0
        %6644 = vmatpush1.msra.mxu0 0.0
        %6645 = vmatprep.subr.mxu0 0.0
        %6646 = vmatpush1.msra.mxu0 0.0
        %6647 = vmatprep.subr.mxu0 0.0
        %6648 = vmatpush1.msra.mxu0 0.0
        %6649 = vmatprep.subr.mxu0 0.0
        %6650 = vmatpush1.msra.mxu0 0.0
        %6651 = vmatprep.subr.mxu0 0.0
        %6652 = vmatpush1.msra.mxu0 0.0
        %6653 = vmatprep.subr.mxu0 0.0
        %6654 = vmatpush1.msra.mxu0 0.0
        %6655 = vmatprep.subr.mxu0 0.0
        %6656 = vmatpush1.msra.mxu0 0.0
        %6657 = vmatprep.subr.mxu0 0.0
        %6658 = vmatpush1.msra.mxu0 0.0
        %6659 = vmatprep.subr.mxu0 0.0
        %6660 = vmatpush1.msra.mxu0 0.0
        %6661 = vmatprep.subr.mxu0 0.0
        %6662 = vmatpush1.msra.mxu0 0.0
        %6663 = vmatprep.subr.mxu0 0.0
        %6664 = vmatpush1.msra.mxu0 0.0
        %6665 = vmatprep.subr.mxu0 0.0
        %6666 = vmatpush1.msra.mxu0 0.0
        %6667 = vmatprep.subr.mxu0 0.0
        %6668 = vmatpush1.msra.mxu0 %v488
        %6669 = vmatprep.subr.mxu0 0.0
        %6670 = vmatpush1.msra.mxu0 %v487
        %6671 = vmatprep.subr.mxu0 0.0
        %6672 = vmatpush2.msra.mxu0 0.0
        %6673 = vmatprep.subr.mxu0 0.0
        %6674 = vmatpush2.msra.mxu0 0.0
        %6675 = vmatprep.subr.mxu0 0.0
        %6676 = vmatpush2.msra.mxu0 0.0
        %6677 = vmatprep.subr.mxu0 0.0
        %6678 = vmatpush2.msra.mxu0 0.0
        %6679 = vmatprep.subr.mxu0 0.0
        %6680 = vmatpush2.msra.mxu0 0.0
        %6681 = vmatprep.subr.mxu0 0.0
        %6682 = vmatpush2.msra.mxu0 0.0
        %6683 = vmatprep.subr.mxu0 0.0
        %6684 = vmatpush2.msra.mxu0 0.0
        %6685 = vmatprep.subr.mxu0 0.0
        %6686 = vmatpush2.msra.mxu0 0.0
        %6687 = vmatprep.subr.mxu0 0.0
        %6688 = vmatpush2.msra.mxu0 0.0
        %6689 = vmatprep.subr.mxu0 0.0
        %6690 = vmatpush2.msra.mxu0 0.0
        %6691 = vmatprep.subr.mxu0 0.0
        %6692 = vmatpush2.msra.mxu0 0.0
        %6693 = vmatprep.subr.mxu0 0.0
        %6694 = vmatpush2.msra.mxu0 0.0
        %6695 = vmatprep.subr.mxu0 0.0
        %6696 = vmatpush2.msra.mxu0 0.0
        %6697 = vmatprep.subr.mxu0 0.0
        %6698 = vmatpush2.msra.mxu0 0.0
        %6699 = vmatprep.subr.mxu0 0.0
        %6700 = vmatpush2.msra.mxu0 0.0
        %6701 = vmatprep.subr.mxu0 0.0
        %6702 = vmatpush2.msra.mxu0 0.0
        %6703 = vmatprep.mubr.f32.mxu0 0.0
        %6704 = vmatmul.mubr.f32.gmra.mxu0 %v6637
        %v6705 = vpop.f32.mrf.mxu0
        %v6706 = vadd.f32 0.0, %v6705
        %v6707 = vpop.f32.mrf.mxu0
        %6708 = vdwg.mxu0
        %6725 = vset.pattern.permute.xlu0 0
        %6726 = vperm.xlu0 %6725, %v5387
        %v6727 = vpop.permute.xlu0 %6726
        %6728 = vset.pattern.permute.xlu0 0
        %6729 = vperm.xlu0 %6728, %v5388
        %v6730 = vpop.permute.xlu0 %6729
        %6731 = vset.pattern.permute.xlu0 0
        %6732 = vperm.xlu0 %6731, %v5389
        %v6733 = vpop.permute.xlu0 %6732
        %6734 = vset.pattern.permute.xlu0 0
        %6735 = vperm.xlu0 %6734, %v5390
        %v6736 = vpop.permute.xlu0 %6735
        %6737 = vset.pattern.permute.xlu0 0
        %6738 = vperm.xlu0 %6737, %v5391
        %v6739 = vpop.permute.xlu0 %6738
        %6740 = vset.pattern.permute.xlu0 0
        %6741 = vperm.xlu0 %6740, %v5392
        %v6742 = vpop.permute.xlu0 %6741
        %6743 = vset.pattern.permute.xlu0 0
        %6744 = vperm.xlu0 %6743, %v5393
        %v6745 = vpop.permute.xlu0 %6744
        %6746 = vset.pattern.permute.xlu0 0
        %6747 = vperm.xlu0 %6746, %v5394
        %v6748 = vpop.permute.xlu0 %6747
        %6749 = vset.pattern.permute.xlu0 0
        %6750 = vperm.xlu0 %6749, %v5395
        %v6751 = vpop.permute.xlu0 %6750
        %6752 = vset.pattern.permute.xlu0 0
        %6753 = vperm.xlu0 %6752, %v5396
        %v6754 = vpop.permute.xlu0 %6753
        %6755 = vset.pattern.permute.xlu0 0
        %6756 = vperm.xlu0 %6755, %v5397
        %v6757 = vpop.permute.xlu0 %6756
        %6758 = vset.pattern.permute.xlu0 0
        %6759 = vperm.xlu0 %6758, %v5398
        %v6760 = vpop.permute.xlu0 %6759
        %6761 = vset.pattern.permute.xlu0 0
        %6762 = vperm.xlu0 %6761, %v5399
        %v6763 = vpop.permute.xlu0 %6762
        %6764 = vset.pattern.permute.xlu0 0
        %6765 = vperm.xlu0 %6764, %v5400
        %v6766 = vpop.permute.xlu0 %6765
        %6767 = vset.pattern.permute.xlu0 0
        %6768 = vperm.xlu0 %6767, %v5401
        %v6769 = vpop.permute.xlu0 %6768
        %6770 = vset.pattern.permute.xlu0 0
        %6771 = vperm.xlu0 %6770, %v5402
        %v6772 = vpop.permute.xlu0 %6771
        %v6773 = vlaneseq
        %v6774 = vshrl.u32 %v6773, 7
        %v6775 = vsub.s32 %v2392, %v6774
        %v6776 = vrot.slane %v6727, %v6775
        %v6777 = vlaneseq
        %v6778 = vshrl.u32 %v6777, 7
        %v6779 = vsub.s32 %v2397, %v6778
        %v6780 = vrot.slane %v6730, %v6779
        %v6781 = vsel %vm2402, %v6780, %v6776
        %v6782 = vlaneseq
        %v6783 = vshrl.u32 %v6782, 7
        %v6784 = vsub.s32 %v2392, %v6783
        %v6785 = vrot.slane %v6733, %v6784
        %v6786 = vlaneseq
        %v6787 = vshrl.u32 %v6786, 7
        %v6788 = vsub.s32 %v2397, %v6787
        %v6789 = vrot.slane %v6736, %v6788
        %v6790 = vsel %vm2402, %v6789, %v6785
        %v6791 = vlaneseq
        %v6792 = vshrl.u32 %v6791, 7
        %v6793 = vsub.s32 %v2392, %v6792
        %v6794 = vrot.slane %v6739, %v6793
        %v6795 = vlaneseq
        %v6796 = vshrl.u32 %v6795, 7
        %v6797 = vsub.s32 %v2397, %v6796
        %v6798 = vrot.slane %v6742, %v6797
        %v6799 = vsel %vm2402, %v6798, %v6794
        %v6800 = vlaneseq
        %v6801 = vshrl.u32 %v6800, 7
        %v6802 = vsub.s32 %v2392, %v6801
        %v6803 = vrot.slane %v6745, %v6802
        %v6804 = vlaneseq
        %v6805 = vshrl.u32 %v6804, 7
        %v6806 = vsub.s32 %v2397, %v6805
        %v6807 = vrot.slane %v6748, %v6806
        %v6808 = vsel %vm2402, %v6807, %v6803
        %v6809 = vlaneseq
        %v6810 = vshrl.u32 %v6809, 7
        %v6811 = vsub.s32 %v2392, %v6810
        %v6812 = vrot.slane %v6751, %v6811
        %v6813 = vlaneseq
        %v6814 = vshrl.u32 %v6813, 7
        %v6815 = vsub.s32 %v2397, %v6814
        %v6816 = vrot.slane %v6754, %v6815
        %v6817 = vsel %vm2402, %v6816, %v6812
        %v6818 = vlaneseq
        %v6819 = vshrl.u32 %v6818, 7
        %v6820 = vsub.s32 %v2392, %v6819
        %v6821 = vrot.slane %v6757, %v6820
        %v6822 = vlaneseq
        %v6823 = vshrl.u32 %v6822, 7
        %v6824 = vsub.s32 %v2397, %v6823
        %v6825 = vrot.slane %v6760, %v6824
        %v6826 = vsel %vm2402, %v6825, %v6821
        %v6827 = vlaneseq
        %v6828 = vshrl.u32 %v6827, 7
        %v6829 = vsub.s32 %v2392, %v6828
        %v6830 = vrot.slane %v6763, %v6829
        %v6831 = vlaneseq
        %v6832 = vshrl.u32 %v6831, 7
        %v6833 = vsub.s32 %v2397, %v6832
        %v6834 = vrot.slane %v6766, %v6833
        %v6835 = vsel %vm2402, %v6834, %v6830
        %v6836 = vlaneseq
        %v6837 = vshrl.u32 %v6836, 7
        %v6838 = vsub.s32 %v2392, %v6837
        %v6839 = vrot.slane %v6769, %v6838
        %v6840 = vlaneseq
        %v6841 = vshrl.u32 %v6840, 7
        %v6842 = vsub.s32 %v2397, %v6841
        %v6843 = vrot.slane %v6772, %v6842
        %v6844 = vsel %vm2402, %v6843, %v6839
        %v6845 = vsel %vm2971, %v6790, %v6781
        %v6846 = vsel %vm2973, %v6799, %v6845
        %v6847 = vsel %vm2975, %v6808, %v6846
        %v6848 = vsel %vm2977, %v6817, %v6847
        %v6849 = vsel %vm2979, %v6826, %v6848
        %v6850 = vsel %vm2981, %v6835, %v6849
        %v6851 = vsel %vm2983, %v6844, %v6850
        %v6852 = vsel %vm3042, %v6851, 0
        %6854 = vmatprep.subr.mxu0 0.0
        %6855 = vmatpush1.msra.mxu0 0.0
        %6856 = vmatprep.subr.mxu0 0.0
        %6857 = vmatpush1.msra.mxu0 0.0
        %6858 = vmatprep.subr.mxu0 0.0
        %6859 = vmatpush1.msra.mxu0 0.0
        %6860 = vmatprep.subr.mxu0 0.0
        %6861 = vmatpush1.msra.mxu0 0.0
        %6862 = vmatprep.subr.mxu0 0.0
        %6863 = vmatpush1.msra.mxu0 0.0
        %6864 = vmatprep.subr.mxu0 0.0
        %6865 = vmatpush1.msra.mxu0 0.0
        %6866 = vmatprep.subr.mxu0 0.0
        %6867 = vmatpush1.msra.mxu0 0.0
        %6868 = vmatprep.subr.mxu0 0.0
        %6869 = vmatpush1.msra.mxu0 0.0
        %6870 = vmatprep.subr.mxu0 0.0
        %6871 = vmatpush1.msra.mxu0 0.0
        %6872 = vmatprep.subr.mxu0 0.0
        %6873 = vmatpush1.msra.mxu0 0.0
        %6874 = vmatprep.subr.mxu0 0.0
        %6875 = vmatpush1.msra.mxu0 0.0
        %6876 = vmatprep.subr.mxu0 0.0
        %6877 = vmatpush1.msra.mxu0 0.0
        %6878 = vmatprep.subr.mxu0 0.0
        %6879 = vmatpush1.msra.mxu0 0.0
        %6880 = vmatprep.subr.mxu0 0.0
        %6881 = vmatpush1.msra.mxu0 0.0
        %6882 = vmatprep.subr.mxu0 0.0
        %6883 = vmatpush1.msra.mxu0 %v490
        %6884 = vmatprep.subr.mxu0 0.0
        %6885 = vmatpush1.msra.mxu0 %v489
        %6886 = vmatprep.subr.mxu0 0.0
        %6887 = vmatpush2.msra.mxu0 0.0
        %6888 = vmatprep.subr.mxu0 0.0
        %6889 = vmatpush2.msra.mxu0 0.0
        %6890 = vmatprep.subr.mxu0 0.0
        %6891 = vmatpush2.msra.mxu0 0.0
        %6892 = vmatprep.subr.mxu0 0.0
        %6893 = vmatpush2.msra.mxu0 0.0
        %6894 = vmatprep.subr.mxu0 0.0
        %6895 = vmatpush2.msra.mxu0 0.0
        %6896 = vmatprep.subr.mxu0 0.0
        %6897 = vmatpush2.msra.mxu0 0.0
        %6898 = vmatprep.subr.mxu0 0.0
        %6899 = vmatpush2.msra.mxu0 0.0
        %6900 = vmatprep.subr.mxu0 0.0
        %6901 = vmatpush2.msra.mxu0 0.0
        %6902 = vmatprep.subr.mxu0 0.0
        %6903 = vmatpush2.msra.mxu0 0.0
        %6904 = vmatprep.subr.mxu0 0.0
        %6905 = vmatpush2.msra.mxu0 0.0
        %6906 = vmatprep.subr.mxu0 0.0
        %6907 = vmatpush2.msra.mxu0 0.0
        %6908 = vmatprep.subr.mxu0 0.0
        %6909 = vmatpush2.msra.mxu0 0.0
        %6910 = vmatprep.subr.mxu0 0.0
        %6911 = vmatpush2.msra.mxu0 0.0
        %6912 = vmatprep.subr.mxu0 0.0
        %6913 = vmatpush2.msra.mxu0 0.0
        %6914 = vmatprep.subr.mxu0 0.0
        %6915 = vmatpush2.msra.mxu0 0.0
        %6916 = vmatprep.subr.mxu0 0.0
        %6917 = vmatpush2.msra.mxu0 0.0
        %6918 = vmatprep.mubr.f32.mxu0 0.0
        %6919 = vmatmul.mubr.f32.gmra.mxu0 %v6852
        %v6920 = vpop.f32.mrf.mxu0
        %v6921 = vadd.f32 0.0, %v6920
        %v6922 = vpop.f32.mrf.mxu0
        %6923 = vdwg.mxu0
        %6940 = vset.pattern.permute.xlu0 0
        %6941 = vperm.xlu0 %6940, %v5403
        %v6942 = vpop.permute.xlu0 %6941
        %6943 = vset.pattern.permute.xlu0 0
        %6944 = vperm.xlu0 %6943, %v5404
        %v6945 = vpop.permute.xlu0 %6944
        %6946 = vset.pattern.permute.xlu0 0
        %6947 = vperm.xlu0 %6946, %v5405
        %v6948 = vpop.permute.xlu0 %6947
        %6949 = vset.pattern.permute.xlu0 0
        %6950 = vperm.xlu0 %6949, %v5406
        %v6951 = vpop.permute.xlu0 %6950
        %6952 = vset.pattern.permute.xlu0 0
        %6953 = vperm.xlu0 %6952, %v5407
        %v6954 = vpop.permute.xlu0 %6953
        %6955 = vset.pattern.permute.xlu0 0
        %6956 = vperm.xlu0 %6955, %v5408
        %v6957 = vpop.permute.xlu0 %6956
        %6958 = vset.pattern.permute.xlu0 0
        %6959 = vperm.xlu0 %6958, %v5409
        %v6960 = vpop.permute.xlu0 %6959
        %6961 = vset.pattern.permute.xlu0 0
        %6962 = vperm.xlu0 %6961, %v5410
        %v6963 = vpop.permute.xlu0 %6962
        %6964 = vset.pattern.permute.xlu0 0
        %6965 = vperm.xlu0 %6964, %v5411
        %v6966 = vpop.permute.xlu0 %6965
        %6967 = vset.pattern.permute.xlu0 0
        %6968 = vperm.xlu0 %6967, %v5412
        %v6969 = vpop.permute.xlu0 %6968
        %6970 = vset.pattern.permute.xlu0 0
        %6971 = vperm.xlu0 %6970, %v5413
        %v6972 = vpop.permute.xlu0 %6971
        %6973 = vset.pattern.permute.xlu0 0
        %6974 = vperm.xlu0 %6973, %v5414
        %v6975 = vpop.permute.xlu0 %6974
        %6976 = vset.pattern.permute.xlu0 0
        %6977 = vperm.xlu0 %6976, %v5415
        %v6978 = vpop.permute.xlu0 %6977
        %6979 = vset.pattern.permute.xlu0 0
        %6980 = vperm.xlu0 %6979, %v5416
        %v6981 = vpop.permute.xlu0 %6980
        %6982 = vset.pattern.permute.xlu0 0
        %6983 = vperm.xlu0 %6982, %v5417
        %v6984 = vpop.permute.xlu0 %6983
        %6985 = vset.pattern.permute.xlu0 0
        %6986 = vperm.xlu0 %6985, %v5418
        %v6987 = vpop.permute.xlu0 %6986
        %v6988 = vlaneseq
        %v6989 = vshrl.u32 %v6988, 7
        %v6990 = vsub.s32 %v2392, %v6989
        %v6991 = vrot.slane %v6942, %v6990
        %v6992 = vlaneseq
        %v6993 = vshrl.u32 %v6992, 7
        %v6994 = vsub.s32 %v2397, %v6993
        %v6995 = vrot.slane %v6945, %v6994
        %v6996 = vsel %vm2402, %v6995, %v6991
        %v6997 = vlaneseq
        %v6998 = vshrl.u32 %v6997, 7
        %v6999 = vsub.s32 %v2392, %v6998
        %v7000 = vrot.slane %v6948, %v6999
        %v7001 = vlaneseq
        %v7002 = vshrl.u32 %v7001, 7
        %v7003 = vsub.s32 %v2397, %v7002
        %v7004 = vrot.slane %v6951, %v7003
        %v7005 = vsel %vm2402, %v7004, %v7000
        %v7006 = vlaneseq
        %v7007 = vshrl.u32 %v7006, 7
        %v7008 = vsub.s32 %v2392, %v7007
        %v7009 = vrot.slane %v6954, %v7008
        %v7010 = vlaneseq
        %v7011 = vshrl.u32 %v7010, 7
        %v7012 = vsub.s32 %v2397, %v7011
        %v7013 = vrot.slane %v6957, %v7012
        %v7014 = vsel %vm2402, %v7013, %v7009
        %v7015 = vlaneseq
        %v7016 = vshrl.u32 %v7015, 7
        %v7017 = vsub.s32 %v2392, %v7016
        %v7018 = vrot.slane %v6960, %v7017
        %v7019 = vlaneseq
        %v7020 = vshrl.u32 %v7019, 7
        %v7021 = vsub.s32 %v2397, %v7020
        %v7022 = vrot.slane %v6963, %v7021
        %v7023 = vsel %vm2402, %v7022, %v7018
        %v7024 = vlaneseq
        %v7025 = vshrl.u32 %v7024, 7
        %v7026 = vsub.s32 %v2392, %v7025
        %v7027 = vrot.slane %v6966, %v7026
        %v7028 = vlaneseq
        %v7029 = vshrl.u32 %v7028, 7
        %v7030 = vsub.s32 %v2397, %v7029
        %v7031 = vrot.slane %v6969, %v7030
        %v7032 = vsel %vm2402, %v7031, %v7027
        %v7033 = vlaneseq
        %v7034 = vshrl.u32 %v7033, 7
        %v7035 = vsub.s32 %v2392, %v7034
        %v7036 = vrot.slane %v6972, %v7035
        %v7037 = vlaneseq
        %v7038 = vshrl.u32 %v7037, 7
        %v7039 = vsub.s32 %v2397, %v7038
        %v7040 = vrot.slane %v6975, %v7039
        %v7041 = vsel %vm2402, %v7040, %v7036
        %v7042 = vlaneseq
        %v7043 = vshrl.u32 %v7042, 7
        %v7044 = vsub.s32 %v2392, %v7043
        %v7045 = vrot.slane %v6978, %v7044
        %v7046 = vlaneseq
        %v7047 = vshrl.u32 %v7046, 7
        %v7048 = vsub.s32 %v2397, %v7047
        %v7049 = vrot.slane %v6981, %v7048
        %v7050 = vsel %vm2402, %v7049, %v7045
        %v7051 = vlaneseq
        %v7052 = vshrl.u32 %v7051, 7
        %v7053 = vsub.s32 %v2392, %v7052
        %v7054 = vrot.slane %v6984, %v7053
        %v7055 = vlaneseq
        %v7056 = vshrl.u32 %v7055, 7
        %v7057 = vsub.s32 %v2397, %v7056
        %v7058 = vrot.slane %v6987, %v7057
        %v7059 = vsel %vm2402, %v7058, %v7054
        %v7060 = vsel %vm2971, %v7005, %v6996
        %v7061 = vsel %vm2973, %v7014, %v7060
        %v7062 = vsel %vm2975, %v7023, %v7061
        %v7063 = vsel %vm2977, %v7032, %v7062
        %v7064 = vsel %vm2979, %v7041, %v7063
        %v7065 = vsel %vm2981, %v7050, %v7064
        %v7066 = vsel %vm2983, %v7059, %v7065
        %v7067 = vsel %vm3042, %v7066, 0
        %7069 = vmatprep.subr.mxu0 0.0
        %7070 = vmatpush1.msra.mxu0 0.0
        %7071 = vmatprep.subr.mxu0 0.0
        %7072 = vmatpush1.msra.mxu0 0.0
        %7073 = vmatprep.subr.mxu0 0.0
        %7074 = vmatpush1.msra.mxu0 0.0
        %7075 = vmatprep.subr.mxu0 0.0
        %7076 = vmatpush1.msra.mxu0 0.0
        %7077 = vmatprep.subr.mxu0 0.0
        %7078 = vmatpush1.msra.mxu0 0.0
        %7079 = vmatprep.subr.mxu0 0.0
        %7080 = vmatpush1.msra.mxu0 0.0
        %7081 = vmatprep.subr.mxu0 0.0
        %7082 = vmatpush1.msra.mxu0 0.0
        %7083 = vmatprep.subr.mxu0 0.0
        %7084 = vmatpush1.msra.mxu0 0.0
        %7085 = vmatprep.subr.mxu0 0.0
        %7086 = vmatpush1.msra.mxu0 0.0
        %7087 = vmatprep.subr.mxu0 0.0
        %7088 = vmatpush1.msra.mxu0 0.0
        %7089 = vmatprep.subr.mxu0 0.0
        %7090 = vmatpush1.msra.mxu0 0.0
        %7091 = vmatprep.subr.mxu0 0.0
        %7092 = vmatpush1.msra.mxu0 0.0
        %7093 = vmatprep.subr.mxu0 0.0
        %7094 = vmatpush1.msra.mxu0 0.0
        %7095 = vmatprep.subr.mxu0 0.0
        %7096 = vmatpush1.msra.mxu0 0.0
        %7097 = vmatprep.subr.mxu0 0.0
        %7098 = vmatpush1.msra.mxu0 %v492
        %7099 = vmatprep.subr.mxu0 0.0
        %7100 = vmatpush1.msra.mxu0 %v491
        %7101 = vmatprep.subr.mxu0 0.0
        %7102 = vmatpush2.msra.mxu0 0.0
        %7103 = vmatprep.subr.mxu0 0.0
        %7104 = vmatpush2.msra.mxu0 0.0
        %7105 = vmatprep.subr.mxu0 0.0
        %7106 = vmatpush2.msra.mxu0 0.0
        %7107 = vmatprep.subr.mxu0 0.0
        %7108 = vmatpush2.msra.mxu0 0.0
        %7109 = vmatprep.subr.mxu0 0.0
        %7110 = vmatpush2.msra.mxu0 0.0
        %7111 = vmatprep.subr.mxu0 0.0
        %7112 = vmatpush2.msra.mxu0 0.0
        %7113 = vmatprep.subr.mxu0 0.0
        %7114 = vmatpush2.msra.mxu0 0.0
        %7115 = vmatprep.subr.mxu0 0.0
        %7116 = vmatpush2.msra.mxu0 0.0
        %7117 = vmatprep.subr.mxu0 0.0
        %7118 = vmatpush2.msra.mxu0 0.0
        %7119 = vmatprep.subr.mxu0 0.0
        %7120 = vmatpush2.msra.mxu0 0.0
        %7121 = vmatprep.subr.mxu0 0.0
        %7122 = vmatpush2.msra.mxu0 0.0
        %7123 = vmatprep.subr.mxu0 0.0
        %7124 = vmatpush2.msra.mxu0 0.0
        %7125 = vmatprep.subr.mxu0 0.0
        %7126 = vmatpush2.msra.mxu0 0.0
        %7127 = vmatprep.subr.mxu0 0.0
        %7128 = vmatpush2.msra.mxu0 0.0
        %7129 = vmatprep.subr.mxu0 0.0
        %7130 = vmatpush2.msra.mxu0 0.0
        %7131 = vmatprep.subr.mxu0 0.0
        %7132 = vmatpush2.msra.mxu0 0.0
        %7133 = vmatprep.mubr.f32.mxu0 0.0
        %7134 = vmatmul.mubr.f32.gmra.mxu0 %v7067
        %v7135 = vpop.f32.mrf.mxu0
        %v7136 = vadd.f32 0.0, %v7135
        %v7137 = vpop.f32.mrf.mxu0
        %7138 = vdwg.mxu0
        %v7139 = vld [vmem:[#allocation11] sm:$0xff]
        %v7140 = vld [vmem:[#allocation11 + $0x8] sm:$0xff]
        %v7141 = vld [vmem:[#allocation11 + $0x10] sm:$0xff]
        %v7142 = vld [vmem:[#allocation11 + $0x18] sm:$0xff]
        %v7143 = vld [vmem:[#allocation11 + $0x20] sm:$0xff]
        %v7144 = vld [vmem:[#allocation11 + $0x28] sm:$0xff]
        %v7145 = vld [vmem:[#allocation11 + $0x30] sm:$0xff]
        %v7146 = vld [vmem:[#allocation11 + $0x38] sm:$0xff]
        %v7148 = vsel %vm529, %v5631, 0
        %v7151 = vsel %vm529, %v5846, 0
        %v7154 = vsel %vm529, %v6061, 0
        %v7157 = vsel %vm529, %v6276, 0
        %v7160 = vsel %vm529, %v6491, 0
        %v7163 = vsel %vm529, %v6706, 0
        %v7166 = vsel %vm529, %v6921, 0
        %v7169 = vsel %vm529, %v7136, 0
        %7171 = vmatprep.subr.mxu0 0.0
        %7172 = vmatpush1.msra.mxu0 0.0
        %7173 = vmatprep.subr.mxu0 0.0
        %7174 = vmatpush1.msra.mxu0 0.0
        %7175 = vmatprep.subr.mxu0 0.0
        %7176 = vmatpush1.msra.mxu0 0.0
        %7177 = vmatprep.subr.mxu0 0.0
        %7178 = vmatpush1.msra.mxu0 0.0
        %7179 = vmatprep.subr.mxu0 0.0
        %7180 = vmatpush1.msra.mxu0 0.0
        %7181 = vmatprep.subr.mxu0 0.0
        %7182 = vmatpush1.msra.mxu0 0.0
        %7183 = vmatprep.subr.mxu0 0.0
        %7184 = vmatpush1.msra.mxu0 0.0
        %7185 = vmatprep.subr.mxu0 0.0
        %7186 = vmatpush1.msra.mxu0 0.0
        %7187 = vmatprep.subr.mxu0 0.0
        %7188 = vmatpush1.msra.mxu0 %v7146
        %7189 = vmatprep.subr.mxu0 0.0
        %7190 = vmatpush1.msra.mxu0 %v7145
        %7191 = vmatprep.subr.mxu0 0.0
        %7192 = vmatpush1.msra.mxu0 %v7144
        %7193 = vmatprep.subr.mxu0 0.0
        %7194 = vmatpush1.msra.mxu0 %v7143
        %7195 = vmatprep.subr.mxu0 0.0
        %7196 = vmatpush1.msra.mxu0 %v7142
        %7197 = vmatprep.subr.mxu0 0.0
        %7198 = vmatpush1.msra.mxu0 %v7141
        %7199 = vmatprep.subr.mxu0 0.0
        %7200 = vmatpush1.msra.mxu0 %v7140
        %7201 = vmatprep.subr.mxu0 0.0
        %7202 = vmatpush1.msra.mxu0 %v7139
        %7203 = vmatprep.subr.mxu0 0.0
        %7204 = vmatpush2.msra.mxu0 0.0
        %7205 = vmatprep.subr.mxu0 0.0
        %7206 = vmatpush2.msra.mxu0 0.0
        %7207 = vmatprep.subr.mxu0 0.0
        %7208 = vmatpush2.msra.mxu0 0.0
        %7209 = vmatprep.subr.mxu0 0.0
        %7210 = vmatpush2.msra.mxu0 0.0
        %7211 = vmatprep.subr.mxu0 0.0
        %7212 = vmatpush2.msra.mxu0 0.0
        %7213 = vmatprep.subr.mxu0 0.0
        %7214 = vmatpush2.msra.mxu0 0.0
        %7215 = vmatprep.subr.mxu0 0.0
        %7216 = vmatpush2.msra.mxu0 0.0
        %7217 = vmatprep.subr.mxu0 0.0
        %7218 = vmatpush2.msra.mxu0 0.0
        %7219 = vmatprep.subr.mxu0 0.0
        %7220 = vmatpush2.msra.mxu0 0.0
        %7221 = vmatprep.subr.mxu0 0.0
        %7222 = vmatpush2.msra.mxu0 0.0
        %7223 = vmatprep.subr.mxu0 0.0
        %7224 = vmatpush2.msra.mxu0 0.0
        %7225 = vmatprep.subr.mxu0 0.0
        %7226 = vmatpush2.msra.mxu0 0.0
        %7227 = vmatprep.subr.mxu0 0.0
        %7228 = vmatpush2.msra.mxu0 0.0
        %7229 = vmatprep.subr.mxu0 0.0
        %7230 = vmatpush2.msra.mxu0 0.0
        %7231 = vmatprep.subr.mxu0 0.0
        %7232 = vmatpush2.msra.mxu0 0.0
        %7233 = vmatprep.subr.mxu0 0.0
        %7234 = vmatpush2.msra.mxu0 0.0
        %7235 = vmatprep.mubr.f32.mxu0 0.0
        %7236 = vmatmul.mubr.f32.gmra.mxu0 %v7148
        %v7237 = vpop.f32.mrf.mxu0
        %v7238 = vadd.f32 0.0, %v7237
        %v7239 = vpop.f32.mrf.mxu0
        %7240 = vmatprep.mubr.f32.mxu0 0.0
        %7241 = vmatmul.mubr.f32.gmra.mxu0 %v7151
        %v7242 = vpop.f32.mrf.mxu0
        %v7243 = vadd.f32 0.0, %v7242
        %v7244 = vpop.f32.mrf.mxu0
        %7245 = vmatprep.mubr.f32.mxu0 0.0
        %7246 = vmatmul.mubr.f32.gmra.mxu0 %v7154
        %v7247 = vpop.f32.mrf.mxu0
        %v7248 = vadd.f32 0.0, %v7247
        %v7249 = vpop.f32.mrf.mxu0
        %7250 = vmatprep.mubr.f32.mxu0 0.0
        %7251 = vmatmul.mubr.f32.gmra.mxu0 %v7157
        %v7252 = vpop.f32.mrf.mxu0
        %v7253 = vadd.f32 0.0, %v7252
        %v7254 = vpop.f32.mrf.mxu0
        %7255 = vmatprep.mubr.f32.mxu0 0.0
        %7256 = vmatmul.mubr.f32.gmra.mxu0 %v7160
        %v7257 = vpop.f32.mrf.mxu0
        %v7258 = vadd.f32 0.0, %v7257
        %v7259 = vpop.f32.mrf.mxu0
        %7260 = vmatprep.mubr.f32.mxu0 0.0
        %7261 = vmatmul.mubr.f32.gmra.mxu0 %v7163
        %v7262 = vpop.f32.mrf.mxu0
        %v7263 = vadd.f32 0.0, %v7262
        %v7264 = vpop.f32.mrf.mxu0
        %7265 = vmatprep.mubr.f32.mxu0 0.0
        %7266 = vmatmul.mubr.f32.gmra.mxu0 %v7166
        %v7267 = vpop.f32.mrf.mxu0
        %v7268 = vadd.f32 0.0, %v7267
        %v7269 = vpop.f32.mrf.mxu0
        %7270 = vmatprep.mubr.f32.mxu0 0.0
        %7271 = vmatmul.mubr.f32.gmra.mxu0 %v7169
        %v7272 = vpop.f32.mrf.mxu0
        %v7273 = vadd.f32 0.0, %v7272
        %v7274 = vpop.f32.mrf.mxu0
        %7275 = vdwg.mxu0
        %7284 = vrot.lane.b32.xlu0 %v7238, 32
        %v7285 = vpop.permute.xlu0 %7284
        %7286 = vrot.lane.b32.xlu0 %v7243, 32
        %v7287 = vpop.permute.xlu0 %7286
        %7288 = vrot.lane.b32.xlu0 %v7248, 32
        %v7289 = vpop.permute.xlu0 %7288
        %7290 = vrot.lane.b32.xlu0 %v7253, 32
        %v7291 = vpop.permute.xlu0 %7290
        %7292 = vrot.lane.b32.xlu0 %v7258, 32
        %v7293 = vpop.permute.xlu0 %7292
        %7294 = vrot.lane.b32.xlu0 %v7263, 32
        %v7295 = vpop.permute.xlu0 %7294
        %7296 = vrot.lane.b32.xlu0 %v7268, 32
        %v7297 = vpop.permute.xlu0 %7296
        %7298 = vrot.lane.b32.xlu0 %v7273, 32
        %v7299 = vpop.permute.xlu0 %7298
        %v7308 = vadd.f32 %v621, %v7285
        %v7309 = vadd.f32 %v623, %v7285
        %v7310 = vadd.f32 %v627, %v7287
        %v7311 = vadd.f32 %v629, %v7287
        %v7312 = vadd.f32 %v633, %v7289
        %v7313 = vadd.f32 %v635, %v7289
        %v7314 = vadd.f32 %v639, %v7291
        %v7315 = vadd.f32 %v641, %v7291
        %v7316 = vadd.f32 %v645, %v7293
        %v7317 = vadd.f32 %v647, %v7293
        %v7318 = vadd.f32 %v651, %v7295
        %v7319 = vadd.f32 %v653, %v7295
        %v7320 = vadd.f32 %v657, %v7297
        %v7321 = vadd.f32 %v659, %v7297
        %v7322 = vadd.f32 %v663, %v7299
        %v7323 = vadd.f32 %v665, %v7299
        %v7324 = vxor.u32 %v7308, 2147483648
        %v7325 = vxor.u32 %v7309, 2147483648
        %v7326 = vxor.u32 %v7310, 2147483648
        %v7327 = vxor.u32 %v7311, 2147483648
        %v7328 = vxor.u32 %v7312, 2147483648
        %v7329 = vxor.u32 %v7313, 2147483648
        %v7330 = vxor.u32 %v7314, 2147483648
        %v7331 = vxor.u32 %v7315, 2147483648
        %v7332 = vxor.u32 %v7316, 2147483648
        %v7333 = vxor.u32 %v7317, 2147483648
        %v7334 = vxor.u32 %v7318, 2147483648
        %v7335 = vxor.u32 %v7319, 2147483648
        %v7336 = vxor.u32 %v7320, 2147483648
        %v7337 = vxor.u32 %v7321, 2147483648
        %v7338 = vxor.u32 %v7322, 2147483648
        %v7339 = vxor.u32 %v7323, 2147483648
        %v7340 = vmul.f32 %v7324, 1.442695
        %v7341 = vpow.pop %v7340
        %v7342 = vmul.f32 %v7325, 1.442695
        %v7343 = vpow.pop %v7342
        %v7344 = vmul.f32 %v7326, 1.442695
        %v7345 = vpow.pop %v7344
        %v7346 = vmul.f32 %v7327, 1.442695
        %v7347 = vpow.pop %v7346
        %v7348 = vmul.f32 %v7328, 1.442695
        %v7349 = vpow.pop %v7348
        %v7350 = vmul.f32 %v7329, 1.442695
        %v7351 = vpow.pop %v7350
        %v7352 = vmul.f32 %v7330, 1.442695
        %v7353 = vpow.pop %v7352
        %v7354 = vmul.f32 %v7331, 1.442695
        %v7355 = vpow.pop %v7354
        %v7356 = vmul.f32 %v7332, 1.442695
        %v7357 = vpow.pop %v7356
        %v7358 = vmul.f32 %v7333, 1.442695
        %v7359 = vpow.pop %v7358
        %v7360 = vmul.f32 %v7334, 1.442695
        %v7361 = vpow.pop %v7360
        %v7362 = vmul.f32 %v7335, 1.442695
        %v7363 = vpow.pop %v7362
        %v7364 = vmul.f32 %v7336, 1.442695
        %v7365 = vpow.pop %v7364
        %v7366 = vmul.f32 %v7337, 1.442695
        %v7367 = vpow.pop %v7366
        %v7368 = vmul.f32 %v7338, 1.442695
        %v7369 = vpow.pop %v7368
        %v7370 = vmul.f32 %v7339, 1.442695
        %v7371 = vpow.pop %v7370
        %v7372 = vadd.f32 %v7341, 1.0
        %v7373 = vadd.f32 %v7343, 1.0
        %v7374 = vadd.f32 %v7345, 1.0
        %v7375 = vadd.f32 %v7347, 1.0
        %v7376 = vadd.f32 %v7349, 1.0
        %v7377 = vadd.f32 %v7351, 1.0
        %v7378 = vadd.f32 %v7353, 1.0
        %v7379 = vadd.f32 %v7355, 1.0
        %v7380 = vadd.f32 %v7357, 1.0
        %v7381 = vadd.f32 %v7359, 1.0
        %v7382 = vadd.f32 %v7361, 1.0
        %v7383 = vadd.f32 %v7363, 1.0
        %v7384 = vadd.f32 %v7365, 1.0
        %v7385 = vadd.f32 %v7367, 1.0
        %v7386 = vadd.f32 %v7369, 1.0
        %v7387 = vadd.f32 %v7371, 1.0
        %v7388 = vrcp.pop %v7372
        %v7389 = vmul.f32 1.0, %v7388
        %v7390 = vrcp.pop %v7373
        %v7391 = vmul.f32 1.0, %v7390
        %v7392 = vrcp.pop %v7374
        %v7393 = vmul.f32 1.0, %v7392
        %v7394 = vrcp.pop %v7375
        %v7395 = vmul.f32 1.0, %v7394
        %v7396 = vrcp.pop %v7376
        %v7397 = vmul.f32 1.0, %v7396
        %v7398 = vrcp.pop %v7377
        %v7399 = vmul.f32 1.0, %v7398
        %v7400 = vrcp.pop %v7378
        %v7401 = vmul.f32 1.0, %v7400
        %v7402 = vrcp.pop %v7379
        %v7403 = vmul.f32 1.0, %v7402
        %v7404 = vrcp.pop %v7380
        %v7405 = vmul.f32 1.0, %v7404
        %v7406 = vrcp.pop %v7381
        %v7407 = vmul.f32 1.0, %v7406
        %v7408 = vrcp.pop %v7382
        %v7409 = vmul.f32 1.0, %v7408
        %v7410 = vrcp.pop %v7383
        %v7411 = vmul.f32 1.0, %v7410
        %v7412 = vrcp.pop %v7384
        %v7413 = vmul.f32 1.0, %v7412
        %v7414 = vrcp.pop %v7385
        %v7415 = vmul.f32 1.0, %v7414
        %v7416 = vrcp.pop %v7386
        %v7417 = vmul.f32 1.0, %v7416
        %v7418 = vrcp.pop %v7387
        %v7419 = vmul.f32 1.0, %v7418
        %7420 = vrot.lane.b32.xlu0 %v493, 32
        %v7421 = vpop.permute.xlu0 %7420
        %7422 = vrot.lane.b32.xlu0 %v494, 32
        %v7423 = vpop.permute.xlu0 %7422
        %7424 = vrot.lane.b32.xlu0 %v495, 32
        %v7425 = vpop.permute.xlu0 %7424
        %7426 = vrot.lane.b32.xlu0 %v496, 32
        %v7427 = vpop.permute.xlu0 %7426
        %7428 = vrot.lane.b32.xlu0 %v497, 32
        %v7429 = vpop.permute.xlu0 %7428
        %7430 = vrot.lane.b32.xlu0 %v498, 32
        %v7431 = vpop.permute.xlu0 %7430
        %7432 = vrot.lane.b32.xlu0 %v499, 32
        %v7433 = vpop.permute.xlu0 %7432
        %7434 = vrot.lane.b32.xlu0 %v500, 32
        %v7435 = vpop.permute.xlu0 %7434
        %v7444 = vmul.f32 %v7389, %v7421
        %v7445 = vmul.f32 %v7393, %v7423
        %v7446 = vmul.f32 %v7397, %v7425
        %v7447 = vmul.f32 %v7401, %v7427
        %v7448 = vmul.f32 %v7405, %v7429
        %v7449 = vmul.f32 %v7409, %v7431
        %v7450 = vmul.f32 %v7413, %v7433
        %v7451 = vmul.f32 %v7417, %v7435
        %7452 = vrot.lane.b32.xlu0 %v5631, 96
        %v7453 = vpop.permute.xlu0 %7452
        %7454 = vrot.lane.b32.xlu0 %v5846, 96
        %v7455 = vpop.permute.xlu0 %7454
        %7456 = vrot.lane.b32.xlu0 %v6061, 96
        %v7457 = vpop.permute.xlu0 %7456
        %7458 = vrot.lane.b32.xlu0 %v6276, 96
        %v7459 = vpop.permute.xlu0 %7458
        %7460 = vrot.lane.b32.xlu0 %v6491, 96
        %v7461 = vpop.permute.xlu0 %7460
        %7462 = vrot.lane.b32.xlu0 %v6706, 96
        %v7463 = vpop.permute.xlu0 %7462
        %7464 = vrot.lane.b32.xlu0 %v6921, 96
        %v7465 = vpop.permute.xlu0 %7464
        %7466 = vrot.lane.b32.xlu0 %v7136, 96
        %v7467 = vpop.permute.xlu0 %7466
        %v7476 = vmul.f32 %v7389, %v7453
        %v7477 = vmul.f32 %v7391, %v7453
        %v7478 = vmul.f32 %v7393, %v7455
        %v7479 = vmul.f32 %v7395, %v7455
        %v7480 = vmul.f32 %v7397, %v7457
        %v7481 = vmul.f32 %v7399, %v7457
        %v7482 = vmul.f32 %v7401, %v7459
        %v7483 = vmul.f32 %v7403, %v7459
        %v7484 = vmul.f32 %v7405, %v7461
        %v7485 = vmul.f32 %v7407, %v7461
        %v7486 = vmul.f32 %v7409, %v7463
        %v7487 = vmul.f32 %v7411, %v7463
        %v7488 = vmul.f32 %v7413, %v7465
        %v7489 = vmul.f32 %v7415, %v7465
        %v7490 = vmul.f32 %v7417, %v7467
        %v7491 = vmul.f32 %v7419, %v7467
        %v7492 = vld [vmem:[#allocation13] sm:$0xff]
        %v7493 = vld [vmem:[#allocation13 + $0x8] sm:$0xff]
        %v7494 = vld [vmem:[#allocation13 + $0x10] sm:$0xff]
        %v7495 = vld [vmem:[#allocation13 + $0x18] sm:$0xff]
        %v7496 = vld [vmem:[#allocation13 + $0x20] sm:$0xff]
        %v7497 = vld [vmem:[#allocation13 + $0x28] sm:$0xff]
        %v7498 = vld [vmem:[#allocation13 + $0x30] sm:$0xff]
        %v7499 = vld [vmem:[#allocation13 + $0x38] sm:$0xff]
        %v7500 = vld [vmem:[#allocation13 + $0x40] sm:$0xff]
        %v7501 = vld [vmem:[#allocation13 + $0x48] sm:$0xff]
        %v7502 = vld [vmem:[#allocation13 + $0x50] sm:$0xff]
        %v7503 = vld [vmem:[#allocation13 + $0x58] sm:$0xff]
        %v7504 = vld [vmem:[#allocation13 + $0x60] sm:$0xff]
        %v7505 = vld [vmem:[#allocation13 + $0x68] sm:$0xff]
        %v7506 = vld [vmem:[#allocation13 + $0x70] sm:$0xff]
        %v7507 = vld [vmem:[#allocation13 + $0x78] sm:$0xff]
        %v7508 = vld [vmem:[#allocation14] sm:$0xff]
        %v7509 = vld [vmem:[#allocation14 + $0x8] sm:$0xff]
        %v7510 = vld [vmem:[#allocation14 + $0x10] sm:$0xff]
        %v7511 = vld [vmem:[#allocation14 + $0x18] sm:$0xff]
        %v7512 = vld [vmem:[#allocation14 + $0x20] sm:$0xff]
        %v7513 = vld [vmem:[#allocation14 + $0x28] sm:$0xff]
        %v7514 = vld [vmem:[#allocation14 + $0x30] sm:$0xff]
        %v7515 = vld [vmem:[#allocation14 + $0x38] sm:$0xff]
        %v7516 = vld [vmem:[#allocation14 + $0x40] sm:$0xff]
        %v7517 = vld [vmem:[#allocation14 + $0x48] sm:$0xff]
        %v7518 = vld [vmem:[#allocation14 + $0x50] sm:$0xff]
        %v7519 = vld [vmem:[#allocation14 + $0x58] sm:$0xff]
        %v7520 = vld [vmem:[#allocation14 + $0x60] sm:$0xff]
        %v7521 = vld [vmem:[#allocation14 + $0x68] sm:$0xff]
        %v7522 = vld [vmem:[#allocation14 + $0x70] sm:$0xff]
        %v7523 = vld [vmem:[#allocation14 + $0x78] sm:$0xff]
        %7540 = vrot.lane.b32.xlu0 %v7476, 32
        %v7541 = vpop.permute.xlu0 %7540
        %7542 = vrot.lane.b32.xlu0 %v7477, 32
        %v7543 = vpop.permute.xlu0 %7542
        %7544 = vrot.lane.b32.xlu0 %v7478, 32
        %v7545 = vpop.permute.xlu0 %7544
        %7546 = vrot.lane.b32.xlu0 %v7479, 32
        %v7547 = vpop.permute.xlu0 %7546
        %7548 = vrot.lane.b32.xlu0 %v7480, 32
        %v7549 = vpop.permute.xlu0 %7548
        %7550 = vrot.lane.b32.xlu0 %v7481, 32
        %v7551 = vpop.permute.xlu0 %7550
        %7552 = vrot.lane.b32.xlu0 %v7482, 32
        %v7553 = vpop.permute.xlu0 %7552
        %7554 = vrot.lane.b32.xlu0 %v7483, 32
        %v7555 = vpop.permute.xlu0 %7554
        %7556 = vrot.lane.b32.xlu0 %v7484, 32
        %v7557 = vpop.permute.xlu0 %7556
        %7558 = vrot.lane.b32.xlu0 %v7485, 32
        %v7559 = vpop.permute.xlu0 %7558
        %7560 = vrot.lane.b32.xlu0 %v7486, 32
        %v7561 = vpop.permute.xlu0 %7560
        %7562 = vrot.lane.b32.xlu0 %v7487, 32
        %v7563 = vpop.permute.xlu0 %7562
        %7564 = vrot.lane.b32.xlu0 %v7488, 32
        %v7565 = vpop.permute.xlu0 %7564
        %7566 = vrot.lane.b32.xlu0 %v7489, 32
        %v7567 = vpop.permute.xlu0 %7566
        %7568 = vrot.lane.b32.xlu0 %v7490, 32
        %v7569 = vpop.permute.xlu0 %7568
        %7570 = vrot.lane.b32.xlu0 %v7491, 32
        %v7571 = vpop.permute.xlu0 %7570
        %v7572 = vsel %vm1878, %v7541, %v7543
        %v7573 = vsel %vm1878, %v7545, %v7547
        %v7574 = vsel %vm1878, %v7549, %v7551
        %v7575 = vsel %vm1878, %v7553, %v7555
        %v7576 = vsel %vm1878, %v7557, %v7559
        %v7577 = vsel %vm1878, %v7561, %v7563
        %v7578 = vsel %vm1878, %v7565, %v7567
        %v7579 = vsel %vm1878, %v7569, %v7571
        %v7580 = vsel %vm529, %v7572, 0
        %v7582 = vsel %vm529, %v7573, 0
        %v7584 = vsel %vm529, %v7574, 0
        %v7586 = vsel %vm529, %v7575, 0
        %v7588 = vsel %vm529, %v7576, 0
        %v7590 = vsel %vm529, %v7577, 0
        %v7592 = vsel %vm529, %v7578, 0
        %v7594 = vsel %vm529, %v7579, 0
        %7596 = vmatprep.subr.mxu0 0.0
        %7597 = vmatpush1.msra.mxu0 0.0
        %7598 = vmatprep.subr.mxu0 0.0
        %7599 = vmatpush1.msra.mxu0 0.0
        %7600 = vmatprep.subr.mxu0 0.0
        %7601 = vmatpush1.msra.mxu0 0.0
        %7602 = vmatprep.subr.mxu0 0.0
        %7603 = vmatpush1.msra.mxu0 0.0
        %7604 = vmatprep.subr.mxu0 0.0
        %7605 = vmatpush1.msra.mxu0 0.0
        %7606 = vmatprep.subr.mxu0 0.0
        %7607 = vmatpush1.msra.mxu0 0.0
        %7608 = vmatprep.subr.mxu0 0.0
        %7609 = vmatpush1.msra.mxu0 0.0
        %7610 = vmatprep.subr.mxu0 0.0
        %7611 = vmatpush1.msra.mxu0 0.0
        %7612 = vmatprep.subr.mxu0 %v7523
        %7613 = vmatpush1.msra.mxu0 %v7522
        %7614 = vmatprep.subr.mxu0 %v7521
        %7615 = vmatpush1.msra.mxu0 %v7520
        %7616 = vmatprep.subr.mxu0 %v7519
        %7617 = vmatpush1.msra.mxu0 %v7518
        %7618 = vmatprep.subr.mxu0 %v7517
        %7619 = vmatpush1.msra.mxu0 %v7516
        %7620 = vmatprep.subr.mxu0 %v7515
        %7621 = vmatpush1.msra.mxu0 %v7514
        %7622 = vmatprep.subr.mxu0 %v7513
        %7623 = vmatpush1.msra.mxu0 %v7512
        %7624 = vmatprep.subr.mxu0 %v7511
        %7625 = vmatpush1.msra.mxu0 %v7510
        %7626 = vmatprep.subr.mxu0 %v7509
        %7627 = vmatpush1.msra.mxu0 %v7508
        %7628 = vmatprep.subr.mxu0 0.0
        %7629 = vmatpush2.msra.mxu0 0.0
        %7630 = vmatprep.subr.mxu0 0.0
        %7631 = vmatpush2.msra.mxu0 0.0
        %7632 = vmatprep.subr.mxu0 0.0
        %7633 = vmatpush2.msra.mxu0 0.0
        %7634 = vmatprep.subr.mxu0 0.0
        %7635 = vmatpush2.msra.mxu0 0.0
        %7636 = vmatprep.subr.mxu0 0.0
        %7637 = vmatpush2.msra.mxu0 0.0
        %7638 = vmatprep.subr.mxu0 0.0
        %7639 = vmatpush2.msra.mxu0 0.0
        %7640 = vmatprep.subr.mxu0 0.0
        %7641 = vmatpush2.msra.mxu0 0.0
        %7642 = vmatprep.subr.mxu0 0.0
        %7643 = vmatpush2.msra.mxu0 0.0
        %7644 = vmatprep.subr.mxu0 0.0
        %7645 = vmatpush2.msra.mxu0 0.0
        %7646 = vmatprep.subr.mxu0 0.0
        %7647 = vmatpush2.msra.mxu0 0.0
        %7648 = vmatprep.subr.mxu0 0.0
        %7649 = vmatpush2.msra.mxu0 0.0
        %7650 = vmatprep.subr.mxu0 0.0
        %7651 = vmatpush2.msra.mxu0 0.0
        %7652 = vmatprep.subr.mxu0 0.0
        %7653 = vmatpush2.msra.mxu0 0.0
        %7654 = vmatprep.subr.mxu0 0.0
        %7655 = vmatpush2.msra.mxu0 0.0
        %7656 = vmatprep.subr.mxu0 0.0
        %7657 = vmatpush2.msra.mxu0 0.0
        %7658 = vmatprep.subr.mxu0 0.0
        %7659 = vmatpush2.msra.mxu0 0.0
        %7660 = vmatprep.mubr.f32.mxu0 0.0
        %7661 = vmatmul.mubr.f32.gmra.mxu0 %v7580
        %v7662 = vpop.f32.mrf.mxu0
        %v7663 = vadd.f32 0.0, %v7662
        %v7664 = vpop.f32.mrf.mxu0
        %v7665 = vadd.f32 0.0, %v7664
        %7666 = vmatprep.mubr.f32.mxu0 0.0
        %7667 = vmatmul.mubr.f32.gmra.mxu0 %v7582
        %v7668 = vpop.f32.mrf.mxu0
        %v7669 = vadd.f32 0.0, %v7668
        %v7670 = vpop.f32.mrf.mxu0
        %v7671 = vadd.f32 0.0, %v7670
        %7672 = vmatprep.mubr.f32.mxu0 0.0
        %7673 = vmatmul.mubr.f32.gmra.mxu0 %v7584
        %v7674 = vpop.f32.mrf.mxu0
        %v7675 = vadd.f32 0.0, %v7674
        %v7676 = vpop.f32.mrf.mxu0
        %v7677 = vadd.f32 0.0, %v7676
        %7678 = vmatprep.mubr.f32.mxu0 0.0
        %7679 = vmatmul.mubr.f32.gmra.mxu0 %v7586
        %v7680 = vpop.f32.mrf.mxu0
        %v7681 = vadd.f32 0.0, %v7680
        %v7682 = vpop.f32.mrf.mxu0
        %v7683 = vadd.f32 0.0, %v7682
        %7684 = vmatprep.mubr.f32.mxu0 0.0
        %7685 = vmatmul.mubr.f32.gmra.mxu0 %v7588
        %v7686 = vpop.f32.mrf.mxu0
        %v7687 = vadd.f32 0.0, %v7686
        %v7688 = vpop.f32.mrf.mxu0
        %v7689 = vadd.f32 0.0, %v7688
        %7690 = vmatprep.mubr.f32.mxu0 0.0
        %7691 = vmatmul.mubr.f32.gmra.mxu0 %v7590
        %v7692 = vpop.f32.mrf.mxu0
        %v7693 = vadd.f32 0.0, %v7692
        %v7694 = vpop.f32.mrf.mxu0
        %v7695 = vadd.f32 0.0, %v7694
        %7696 = vmatprep.mubr.f32.mxu0 0.0
        %7697 = vmatmul.mubr.f32.gmra.mxu0 %v7592
        %v7698 = vpop.f32.mrf.mxu0
        %v7699 = vadd.f32 0.0, %v7698
        %v7700 = vpop.f32.mrf.mxu0
        %v7701 = vadd.f32 0.0, %v7700
        %7702 = vmatprep.mubr.f32.mxu0 0.0
        %7703 = vmatmul.mubr.f32.gmra.mxu0 %v7594
        %v7704 = vpop.f32.mrf.mxu0
        %v7705 = vadd.f32 0.0, %v7704
        %v7706 = vpop.f32.mrf.mxu0
        %v7707 = vadd.f32 0.0, %v7706
        %7708 = vdwg.mxu0
        %7717 = vrot.lane.b32.xlu0 %v7444, 96
        %v7718 = vpop.permute.xlu0 %7717
        %7719 = vrot.lane.b32.xlu0 %v7445, 96
        %v7720 = vpop.permute.xlu0 %7719
        %7721 = vrot.lane.b32.xlu0 %v7446, 96
        %v7722 = vpop.permute.xlu0 %7721
        %7723 = vrot.lane.b32.xlu0 %v7447, 96
        %v7724 = vpop.permute.xlu0 %7723
        %7725 = vrot.lane.b32.xlu0 %v7448, 96
        %v7726 = vpop.permute.xlu0 %7725
        %7727 = vrot.lane.b32.xlu0 %v7449, 96
        %v7728 = vpop.permute.xlu0 %7727
        %7729 = vrot.lane.b32.xlu0 %v7450, 96
        %v7730 = vpop.permute.xlu0 %7729
        %7731 = vrot.lane.b32.xlu0 %v7451, 96
        %v7732 = vpop.permute.xlu0 %7731
        %v7733 = vsel %vm529, %v7718, 0
        %v7735 = vsel %vm529, %v7720, 0
        %v7737 = vsel %vm529, %v7722, 0
        %v7739 = vsel %vm529, %v7724, 0
        %v7741 = vsel %vm529, %v7726, 0
        %v7743 = vsel %vm529, %v7728, 0
        %v7745 = vsel %vm529, %v7730, 0
        %v7747 = vsel %vm529, %v7732, 0
        %7749 = vmatprep.subr.mxu0 0.0
        %7750 = vmatpush1.msra.mxu0 0.0
        %7751 = vmatprep.subr.mxu0 0.0
        %7752 = vmatpush1.msra.mxu0 0.0
        %7753 = vmatprep.subr.mxu0 0.0
        %7754 = vmatpush1.msra.mxu0 0.0
        %7755 = vmatprep.subr.mxu0 0.0
        %7756 = vmatpush1.msra.mxu0 0.0
        %7757 = vmatprep.subr.mxu0 0.0
        %7758 = vmatpush1.msra.mxu0 0.0
        %7759 = vmatprep.subr.mxu0 0.0
        %7760 = vmatpush1.msra.mxu0 0.0
        %7761 = vmatprep.subr.mxu0 0.0
        %7762 = vmatpush1.msra.mxu0 0.0
        %7763 = vmatprep.subr.mxu0 0.0
        %7764 = vmatpush1.msra.mxu0 0.0
        %7765 = vmatprep.subr.mxu0 %v7507
        %7766 = vmatpush1.msra.mxu0 %v7506
        %7767 = vmatprep.subr.mxu0 %v7505
        %7768 = vmatpush1.msra.mxu0 %v7504
        %7769 = vmatprep.subr.mxu0 %v7503
        %7770 = vmatpush1.msra.mxu0 %v7502
        %7771 = vmatprep.subr.mxu0 %v7501
        %7772 = vmatpush1.msra.mxu0 %v7500
        %7773 = vmatprep.subr.mxu0 %v7499
        %7774 = vmatpush1.msra.mxu0 %v7498
        %7775 = vmatprep.subr.mxu0 %v7497
        %7776 = vmatpush1.msra.mxu0 %v7496
        %7777 = vmatprep.subr.mxu0 %v7495
        %7778 = vmatpush1.msra.mxu0 %v7494
        %7779 = vmatprep.subr.mxu0 %v7493
        %7780 = vmatpush1.msra.mxu0 %v7492
        %7781 = vmatprep.subr.mxu0 0.0
        %7782 = vmatpush2.msra.mxu0 0.0
        %7783 = vmatprep.subr.mxu0 0.0
        %7784 = vmatpush2.msra.mxu0 0.0
        %7785 = vmatprep.subr.mxu0 0.0
        %7786 = vmatpush2.msra.mxu0 0.0
        %7787 = vmatprep.subr.mxu0 0.0
        %7788 = vmatpush2.msra.mxu0 0.0
        %7789 = vmatprep.subr.mxu0 0.0
        %7790 = vmatpush2.msra.mxu0 0.0
        %7791 = vmatprep.subr.mxu0 0.0
        %7792 = vmatpush2.msra.mxu0 0.0
        %7793 = vmatprep.subr.mxu0 0.0
        %7794 = vmatpush2.msra.mxu0 0.0
        %7795 = vmatprep.subr.mxu0 0.0
        %7796 = vmatpush2.msra.mxu0 0.0
        %7797 = vmatprep.subr.mxu0 0.0
        %7798 = vmatpush2.msra.mxu0 0.0
        %7799 = vmatprep.subr.mxu0 0.0
        %7800 = vmatpush2.msra.mxu0 0.0
        %7801 = vmatprep.subr.mxu0 0.0
        %7802 = vmatpush2.msra.mxu0 0.0
        %7803 = vmatprep.subr.mxu0 0.0
        %7804 = vmatpush2.msra.mxu0 0.0
        %7805 = vmatprep.subr.mxu0 0.0
        %7806 = vmatpush2.msra.mxu0 0.0
        %7807 = vmatprep.subr.mxu0 0.0
        %7808 = vmatpush2.msra.mxu0 0.0
        %7809 = vmatprep.subr.mxu0 0.0
        %7810 = vmatpush2.msra.mxu0 0.0
        %7811 = vmatprep.subr.mxu0 0.0
        %7812 = vmatpush2.msra.mxu0 0.0
        %7813 = vmatprep.mubr.f32.mxu0 0.0
        %7814 = vmatmul.mubr.f32.gmra.mxu0 %v7733
        %v7815 = vpop.f32.mrf.mxu0
        %v7816 = vadd.f32 %v7663, %v7815
        %v7817 = vpop.f32.mrf.mxu0
        %v7818 = vadd.f32 %v7665, %v7817
        %7819 = vmatprep.mubr.f32.mxu0 0.0
        %7820 = vmatmul.mubr.f32.gmra.mxu0 %v7735
        %v7821 = vpop.f32.mrf.mxu0
        %v7822 = vadd.f32 %v7669, %v7821
        %v7823 = vpop.f32.mrf.mxu0
        %v7824 = vadd.f32 %v7671, %v7823
        %7825 = vmatprep.mubr.f32.mxu0 0.0
        %7826 = vmatmul.mubr.f32.gmra.mxu0 %v7737
        %v7827 = vpop.f32.mrf.mxu0
        %v7828 = vadd.f32 %v7675, %v7827
        %v7829 = vpop.f32.mrf.mxu0
        %v7830 = vadd.f32 %v7677, %v7829
        %7831 = vmatprep.mubr.f32.mxu0 0.0
        %7832 = vmatmul.mubr.f32.gmra.mxu0 %v7739
        %v7833 = vpop.f32.mrf.mxu0
        %v7834 = vadd.f32 %v7681, %v7833
        %v7835 = vpop.f32.mrf.mxu0
        %v7836 = vadd.f32 %v7683, %v7835
        %7837 = vmatprep.mubr.f32.mxu0 0.0
        %7838 = vmatmul.mubr.f32.gmra.mxu0 %v7741
        %v7839 = vpop.f32.mrf.mxu0
        %v7840 = vadd.f32 %v7687, %v7839
        %v7841 = vpop.f32.mrf.mxu0
        %v7842 = vadd.f32 %v7689, %v7841
        %7843 = vmatprep.mubr.f32.mxu0 0.0
        %7844 = vmatmul.mubr.f32.gmra.mxu0 %v7743
        %v7845 = vpop.f32.mrf.mxu0
        %v7846 = vadd.f32 %v7693, %v7845
        %v7847 = vpop.f32.mrf.mxu0
        %v7848 = vadd.f32 %v7695, %v7847
        %7849 = vmatprep.mubr.f32.mxu0 0.0
        %7850 = vmatmul.mubr.f32.gmra.mxu0 %v7745
        %v7851 = vpop.f32.mrf.mxu0
        %v7852 = vadd.f32 %v7699, %v7851
        %v7853 = vpop.f32.mrf.mxu0
        %v7854 = vadd.f32 %v7701, %v7853
        %7855 = vmatprep.mubr.f32.mxu0 0.0
        %7856 = vmatmul.mubr.f32.gmra.mxu0 %v7747
        %v7857 = vpop.f32.mrf.mxu0
        %v7858 = vadd.f32 %v7705, %v7857
        %v7859 = vpop.f32.mrf.mxu0
        %v7860 = vadd.f32 %v7707, %v7859
        %7861 = vdwg.mxu0
        %v7862 = vld [vmem:[%s9] sm:$0x3]
        %v7864 = vlaneseq
        %v7865 = vshrl.u32 %v7864, 7
        %v7866 = vsub.s32 0, %v7865
        %v7867 = vrot.slane %v7862, %v7866
        %v7868 = vlaneseq
        %v7869 = vshrl.u32 %v7868, 7
        %v7870 = vsub.s32 1, %v7869
        %v7871 = vrot.slane %v7862, %v7870
        %v7874 = vadd.f32 %v7816, %v7867
        %v7875 = vadd.f32 %v7818, %v7871
        %v7876 = vadd.f32 %v7822, %v7867
        %v7877 = vadd.f32 %v7824, %v7871
        %v7878 = vadd.f32 %v7828, %v7867
        %v7879 = vadd.f32 %v7830, %v7871
        %v7880 = vadd.f32 %v7834, %v7867
        %v7881 = vadd.f32 %v7836, %v7871
        %v7882 = vadd.f32 %v7840, %v7867
        %v7883 = vadd.f32 %v7842, %v7871
        %v7884 = vadd.f32 %v7846, %v7867
        %v7885 = vadd.f32 %v7848, %v7871
        %v7886 = vadd.f32 %v7852, %v7867
        %v7887 = vadd.f32 %v7854, %v7871
        %v7888 = vadd.f32 %v7858, %v7867
        %v7889 = vadd.f32 %v7860, %v7871
        %7890 = vst [vmem:[%s476] sm:$0xff] %v7874
        %7891 = vst.msk [vmem:[%s476 + $0x8] sm:$0xff] %vm529, %v7875
        %7892 = vst [vmem:[%s476 + $0x10] sm:$0xff] %v7876
        %7893 = vst.msk [vmem:[%s476 + $0x18] sm:$0xff] %vm529, %v7877
        %7894 = vst [vmem:[%s476 + $0x20] sm:$0xff] %v7878
        %7895 = vst.msk [vmem:[%s476 + $0x28] sm:$0xff] %vm529, %v7879
        %7896 = vst [vmem:[%s476 + $0x30] sm:$0xff] %v7880
        %7897 = vst.msk [vmem:[%s476 + $0x38] sm:$0xff] %vm529, %v7881
        %7898 = vst [vmem:[%s476 + $0x40] sm:$0xff] %v7882
        %7899 = vst.msk [vmem:[%s476 + $0x48] sm:$0xff] %vm529, %v7883
        %7900 = vst [vmem:[%s476 + $0x50] sm:$0xff] %v7884
        %7901 = vst.msk [vmem:[%s476 + $0x58] sm:$0xff] %vm529, %v7885
        %7902 = vst [vmem:[%s476 + $0x60] sm:$0xff] %v7886
        %7903 = vst.msk [vmem:[%s476 + $0x68] sm:$0xff] %vm529, %v7887
        %7904 = vst [vmem:[%s476 + $0x70] sm:$0xff] %v7888
        %7905 = vst.msk [vmem:[%s476 + $0x78] sm:$0xff] %vm529, %v7889
        %s7906 = sand.u32 %s254, 1
        %s7907 = scalar_lea.sflag [#allocation4], %s7906
        %s7908 = sand.u32 %s254, 1
        %s7909 = smul.addr %s7908, 128
        %s7910 = scalar_lea.vmem [#allocation16], %s7909
        // Predicated region
        $region93: #{tpu_custom_call.1} parent=59 // pred_check
          %p7911 = pneg %p264
        $region94: #{tpu_custom_call.1} parent=59 // pred_check_branch
          %7913 = sbr.rel (%p7911) target = $region96
        $region95: #{tpu_custom_call.1} parent=59 // pred_region
          %s7915 = ssub.s32 2048, 2048
          %7916 = vsyncadd %s7907, %s7915
          %s7917 = smul.addr %s31, 2
          %s7918 = smul.addr %s7917, 128
          %s7919 = scalar_lea.hbm %s10, %s7918
          %s7920 = sshll.u32 %s7910, 4
          %s7921 = int_to_ptr.vmem [resolvable:$true] %s7920
          %7926 = dma.vmem_to_hbm [thread:$0]  %s7921, 2048, %s7919, %s7907, 256, 512, 16
        $region96: #{tpu_custom_call.1} parent=59 // pred_fallthru
          _
      $region60: #{tpu_custom_call.1} parent=5 // pred_fallthru
        _
      %p7927 = scmp.le.s32.totalorder 2, %s26
      // Predicated region
      $region97: #{tpu_custom_call.1} parent=5 // pred_check
        %p7928 = pneg %p7927
      $region98: #{tpu_custom_call.1} parent=5 // pred_check_branch
        %7930 = sbr.rel (%p7928) target = $region100
      $region99: #{tpu_custom_call.1} parent=5 // pred_region
        %s7931 = ssub.s32 %s26, 2
        // Predicated region
        $region101: #{tpu_custom_call.1} parent=99 // pred_check
          %p7932 = pneg %p270
        $region102: #{tpu_custom_call.1} parent=99 // pred_check_branch
          %7934 = sbr.rel (%p7932) target = $region104
        $region103: #{tpu_custom_call.1} parent=99 // pred_region
          %s7935 = sand.u32 %s255, 1
          %s7936 = scalar_lea.sflag [#allocation4], %s7935
          %s7937 = sand.u32 %s255, 1
          %s7938 = smul.addr %s7937, 128
          %s7939 = scalar_lea.vmem [#allocation16], %s7938
          %7940 = dma.done %s7936, 2048
        $region104: #{tpu_custom_call.1} parent=99 // pred_fallthru
          _
      $region100: #{tpu_custom_call.1} parent=5 // pred_fallthru
        _
    $region6: #{tpu_custom_call.1} parent=1 // loop_footer
      %s30 = sadd.s32 1, %s26
    $region7: #{tpu_custom_call.1} parent=1 // loop_footer_branch
      %25 = sbr.rel target = $region3
    $region8: #{tpu_custom_call.1} parent=1 // loop_exit
      _
    %7941 = vsyncpa [#allocation3], 1
    %s7942 = scalar_lea.sflag [#allocation3], 1
    %7943 = vsyncpa %s7942, 1
    %7944 = vsyncpa [#allocation6], 1
    %s7945 = scalar_lea.sflag [#allocation6], 1
    %7946 = vsyncpa %s7945, 1
    %7947 = vsyncpa [#allocation9], 1
    %7948 = vsyncpa [#allocation12], 1
    %7949 = vsyncpa [#allocation15], 1
    %7950 = vsyncpa [#allocation4], 1
    %s7951 = scalar_lea.sflag [#allocation4], 1
    %7952 = vsyncpa %s7951, 1

</llo_original>
